<compile_context>
chip_gen: v7x
topology: tpu7x:2x2x1
jax: 0.10.0
libtpu: 0.0.40
codegen_flags: <defaults>
</compile_context>

<pallas_src>
import functools

import numpy as np
import jax
import jax.numpy as jnp
from jax.experimental import pallas as pl
from jax.experimental.pallas import tpu as pltpu

LANES = 128
CG1 = 10   # conv1-output lane stride: lane = j*CG1 + c1   (j in 0..11, c1 in 0..9)
CG2 = 32   # conv2-output lane stride: lane = f*CG2 + c2   (f in 0..3,  c2 in 0..19)


# ---------------------------------------------------------------------------
# Fused kernel: conv1 -> pool -> relu -> conv2 -> pool -> relu -> fc1 -> fc2
# ---------------------------------------------------------------------------
def _cnn_kernel(x_ref, w1_ref, b1_ref, w2_ref, b2_ref,
                wf1_ref, bf1_ref, wf2_ref, bf2_ref, o_ref):
    BT = x_ref.shape[0]

    # ---- conv1 as 5 row-shifts x 2 column parities of banded matmuls ------
    # u_par[b*24+p, j*10+c1] = conv1(x)[b, p, 2j+par, c1]   (bias added later)
    u0 = jnp.zeros((BT * 24, LANES), jnp.float32)
    u1 = jnp.zeros((BT * 24, LANES), jnp.float32)
    for dr in range(5):
        a = x_ref[:, dr:dr + 24, :].reshape(BT * 24, LANES)          # bf16
        u0 = u0 + jnp.dot(a, w1_ref[dr, 0], preferred_element_type=jnp.float32)
        u1 = u1 + jnp.dot(a, w1_ref[dr, 1], preferred_element_type=jnp.float32)
    # 2x2 max-pool: column pairs = parity max, row pairs = sublane max.
    # (bias is lane-constant, so adding it between the maxes is equivalent.)
    u = jnp.maximum(u0, u1) + b1_ref[...]
    u = u.reshape(BT, 12, 2, LANES)
    v = jnp.maximum(jnp.maximum(u[:, :, 0, :], u[:, :, 1, :]), 0.0)   # relu
    v = v.astype(jnp.bfloat16)                                        # [BT,12,128]

    # ---- conv2 (same banded scheme) ----------------------------------------
    t0 = jnp.zeros((BT * 8, LANES), jnp.float32)
    t1 = jnp.zeros((BT * 8, LANES), jnp.float32)
    for di in range(5):
        a = v[:, di:di + 8, :].reshape(BT * 8, LANES)
        t0 = t0 + jnp.dot(a, w2_ref[di, 0], preferred_element_type=jnp.float32)
        t1 = t1 + jnp.dot(a, w2_ref[di, 1], preferred_element_type=jnp.float32)
    t = jnp.maximum(t0, t1) + b2_ref[...]
    t = t.reshape(BT, 4, 2, LANES)
    z = jnp.maximum(jnp.maximum(t[:, :, 0, :], t[:, :, 1, :]), 0.0)
    z = z.astype(jnp.bfloat16)                                        # [BT,4,128]

    # ---- fc1 (+relu) + fc2, contracted per pooled row e --------------------
    h = jnp.zeros((BT, LANES), jnp.float32)
    for e in range(4):
        h = h + jnp.dot(z[:, e, :], wf1_ref[e], preferred_element_type=jnp.float32)
    h = jnp.maximum(h + bf1_ref[...], 0.0).astype(jnp.bfloat16)
    o = jnp.dot(h, wf2_ref[...], preferred_element_type=jnp.float32)
    o_ref[...] = o + bf2_ref[...]


# ---------------------------------------------------------------------------
# Host-side one-time weight preparation (banded / permuted / zero-padded)
# ---------------------------------------------------------------------------
def prepare_params(params):
    w1, b1, w2, b2, wf1, bf1, wf2, bf2 = [np.asarray(p, np.float32) for p in params]

    # conv1: W1[dr, par][s, j*CG1 + c1] = w1[c1, 0, dr, s - (2j+par)]
    W1 = np.zeros((5, 2, LANES, LANES), np.float32)
    for dr in range(5):
        for par in range(2):
            for j in range(12):
                for ds in range(5):
                    s = 2 * j + par + ds                     # input column, <= 27
                    W1[dr, par, s, j * CG1:j * CG1 + 10] = w1[:, 0, dr, ds]
    B1 = np.zeros((1, LANES), np.float32)
    for j in range(12):
        B1[0, j * CG1:j * CG1 + 10] = b1

    # conv2: W2[di, par][j*CG1 + c1, f*CG2 + c2] = w2[c2, c1, di, j - (2f+par)]
    W2 = np.zeros((5, 2, LANES, LANES), np.float32)
    for di in range(5):
        for par in range(2):
            for f in range(4):
                for dj in range(5):
                    j = 2 * f + par + dj                     # pooled-1 column, <= 11
                    W2[di, par, j * CG1:j * CG1 + 10,
                       f * CG2:f * CG2 + 20] = w2[:, :, di, dj].T   # [c1, c2]
    B2 = np.zeros((1, LANES), np.float32)
    for f in range(4):
        B2[0, f * CG2:f * CG2 + 20] = b2

    # fc1 split by pooled row e (torch flatten order of [B,20,4,4] = c2*16+e*4+f)
    WF1 = np.zeros((4, LANES, LANES), np.float32)
    for e in range(4):
        for f in range(4):
            idx = np.arange(20) * 16 + e * 4 + f
            WF1[e, f * CG2:f * CG2 + 20, :50] = wf1[:, idx].T        # [c2, out]
    BF1 = np.zeros((1, LANES), np.float32)
    BF1[0, :50] = bf1

    WF2 = np.zeros((LANES, LANES), np.float32)
    WF2[:50, :10] = wf2.T
    BF2 = np.zeros((1, LANES), np.float32)
    BF2[0, :10] = bf2

    bf = lambda a: jnp.asarray(a, jnp.bfloat16)
    f32 = lambda a: jnp.asarray(a, jnp.float32)
    return (bf(W1), f32(B1), bf(W2), f32(B2), bf(WF1), f32(BF1), bf(WF2), f32(BF2))


# ---------------------------------------------------------------------------
# Forward pass (single pallas_call, B_TILE images per grid step)
# ---------------------------------------------------------------------------
@functools.partial(jax.jit, static_argnames=())
def cnn_forward(x_nchw, prepped):
    W1, B1, W2, B2, WF1, BF1, WF2, BF2 = prepped
    B = x_nchw.shape[0]

    # Batch tile: amortize the ~0.35us per-grid-step overhead over many images
    # (for large B the grid is typically even, keeping both v7x TCs busy).
    BT = 32 if B >= 32 else max(8, ((B + 7) // 8) * 8)
    Bp = ((B + BT - 1) // BT) * BT

    # Raw image, lane-padded to 128 (no host-side im2col inflation).
    x = jnp.zeros((Bp, 28, LANES), jnp.bfloat16)
    x = x.at[:B, :, :28].set(x_nchw[:, 0].astype(jnp.bfloat16))

    logits = pl.pallas_call(
        _cnn_kernel,
        out_shape=jax.ShapeDtypeStruct((Bp, LANES), jnp.float32),
        grid=(Bp // BT,),
        in_specs=[
            pl.BlockSpec((BT, 28, LANES), lambda i: (i, 0, 0)),
            pl.BlockSpec((5, 2, LANES, LANES), lambda i: (0, 0, 0, 0)),
            pl.BlockSpec((1, LANES), lambda i: (0, 0)),
            pl.BlockSpec((5, 2, LANES, LANES), lambda i: (0, 0, 0, 0)),
            pl.BlockSpec((1, LANES), lambda i: (0, 0)),
            pl.BlockSpec((4, LANES, LANES), lambda i: (0, 0, 0)),
            pl.BlockSpec((1, LANES), lambda i: (0, 0)),
            pl.BlockSpec((LANES, LANES), lambda i: (0, 0)),
            pl.BlockSpec((1, LANES), lambda i: (0, 0)),
        ],
        out_specs=pl.BlockSpec((BT, LANES), lambda i: (i, 0)),
        compiler_params=pltpu.CompilerParams(
            dimension_semantics=("parallel",)),
    )(x, W1, B1, W2, B2, WF1, BF1, WF2, BF2)

    return logits[:B, :10]


# ---------------------------------------------------------------------------
# Pure-JAX reference (correctness check)
# ---------------------------------------------------------------------------
def cnn_reference(x, params):
    w1, b1, w2, b2, wf1, bf1, wf2, bf2 = params
    dn = ("NCHW", "OIHW", "NCHW")

    def pool2(v):
        return jax.lax.reduce_window(v, -jnp.inf, jax.lax.max,
                                     (1, 1, 2, 2), (1, 1, 2, 2), "VALID")

    y = jax.lax.conv_general_dilated(x, w1, (1, 1), "VALID",
                                     dimension_numbers=dn) + b1[None, :, None, None]
    y = jnp.maximum(pool2(y), 0.0)
    y = jax.lax.conv_general_dilated(y, w2, (1, 1), "VALID",
                                     dimension_numbers=dn) + b2[None, :, None, None]
    y = jnp.maximum(pool2(y), 0.0)
    y = y.reshape(x.shape[0], 320)
    y = jnp.maximum(y @ wf1.T + bf1, 0.0)
    y = y @ wf2.T + bf2
    return y


def init_params(key):
    ks = jax.random.split(key, 8)
    w1 = 0.1 * jax.random.normal(ks[0], (10, 1, 5, 5), jnp.float32)
    b1 = 0.1 * jax.random.normal(ks[1], (10,), jnp.float32)
    w2 = 0.1 * jax.random.normal(ks[2], (20, 10, 5, 5), jnp.float32)
    b2 = 0.1 * jax.random.normal(ks[3], (20,), jnp.float32)
    wf1 = 0.05 * jax.random.normal(ks[4], (50, 320), jnp.float32)   # torch Linear: [out, in]
    bf1 = 0.05 * jax.random.normal(ks[5], (50,), jnp.float32)
    wf2 = 0.05 * jax.random.normal(ks[6], (10, 50), jnp.float32)
    bf2 = 0.05 * jax.random.normal(ks[7], (10,), jnp.float32)
    return (w1, b1, w2, b2, wf1, bf1, wf2, bf2)


if __name__ == "__main__":
    key = jax.random.PRNGKey(0)
    kx, kp = jax.random.split(key)
    # MNIST-style input: the 320-dim flatten implies 1x28x28 spatial input.
    x = jax.random.normal(kx, (2, 1, 28, 28), jnp.float32)
    params = init_params(kp)
    prepped = prepare_params(params)       # one-time host-side weight prep

    out = jax.block_until_ready(cnn_forward(x, prepped))
    assert out.shape == (2, 10) and out.dtype == jnp.float32

    ref = jax.block_until_ready(cnn_reference(x, params))
    # bf16 MXU operands (f32 accumulate) -> slightly looser tolerance.
    assert jnp.allclose(out, ref, rtol=2e-2, atol=2e-2), "mismatch vs reference"

    print("KERNEL_OK")
</pallas_src>

<mosaic_0001>
module attributes {stable_mosaic.version = 11 : i64} {
  func.func @_cnn_kernel(%arg0: i32, %arg1: memref<8x28x128xbf16, #tpu.memory_space<vmem>>, %arg2: memref<5x2x128x128xbf16, #tpu.memory_space<vmem>>, %arg3: memref<1x128xf32, #tpu.memory_space<vmem>>, %arg4: memref<5x2x128x128xbf16, #tpu.memory_space<vmem>>, %arg5: memref<1x128xf32, #tpu.memory_space<vmem>>, %arg6: memref<4x128x128xbf16, #tpu.memory_space<vmem>>, %arg7: memref<1x128xf32, #tpu.memory_space<vmem>>, %arg8: memref<128x128xbf16, #tpu.memory_space<vmem>>, %arg9: memref<1x128xf32, #tpu.memory_space<vmem>>, %arg10: memref<8x128xf32, #tpu.memory_space<vmem>>) attributes {dimension_semantics = [#tpu.dimension_semantics<parallel>], iteration_bounds = array<i64: 1>, scalar_prefetch = 0 : i64, scratch_operands = 0 : i64, tpu.core_type = #tpu.core_type<tc>, window_params = [{transform_indices = @transform_0, window_bounds = array<i64: 8, 28, 128>}, {pipeline_mode = #tpu.pipeline_mode<synchronous>, transform_indices = @transform_1, window_bounds = array<i64: 5, 2, 128, 128>}, {pipeline_mode = #tpu.pipeline_mode<synchronous>, transform_indices = @transform_2, window_bounds = array<i64: 1, 128>}, {pipeline_mode = #tpu.pipeline_mode<synchronous>, transform_indices = @transform_3, window_bounds = array<i64: 5, 2, 128, 128>}, {pipeline_mode = #tpu.pipeline_mode<synchronous>, transform_indices = @transform_4, window_bounds = array<i64: 1, 128>}, {pipeline_mode = #tpu.pipeline_mode<synchronous>, transform_indices = @transform_5, window_bounds = array<i64: 4, 128, 128>}, {pipeline_mode = #tpu.pipeline_mode<synchronous>, transform_indices = @transform_6, window_bounds = array<i64: 1, 128>}, {pipeline_mode = #tpu.pipeline_mode<synchronous>, transform_indices = @transform_7, window_bounds = array<i64: 128, 128>}, {pipeline_mode = #tpu.pipeline_mode<synchronous>, transform_indices = @transform_8, window_bounds = array<i64: 1, 128>}, {transform_indices = @transform_9, window_bounds = array<i64: 8, 128>}]} {
    %cst = arith.constant 0.000000e+00 : f32
    %0 = vector.broadcast %cst : f32 to vector<192x128xf32>
    %cst_0 = arith.constant 0.000000e+00 : f32
    %1 = vector.broadcast %cst_0 : f32 to vector<192x128xf32>
    %c0 = arith.constant 0 : index
    %c0_1 = arith.constant 0 : index
    %c0_2 = arith.constant 0 : index
    %2 = vector.load %arg1[%c0, %c0_1, %c0_2] : memref<8x28x128xbf16, #tpu.memory_space<vmem>>, vector<8x24x128xbf16>
    %3 = vector.shape_cast %2 : vector<8x24x128xbf16> to vector<192x128xbf16>
    %c0_3 = arith.constant 0 : index
    %c0_4 = arith.constant 0 : index
    %c0_5 = arith.constant 0 : index
    %c0_6 = arith.constant 0 : index
    %4 = vector.load %arg2[%c0_3, %c0_4, %c0_5, %c0_6] : memref<5x2x128x128xbf16, #tpu.memory_space<vmem>>, vector<1x1x128x128xbf16>
    %5 = vector.shape_cast %4 : vector<1x1x128x128xbf16> to vector<128x128xbf16>
    %cst_7 = arith.constant dense<0.000000e+00> : vector<192x128xf32>
    %6 = tpu.matmul %3, %5, %cst_7 {dimension_numbers = #tpu.dot_dimension_numbers<[1], [0], [0], [1], [0, 0, 1, 1], [], []>} : vector<192x128xbf16>, vector<128x128xbf16>, vector<192x128xf32> -> vector<192x128xf32>
    %7 = arith.addf %0, %6 : vector<192x128xf32>
    %c0_8 = arith.constant 0 : index
    %c1 = arith.constant 1 : index
    %c0_9 = arith.constant 0 : index
    %c0_10 = arith.constant 0 : index
    %8 = vector.load %arg2[%c0_8, %c1, %c0_9, %c0_10] : memref<5x2x128x128xbf16, #tpu.memory_space<vmem>>, vector<1x1x128x128xbf16>
    %9 = vector.shape_cast %8 : vector<1x1x128x128xbf16> to vector<128x128xbf16>
    %cst_11 = arith.constant dense<0.000000e+00> : vector<192x128xf32>
    %10 = tpu.matmul %3, %9, %cst_11 {dimension_numbers = #tpu.dot_dimension_numbers<[1], [0], [0], [1], [0, 0, 1, 1], [], []>} : vector<192x128xbf16>, vector<128x128xbf16>, vector<192x128xf32> -> vector<192x128xf32>
    %11 = arith.addf %1, %10 : vector<192x128xf32>
    %c0_12 = arith.constant 0 : index
    %c1_13 = arith.constant 1 : index
    %c0_14 = arith.constant 0 : index
    %12 = vector.load %arg1[%c0_12, %c1_13, %c0_14] : memref<8x28x128xbf16, #tpu.memory_space<vmem>>, vector<8x24x128xbf16>
    %13 = vector.shape_cast %12 : vector<8x24x128xbf16> to vector<192x128xbf16>
    %c1_15 = arith.constant 1 : index
    %c0_16 = arith.constant 0 : index
    %c0_17 = arith.constant 0 : index
    %c0_18 = arith.constant 0 : index
    %14 = vector.load %arg2[%c1_15, %c0_16, %c0_17, %c0_18] : memref<5x2x128x128xbf16, #tpu.memory_space<vmem>>, vector<1x1x128x128xbf16>
    %15 = vector.shape_cast %14 : vector<1x1x128x128xbf16> to vector<128x128xbf16>
    %cst_19 = arith.constant dense<0.000000e+00> : vector<192x128xf32>
    %16 = tpu.matmul %13, %15, %cst_19 {dimension_numbers = #tpu.dot_dimension_numbers<[1], [0], [0], [1], [0, 0, 1, 1], [], []>} : vector<192x128xbf16>, vector<128x128xbf16>, vector<192x128xf32> -> vector<192x128xf32>
    %17 = arith.addf %7, %16 : vector<192x128xf32>
    %c1_20 = arith.constant 1 : index
    %c1_21 = arith.constant 1 : index
    %c0_22 = arith.constant 0 : index
    %c0_23 = arith.constant 0 : index
    %18 = vector.load %arg2[%c1_20, %c1_21, %c0_22, %c0_23] : memref<5x2x128x128xbf16, #tpu.memory_space<vmem>>, vector<1x1x128x128xbf16>
    %19 = vector.shape_cast %18 : vector<1x1x128x128xbf16> to vector<128x128xbf16>
    %cst_24 = arith.constant dense<0.000000e+00> : vector<192x128xf32>
    %20 = tpu.matmul %13, %19, %cst_24 {dimension_numbers = #tpu.dot_dimension_numbers<[1], [0], [0], [1], [0, 0, 1, 1], [], []>} : vector<192x128xbf16>, vector<128x128xbf16>, vector<192x128xf32> -> vector<192x128xf32>
    %21 = arith.addf %11, %20 : vector<192x128xf32>
    %c0_25 = arith.constant 0 : index
    %c2 = arith.constant 2 : index
    %c0_26 = arith.constant 0 : index
    %22 = vector.load %arg1[%c0_25, %c2, %c0_26] : memref<8x28x128xbf16, #tpu.memory_space<vmem>>, vector<8x24x128xbf16>
    %23 = vector.shape_cast %22 : vector<8x24x128xbf16> to vector<192x128xbf16>
    %c2_27 = arith.constant 2 : index
    %c0_28 = arith.constant 0 : index
    %c0_29 = arith.constant 0 : index
    %c0_30 = arith.constant 0 : index
    %24 = vector.load %arg2[%c2_27, %c0_28, %c0_29, %c0_30] : memref<5x2x128x128xbf16, #tpu.memory_space<vmem>>, vector<1x1x128x128xbf16>
    %25 = vector.shape_cast %24 : vector<1x1x128x128xbf16> to vector<128x128xbf16>
    %cst_31 = arith.constant dense<0.000000e+00> : vector<192x128xf32>
    %26 = tpu.matmul %23, %25, %cst_31 {dimension_numbers = #tpu.dot_dimension_numbers<[1], [0], [0], [1], [0, 0, 1, 1], [], []>} : vector<192x128xbf16>, vector<128x128xbf16>, vector<192x128xf32> -> vector<192x128xf32>
    %27 = arith.addf %17, %26 : vector<192x128xf32>
    %c2_32 = arith.constant 2 : index
    %c1_33 = arith.constant 1 : index
    %c0_34 = arith.constant 0 : index
    %c0_35 = arith.constant 0 : index
    %28 = vector.load %arg2[%c2_32, %c1_33, %c0_34, %c0_35] : memref<5x2x128x128xbf16, #tpu.memory_space<vmem>>, vector<1x1x128x128xbf16>
    %29 = vector.shape_cast %28 : vector<1x1x128x128xbf16> to vector<128x128xbf16>
    %cst_36 = arith.constant dense<0.000000e+00> : vector<192x128xf32>
    %30 = tpu.matmul %23, %29, %cst_36 {dimension_numbers = #tpu.dot_dimension_numbers<[1], [0], [0], [1], [0, 0, 1, 1], [], []>} : vector<192x128xbf16>, vector<128x128xbf16>, vector<192x128xf32> -> vector<192x128xf32>
    %31 = arith.addf %21, %30 : vector<192x128xf32>
    %c0_37 = arith.constant 0 : index
    %c3 = arith.constant 3 : index
    %c0_38 = arith.constant 0 : index
    %32 = vector.load %arg1[%c0_37, %c3, %c0_38] : memref<8x28x128xbf16, #tpu.memory_space<vmem>>, vector<8x24x128xbf16>
    %33 = vector.shape_cast %32 : vector<8x24x128xbf16> to vector<192x128xbf16>
    %c3_39 = arith.constant 3 : index
    %c0_40 = arith.constant 0 : index
    %c0_41 = arith.constant 0 : index
    %c0_42 = arith.constant 0 : index
    %34 = vector.load %arg2[%c3_39, %c0_40, %c0_41, %c0_42] : memref<5x2x128x128xbf16, #tpu.memory_space<vmem>>, vector<1x1x128x128xbf16>
    %35 = vector.shape_cast %34 : vector<1x1x128x128xbf16> to vector<128x128xbf16>
    %cst_43 = arith.constant dense<0.000000e+00> : vector<192x128xf32>
    %36 = tpu.matmul %33, %35, %cst_43 {dimension_numbers = #tpu.dot_dimension_numbers<[1], [0], [0], [1], [0, 0, 1, 1], [], []>} : vector<192x128xbf16>, vector<128x128xbf16>, vector<192x128xf32> -> vector<192x128xf32>
    %37 = arith.addf %27, %36 : vector<192x128xf32>
    %c3_44 = arith.constant 3 : index
    %c1_45 = arith.constant 1 : index
    %c0_46 = arith.constant 0 : index
    %c0_47 = arith.constant 0 : index
    %38 = vector.load %arg2[%c3_44, %c1_45, %c0_46, %c0_47] : memref<5x2x128x128xbf16, #tpu.memory_space<vmem>>, vector<1x1x128x128xbf16>
    %39 = vector.shape_cast %38 : vector<1x1x128x128xbf16> to vector<128x128xbf16>
    %cst_48 = arith.constant dense<0.000000e+00> : vector<192x128xf32>
    %40 = tpu.matmul %33, %39, %cst_48 {dimension_numbers = #tpu.dot_dimension_numbers<[1], [0], [0], [1], [0, 0, 1, 1], [], []>} : vector<192x128xbf16>, vector<128x128xbf16>, vector<192x128xf32> -> vector<192x128xf32>
    %41 = arith.addf %31, %40 : vector<192x128xf32>
    %c0_49 = arith.constant 0 : index
    %c4 = arith.constant 4 : index
    %c0_50 = arith.constant 0 : index
    %42 = vector.load %arg1[%c0_49, %c4, %c0_50] : memref<8x28x128xbf16, #tpu.memory_space<vmem>>, vector<8x24x128xbf16>
    %43 = vector.shape_cast %42 : vector<8x24x128xbf16> to vector<192x128xbf16>
    %c4_51 = arith.constant 4 : index
    %c0_52 = arith.constant 0 : index
    %c0_53 = arith.constant 0 : index
    %c0_54 = arith.constant 0 : index
    %44 = vector.load %arg2[%c4_51, %c0_52, %c0_53, %c0_54] : memref<5x2x128x128xbf16, #tpu.memory_space<vmem>>, vector<1x1x128x128xbf16>
    %45 = vector.shape_cast %44 : vector<1x1x128x128xbf16> to vector<128x128xbf16>
    %cst_55 = arith.constant dense<0.000000e+00> : vector<192x128xf32>
    %46 = tpu.matmul %43, %45, %cst_55 {dimension_numbers = #tpu.dot_dimension_numbers<[1], [0], [0], [1], [0, 0, 1, 1], [], []>} : vector<192x128xbf16>, vector<128x128xbf16>, vector<192x128xf32> -> vector<192x128xf32>
    %47 = arith.addf %37, %46 : vector<192x128xf32>
    %c4_56 = arith.constant 4 : index
    %c1_57 = arith.constant 1 : index
    %c0_58 = arith.constant 0 : index
    %c0_59 = arith.constant 0 : index
    %48 = vector.load %arg2[%c4_56, %c1_57, %c0_58, %c0_59] : memref<5x2x128x128xbf16, #tpu.memory_space<vmem>>, vector<1x1x128x128xbf16>
    %49 = vector.shape_cast %48 : vector<1x1x128x128xbf16> to vector<128x128xbf16>
    %cst_60 = arith.constant dense<0.000000e+00> : vector<192x128xf32>
    %50 = tpu.matmul %43, %49, %cst_60 {dimension_numbers = #tpu.dot_dimension_numbers<[1], [0], [0], [1], [0, 0, 1, 1], [], []>} : vector<192x128xbf16>, vector<128x128xbf16>, vector<192x128xf32> -> vector<192x128xf32>
    %51 = arith.addf %41, %50 : vector<192x128xf32>
    %52 = arith.maximumf %47, %51 : vector<192x128xf32>
    %c0_61 = arith.constant 0 : index
    %c0_62 = arith.constant 0 : index
    %53 = vector.load %arg3[%c0_61, %c0_62] : memref<1x128xf32, #tpu.memory_space<vmem>>, vector<1x128xf32>
    %54 = vector.broadcast %53 : vector<1x128xf32> to vector<192x128xf32>
    %55 = arith.addf %52, %54 : vector<192x128xf32>
    %56 = vector.shape_cast %55 : vector<192x128xf32> to vector<8x12x2x128xf32>
    %57 = vector.extract_strided_slice %56 {offsets = [0, 0, 0, 0], sizes = [8, 12, 1, 128], strides = [1, 1, 1, 1]} : vector<8x12x2x128xf32> to vector<8x12x1x128xf32>
    %58 = vector.shape_cast %57 : vector<8x12x1x128xf32> to vector<8x12x128xf32>
    %59 = vector.extract_strided_slice %56 {offsets = [0, 0, 1, 0], sizes = [8, 12, 1, 128], strides = [1, 1, 1, 1]} : vector<8x12x2x128xf32> to vector<8x12x1x128xf32>
    %60 = vector.shape_cast %59 : vector<8x12x1x128xf32> to vector<8x12x128xf32>
    %61 = arith.maximumf %58, %60 : vector<8x12x128xf32>
    %cst_63 = arith.constant 0.000000e+00 : f32
    %62 = vector.broadcast %cst_63 : f32 to vector<8x12x128xf32>
    %63 = arith.maximumf %61, %62 : vector<8x12x128xf32>
    %64 = arith.truncf %63 : vector<8x12x128xf32> to vector<8x12x128xbf16>
    %cst_64 = arith.constant 0.000000e+00 : f32
    %65 = vector.broadcast %cst_64 : f32 to vector<64x128xf32>
    %cst_65 = arith.constant 0.000000e+00 : f32
    %66 = vector.broadcast %cst_65 : f32 to vector<64x128xf32>
    %67 = vector.extract_strided_slice %64 {offsets = [0, 0, 0], sizes = [8, 8, 128], strides = [1, 1, 1]} : vector<8x12x128xbf16> to vector<8x8x128xbf16>
    %68 = vector.shape_cast %67 : vector<8x8x128xbf16> to vector<64x128xbf16>
    %c0_66 = arith.constant 0 : index
    %c0_67 = arith.constant 0 : index
    %c0_68 = arith.constant 0 : index
    %c0_69 = arith.constant 0 : index
    %69 = vector.load %arg4[%c0_66, %c0_67, %c0_68, %c0_69] : memref<5x2x128x128xbf16, #tpu.memory_space<vmem>>, vector<1x1x128x128xbf16>
    %70 = vector.shape_cast %69 : vector<1x1x128x128xbf16> to vector<128x128xbf16>
    %cst_70 = arith.constant dense<0.000000e+00> : vector<64x128xf32>
    %71 = tpu.matmul %68, %70, %cst_70 {dimension_numbers = #tpu.dot_dimension_numbers<[1], [0], [0], [1], [0, 0, 1, 1], [], []>} : vector<64x128xbf16>, vector<128x128xbf16>, vector<64x128xf32> -> vector<64x128xf32>
    %72 = arith.addf %65, %71 : vector<64x128xf32>
    %c0_71 = arith.constant 0 : index
    %c1_72 = arith.constant 1 : index
    %c0_73 = arith.constant 0 : index
    %c0_74 = arith.constant 0 : index
    %73 = vector.load %arg4[%c0_71, %c1_72, %c0_73, %c0_74] : memref<5x2x128x128xbf16, #tpu.memory_space<vmem>>, vector<1x1x128x128xbf16>
    %74 = vector.shape_cast %73 : vector<1x1x128x128xbf16> to vector<128x128xbf16>
    %cst_75 = arith.constant dense<0.000000e+00> : vector<64x128xf32>
    %75 = tpu.matmul %68, %74, %cst_75 {dimension_numbers = #tpu.dot_dimension_numbers<[1], [0], [0], [1], [0, 0, 1, 1], [], []>} : vector<64x128xbf16>, vector<128x128xbf16>, vector<64x128xf32> -> vector<64x128xf32>
    %76 = arith.addf %66, %75 : vector<64x128xf32>
    %77 = vector.extract_strided_slice %64 {offsets = [0, 1, 0], sizes = [8, 8, 128], strides = [1, 1, 1]} : vector<8x12x128xbf16> to vector<8x8x128xbf16>
    %78 = vector.shape_cast %77 : vector<8x8x128xbf16> to vector<64x128xbf16>
    %c1_76 = arith.constant 1 : index
    %c0_77 = arith.constant 0 : index
    %c0_78 = arith.constant 0 : index
    %c0_79 = arith.constant 0 : index
    %79 = vector.load %arg4[%c1_76, %c0_77, %c0_78, %c0_79] : memref<5x2x128x128xbf16, #tpu.memory_space<vmem>>, vector<1x1x128x128xbf16>
    %80 = vector.shape_cast %79 : vector<1x1x128x128xbf16> to vector<128x128xbf16>
    %cst_80 = arith.constant dense<0.000000e+00> : vector<64x128xf32>
    %81 = tpu.matmul %78, %80, %cst_80 {dimension_numbers = #tpu.dot_dimension_numbers<[1], [0], [0], [1], [0, 0, 1, 1], [], []>} : vector<64x128xbf16>, vector<128x128xbf16>, vector<64x128xf32> -> vector<64x128xf32>
    %82 = arith.addf %72, %81 : vector<64x128xf32>
    %c1_81 = arith.constant 1 : index
    %c1_82 = arith.constant 1 : index
    %c0_83 = arith.constant 0 : index
    %c0_84 = arith.constant 0 : index
    %83 = vector.load %arg4[%c1_81, %c1_82, %c0_83, %c0_84] : memref<5x2x128x128xbf16, #tpu.memory_space<vmem>>, vector<1x1x128x128xbf16>
    %84 = vector.shape_cast %83 : vector<1x1x128x128xbf16> to vector<128x128xbf16>
    %cst_85 = arith.constant dense<0.000000e+00> : vector<64x128xf32>
    %85 = tpu.matmul %78, %84, %cst_85 {dimension_numbers = #tpu.dot_dimension_numbers<[1], [0], [0], [1], [0, 0, 1, 1], [], []>} : vector<64x128xbf16>, vector<128x128xbf16>, vector<64x128xf32> -> vector<64x128xf32>
    %86 = arith.addf %76, %85 : vector<64x128xf32>
    %87 = vector.extract_strided_slice %64 {offsets = [0, 2, 0], sizes = [8, 8, 128], strides = [1, 1, 1]} : vector<8x12x128xbf16> to vector<8x8x128xbf16>
    %88 = vector.shape_cast %87 : vector<8x8x128xbf16> to vector<64x128xbf16>
    %c2_86 = arith.constant 2 : index
    %c0_87 = arith.constant 0 : index
    %c0_88 = arith.constant 0 : index
    %c0_89 = arith.constant 0 : index
    %89 = vector.load %arg4[%c2_86, %c0_87, %c0_88, %c0_89] : memref<5x2x128x128xbf16, #tpu.memory_space<vmem>>, vector<1x1x128x128xbf16>
    %90 = vector.shape_cast %89 : vector<1x1x128x128xbf16> to vector<128x128xbf16>
    %cst_90 = arith.constant dense<0.000000e+00> : vector<64x128xf32>
    %91 = tpu.matmul %88, %90, %cst_90 {dimension_numbers = #tpu.dot_dimension_numbers<[1], [0], [0], [1], [0, 0, 1, 1], [], []>} : vector<64x128xbf16>, vector<128x128xbf16>, vector<64x128xf32> -> vector<64x128xf32>
    %92 = arith.addf %82, %91 : vector<64x128xf32>
    %c2_91 = arith.constant 2 : index
    %c1_92 = arith.constant 1 : index
    %c0_93 = arith.constant 0 : index
    %c0_94 = arith.constant 0 : index
    %93 = vector.load %arg4[%c2_91, %c1_92, %c0_93, %c0_94] : memref<5x2x128x128xbf16, #tpu.memory_space<vmem>>, vector<1x1x128x128xbf16>
    %94 = vector.shape_cast %93 : vector<1x1x128x128xbf16> to vector<128x128xbf16>
    %cst_95 = arith.constant dense<0.000000e+00> : vector<64x128xf32>
    %95 = tpu.matmul %88, %94, %cst_95 {dimension_numbers = #tpu.dot_dimension_numbers<[1], [0], [0], [1], [0, 0, 1, 1], [], []>} : vector<64x128xbf16>, vector<128x128xbf16>, vector<64x128xf32> -> vector<64x128xf32>
    %96 = arith.addf %86, %95 : vector<64x128xf32>
    %97 = vector.extract_strided_slice %64 {offsets = [0, 3, 0], sizes = [8, 8, 128], strides = [1, 1, 1]} : vector<8x12x128xbf16> to vector<8x8x128xbf16>
    %98 = vector.shape_cast %97 : vector<8x8x128xbf16> to vector<64x128xbf16>
    %c3_96 = arith.constant 3 : index
    %c0_97 = arith.constant 0 : index
    %c0_98 = arith.constant 0 : index
    %c0_99 = arith.constant 0 : index
    %99 = vector.load %arg4[%c3_96, %c0_97, %c0_98, %c0_99] : memref<5x2x128x128xbf16, #tpu.memory_space<vmem>>, vector<1x1x128x128xbf16>
    %100 = vector.shape_cast %99 : vector<1x1x128x128xbf16> to vector<128x128xbf16>
    %cst_100 = arith.constant dense<0.000000e+00> : vector<64x128xf32>
    %101 = tpu.matmul %98, %100, %cst_100 {dimension_numbers = #tpu.dot_dimension_numbers<[1], [0], [0], [1], [0, 0, 1, 1], [], []>} : vector<64x128xbf16>, vector<128x128xbf16>, vector<64x128xf32> -> vector<64x128xf32>
    %102 = arith.addf %92, %101 : vector<64x128xf32>
    %c3_101 = arith.constant 3 : index
    %c1_102 = arith.constant 1 : index
    %c0_103 = arith.constant 0 : index
    %c0_104 = arith.constant 0 : index
    %103 = vector.load %arg4[%c3_101, %c1_102, %c0_103, %c0_104] : memref<5x2x128x128xbf16, #tpu.memory_space<vmem>>, vector<1x1x128x128xbf16>
    %104 = vector.shape_cast %103 : vector<1x1x128x128xbf16> to vector<128x128xbf16>
    %cst_105 = arith.constant dense<0.000000e+00> : vector<64x128xf32>
    %105 = tpu.matmul %98, %104, %cst_105 {dimension_numbers = #tpu.dot_dimension_numbers<[1], [0], [0], [1], [0, 0, 1, 1], [], []>} : vector<64x128xbf16>, vector<128x128xbf16>, vector<64x128xf32> -> vector<64x128xf32>
    %106 = arith.addf %96, %105 : vector<64x128xf32>
    %107 = vector.extract_strided_slice %64 {offsets = [0, 4, 0], sizes = [8, 8, 128], strides = [1, 1, 1]} : vector<8x12x128xbf16> to vector<8x8x128xbf16>
    %108 = vector.shape_cast %107 : vector<8x8x128xbf16> to vector<64x128xbf16>
    %c4_106 = arith.constant 4 : index
    %c0_107 = arith.constant 0 : index
    %c0_108 = arith.constant 0 : index
    %c0_109 = arith.constant 0 : index
    %109 = vector.load %arg4[%c4_106, %c0_107, %c0_108, %c0_109] : memref<5x2x128x128xbf16, #tpu.memory_space<vmem>>, vector<1x1x128x128xbf16>
    %110 = vector.shape_cast %109 : vector<1x1x128x128xbf16> to vector<128x128xbf16>
    %cst_110 = arith.constant dense<0.000000e+00> : vector<64x128xf32>
    %111 = tpu.matmul %108, %110, %cst_110 {dimension_numbers = #tpu.dot_dimension_numbers<[1], [0], [0], [1], [0, 0, 1, 1], [], []>} : vector<64x128xbf16>, vector<128x128xbf16>, vector<64x128xf32> -> vector<64x128xf32>
    %112 = arith.addf %102, %111 : vector<64x128xf32>
    %c4_111 = arith.constant 4 : index
    %c1_112 = arith.constant 1 : index
    %c0_113 = arith.constant 0 : index
    %c0_114 = arith.constant 0 : index
    %113 = vector.load %arg4[%c4_111, %c1_112, %c0_113, %c0_114] : memref<5x2x128x128xbf16, #tpu.memory_space<vmem>>, vector<1x1x128x128xbf16>
    %114 = vector.shape_cast %113 : vector<1x1x128x128xbf16> to vector<128x128xbf16>
    %cst_115 = arith.constant dense<0.000000e+00> : vector<64x128xf32>
    %115 = tpu.matmul %108, %114, %cst_115 {dimension_numbers = #tpu.dot_dimension_numbers<[1], [0], [0], [1], [0, 0, 1, 1], [], []>} : vector<64x128xbf16>, vector<128x128xbf16>, vector<64x128xf32> -> vector<64x128xf32>
    %116 = arith.addf %106, %115 : vector<64x128xf32>
    %117 = arith.maximumf %112, %116 : vector<64x128xf32>
    %c0_116 = arith.constant 0 : index
    %c0_117 = arith.constant 0 : index
    %118 = vector.load %arg5[%c0_116, %c0_117] : memref<1x128xf32, #tpu.memory_space<vmem>>, vector<1x128xf32>
    %119 = vector.broadcast %118 : vector<1x128xf32> to vector<64x128xf32>
    %120 = arith.addf %117, %119 : vector<64x128xf32>
    %121 = vector.shape_cast %120 : vector<64x128xf32> to vector<8x4x2x128xf32>
    %122 = vector.extract_strided_slice %121 {offsets = [0, 0, 0, 0], sizes = [8, 4, 1, 128], strides = [1, 1, 1, 1]} : vector<8x4x2x128xf32> to vector<8x4x1x128xf32>
    %123 = vector.shape_cast %122 : vector<8x4x1x128xf32> to vector<8x4x128xf32>
    %124 = vector.extract_strided_slice %121 {offsets = [0, 0, 1, 0], sizes = [8, 4, 1, 128], strides = [1, 1, 1, 1]} : vector<8x4x2x128xf32> to vector<8x4x1x128xf32>
    %125 = vector.shape_cast %124 : vector<8x4x1x128xf32> to vector<8x4x128xf32>
    %126 = arith.maximumf %123, %125 : vector<8x4x128xf32>
    %cst_118 = arith.constant 0.000000e+00 : f32
    %127 = vector.broadcast %cst_118 : f32 to vector<8x4x128xf32>
    %128 = arith.maximumf %126, %127 : vector<8x4x128xf32>
    %129 = arith.truncf %128 : vector<8x4x128xf32> to vector<8x4x128xbf16>
    %cst_119 = arith.constant 0.000000e+00 : f32
    %130 = vector.broadcast %cst_119 : f32 to vector<8x128xf32>
    %131 = vector.extract_strided_slice %129 {offsets = [0, 0, 0], sizes = [8, 1, 128], strides = [1, 1, 1]} : vector<8x4x128xbf16> to vector<8x1x128xbf16>
    %132 = vector.shape_cast %131 : vector<8x1x128xbf16> to vector<8x128xbf16>
    %c0_120 = arith.constant 0 : index
    %c0_121 = arith.constant 0 : index
    %c0_122 = arith.constant 0 : index
    %133 = vector.load %arg6[%c0_120, %c0_121, %c0_122] : memref<4x128x128xbf16, #tpu.memory_space<vmem>>, vector<1x128x128xbf16>
    %134 = vector.shape_cast %133 : vector<1x128x128xbf16> to vector<128x128xbf16>
    %cst_123 = arith.constant dense<0.000000e+00> : vector<8x128xf32>
    %135 = tpu.matmul %132, %134, %cst_123 {dimension_numbers = #tpu.dot_dimension_numbers<[1], [0], [0], [1], [0, 0, 1, 1], [], []>} : vector<8x128xbf16>, vector<128x128xbf16>, vector<8x128xf32> -> vector<8x128xf32>
    %136 = arith.addf %130, %135 : vector<8x128xf32>
    %137 = vector.extract_strided_slice %129 {offsets = [0, 1, 0], sizes = [8, 1, 128], strides = [1, 1, 1]} : vector<8x4x128xbf16> to vector<8x1x128xbf16>
    %138 = vector.shape_cast %137 : vector<8x1x128xbf16> to vector<8x128xbf16>
    %c1_124 = arith.constant 1 : index
    %c0_125 = arith.constant 0 : index
    %c0_126 = arith.constant 0 : index
    %139 = vector.load %arg6[%c1_124, %c0_125, %c0_126] : memref<4x128x128xbf16, #tpu.memory_space<vmem>>, vector<1x128x128xbf16>
    %140 = vector.shape_cast %139 : vector<1x128x128xbf16> to vector<128x128xbf16>
    %cst_127 = arith.constant dense<0.000000e+00> : vector<8x128xf32>
    %141 = tpu.matmul %138, %140, %cst_127 {dimension_numbers = #tpu.dot_dimension_numbers<[1], [0], [0], [1], [0, 0, 1, 1], [], []>} : vector<8x128xbf16>, vector<128x128xbf16>, vector<8x128xf32> -> vector<8x128xf32>
    %142 = arith.addf %136, %141 : vector<8x128xf32>
    %143 = vector.extract_strided_slice %129 {offsets = [0, 2, 0], sizes = [8, 1, 128], strides = [1, 1, 1]} : vector<8x4x128xbf16> to vector<8x1x128xbf16>
    %144 = vector.shape_cast %143 : vector<8x1x128xbf16> to vector<8x128xbf16>
    %c2_128 = arith.constant 2 : index
    %c0_129 = arith.constant 0 : index
    %c0_130 = arith.constant 0 : index
    %145 = vector.load %arg6[%c2_128, %c0_129, %c0_130] : memref<4x128x128xbf16, #tpu.memory_space<vmem>>, vector<1x128x128xbf16>
    %146 = vector.shape_cast %145 : vector<1x128x128xbf16> to vector<128x128xbf16>
    %cst_131 = arith.constant dense<0.000000e+00> : vector<8x128xf32>
    %147 = tpu.matmul %144, %146, %cst_131 {dimension_numbers = #tpu.dot_dimension_numbers<[1], [0], [0], [1], [0, 0, 1, 1], [], []>} : vector<8x128xbf16>, vector<128x128xbf16>, vector<8x128xf32> -> vector<8x128xf32>
    %148 = arith.addf %142, %147 : vector<8x128xf32>
    %149 = vector.extract_strided_slice %129 {offsets = [0, 3, 0], sizes = [8, 1, 128], strides = [1, 1, 1]} : vector<8x4x128xbf16> to vector<8x1x128xbf16>
    %150 = vector.shape_cast %149 : vector<8x1x128xbf16> to vector<8x128xbf16>
    %c3_132 = arith.constant 3 : index
    %c0_133 = arith.constant 0 : index
    %c0_134 = arith.constant 0 : index
    %151 = vector.load %arg6[%c3_132, %c0_133, %c0_134] : memref<4x128x128xbf16, #tpu.memory_space<vmem>>, vector<1x128x128xbf16>
    %152 = vector.shape_cast %151 : vector<1x128x128xbf16> to vector<128x128xbf16>
    %cst_135 = arith.constant dense<0.000000e+00> : vector<8x128xf32>
    %153 = tpu.matmul %150, %152, %cst_135 {dimension_numbers = #tpu.dot_dimension_numbers<[1], [0], [0], [1], [0, 0, 1, 1], [], []>} : vector<8x128xbf16>, vector<128x128xbf16>, vector<8x128xf32> -> vector<8x128xf32>
    %154 = arith.addf %148, %153 : vector<8x128xf32>
    %c0_136 = arith.constant 0 : index
    %c0_137 = arith.constant 0 : index
    %155 = vector.load %arg7[%c0_136, %c0_137] : memref<1x128xf32, #tpu.memory_space<vmem>>, vector<1x128xf32>
    %156 = vector.broadcast %155 : vector<1x128xf32> to vector<8x128xf32>
    %157 = arith.addf %154, %156 : vector<8x128xf32>
    %cst_138 = arith.constant 0.000000e+00 : f32
    %158 = vector.broadcast %cst_138 : f32 to vector<8x128xf32>
    %159 = arith.maximumf %157, %158 : vector<8x128xf32>
    %160 = arith.truncf %159 : vector<8x128xf32> to vector<8x128xbf16>
    %c0_139 = arith.constant 0 : index
    %c0_140 = arith.constant 0 : index
    %161 = vector.load %arg8[%c0_139, %c0_140] : memref<128x128xbf16, #tpu.memory_space<vmem>>, vector<128x128xbf16>
    %cst_141 = arith.constant dense<0.000000e+00> : vector<8x128xf32>
    %162 = tpu.matmul %160, %161, %cst_141 {dimension_numbers = #tpu.dot_dimension_numbers<[1], [0], [0], [1], [0, 0, 1, 1], [], []>} : vector<8x128xbf16>, vector<128x128xbf16>, vector<8x128xf32> -> vector<8x128xf32>
    %c0_142 = arith.constant 0 : index
    %c0_143 = arith.constant 0 : index
    %163 = vector.load %arg9[%c0_142, %c0_143] : memref<1x128xf32, #tpu.memory_space<vmem>>, vector<1x128xf32>
    %164 = vector.broadcast %163 : vector<1x128xf32> to vector<8x128xf32>
    %165 = arith.addf %162, %164 : vector<8x128xf32>
    %c0_144 = arith.constant 0 : index
    %c0_145 = arith.constant 0 : index
    %166 = vector.load %arg10[%c0_144, %c0_145] : memref<8x128xf32, #tpu.memory_space<vmem>>, vector<8x128xf32>
    tpu.vector_store %arg10[%c0_144, %c0_145], %165 {strides = array<i32>} : memref<8x128xf32, #tpu.memory_space<vmem>>, vector<8x128xf32>,
    return
  }
  func.func @transform_0(%arg0: i32) -> (i32, i32, i32) {
    %c0_i32 = arith.constant 0 : i32
    %c0_i32_0 = arith.constant 0 : i32
    %c0_i32_1 = arith.constant 0 : i32
    return %arg0, %c0_i32, %c0_i32_0 : i32, i32, i32
  }
  func.func @transform_1(%arg0: i32) -> (i32, i32, i32, i32) {
    %c0_i32 = arith.constant 0 : i32
    %c0_i32_0 = arith.constant 0 : i32
    %c0_i32_1 = arith.constant 0 : i32
    %c0_i32_2 = arith.constant 0 : i32
    %c0_i32_3 = arith.constant 0 : i32
    return %c0_i32, %c0_i32_0, %c0_i32_1, %c0_i32_2 : i32, i32, i32, i32
  }
  func.func @transform_2(%arg0: i32) -> (i32, i32) {
    %c0_i32 = arith.constant 0 : i32
    %c0_i32_0 = arith.constant 0 : i32
    %c0_i32_1 = arith.constant 0 : i32
    return %c0_i32, %c0_i32_0 : i32, i32
  }
  func.func @transform_3(%arg0: i32) -> (i32, i32, i32, i32) {
    %c0_i32 = arith.constant 0 : i32
    %c0_i32_0 = arith.constant 0 : i32
    %c0_i32_1 = arith.constant 0 : i32
    %c0_i32_2 = arith.constant 0 : i32
    %c0_i32_3 = arith.constant 0 : i32
    return %c0_i32, %c0_i32_0, %c0_i32_1, %c0_i32_2 : i32, i32, i32, i32
  }
  func.func @transform_4(%arg0: i32) -> (i32, i32) {
    %c0_i32 = arith.constant 0 : i32
    %c0_i32_0 = arith.constant 0 : i32
    %c0_i32_1 = arith.constant 0 : i32
    return %c0_i32, %c0_i32_0 : i32, i32
  }
  func.func @transform_5(%arg0: i32) -> (i32, i32, i32) {
    %c0_i32 = arith.constant 0 : i32
    %c0_i32_0 = arith.constant 0 : i32
    %c0_i32_1 = arith.constant 0 : i32
    %c0_i32_2 = arith.constant 0 : i32
    return %c0_i32, %c0_i32_0, %c0_i32_1 : i32, i32, i32
  }
  func.func @transform_6(%arg0: i32) -> (i32, i32) {
    %c0_i32 = arith.constant 0 : i32
    %c0_i32_0 = arith.constant 0 : i32
    %c0_i32_1 = arith.constant 0 : i32
    return %c0_i32, %c0_i32_0 : i32, i32
  }
  func.func @transform_7(%arg0: i32) -> (i32, i32) {
    %c0_i32 = arith.constant 0 : i32
    %c0_i32_0 = arith.constant 0 : i32
    %c0_i32_1 = arith.constant 0 : i32
    return %c0_i32, %c0_i32_0 : i32, i32
  }
  func.func @transform_8(%arg0: i32) -> (i32, i32) {
    %c0_i32 = arith.constant 0 : i32
    %c0_i32_0 = arith.constant 0 : i32
    %c0_i32_1 = arith.constant 0 : i32
    return %c0_i32, %c0_i32_0 : i32, i32
  }
  func.func @transform_9(%arg0: i32) -> (i32, i32) {
    %c0_i32 = arith.constant 0 : i32
    %c0_i32_0 = arith.constant 0 : i32
    return %arg0, %c0_i32 : i32, i32
  }
}

</mosaic_0001>

<llo_original>
// kernel: cnn_forward.1
$region0: #{cnn_forward.1}
  #allocation0 [shape = 'u32[]', space=smem, size = 0x4, offset = 0x4, fixed_abs, tag = 'smem constant byte address 0x4 - core index']
  #allocation1 [shape = 'u32[144,128]{1,0:T(1,128)}', space=vmem, size = 0x12000, scoped, tag = 'internal scratch']
  %s0 = inlined_call_operand.vmem [shape: bf16[8,28,128], index: 0, kind: input, shape index: {}]
  %s1 = inlined_call_operand.hbm [shape: bf16[5,2,128,128], index: 1, kind: input, shape index: {}]
  %s2 = inlined_call_operand.vmem [shape: f32[1,128], index: 2, kind: input, shape index: {}]
  %s3 = inlined_call_operand.hbm [shape: bf16[5,2,128,128], index: 3, kind: input, shape index: {}]
  %s4 = inlined_call_operand.vmem [shape: f32[1,128], index: 4, kind: input, shape index: {}]
  %s5 = inlined_call_operand.vmem [shape: bf16[4,128,128], index: 5, kind: input, shape index: {}]
  %s6 = inlined_call_operand.vmem [shape: f32[1,128], index: 6, kind: input, shape index: {}]
  %s7 = inlined_call_operand.hbm [shape: bf16[128,128], index: 7, kind: input, shape index: {}]
  %s8 = inlined_call_operand.vmem [shape: f32[1,128], index: 8, kind: input, shape index: {}]
  %s9 = inlined_call_operand.vmem [shape: f32[8,128], index: 9, kind: output, shape index: {}]
  %s10 = sld [smem:[#allocation0]]
  $region58: #{cnn_forward.1} parent=0
    _
  %s12 = ssub.s32 1, %s10
  %s13 = scalar_select 0, %s12, %s10
  $region1: #{cnn_forward.1} parent=0
    #allocation2 [shape = 'u8[327680]{0}', space=vmem, size = 0x50000, scoped, tag = 'input window, operand 1, single buffered']
    #allocation3 [shape = 's32[1]{0}', space=sflag, size = 0x4, scoped, tag = 'scoped memory for cnn_forward.1']
    #allocation4 [shape = 'u8[327680]{0}', space=vmem, size = 0x50000, scoped, tag = 'input window, operand 3, single buffered']
    #allocation5 [shape = 's32[1]{0}', space=sflag, size = 0x4, scoped, tag = 'scoped memory for cnn_forward.1']
    #allocation6 [shape = 'u8[32768]{0}', space=vmem, size = 0x8000, scoped, tag = 'input window, operand 7, single buffered']
    %14 = vsyncpa [#allocation3], 0
    %15 = vsyncpa [#allocation5], 0
    // Predicated region
    $region2: #{cnn_forward.1} parent=1 // pred_check
      _
    $region3: #{cnn_forward.1} parent=1 // pred_check_branch
      %17 = sbr.rel (0) target = $region5
    $region4: #{cnn_forward.1} parent=1 // pred_region
      _
    $region5: #{cnn_forward.1} parent=1 // pred_fallthru
      _
    // Predicated region
    $region6: #{cnn_forward.1} parent=1 // pred_check
      _
    $region7: #{cnn_forward.1} parent=1 // pred_check_branch
      %19 = sbr.rel (0) target = $region9
    $region8: #{cnn_forward.1} parent=1 // pred_region
      %s21 = ssub.s32 10240, 10240
      %22 = vsyncadd [#allocation3], %s21
      %s23 = sshll.u32 [#allocation2], 4
      %s24 = int_to_ptr.vmem [resolvable:$true] %s23
      %29 = dma.hbm_to_vmem [thread:$0]  %s1, 10240, %s24, [#allocation3], 64, 64, 4
    $region9: #{cnn_forward.1} parent=1 // pred_fallthru
      _
    // Predicated region
    $region10: #{cnn_forward.1} parent=1 // pred_check
      _
    $region11: #{cnn_forward.1} parent=1 // pred_check_branch
      %31 = sbr.rel (0) target = $region13
    $region12: #{cnn_forward.1} parent=1 // pred_region
      _
    $region13: #{cnn_forward.1} parent=1 // pred_fallthru
      _
    // Predicated region
    $region14: #{cnn_forward.1} parent=1 // pred_check
      _
    $region15: #{cnn_forward.1} parent=1 // pred_check_branch
      %33 = sbr.rel (0) target = $region17
    $region16: #{cnn_forward.1} parent=1 // pred_region
      %s35 = ssub.s32 10240, 10240
      %36 = vsyncadd [#allocation5], %s35
      %s37 = sshll.u32 [#allocation4], 4
      %s38 = int_to_ptr.vmem [resolvable:$true] %s37
      %43 = dma.hbm_to_vmem [thread:$0]  %s3, 10240, %s38, [#allocation5], 64, 64, 4
    $region17: #{cnn_forward.1} parent=1 // pred_fallthru
      _
    // Predicated region
    $region18: #{cnn_forward.1} parent=1 // pred_check
      _
    $region19: #{cnn_forward.1} parent=1 // pred_check_branch
      %45 = sbr.rel (0) target = $region21
    $region20: #{cnn_forward.1} parent=1 // pred_region
      _
    $region21: #{cnn_forward.1} parent=1 // pred_fallthru
      _
    // Predicated region
    $region22: #{cnn_forward.1} parent=1 // pred_check
      _
    $region23: #{cnn_forward.1} parent=1 // pred_check_branch
      %47 = sbr.rel (0) target = $region25
    $region24: #{cnn_forward.1} parent=1 // pred_region
      _
    $region25: #{cnn_forward.1} parent=1 // pred_fallthru
      _
    // Predicated region
    $region26: #{cnn_forward.1} parent=1 // pred_check
      _
    $region27: #{cnn_forward.1} parent=1 // pred_check_branch
      %49 = sbr.rel (0) target = $region29
    $region28: #{cnn_forward.1} parent=1 // pred_region
      _
    $region29: #{cnn_forward.1} parent=1 // pred_fallthru
      _
    // Predicated region
    $region30: #{cnn_forward.1} parent=1 // pred_check
      _
    $region31: #{cnn_forward.1} parent=1 // pred_check_branch
      %51 = sbr.rel (0) target = $region33
    $region32: #{cnn_forward.1} parent=1 // pred_region
      %s53 = ssub.s32 1024, 1024
      %54 = vsyncadd [#allocation5], %s53
      %s55 = sshll.u32 [#allocation6], 4
      %s56 = int_to_ptr.vmem [resolvable:$true] %s55
      %61 = dma.hbm_to_vmem [thread:$0]  %s7, 1024, %s56, [#allocation5], 64, 64, 4
    $region33: #{cnn_forward.1} parent=1 // pred_fallthru
      _
    // Predicated region
    $region34: #{cnn_forward.1} parent=1 // pred_check
      _
    $region35: #{cnn_forward.1} parent=1 // pred_check_branch
      %63 = sbr.rel (0) target = $region37
    $region36: #{cnn_forward.1} parent=1 // pred_region
      _
    $region37: #{cnn_forward.1} parent=1 // pred_fallthru
      _
    // Predicated region
    $region38: #{cnn_forward.1} parent=1 // pred_check
      _
    $region39: #{cnn_forward.1} parent=1 // pred_check_branch
      %65 = sbr.rel (0) target = $region41
    $region40: #{cnn_forward.1} parent=1 // pred_region
      %66 = dma.done [#allocation3], 10240
    $region41: #{cnn_forward.1} parent=1 // pred_fallthru
      _
    // Predicated region
    $region42: #{cnn_forward.1} parent=1 // pred_check
      _
    $region43: #{cnn_forward.1} parent=1 // pred_check_branch
      %68 = sbr.rel (0) target = $region45
    $region44: #{cnn_forward.1} parent=1 // pred_region
      %69 = dma.done [#allocation5], 10240
    $region45: #{cnn_forward.1} parent=1 // pred_fallthru
      _
    // Predicated region
    $region46: #{cnn_forward.1} parent=1 // pred_check
      _
    $region47: #{cnn_forward.1} parent=1 // pred_check_branch
      %71 = sbr.rel (0) target = $region49
    $region48: #{cnn_forward.1} parent=1 // pred_region
      %72 = dma.done [#allocation5], 1024
    $region49: #{cnn_forward.1} parent=1 // pred_fallthru
      _
    %v74 = vld [vmem:[%s0] sm:$0xf]
    %v75 = vld [vmem:[%s0 + $0x4] sm:$0xf]
    %v76 = vld [vmem:[%s0 + $0x8] sm:$0xf]
    %v77 = vld [vmem:[%s0 + $0x10] sm:$0xf]
    %v78 = vld [vmem:[%s0 + $0x14] sm:$0xf]
    %v79 = vld [vmem:[%s0 + $0x18] sm:$0xf]
    %v80 = vld [vmem:[%s0 + $0x20] sm:$0xf]
    %v81 = vld [vmem:[%s0 + $0x24] sm:$0xf]
    %v82 = vld [vmem:[%s0 + $0x28] sm:$0xf]
    %v83 = vld [vmem:[%s0 + $0x30] sm:$0xf]
    %v84 = vld [vmem:[%s0 + $0x34] sm:$0xf]
    %v85 = vld [vmem:[%s0 + $0x38] sm:$0xf]
    %v86 = vld [vmem:[%s0 + $0x40] sm:$0xf]
    %v87 = vld [vmem:[%s0 + $0x44] sm:$0xf]
    %v88 = vld [vmem:[%s0 + $0x48] sm:$0xf]
    %v89 = vld [vmem:[%s0 + $0x50] sm:$0xf]
    %v90 = vld [vmem:[%s0 + $0x54] sm:$0xf]
    %v91 = vld [vmem:[%s0 + $0x58] sm:$0xf]
    %v92 = vld [vmem:[%s0 + $0x60] sm:$0xf]
    %v93 = vld [vmem:[%s0 + $0x64] sm:$0xf]
    %v94 = vld [vmem:[%s0 + $0x68] sm:$0xf]
    %v95 = vld [vmem:[%s0 + $0x70] sm:$0xf]
    %v96 = vld [vmem:[%s0 + $0x74] sm:$0xf]
    %v97 = vld [vmem:[%s0 + $0x78] sm:$0xf]
    %v98 = vld [vmem:[#allocation2] sm:$0xf]
    %v99 = vld [vmem:[#allocation2 + $0x4] sm:$0xf]
    %v100 = vld [vmem:[#allocation2 + $0x8] sm:$0xf]
    %v101 = vld [vmem:[#allocation2 + $0xc] sm:$0xf]
    %v102 = vld [vmem:[#allocation2 + $0x10] sm:$0xf]
    %v103 = vld [vmem:[#allocation2 + $0x14] sm:$0xf]
    %v104 = vld [vmem:[#allocation2 + $0x18] sm:$0xf]
    %v105 = vld [vmem:[#allocation2 + $0x1c] sm:$0xf]
    %v106 = vld [vmem:[#allocation2 + $0x20] sm:$0xf]
    %v107 = vld [vmem:[#allocation2 + $0x24] sm:$0xf]
    %v108 = vld [vmem:[#allocation2 + $0x28] sm:$0xf]
    %v109 = vld [vmem:[#allocation2 + $0x2c] sm:$0xf]
    %v110 = vld [vmem:[#allocation2 + $0x30] sm:$0xf]
    %v111 = vld [vmem:[#allocation2 + $0x34] sm:$0xf]
    %v112 = vld [vmem:[#allocation2 + $0x38] sm:$0xf]
    %v113 = vld [vmem:[#allocation2 + $0x3c] sm:$0xf]
    %s114 = scalar_lea.vmem [#allocation2], 64
    %v115 = vld [vmem:[%s114] sm:$0xf]
    %v116 = vld [vmem:[%s114 + $0x4] sm:$0xf]
    %v117 = vld [vmem:[%s114 + $0x8] sm:$0xf]
    %v118 = vld [vmem:[%s114 + $0xc] sm:$0xf]
    %v119 = vld [vmem:[%s114 + $0x10] sm:$0xf]
    %v120 = vld [vmem:[%s114 + $0x14] sm:$0xf]
    %v121 = vld [vmem:[%s114 + $0x18] sm:$0xf]
    %v122 = vld [vmem:[%s114 + $0x1c] sm:$0xf]
    %v123 = vld [vmem:[%s114 + $0x20] sm:$0xf]
    %v124 = vld [vmem:[%s114 + $0x24] sm:$0xf]
    %v125 = vld [vmem:[%s114 + $0x28] sm:$0xf]
    %v126 = vld [vmem:[%s114 + $0x2c] sm:$0xf]
    %v127 = vld [vmem:[%s114 + $0x30] sm:$0xf]
    %v128 = vld [vmem:[%s114 + $0x34] sm:$0xf]
    %v129 = vld [vmem:[%s114 + $0x38] sm:$0xf]
    %v130 = vld [vmem:[%s114 + $0x3c] sm:$0xf]
    %v131 = vld [vmem:[%s0 + $0xc] sm:$0x1]
    %v132 = vld [vmem:[%s0 + $0x1c] sm:$0x1]
    %v133 = vld [vmem:[%s0 + $0x2c] sm:$0x1]
    %v134 = vld [vmem:[%s0 + $0x3c] sm:$0x1]
    %v135 = vld [vmem:[%s0 + $0x4c] sm:$0x1]
    %v136 = vld [vmem:[%s0 + $0x5c] sm:$0x1]
    %v137 = vld [vmem:[%s0 + $0x6c] sm:$0x1]
    %v138 = vld [vmem:[%s0 + $0x7c] sm:$0x1]
    %vm139 = vsmask.f32 3328
    %vm140 = vsmask.f32 7440
    %vm141 = vmor %vm139, %vm140
    %v143 = vshrl.u32 %v74, 16
    %v145 = vrot.slane %v143, 4
    %v146 = vshll.u32 %v74, 16
    %v148 = vrot.slane %v146, 5
    %v149 = vor.u32 %v145, %v148
    %v150 = vrot.slane %v149, 4
    %v152 = vshll.u32 %v75, 16
    %v154 = vrot.slane %v152, 5
    %v155 = vsel %vm141, %v150, %v154
    %v156 = vshrl.u32 %v75, 16
    %v158 = vrot.slane %v156, 4
    %v159 = vor.u32 %v158, %v154
    %v160 = vrot.slane %v159, 4
    %v162 = vshll.u32 %v76, 16
    %v164 = vrot.slane %v162, 5
    %v165 = vsel %vm141, %v160, %v164
    %v166 = vshrl.u32 %v76, 16
    %v168 = vrot.slane %v166, 4
    %v169 = vor.u32 %v168, %v164
    %v170 = vrot.slane %v169, 4
    %v172 = vshll.u32 %v131, 16
    %v174 = vrot.slane %v172, 5
    %v175 = vsel %vm141, %v170, %v174
    %v177 = vshrl.u32 %v77, 16
    %v179 = vrot.slane %v177, 4
    %v180 = vshll.u32 %v77, 16
    %v182 = vrot.slane %v180, 5
    %v183 = vor.u32 %v179, %v182
    %v184 = vrot.slane %v183, 4
    %v186 = vshll.u32 %v78, 16
    %v188 = vrot.slane %v186, 5
    %v189 = vsel %vm141, %v184, %v188
    %v190 = vshrl.u32 %v78, 16
    %v192 = vrot.slane %v190, 4
    %v193 = vor.u32 %v192, %v188
    %v194 = vrot.slane %v193, 4
    %v196 = vshll.u32 %v79, 16
    %v198 = vrot.slane %v196, 5
    %v199 = vsel %vm141, %v194, %v198
    %v200 = vshrl.u32 %v79, 16
    %v202 = vrot.slane %v200, 4
    %v203 = vor.u32 %v202, %v198
    %v204 = vrot.slane %v203, 4
    %v206 = vshll.u32 %v132, 16
    %v208 = vrot.slane %v206, 5
    %v209 = vsel %vm141, %v204, %v208
    %v211 = vshrl.u32 %v80, 16
    %v213 = vrot.slane %v211, 4
    %v214 = vshll.u32 %v80, 16
    %v216 = vrot.slane %v214, 5
    %v217 = vor.u32 %v213, %v216
    %v218 = vrot.slane %v217, 4
    %v220 = vshll.u32 %v81, 16
    %v222 = vrot.slane %v220, 5
    %v223 = vsel %vm141, %v218, %v222
    %v224 = vshrl.u32 %v81, 16
    %v226 = vrot.slane %v224, 4
    %v227 = vor.u32 %v226, %v222
    %v228 = vrot.slane %v227, 4
    %v230 = vshll.u32 %v82, 16
    %v232 = vrot.slane %v230, 5
    %v233 = vsel %vm141, %v228, %v232
    %v234 = vshrl.u32 %v82, 16
    %v236 = vrot.slane %v234, 4
    %v237 = vor.u32 %v236, %v232
    %v238 = vrot.slane %v237, 4
    %v240 = vshll.u32 %v133, 16
    %v242 = vrot.slane %v240, 5
    %v243 = vsel %vm141, %v238, %v242
    %v245 = vshrl.u32 %v83, 16
    %v247 = vrot.slane %v245, 4
    %v248 = vshll.u32 %v83, 16
    %v250 = vrot.slane %v248, 5
    %v251 = vor.u32 %v247, %v250
    %v252 = vrot.slane %v251, 4
    %v254 = vshll.u32 %v84, 16
    %v256 = vrot.slane %v254, 5
    %v257 = vsel %vm141, %v252, %v256
    %v258 = vshrl.u32 %v84, 16
    %v260 = vrot.slane %v258, 4
    %v261 = vor.u32 %v260, %v256
    %v262 = vrot.slane %v261, 4
    %v264 = vshll.u32 %v85, 16
    %v266 = vrot.slane %v264, 5
    %v267 = vsel %vm141, %v262, %v266
    %v268 = vshrl.u32 %v85, 16
    %v270 = vrot.slane %v268, 4
    %v271 = vor.u32 %v270, %v266
    %v272 = vrot.slane %v271, 4
    %v274 = vshll.u32 %v134, 16
    %v276 = vrot.slane %v274, 5
    %v277 = vsel %vm141, %v272, %v276
    %v279 = vshrl.u32 %v86, 16
    %v281 = vrot.slane %v279, 4
    %v282 = vshll.u32 %v86, 16
    %v284 = vrot.slane %v282, 5
    %v285 = vor.u32 %v281, %v284
    %v286 = vrot.slane %v285, 4
    %v288 = vshll.u32 %v87, 16
    %v290 = vrot.slane %v288, 5
    %v291 = vsel %vm141, %v286, %v290
    %v292 = vshrl.u32 %v87, 16
    %v294 = vrot.slane %v292, 4
    %v295 = vor.u32 %v294, %v290
    %v296 = vrot.slane %v295, 4
    %v298 = vshll.u32 %v88, 16
    %v300 = vrot.slane %v298, 5
    %v301 = vsel %vm141, %v296, %v300
    %v302 = vshrl.u32 %v88, 16
    %v304 = vrot.slane %v302, 4
    %v305 = vor.u32 %v304, %v300
    %v306 = vrot.slane %v305, 4
    %v308 = vshll.u32 %v135, 16
    %v310 = vrot.slane %v308, 5
    %v311 = vsel %vm141, %v306, %v310
    %v313 = vshrl.u32 %v89, 16
    %v315 = vrot.slane %v313, 4
    %v316 = vshll.u32 %v89, 16
    %v318 = vrot.slane %v316, 5
    %v319 = vor.u32 %v315, %v318
    %v320 = vrot.slane %v319, 4
    %v322 = vshll.u32 %v90, 16
    %v324 = vrot.slane %v322, 5
    %v325 = vsel %vm141, %v320, %v324
    %v326 = vshrl.u32 %v90, 16
    %v328 = vrot.slane %v326, 4
    %v329 = vor.u32 %v328, %v324
    %v330 = vrot.slane %v329, 4
    %v332 = vshll.u32 %v91, 16
    %v334 = vrot.slane %v332, 5
    %v335 = vsel %vm141, %v330, %v334
    %v336 = vshrl.u32 %v91, 16
    %v338 = vrot.slane %v336, 4
    %v339 = vor.u32 %v338, %v334
    %v340 = vrot.slane %v339, 4
    %v342 = vshll.u32 %v136, 16
    %v344 = vrot.slane %v342, 5
    %v345 = vsel %vm141, %v340, %v344
    %v347 = vshrl.u32 %v92, 16
    %v349 = vrot.slane %v347, 4
    %v350 = vshll.u32 %v92, 16
    %v352 = vrot.slane %v350, 5
    %v353 = vor.u32 %v349, %v352
    %v354 = vrot.slane %v353, 4
    %v356 = vshll.u32 %v93, 16
    %v358 = vrot.slane %v356, 5
    %v359 = vsel %vm141, %v354, %v358
    %v360 = vshrl.u32 %v93, 16
    %v362 = vrot.slane %v360, 4
    %v363 = vor.u32 %v362, %v358
    %v364 = vrot.slane %v363, 4
    %v366 = vshll.u32 %v94, 16
    %v368 = vrot.slane %v366, 5
    %v369 = vsel %vm141, %v364, %v368
    %v370 = vshrl.u32 %v94, 16
    %v372 = vrot.slane %v370, 4
    %v373 = vor.u32 %v372, %v368
    %v374 = vrot.slane %v373, 4
    %v376 = vshll.u32 %v137, 16
    %v378 = vrot.slane %v376, 5
    %v379 = vsel %vm141, %v374, %v378
    %v381 = vshrl.u32 %v95, 16
    %v383 = vrot.slane %v381, 4
    %v384 = vshll.u32 %v95, 16
    %v386 = vrot.slane %v384, 5
    %v387 = vor.u32 %v383, %v386
    %v388 = vrot.slane %v387, 4
    %v390 = vshll.u32 %v96, 16
    %v392 = vrot.slane %v390, 5
    %v393 = vsel %vm141, %v388, %v392
    %v394 = vshrl.u32 %v96, 16
    %v396 = vrot.slane %v394, 4
    %v397 = vor.u32 %v396, %v392
    %v398 = vrot.slane %v397, 4
    %v400 = vshll.u32 %v97, 16
    %v402 = vrot.slane %v400, 5
    %v403 = vsel %vm141, %v398, %v402
    %v404 = vshrl.u32 %v97, 16
    %v406 = vrot.slane %v404, 4
    %v407 = vor.u32 %v406, %v402
    %v408 = vrot.slane %v407, 4
    %v410 = vshll.u32 %v138, 16
    %v412 = vrot.slane %v410, 5
    %v413 = vsel %vm141, %v408, %v412
    %s414 = scalar_lea.vmem [#allocation2], 128
    %v415 = vld [vmem:[%s414] sm:$0xf]
    %v416 = vld [vmem:[%s414 + $0x4] sm:$0xf]
    %v417 = vld [vmem:[%s414 + $0x8] sm:$0xf]
    %v418 = vld [vmem:[%s414 + $0xc] sm:$0xf]
    %v419 = vld [vmem:[%s414 + $0x10] sm:$0xf]
    %v420 = vld [vmem:[%s414 + $0x14] sm:$0xf]
    %v421 = vld [vmem:[%s414 + $0x18] sm:$0xf]
    %v422 = vld [vmem:[%s414 + $0x1c] sm:$0xf]
    %v423 = vld [vmem:[%s414 + $0x20] sm:$0xf]
    %v424 = vld [vmem:[%s414 + $0x24] sm:$0xf]
    %v425 = vld [vmem:[%s414 + $0x28] sm:$0xf]
    %v426 = vld [vmem:[%s414 + $0x2c] sm:$0xf]
    %v427 = vld [vmem:[%s414 + $0x30] sm:$0xf]
    %v428 = vld [vmem:[%s414 + $0x34] sm:$0xf]
    %v429 = vld [vmem:[%s414 + $0x38] sm:$0xf]
    %v430 = vld [vmem:[%s414 + $0x3c] sm:$0xf]
    %v431 = vunpack.c.l.b16 %v155
    %v432 = vunpack.c.l.b16 %v165
    %v433 = vunpack.c.l.b16 %v175
    %v434 = vunpack.c.l.b16 %v189
    %v435 = vunpack.c.l.b16 %v199
    %v436 = vunpack.c.l.b16 %v209
    %v437 = vunpack.c.l.b16 %v223
    %v438 = vunpack.c.l.b16 %v233
    %v439 = vunpack.c.l.b16 %v243
    %v440 = vunpack.c.l.b16 %v257
    %v441 = vunpack.c.l.b16 %v267
    %v442 = vunpack.c.l.b16 %v277
    %v443 = vunpack.c.l.b16 %v291
    %v444 = vunpack.c.l.b16 %v301
    %v445 = vunpack.c.l.b16 %v311
    %v446 = vunpack.c.l.b16 %v325
    %v447 = vunpack.c.l.b16 %v335
    %v448 = vunpack.c.l.b16 %v345
    %v449 = vunpack.c.l.b16 %v359
    %v450 = vunpack.c.l.b16 %v369
    %v451 = vunpack.c.l.b16 %v379
    %v452 = vunpack.c.l.b16 %v393
    %v453 = vunpack.c.l.b16 %v403
    %v454 = vunpack.c.l.b16 %v413
    %v455 = vpack.c.b16 %v432, %v431
    %v456 = vpack.c.b16 %v434, %v433
    %v457 = vpack.c.b16 %v436, %v435
    %v458 = vpack.c.b16 %v438, %v437
    %v459 = vpack.c.b16 %v440, %v439
    %v460 = vpack.c.b16 %v442, %v441
    %v461 = vpack.c.b16 %v444, %v443
    %v462 = vpack.c.b16 %v446, %v445
    %v463 = vpack.c.b16 %v448, %v447
    %v464 = vpack.c.b16 %v450, %v449
    %v465 = vpack.c.b16 %v452, %v451
    %v466 = vpack.c.b16 %v454, %v453
    %v495 = vunpack.c.l.b16 %v415
    %v496 = vunpack.c.l.b16 %v416
    %v497 = vunpack.c.l.b16 %v417
    %v498 = vunpack.c.l.b16 %v418
    %v499 = vunpack.c.l.b16 %v419
    %v500 = vunpack.c.l.b16 %v420
    %v501 = vunpack.c.l.b16 %v421
    %v502 = vunpack.c.l.b16 %v422
    %v503 = vunpack.c.l.b16 %v423
    %v504 = vunpack.c.l.b16 %v424
    %v505 = vunpack.c.l.b16 %v425
    %v506 = vunpack.c.l.b16 %v426
    %v507 = vunpack.c.l.b16 %v427
    %v508 = vunpack.c.l.b16 %v428
    %v509 = vunpack.c.l.b16 %v429
    %v510 = vunpack.c.l.b16 %v430
    %v511 = vpack.c.b16 %v496, %v495
    %v512 = vpack.c.b16 %v498, %v497
    %v513 = vpack.c.b16 %v500, %v499
    %v514 = vpack.c.b16 %v502, %v501
    %v515 = vpack.c.b16 %v504, %v503
    %v516 = vpack.c.b16 %v506, %v505
    %v517 = vpack.c.b16 %v508, %v507
    %v518 = vpack.c.b16 %v510, %v509
    %527 = vmatprep.subr.bf16.mxu0 0
    %528 = vmatpush1.bf16.msra.mxu0 %v511
    %529 = vmatprep.subr.bf16.mxu0 0
    %530 = vmatpush1.bf16.msra.mxu0 %v512
    %531 = vmatprep.subr.bf16.mxu0 0
    %532 = vmatpush1.bf16.msra.mxu0 %v513
    %533 = vmatprep.subr.bf16.mxu0 0
    %534 = vmatpush1.bf16.msra.mxu0 %v514
    %535 = vmatprep.subr.bf16.mxu0 0
    %536 = vmatpush1.bf16.msra.mxu0 %v515
    %537 = vmatprep.subr.bf16.mxu0 0
    %538 = vmatpush1.bf16.msra.mxu0 %v516
    %539 = vmatprep.subr.bf16.mxu0 0
    %540 = vmatpush1.bf16.msra.mxu0 %v517
    %541 = vmatprep.subr.bf16.mxu0 0
    %542 = vmatpush1.bf16.msra.mxu0 %v518
    %543 = vmatprep.subr.bf16.mxu0 0
    %544 = vmatpush1.bf16.msra.mxu0 0
    %545 = vmatprep.subr.bf16.mxu0 0
    %546 = vmatpush1.bf16.msra.mxu0 0
    %547 = vmatprep.subr.bf16.mxu0 0
    %548 = vmatpush1.bf16.msra.mxu0 0
    %549 = vmatprep.subr.bf16.mxu0 0
    %550 = vmatpush1.bf16.msra.mxu0 0
    %551 = vmatprep.subr.bf16.mxu0 0
    %552 = vmatpush1.bf16.msra.mxu0 0
    %553 = vmatprep.subr.bf16.mxu0 0
    %554 = vmatpush1.bf16.msra.mxu0 0
    %555 = vmatprep.subr.bf16.mxu0 0
    %556 = vmatpush1.bf16.msra.mxu0 0
    %557 = vmatprep.subr.bf16.mxu0 0
    %558 = vmatpush1.bf16.msra.mxu0 0
    %559 = vmatprep.mubr.bf16.mxu0 0
    %560 = vmatmul.mubr.bf16.gmra.mrb[0].mxu0 %v455
    %v561 = vpop.f32.mrb[0].mxu0
    %v562 = vadd.f32 0.0, %v561
    %v563 = vpop.f32.mrb[0].mxu0
    %v564 = vpop.f32.mrb[0].mxu0
    %v565 = vadd.f32 0.0, %v564
    %v566 = vpop.f32.mrb[0].mxu0
    %567 = vmatprep.mubr.bf16.mxu0 0
    %568 = vmatmul.mubr.bf16.gmra.mrb[0].mxu0 %v456
    %v569 = vpop.f32.mrb[0].mxu0
    %v570 = vadd.f32 0.0, %v569
    %v571 = vpop.f32.mrb[0].mxu0
    %v572 = vpop.f32.mrb[0].mxu0
    %v573 = vadd.f32 0.0, %v572
    %v574 = vpop.f32.mrb[0].mxu0
    %575 = vmatprep.mubr.bf16.mxu0 0
    %576 = vmatmul.mubr.bf16.gmra.mrb[0].mxu0 %v457
    %v577 = vpop.f32.mrb[0].mxu0
    %v578 = vadd.f32 0.0, %v577
    %v579 = vpop.f32.mrb[0].mxu0
    %v580 = vpop.f32.mrb[0].mxu0
    %v581 = vadd.f32 0.0, %v580
    %v582 = vpop.f32.mrb[0].mxu0
    %583 = vmatprep.mubr.bf16.mxu0 0
    %584 = vmatmul.mubr.bf16.gmra.mrb[0].mxu0 %v458
    %v585 = vpop.f32.mrb[0].mxu0
    %v586 = vadd.f32 0.0, %v585
    %v587 = vpop.f32.mrb[0].mxu0
    %v588 = vpop.f32.mrb[0].mxu0
    %v589 = vadd.f32 0.0, %v588
    %v590 = vpop.f32.mrb[0].mxu0
    %591 = vmatprep.mubr.bf16.mxu0 0
    %592 = vmatmul.mubr.bf16.gmra.mrb[0].mxu0 %v459
    %v593 = vpop.f32.mrb[0].mxu0
    %v594 = vadd.f32 0.0, %v593
    %v595 = vpop.f32.mrb[0].mxu0
    %v596 = vpop.f32.mrb[0].mxu0
    %v597 = vadd.f32 0.0, %v596
    %v598 = vpop.f32.mrb[0].mxu0
    %599 = vmatprep.mubr.bf16.mxu0 0
    %600 = vmatmul.mubr.bf16.gmra.mrb[0].mxu0 %v460
    %v601 = vpop.f32.mrb[0].mxu0
    %v602 = vadd.f32 0.0, %v601
    %v603 = vpop.f32.mrb[0].mxu0
    %v604 = vpop.f32.mrb[0].mxu0
    %v605 = vadd.f32 0.0, %v604
    %v606 = vpop.f32.mrb[0].mxu0
    %607 = vmatprep.mubr.bf16.mxu0 0
    %608 = vmatmul.mubr.bf16.gmra.mrb[0].mxu0 %v461
    %v609 = vpop.f32.mrb[0].mxu0
    %v610 = vadd.f32 0.0, %v609
    %v611 = vpop.f32.mrb[0].mxu0
    %v612 = vpop.f32.mrb[0].mxu0
    %v613 = vadd.f32 0.0, %v612
    %v614 = vpop.f32.mrb[0].mxu0
    %615 = vmatprep.mubr.bf16.mxu0 0
    %616 = vmatmul.mubr.bf16.gmra.mrb[0].mxu0 %v462
    %v617 = vpop.f32.mrb[0].mxu0
    %v618 = vadd.f32 0.0, %v617
    %v619 = vpop.f32.mrb[0].mxu0
    %v620 = vpop.f32.mrb[0].mxu0
    %v621 = vadd.f32 0.0, %v620
    %v622 = vpop.f32.mrb[0].mxu0
    %623 = vmatprep.mubr.bf16.mxu0 0
    %624 = vmatmul.mubr.bf16.gmra.mrb[0].mxu0 %v463
    %v625 = vpop.f32.mrb[0].mxu0
    %v626 = vadd.f32 0.0, %v625
    %v627 = vpop.f32.mrb[0].mxu0
    %v628 = vpop.f32.mrb[0].mxu0
    %v629 = vadd.f32 0.0, %v628
    %v630 = vpop.f32.mrb[0].mxu0
    %631 = vmatprep.mubr.bf16.mxu0 0
    %632 = vmatmul.mubr.bf16.gmra.mrb[0].mxu0 %v464
    %v633 = vpop.f32.mrb[0].mxu0
    %v634 = vadd.f32 0.0, %v633
    %v635 = vpop.f32.mrb[0].mxu0
    %v636 = vpop.f32.mrb[0].mxu0
    %v637 = vadd.f32 0.0, %v636
    %v638 = vpop.f32.mrb[0].mxu0
    %639 = vmatprep.mubr.bf16.mxu0 0
    %640 = vmatmul.mubr.bf16.gmra.mrb[0].mxu0 %v465
    %v641 = vpop.f32.mrb[0].mxu0
    %v642 = vadd.f32 0.0, %v641
    %v643 = vpop.f32.mrb[0].mxu0
    %v644 = vpop.f32.mrb[0].mxu0
    %v645 = vadd.f32 0.0, %v644
    %v646 = vpop.f32.mrb[0].mxu0
    %647 = vmatprep.mubr.bf16.mxu0 0
    %648 = vmatmul.mubr.bf16.gmra.mrb[0].mxu0 %v466
    %v649 = vpop.f32.mrb[0].mxu0
    %v650 = vadd.f32 0.0, %v649
    %v651 = vpop.f32.mrb[0].mxu0
    %v652 = vpop.f32.mrb[0].mxu0
    %v653 = vadd.f32 0.0, %v652
    %v654 = vpop.f32.mrb[0].mxu0
    %655 = vdwg.mxu0
    %v680 = vunpack.c.l.b16 %v74
    %v681 = vunpack.c.l.b16 %v75
    %v682 = vunpack.c.l.b16 %v76
    %v683 = vunpack.c.l.b16 %v77
    %v684 = vunpack.c.l.b16 %v78
    %v685 = vunpack.c.l.b16 %v79
    %v686 = vunpack.c.l.b16 %v80
    %v687 = vunpack.c.l.b16 %v81
    %v688 = vunpack.c.l.b16 %v82
    %v689 = vunpack.c.l.b16 %v83
    %v690 = vunpack.c.l.b16 %v84
    %v691 = vunpack.c.l.b16 %v85
    %v692 = vunpack.c.l.b16 %v86
    %v693 = vunpack.c.l.b16 %v87
    %v694 = vunpack.c.l.b16 %v88
    %v695 = vunpack.c.l.b16 %v89
    %v696 = vunpack.c.l.b16 %v90
    %v697 = vunpack.c.l.b16 %v91
    %v698 = vunpack.c.l.b16 %v92
    %v699 = vunpack.c.l.b16 %v93
    %v700 = vunpack.c.l.b16 %v94
    %v701 = vunpack.c.l.b16 %v95
    %v702 = vunpack.c.l.b16 %v96
    %v703 = vunpack.c.l.b16 %v97
    %v704 = vpack.c.b16 %v681, %v680
    %v705 = vpack.c.b16 %v683, %v682
    %v706 = vpack.c.b16 %v685, %v684
    %v707 = vpack.c.b16 %v687, %v686
    %v708 = vpack.c.b16 %v689, %v688
    %v709 = vpack.c.b16 %v691, %v690
    %v710 = vpack.c.b16 %v693, %v692
    %v711 = vpack.c.b16 %v695, %v694
    %v712 = vpack.c.b16 %v697, %v696
    %v713 = vpack.c.b16 %v699, %v698
    %v714 = vpack.c.b16 %v701, %v700
    %v715 = vpack.c.b16 %v703, %v702
    %v744 = vunpack.c.l.b16 %v98
    %v745 = vunpack.c.l.b16 %v99
    %v746 = vunpack.c.l.b16 %v100
    %v747 = vunpack.c.l.b16 %v101
    %v748 = vunpack.c.l.b16 %v102
    %v749 = vunpack.c.l.b16 %v103
    %v750 = vunpack.c.l.b16 %v104
    %v751 = vunpack.c.l.b16 %v105
    %v752 = vunpack.c.l.b16 %v106
    %v753 = vunpack.c.l.b16 %v107
    %v754 = vunpack.c.l.b16 %v108
    %v755 = vunpack.c.l.b16 %v109
    %v756 = vunpack.c.l.b16 %v110
    %v757 = vunpack.c.l.b16 %v111
    %v758 = vunpack.c.l.b16 %v112
    %v759 = vunpack.c.l.b16 %v113
    %v760 = vpack.c.b16 %v745, %v744
    %v761 = vpack.c.b16 %v747, %v746
    %v762 = vpack.c.b16 %v749, %v748
    %v763 = vpack.c.b16 %v751, %v750
    %v764 = vpack.c.b16 %v753, %v752
    %v765 = vpack.c.b16 %v755, %v754
    %v766 = vpack.c.b16 %v757, %v756
    %v767 = vpack.c.b16 %v759, %v758
    %776 = vmatprep.subr.bf16.mxu0 0
    %777 = vmatpush1.bf16.msra.mxu0 %v760
    %778 = vmatprep.subr.bf16.mxu0 0
    %779 = vmatpush1.bf16.msra.mxu0 %v761
    %780 = vmatprep.subr.bf16.mxu0 0
    %781 = vmatpush1.bf16.msra.mxu0 %v762
    %782 = vmatprep.subr.bf16.mxu0 0
    %783 = vmatpush1.bf16.msra.mxu0 %v763
    %784 = vmatprep.subr.bf16.mxu0 0
    %785 = vmatpush1.bf16.msra.mxu0 %v764
    %786 = vmatprep.subr.bf16.mxu0 0
    %787 = vmatpush1.bf16.msra.mxu0 %v765
    %788 = vmatprep.subr.bf16.mxu0 0
    %789 = vmatpush1.bf16.msra.mxu0 %v766
    %790 = vmatprep.subr.bf16.mxu0 0
    %791 = vmatpush1.bf16.msra.mxu0 %v767
    %792 = vmatprep.subr.bf16.mxu0 0
    %793 = vmatpush1.bf16.msra.mxu0 0
    %794 = vmatprep.subr.bf16.mxu0 0
    %795 = vmatpush1.bf16.msra.mxu0 0
    %796 = vmatprep.subr.bf16.mxu0 0
    %797 = vmatpush1.bf16.msra.mxu0 0
    %798 = vmatprep.subr.bf16.mxu0 0
    %799 = vmatpush1.bf16.msra.mxu0 0
    %800 = vmatprep.subr.bf16.mxu0 0
    %801 = vmatpush1.bf16.msra.mxu0 0
    %802 = vmatprep.subr.bf16.mxu0 0
    %803 = vmatpush1.bf16.msra.mxu0 0
    %804 = vmatprep.subr.bf16.mxu0 0
    %805 = vmatpush1.bf16.msra.mxu0 0
    %806 = vmatprep.subr.bf16.mxu0 0
    %807 = vmatpush1.bf16.msra.mxu0 0
    %808 = vmatprep.mubr.bf16.mxu0 0
    %809 = vmatmul.mubr.bf16.gmra.mrb[0].mxu0 %v704
    %v810 = vpop.f32.mrb[0].mxu0
    %v811 = vadd.f32 %v562, %v810
    %v812 = vpop.f32.mrb[0].mxu0
    %v813 = vpop.f32.mrb[0].mxu0
    %v814 = vadd.f32 %v565, %v813
    %v815 = vpop.f32.mrb[0].mxu0
    %816 = vmatprep.mubr.bf16.mxu0 0
    %817 = vmatmul.mubr.bf16.gmra.mrb[0].mxu0 %v705
    %v818 = vpop.f32.mrb[0].mxu0
    %v819 = vadd.f32 %v570, %v818
    %v820 = vpop.f32.mrb[0].mxu0
    %v821 = vpop.f32.mrb[0].mxu0
    %v822 = vadd.f32 %v573, %v821
    %v823 = vpop.f32.mrb[0].mxu0
    %824 = vmatprep.mubr.bf16.mxu0 0
    %825 = vmatmul.mubr.bf16.gmra.mrb[0].mxu0 %v706
    %v826 = vpop.f32.mrb[0].mxu0
    %v827 = vadd.f32 %v578, %v826
    %v828 = vpop.f32.mrb[0].mxu0
    %v829 = vpop.f32.mrb[0].mxu0
    %v830 = vadd.f32 %v581, %v829
    %v831 = vpop.f32.mrb[0].mxu0
    %832 = vmatprep.mubr.bf16.mxu0 0
    %833 = vmatmul.mubr.bf16.gmra.mrb[0].mxu0 %v707
    %v834 = vpop.f32.mrb[0].mxu0
    %v835 = vadd.f32 %v586, %v834
    %v836 = vpop.f32.mrb[0].mxu0
    %v837 = vpop.f32.mrb[0].mxu0
    %v838 = vadd.f32 %v589, %v837
    %v839 = vpop.f32.mrb[0].mxu0
    %840 = vmatprep.mubr.bf16.mxu0 0
    %841 = vmatmul.mubr.bf16.gmra.mrb[0].mxu0 %v708
    %v842 = vpop.f32.mrb[0].mxu0
    %v843 = vadd.f32 %v594, %v842
    %v844 = vpop.f32.mrb[0].mxu0
    %v845 = vpop.f32.mrb[0].mxu0
    %v846 = vadd.f32 %v597, %v845
    %v847 = vpop.f32.mrb[0].mxu0
    %848 = vmatprep.mubr.bf16.mxu0 0
    %849 = vmatmul.mubr.bf16.gmra.mrb[0].mxu0 %v709
    %v850 = vpop.f32.mrb[0].mxu0
    %v851 = vadd.f32 %v602, %v850
    %v852 = vpop.f32.mrb[0].mxu0
    %v853 = vpop.f32.mrb[0].mxu0
    %v854 = vadd.f32 %v605, %v853
    %v855 = vpop.f32.mrb[0].mxu0
    %856 = vmatprep.mubr.bf16.mxu0 0
    %857 = vmatmul.mubr.bf16.gmra.mrb[0].mxu0 %v710
    %v858 = vpop.f32.mrb[0].mxu0
    %v859 = vadd.f32 %v610, %v858
    %v860 = vpop.f32.mrb[0].mxu0
    %v861 = vpop.f32.mrb[0].mxu0
    %v862 = vadd.f32 %v613, %v861
    %v863 = vpop.f32.mrb[0].mxu0
    %864 = vmatprep.mubr.bf16.mxu0 0
    %865 = vmatmul.mubr.bf16.gmra.mrb[0].mxu0 %v711
    %v866 = vpop.f32.mrb[0].mxu0
    %v867 = vadd.f32 %v618, %v866
    %v868 = vpop.f32.mrb[0].mxu0
    %v869 = vpop.f32.mrb[0].mxu0
    %v870 = vadd.f32 %v621, %v869
    %v871 = vpop.f32.mrb[0].mxu0
    %872 = vmatprep.mubr.bf16.mxu0 0
    %873 = vmatmul.mubr.bf16.gmra.mrb[0].mxu0 %v712
    %v874 = vpop.f32.mrb[0].mxu0
    %v875 = vadd.f32 %v626, %v874
    %v876 = vpop.f32.mrb[0].mxu0
    %v877 = vpop.f32.mrb[0].mxu0
    %v878 = vadd.f32 %v629, %v877
    %v879 = vpop.f32.mrb[0].mxu0
    %880 = vmatprep.mubr.bf16.mxu0 0
    %881 = vmatmul.mubr.bf16.gmra.mrb[0].mxu0 %v713
    %v882 = vpop.f32.mrb[0].mxu0
    %v883 = vadd.f32 %v634, %v882
    %v884 = vpop.f32.mrb[0].mxu0
    %v885 = vpop.f32.mrb[0].mxu0
    %v886 = vadd.f32 %v637, %v885
    %v887 = vpop.f32.mrb[0].mxu0
    %888 = vmatprep.mubr.bf16.mxu0 0
    %889 = vmatmul.mubr.bf16.gmra.mrb[0].mxu0 %v714
    %v890 = vpop.f32.mrb[0].mxu0
    %v891 = vadd.f32 %v642, %v890
    %v892 = vpop.f32.mrb[0].mxu0
    %v893 = vpop.f32.mrb[0].mxu0
    %v894 = vadd.f32 %v645, %v893
    %v895 = vpop.f32.mrb[0].mxu0
    %896 = vmatprep.mubr.bf16.mxu0 0
    %897 = vmatmul.mubr.bf16.gmra.mrb[0].mxu0 %v715
    %v898 = vpop.f32.mrb[0].mxu0
    %v899 = vadd.f32 %v650, %v898
    %v900 = vpop.f32.mrb[0].mxu0
    %v901 = vpop.f32.mrb[0].mxu0
    %v902 = vadd.f32 %v653, %v901
    %v903 = vpop.f32.mrb[0].mxu0
    %904 = vdwg.mxu0
    %s905 = scalar_lea.vmem [#allocation2], 192
    %v906 = vld [vmem:[%s905] sm:$0xf]
    %v907 = vld [vmem:[%s905 + $0x4] sm:$0xf]
    %v908 = vld [vmem:[%s905 + $0x8] sm:$0xf]
    %v909 = vld [vmem:[%s905 + $0xc] sm:$0xf]
    %v910 = vld [vmem:[%s905 + $0x10] sm:$0xf]
    %v911 = vld [vmem:[%s905 + $0x14] sm:$0xf]
    %v912 = vld [vmem:[%s905 + $0x18] sm:$0xf]
    %v913 = vld [vmem:[%s905 + $0x1c] sm:$0xf]
    %v914 = vld [vmem:[%s905 + $0x20] sm:$0xf]
    %v915 = vld [vmem:[%s905 + $0x24] sm:$0xf]
    %v916 = vld [vmem:[%s905 + $0x28] sm:$0xf]
    %v917 = vld [vmem:[%s905 + $0x2c] sm:$0xf]
    %v918 = vld [vmem:[%s905 + $0x30] sm:$0xf]
    %v919 = vld [vmem:[%s905 + $0x34] sm:$0xf]
    %v920 = vld [vmem:[%s905 + $0x38] sm:$0xf]
    %v921 = vld [vmem:[%s905 + $0x3c] sm:$0xf]
    %v938 = vunpack.c.l.b16 %v906
    %v939 = vunpack.c.l.b16 %v907
    %v940 = vunpack.c.l.b16 %v908
    %v941 = vunpack.c.l.b16 %v909
    %v942 = vunpack.c.l.b16 %v910
    %v943 = vunpack.c.l.b16 %v911
    %v944 = vunpack.c.l.b16 %v912
    %v945 = vunpack.c.l.b16 %v913
    %v946 = vunpack.c.l.b16 %v914
    %v947 = vunpack.c.l.b16 %v915
    %v948 = vunpack.c.l.b16 %v916
    %v949 = vunpack.c.l.b16 %v917
    %v950 = vunpack.c.l.b16 %v918
    %v951 = vunpack.c.l.b16 %v919
    %v952 = vunpack.c.l.b16 %v920
    %v953 = vunpack.c.l.b16 %v921
    %v954 = vpack.c.b16 %v939, %v938
    %v955 = vpack.c.b16 %v941, %v940
    %v956 = vpack.c.b16 %v943, %v942
    %v957 = vpack.c.b16 %v945, %v944
    %v958 = vpack.c.b16 %v947, %v946
    %v959 = vpack.c.b16 %v949, %v948
    %v960 = vpack.c.b16 %v951, %v950
    %v961 = vpack.c.b16 %v953, %v952
    %970 = vmatprep.subr.bf16.mxu0 0
    %971 = vmatpush1.bf16.msra.mxu0 %v954
    %972 = vmatprep.subr.bf16.mxu0 0
    %973 = vmatpush1.bf16.msra.mxu0 %v955
    %974 = vmatprep.subr.bf16.mxu0 0
    %975 = vmatpush1.bf16.msra.mxu0 %v956
    %976 = vmatprep.subr.bf16.mxu0 0
    %977 = vmatpush1.bf16.msra.mxu0 %v957
    %978 = vmatprep.subr.bf16.mxu0 0
    %979 = vmatpush1.bf16.msra.mxu0 %v958
    %980 = vmatprep.subr.bf16.mxu0 0
    %981 = vmatpush1.bf16.msra.mxu0 %v959
    %982 = vmatprep.subr.bf16.mxu0 0
    %983 = vmatpush1.bf16.msra.mxu0 %v960
    %984 = vmatprep.subr.bf16.mxu0 0
    %985 = vmatpush1.bf16.msra.mxu0 %v961
    %986 = vmatprep.subr.bf16.mxu0 0
    %987 = vmatpush1.bf16.msra.mxu0 0
    %988 = vmatprep.subr.bf16.mxu0 0
    %989 = vmatpush1.bf16.msra.mxu0 0
    %990 = vmatprep.subr.bf16.mxu0 0
    %991 = vmatpush1.bf16.msra.mxu0 0
    %992 = vmatprep.subr.bf16.mxu0 0
    %993 = vmatpush1.bf16.msra.mxu0 0
    %994 = vmatprep.subr.bf16.mxu0 0
    %995 = vmatpush1.bf16.msra.mxu0 0
    %996 = vmatprep.subr.bf16.mxu0 0
    %997 = vmatpush1.bf16.msra.mxu0 0
    %998 = vmatprep.subr.bf16.mxu0 0
    %999 = vmatpush1.bf16.msra.mxu0 0
    %1000 = vmatprep.subr.bf16.mxu0 0
    %1001 = vmatpush1.bf16.msra.mxu0 0
    %1002 = vmatprep.mubr.bf16.mxu0 0
    %1003 = vmatmul.mubr.bf16.gmra.mrb[0].mxu0 %v455
    %v1004 = vpop.f32.mrb[0].mxu0
    %v1005 = vadd.f32 0.0, %v1004
    %v1006 = vpop.f32.mrb[0].mxu0
    %v1007 = vpop.f32.mrb[0].mxu0
    %v1008 = vadd.f32 0.0, %v1007
    %v1009 = vpop.f32.mrb[0].mxu0
    %1010 = vmatprep.mubr.bf16.mxu0 0
    %1011 = vmatmul.mubr.bf16.gmra.mrb[0].mxu0 %v456
    %v1012 = vpop.f32.mrb[0].mxu0
    %v1013 = vadd.f32 0.0, %v1012
    %v1014 = vpop.f32.mrb[0].mxu0
    %v1015 = vpop.f32.mrb[0].mxu0
    %v1016 = vadd.f32 0.0, %v1015
    %v1017 = vpop.f32.mrb[0].mxu0
    %1018 = vmatprep.mubr.bf16.mxu0 0
    %1019 = vmatmul.mubr.bf16.gmra.mrb[0].mxu0 %v457
    %v1020 = vpop.f32.mrb[0].mxu0
    %v1021 = vadd.f32 0.0, %v1020
    %v1022 = vpop.f32.mrb[0].mxu0
    %v1023 = vpop.f32.mrb[0].mxu0
    %v1024 = vadd.f32 0.0, %v1023
    %v1025 = vpop.f32.mrb[0].mxu0
    %1026 = vmatprep.mubr.bf16.mxu0 0
    %1027 = vmatmul.mubr.bf16.gmra.mrb[0].mxu0 %v458
    %v1028 = vpop.f32.mrb[0].mxu0
    %v1029 = vadd.f32 0.0, %v1028
    %v1030 = vpop.f32.mrb[0].mxu0
    %v1031 = vpop.f32.mrb[0].mxu0
    %v1032 = vadd.f32 0.0, %v1031
    %v1033 = vpop.f32.mrb[0].mxu0
    %1034 = vmatprep.mubr.bf16.mxu0 0
    %1035 = vmatmul.mubr.bf16.gmra.mrb[0].mxu0 %v459
    %v1036 = vpop.f32.mrb[0].mxu0
    %v1037 = vadd.f32 0.0, %v1036
    %v1038 = vpop.f32.mrb[0].mxu0
    %v1039 = vpop.f32.mrb[0].mxu0
    %v1040 = vadd.f32 0.0, %v1039
    %v1041 = vpop.f32.mrb[0].mxu0
    %1042 = vmatprep.mubr.bf16.mxu0 0
    %1043 = vmatmul.mubr.bf16.gmra.mrb[0].mxu0 %v460
    %v1044 = vpop.f32.mrb[0].mxu0
    %v1045 = vadd.f32 0.0, %v1044
    %v1046 = vpop.f32.mrb[0].mxu0
    %v1047 = vpop.f32.mrb[0].mxu0
    %v1048 = vadd.f32 0.0, %v1047
    %v1049 = vpop.f32.mrb[0].mxu0
    %1050 = vmatprep.mubr.bf16.mxu0 0
    %1051 = vmatmul.mubr.bf16.gmra.mrb[0].mxu0 %v461
    %v1052 = vpop.f32.mrb[0].mxu0
    %v1053 = vadd.f32 0.0, %v1052
    %v1054 = vpop.f32.mrb[0].mxu0
    %v1055 = vpop.f32.mrb[0].mxu0
    %v1056 = vadd.f32 0.0, %v1055
    %v1057 = vpop.f32.mrb[0].mxu0
    %1058 = vmatprep.mubr.bf16.mxu0 0
    %1059 = vmatmul.mubr.bf16.gmra.mrb[0].mxu0 %v462
    %v1060 = vpop.f32.mrb[0].mxu0
    %v1061 = vadd.f32 0.0, %v1060
    %v1062 = vpop.f32.mrb[0].mxu0
    %v1063 = vpop.f32.mrb[0].mxu0
    %v1064 = vadd.f32 0.0, %v1063
    %v1065 = vpop.f32.mrb[0].mxu0
    %1066 = vmatprep.mubr.bf16.mxu0 0
    %1067 = vmatmul.mubr.bf16.gmra.mrb[0].mxu0 %v463
    %v1068 = vpop.f32.mrb[0].mxu0
    %v1069 = vadd.f32 0.0, %v1068
    %v1070 = vpop.f32.mrb[0].mxu0
    %v1071 = vpop.f32.mrb[0].mxu0
    %v1072 = vadd.f32 0.0, %v1071
    %v1073 = vpop.f32.mrb[0].mxu0
    %1074 = vmatprep.mubr.bf16.mxu0 0
    %1075 = vmatmul.mubr.bf16.gmra.mrb[0].mxu0 %v464
    %v1076 = vpop.f32.mrb[0].mxu0
    %v1077 = vadd.f32 0.0, %v1076
    %v1078 = vpop.f32.mrb[0].mxu0
    %v1079 = vpop.f32.mrb[0].mxu0
    %v1080 = vadd.f32 0.0, %v1079
    %v1081 = vpop.f32.mrb[0].mxu0
    %1082 = vmatprep.mubr.bf16.mxu0 0
    %1083 = vmatmul.mubr.bf16.gmra.mrb[0].mxu0 %v465
    %v1084 = vpop.f32.mrb[0].mxu0
    %v1085 = vadd.f32 0.0, %v1084
    %v1086 = vpop.f32.mrb[0].mxu0
    %v1087 = vpop.f32.mrb[0].mxu0
    %v1088 = vadd.f32 0.0, %v1087
    %v1089 = vpop.f32.mrb[0].mxu0
    %1090 = vmatprep.mubr.bf16.mxu0 0
    %1091 = vmatmul.mubr.bf16.gmra.mrb[0].mxu0 %v466
    %v1092 = vpop.f32.mrb[0].mxu0
    %v1093 = vadd.f32 0.0, %v1092
    %v1094 = vpop.f32.mrb[0].mxu0
    %v1095 = vpop.f32.mrb[0].mxu0
    %v1096 = vadd.f32 0.0, %v1095
    %v1097 = vpop.f32.mrb[0].mxu0
    %1098 = vdwg.mxu0
    %v1115 = vunpack.c.l.b16 %v115
    %v1116 = vunpack.c.l.b16 %v116
    %v1117 = vunpack.c.l.b16 %v117
    %v1118 = vunpack.c.l.b16 %v118
    %v1119 = vunpack.c.l.b16 %v119
    %v1120 = vunpack.c.l.b16 %v120
    %v1121 = vunpack.c.l.b16 %v121
    %v1122 = vunpack.c.l.b16 %v122
    %v1123 = vunpack.c.l.b16 %v123
    %v1124 = vunpack.c.l.b16 %v124
    %v1125 = vunpack.c.l.b16 %v125
    %v1126 = vunpack.c.l.b16 %v126
    %v1127 = vunpack.c.l.b16 %v127
    %v1128 = vunpack.c.l.b16 %v128
    %v1129 = vunpack.c.l.b16 %v129
    %v1130 = vunpack.c.l.b16 %v130
    %v1131 = vpack.c.b16 %v1116, %v1115
    %v1132 = vpack.c.b16 %v1118, %v1117
    %v1133 = vpack.c.b16 %v1120, %v1119
    %v1134 = vpack.c.b16 %v1122, %v1121
    %v1135 = vpack.c.b16 %v1124, %v1123
    %v1136 = vpack.c.b16 %v1126, %v1125
    %v1137 = vpack.c.b16 %v1128, %v1127
    %v1138 = vpack.c.b16 %v1130, %v1129
    %1147 = vmatprep.subr.bf16.mxu0 0
    %1148 = vmatpush1.bf16.msra.mxu0 %v1131
    %1149 = vmatprep.subr.bf16.mxu0 0
    %1150 = vmatpush1.bf16.msra.mxu0 %v1132
    %1151 = vmatprep.subr.bf16.mxu0 0
    %1152 = vmatpush1.bf16.msra.mxu0 %v1133
    %1153 = vmatprep.subr.bf16.mxu0 0
    %1154 = vmatpush1.bf16.msra.mxu0 %v1134
    %1155 = vmatprep.subr.bf16.mxu0 0
    %1156 = vmatpush1.bf16.msra.mxu0 %v1135
    %1157 = vmatprep.subr.bf16.mxu0 0
    %1158 = vmatpush1.bf16.msra.mxu0 %v1136
    %1159 = vmatprep.subr.bf16.mxu0 0
    %1160 = vmatpush1.bf16.msra.mxu0 %v1137
    %1161 = vmatprep.subr.bf16.mxu0 0
    %1162 = vmatpush1.bf16.msra.mxu0 %v1138
    %1163 = vmatprep.subr.bf16.mxu0 0
    %1164 = vmatpush1.bf16.msra.mxu0 0
    %1165 = vmatprep.subr.bf16.mxu0 0
    %1166 = vmatpush1.bf16.msra.mxu0 0
    %1167 = vmatprep.subr.bf16.mxu0 0
    %1168 = vmatpush1.bf16.msra.mxu0 0
    %1169 = vmatprep.subr.bf16.mxu0 0
    %1170 = vmatpush1.bf16.msra.mxu0 0
    %1171 = vmatprep.subr.bf16.mxu0 0
    %1172 = vmatpush1.bf16.msra.mxu0 0
    %1173 = vmatprep.subr.bf16.mxu0 0
    %1174 = vmatpush1.bf16.msra.mxu0 0
    %1175 = vmatprep.subr.bf16.mxu0 0
    %1176 = vmatpush1.bf16.msra.mxu0 0
    %1177 = vmatprep.subr.bf16.mxu0 0
    %1178 = vmatpush1.bf16.msra.mxu0 0
    %1179 = vmatprep.mubr.bf16.mxu0 0
    %1180 = vmatmul.mubr.bf16.gmra.mrb[0].mxu0 %v704
    %v1181 = vpop.f32.mrb[0].mxu0
    %v1182 = vadd.f32 %v1005, %v1181
    %v1183 = vpop.f32.mrb[0].mxu0
    %v1184 = vpop.f32.mrb[0].mxu0
    %v1185 = vadd.f32 %v1008, %v1184
    %v1186 = vpop.f32.mrb[0].mxu0
    %1187 = vmatprep.mubr.bf16.mxu0 0
    %1188 = vmatmul.mubr.bf16.gmra.mrb[0].mxu0 %v705
    %v1189 = vpop.f32.mrb[0].mxu0
    %v1190 = vadd.f32 %v1013, %v1189
    %v1191 = vpop.f32.mrb[0].mxu0
    %v1192 = vpop.f32.mrb[0].mxu0
    %v1193 = vadd.f32 %v1016, %v1192
    %v1194 = vpop.f32.mrb[0].mxu0
    %1195 = vmatprep.mubr.bf16.mxu0 0
    %1196 = vmatmul.mubr.bf16.gmra.mrb[0].mxu0 %v706
    %v1197 = vpop.f32.mrb[0].mxu0
    %v1198 = vadd.f32 %v1021, %v1197
    %v1199 = vpop.f32.mrb[0].mxu0
    %v1200 = vpop.f32.mrb[0].mxu0
    %v1201 = vadd.f32 %v1024, %v1200
    %v1202 = vpop.f32.mrb[0].mxu0
    %1203 = vmatprep.mubr.bf16.mxu0 0
    %1204 = vmatmul.mubr.bf16.gmra.mrb[0].mxu0 %v707
    %v1205 = vpop.f32.mrb[0].mxu0
    %v1206 = vadd.f32 %v1029, %v1205
    %v1207 = vpop.f32.mrb[0].mxu0
    %v1208 = vpop.f32.mrb[0].mxu0
    %v1209 = vadd.f32 %v1032, %v1208
    %v1210 = vpop.f32.mrb[0].mxu0
    %1211 = vmatprep.mubr.bf16.mxu0 0
    %1212 = vmatmul.mubr.bf16.gmra.mrb[0].mxu0 %v708
    %v1213 = vpop.f32.mrb[0].mxu0
    %v1214 = vadd.f32 %v1037, %v1213
    %v1215 = vpop.f32.mrb[0].mxu0
    %v1216 = vpop.f32.mrb[0].mxu0
    %v1217 = vadd.f32 %v1040, %v1216
    %v1218 = vpop.f32.mrb[0].mxu0
    %1219 = vmatprep.mubr.bf16.mxu0 0
    %1220 = vmatmul.mubr.bf16.gmra.mrb[0].mxu0 %v709
    %v1221 = vpop.f32.mrb[0].mxu0
    %v1222 = vadd.f32 %v1045, %v1221
    %v1223 = vpop.f32.mrb[0].mxu0
    %v1224 = vpop.f32.mrb[0].mxu0
    %v1225 = vadd.f32 %v1048, %v1224
    %v1226 = vpop.f32.mrb[0].mxu0
    %1227 = vmatprep.mubr.bf16.mxu0 0
    %1228 = vmatmul.mubr.bf16.gmra.mrb[0].mxu0 %v710
    %v1229 = vpop.f32.mrb[0].mxu0
    %v1230 = vadd.f32 %v1053, %v1229
    %v1231 = vpop.f32.mrb[0].mxu0
    %v1232 = vpop.f32.mrb[0].mxu0
    %v1233 = vadd.f32 %v1056, %v1232
    %v1234 = vpop.f32.mrb[0].mxu0
    %1235 = vmatprep.mubr.bf16.mxu0 0
    %1236 = vmatmul.mubr.bf16.gmra.mrb[0].mxu0 %v711
    %v1237 = vpop.f32.mrb[0].mxu0
    %v1238 = vadd.f32 %v1061, %v1237
    %v1239 = vpop.f32.mrb[0].mxu0
    %v1240 = vpop.f32.mrb[0].mxu0
    %v1241 = vadd.f32 %v1064, %v1240
    %v1242 = vpop.f32.mrb[0].mxu0
    %1243 = vmatprep.mubr.bf16.mxu0 0
    %1244 = vmatmul.mubr.bf16.gmra.mrb[0].mxu0 %v712
    %v1245 = vpop.f32.mrb[0].mxu0
    %v1246 = vadd.f32 %v1069, %v1245
    %v1247 = vpop.f32.mrb[0].mxu0
    %v1248 = vpop.f32.mrb[0].mxu0
    %v1249 = vadd.f32 %v1072, %v1248
    %v1250 = vpop.f32.mrb[0].mxu0
    %1251 = vmatprep.mubr.bf16.mxu0 0
    %1252 = vmatmul.mubr.bf16.gmra.mrb[0].mxu0 %v713
    %v1253 = vpop.f32.mrb[0].mxu0
    %v1254 = vadd.f32 %v1077, %v1253
    %v1255 = vpop.f32.mrb[0].mxu0
    %v1256 = vpop.f32.mrb[0].mxu0
    %v1257 = vadd.f32 %v1080, %v1256
    %v1258 = vpop.f32.mrb[0].mxu0
    %1259 = vmatprep.mubr.bf16.mxu0 0
    %1260 = vmatmul.mubr.bf16.gmra.mrb[0].mxu0 %v714
    %v1261 = vpop.f32.mrb[0].mxu0
    %v1262 = vadd.f32 %v1085, %v1261
    %v1263 = vpop.f32.mrb[0].mxu0
    %v1264 = vpop.f32.mrb[0].mxu0
    %v1265 = vadd.f32 %v1088, %v1264
    %v1266 = vpop.f32.mrb[0].mxu0
    %1267 = vmatprep.mubr.bf16.mxu0 0
    %1268 = vmatmul.mubr.bf16.gmra.mrb[0].mxu0 %v715
    %v1269 = vpop.f32.mrb[0].mxu0
    %v1270 = vadd.f32 %v1093, %v1269
    %v1271 = vpop.f32.mrb[0].mxu0
    %v1272 = vpop.f32.mrb[0].mxu0
    %v1273 = vadd.f32 %v1096, %v1272
    %v1274 = vpop.f32.mrb[0].mxu0
    %1275 = vdwg.mxu0
    %v1276 = vld [vmem:[%s0] sm:$0xe]
    %v1277 = vld [vmem:[%s0 + $0x10] sm:$0xe]
    %v1278 = vld [vmem:[%s0 + $0x20] sm:$0xe]
    %v1279 = vld [vmem:[%s0 + $0x30] sm:$0xe]
    %v1280 = vld [vmem:[%s0 + $0x40] sm:$0xe]
    %v1281 = vld [vmem:[%s0 + $0x50] sm:$0xe]
    %v1282 = vld [vmem:[%s0 + $0x60] sm:$0xe]
    %v1283 = vld [vmem:[%s0 + $0x70] sm:$0xe]
    %vm1300 = vcmask 1042432
    %vm1301 = vcmask 1046532
    %vm1302 = vmor %vm1300, %vm1301
    %v1303 = vrot.slane %v1276, 5
    %v1304 = vrot.slane %v1303, 4
    %v1305 = vrot.slane %v75, 5
    %v1306 = vsel %vm1302, %v1304, %v1305
    %v1307 = vrot.slane %v1305, 4
    %v1308 = vrot.slane %v76, 5
    %v1309 = vsel %vm1302, %v1307, %v1308
    %v1310 = vrot.slane %v1308, 4
    %v1311 = vrot.slane %v131, 5
    %v1312 = vsel %vm1302, %v1310, %v1311
    %v1313 = vrot.slane %v1277, 5
    %v1314 = vrot.slane %v1313, 4
    %v1315 = vrot.slane %v78, 5
    %v1316 = vsel %vm1302, %v1314, %v1315
    %v1317 = vrot.slane %v1315, 4
    %v1318 = vrot.slane %v79, 5
    %v1319 = vsel %vm1302, %v1317, %v1318
    %v1320 = vrot.slane %v1318, 4
    %v1321 = vrot.slane %v132, 5
    %v1322 = vsel %vm1302, %v1320, %v1321
    %v1323 = vrot.slane %v1278, 5
    %v1324 = vrot.slane %v1323, 4
    %v1325 = vrot.slane %v81, 5
    %v1326 = vsel %vm1302, %v1324, %v1325
    %v1327 = vrot.slane %v1325, 4
    %v1328 = vrot.slane %v82, 5
    %v1329 = vsel %vm1302, %v1327, %v1328
    %v1330 = vrot.slane %v1328, 4
    %v1331 = vrot.slane %v133, 5
    %v1332 = vsel %vm1302, %v1330, %v1331
    %v1333 = vrot.slane %v1279, 5
    %v1334 = vrot.slane %v1333, 4
    %v1335 = vrot.slane %v84, 5
    %v1336 = vsel %vm1302, %v1334, %v1335
    %v1337 = vrot.slane %v1335, 4
    %v1338 = vrot.slane %v85, 5
    %v1339 = vsel %vm1302, %v1337, %v1338
    %v1340 = vrot.slane %v1338, 4
    %v1341 = vrot.slane %v134, 5
    %v1342 = vsel %vm1302, %v1340, %v1341
    %v1343 = vrot.slane %v1280, 5
    %v1344 = vrot.slane %v1343, 4
    %v1345 = vrot.slane %v87, 5
    %v1346 = vsel %vm1302, %v1344, %v1345
    %v1347 = vrot.slane %v1345, 4
    %v1348 = vrot.slane %v88, 5
    %v1349 = vsel %vm1302, %v1347, %v1348
    %v1350 = vrot.slane %v1348, 4
    %v1351 = vrot.slane %v135, 5
    %v1352 = vsel %vm1302, %v1350, %v1351
    %v1353 = vrot.slane %v1281, 5
    %v1354 = vrot.slane %v1353, 4
    %v1355 = vrot.slane %v90, 5
    %v1356 = vsel %vm1302, %v1354, %v1355
    %v1357 = vrot.slane %v1355, 4
    %v1358 = vrot.slane %v91, 5
    %v1359 = vsel %vm1302, %v1357, %v1358
    %v1360 = vrot.slane %v1358, 4
    %v1361 = vrot.slane %v136, 5
    %v1362 = vsel %vm1302, %v1360, %v1361
    %v1363 = vrot.slane %v1282, 5
    %v1364 = vrot.slane %v1363, 4
    %v1365 = vrot.slane %v93, 5
    %v1366 = vsel %vm1302, %v1364, %v1365
    %v1367 = vrot.slane %v1365, 4
    %v1368 = vrot.slane %v94, 5
    %v1369 = vsel %vm1302, %v1367, %v1368
    %v1370 = vrot.slane %v1368, 4
    %v1371 = vrot.slane %v137, 5
    %v1372 = vsel %vm1302, %v1370, %v1371
    %v1373 = vrot.slane %v1283, 5
    %v1374 = vrot.slane %v1373, 4
    %v1375 = vrot.slane %v96, 5
    %v1376 = vsel %vm1302, %v1374, %v1375
    %v1377 = vrot.slane %v1375, 4
    %v1378 = vrot.slane %v97, 5
    %v1379 = vsel %vm1302, %v1377, %v1378
    %v1380 = vrot.slane %v1378, 4
    %v1381 = vrot.slane %v138, 5
    %v1382 = vsel %vm1302, %v1380, %v1381
    %s1383 = scalar_lea.vmem [#allocation2], 256
    %v1384 = vld [vmem:[%s1383] sm:$0xf]
    %v1385 = vld [vmem:[%s1383 + $0x4] sm:$0xf]
    %v1386 = vld [vmem:[%s1383 + $0x8] sm:$0xf]
    %v1387 = vld [vmem:[%s1383 + $0xc] sm:$0xf]
    %v1388 = vld [vmem:[%s1383 + $0x10] sm:$0xf]
    %v1389 = vld [vmem:[%s1383 + $0x14] sm:$0xf]
    %v1390 = vld [vmem:[%s1383 + $0x18] sm:$0xf]
    %v1391 = vld [vmem:[%s1383 + $0x1c] sm:$0xf]
    %v1392 = vld [vmem:[%s1383 + $0x20] sm:$0xf]
    %v1393 = vld [vmem:[%s1383 + $0x24] sm:$0xf]
    %v1394 = vld [vmem:[%s1383 + $0x28] sm:$0xf]
    %v1395 = vld [vmem:[%s1383 + $0x2c] sm:$0xf]
    %v1396 = vld [vmem:[%s1383 + $0x30] sm:$0xf]
    %v1397 = vld [vmem:[%s1383 + $0x34] sm:$0xf]
    %v1398 = vld [vmem:[%s1383 + $0x38] sm:$0xf]
    %v1399 = vld [vmem:[%s1383 + $0x3c] sm:$0xf]
    %v1400 = vunpack.c.l.b16 %v1306
    %v1401 = vunpack.c.l.b16 %v1309
    %v1402 = vunpack.c.l.b16 %v1312
    %v1403 = vunpack.c.l.b16 %v1316
    %v1404 = vunpack.c.l.b16 %v1319
    %v1405 = vunpack.c.l.b16 %v1322
    %v1406 = vunpack.c.l.b16 %v1326
    %v1407 = vunpack.c.l.b16 %v1329
    %v1408 = vunpack.c.l.b16 %v1332
    %v1409 = vunpack.c.l.b16 %v1336
    %v1410 = vunpack.c.l.b16 %v1339
    %v1411 = vunpack.c.l.b16 %v1342
    %v1412 = vunpack.c.l.b16 %v1346
    %v1413 = vunpack.c.l.b16 %v1349
    %v1414 = vunpack.c.l.b16 %v1352
    %v1415 = vunpack.c.l.b16 %v1356
    %v1416 = vunpack.c.l.b16 %v1359
    %v1417 = vunpack.c.l.b16 %v1362
    %v1418 = vunpack.c.l.b16 %v1366
    %v1419 = vunpack.c.l.b16 %v1369
    %v1420 = vunpack.c.l.b16 %v1372
    %v1421 = vunpack.c.l.b16 %v1376
    %v1422 = vunpack.c.l.b16 %v1379
    %v1423 = vunpack.c.l.b16 %v1382
    %v1424 = vpack.c.b16 %v1401, %v1400
    %v1425 = vpack.c.b16 %v1403, %v1402
    %v1426 = vpack.c.b16 %v1405, %v1404
    %v1427 = vpack.c.b16 %v1407, %v1406
    %v1428 = vpack.c.b16 %v1409, %v1408
    %v1429 = vpack.c.b16 %v1411, %v1410
    %v1430 = vpack.c.b16 %v1413, %v1412
    %v1431 = vpack.c.b16 %v1415, %v1414
    %v1432 = vpack.c.b16 %v1417, %v1416
    %v1433 = vpack.c.b16 %v1419, %v1418
    %v1434 = vpack.c.b16 %v1421, %v1420
    %v1435 = vpack.c.b16 %v1423, %v1422
    %v1464 = vunpack.c.l.b16 %v1384
    %v1465 = vunpack.c.l.b16 %v1385
    %v1466 = vunpack.c.l.b16 %v1386
    %v1467 = vunpack.c.l.b16 %v1387
    %v1468 = vunpack.c.l.b16 %v1388
    %v1469 = vunpack.c.l.b16 %v1389
    %v1470 = vunpack.c.l.b16 %v1390
    %v1471 = vunpack.c.l.b16 %v1391
    %v1472 = vunpack.c.l.b16 %v1392
    %v1473 = vunpack.c.l.b16 %v1393
    %v1474 = vunpack.c.l.b16 %v1394
    %v1475 = vunpack.c.l.b16 %v1395
    %v1476 = vunpack.c.l.b16 %v1396
    %v1477 = vunpack.c.l.b16 %v1397
    %v1478 = vunpack.c.l.b16 %v1398
    %v1479 = vunpack.c.l.b16 %v1399
    %v1480 = vpack.c.b16 %v1465, %v1464
    %v1481 = vpack.c.b16 %v1467, %v1466
    %v1482 = vpack.c.b16 %v1469, %v1468
    %v1483 = vpack.c.b16 %v1471, %v1470
    %v1484 = vpack.c.b16 %v1473, %v1472
    %v1485 = vpack.c.b16 %v1475, %v1474
    %v1486 = vpack.c.b16 %v1477, %v1476
    %v1487 = vpack.c.b16 %v1479, %v1478
    %1496 = vmatprep.subr.bf16.mxu0 0
    %1497 = vmatpush1.bf16.msra.mxu0 %v1480
    %1498 = vmatprep.subr.bf16.mxu0 0
    %1499 = vmatpush1.bf16.msra.mxu0 %v1481
    %1500 = vmatprep.subr.bf16.mxu0 0
    %1501 = vmatpush1.bf16.msra.mxu0 %v1482
    %1502 = vmatprep.subr.bf16.mxu0 0
    %1503 = vmatpush1.bf16.msra.mxu0 %v1483
    %1504 = vmatprep.subr.bf16.mxu0 0
    %1505 = vmatpush1.bf16.msra.mxu0 %v1484
    %1506 = vmatprep.subr.bf16.mxu0 0
    %1507 = vmatpush1.bf16.msra.mxu0 %v1485
    %1508 = vmatprep.subr.bf16.mxu0 0
    %1509 = vmatpush1.bf16.msra.mxu0 %v1486
    %1510 = vmatprep.subr.bf16.mxu0 0
    %1511 = vmatpush1.bf16.msra.mxu0 %v1487
    %1512 = vmatprep.subr.bf16.mxu0 0
    %1513 = vmatpush1.bf16.msra.mxu0 0
    %1514 = vmatprep.subr.bf16.mxu0 0
    %1515 = vmatpush1.bf16.msra.mxu0 0
    %1516 = vmatprep.subr.bf16.mxu0 0
    %1517 = vmatpush1.bf16.msra.mxu0 0
    %1518 = vmatprep.subr.bf16.mxu0 0
    %1519 = vmatpush1.bf16.msra.mxu0 0
    %1520 = vmatprep.subr.bf16.mxu0 0
    %1521 = vmatpush1.bf16.msra.mxu0 0
    %1522 = vmatprep.subr.bf16.mxu0 0
    %1523 = vmatpush1.bf16.msra.mxu0 0
    %1524 = vmatprep.subr.bf16.mxu0 0
    %1525 = vmatpush1.bf16.msra.mxu0 0
    %1526 = vmatprep.subr.bf16.mxu0 0
    %1527 = vmatpush1.bf16.msra.mxu0 0
    %1528 = vmatprep.mubr.bf16.mxu0 0
    %1529 = vmatmul.mubr.bf16.gmra.mrb[0].mxu0 %v1424
    %v1530 = vpop.f32.mrb[0].mxu0
    %v1531 = vadd.f32 0.0, %v1530
    %v1532 = vpop.f32.mrb[0].mxu0
    %v1533 = vpop.f32.mrb[0].mxu0
    %v1534 = vadd.f32 0.0, %v1533
    %v1535 = vpop.f32.mrb[0].mxu0
    %1536 = vmatprep.mubr.bf16.mxu0 0
    %1537 = vmatmul.mubr.bf16.gmra.mrb[0].mxu0 %v1425
    %v1538 = vpop.f32.mrb[0].mxu0
    %v1539 = vadd.f32 0.0, %v1538
    %v1540 = vpop.f32.mrb[0].mxu0
    %v1541 = vpop.f32.mrb[0].mxu0
    %v1542 = vadd.f32 0.0, %v1541
    %v1543 = vpop.f32.mrb[0].mxu0
    %1544 = vmatprep.mubr.bf16.mxu0 0
    %1545 = vmatmul.mubr.bf16.gmra.mrb[0].mxu0 %v1426
    %v1546 = vpop.f32.mrb[0].mxu0
    %v1547 = vadd.f32 0.0, %v1546
    %v1548 = vpop.f32.mrb[0].mxu0
    %v1549 = vpop.f32.mrb[0].mxu0
    %v1550 = vadd.f32 0.0, %v1549
    %v1551 = vpop.f32.mrb[0].mxu0
    %1552 = vmatprep.mubr.bf16.mxu0 0
    %1553 = vmatmul.mubr.bf16.gmra.mrb[0].mxu0 %v1427
    %v1554 = vpop.f32.mrb[0].mxu0
    %v1555 = vadd.f32 0.0, %v1554
    %v1556 = vpop.f32.mrb[0].mxu0
    %v1557 = vpop.f32.mrb[0].mxu0
    %v1558 = vadd.f32 0.0, %v1557
    %v1559 = vpop.f32.mrb[0].mxu0
    %1560 = vmatprep.mubr.bf16.mxu0 0
    %1561 = vmatmul.mubr.bf16.gmra.mrb[0].mxu0 %v1428
    %v1562 = vpop.f32.mrb[0].mxu0
    %v1563 = vadd.f32 0.0, %v1562
    %v1564 = vpop.f32.mrb[0].mxu0
    %v1565 = vpop.f32.mrb[0].mxu0
    %v1566 = vadd.f32 0.0, %v1565
    %v1567 = vpop.f32.mrb[0].mxu0
    %1568 = vmatprep.mubr.bf16.mxu0 0
    %1569 = vmatmul.mubr.bf16.gmra.mrb[0].mxu0 %v1429
    %v1570 = vpop.f32.mrb[0].mxu0
    %v1571 = vadd.f32 0.0, %v1570
    %v1572 = vpop.f32.mrb[0].mxu0
    %v1573 = vpop.f32.mrb[0].mxu0
    %v1574 = vadd.f32 0.0, %v1573
    %v1575 = vpop.f32.mrb[0].mxu0
    %1576 = vmatprep.mubr.bf16.mxu0 0
    %1577 = vmatmul.mubr.bf16.gmra.mrb[0].mxu0 %v1430
    %v1578 = vpop.f32.mrb[0].mxu0
    %v1579 = vadd.f32 0.0, %v1578
    %v1580 = vpop.f32.mrb[0].mxu0
    %v1581 = vpop.f32.mrb[0].mxu0
    %v1582 = vadd.f32 0.0, %v1581
    %v1583 = vpop.f32.mrb[0].mxu0
    %1584 = vmatprep.mubr.bf16.mxu0 0
    %1585 = vmatmul.mubr.bf16.gmra.mrb[0].mxu0 %v1431
    %v1586 = vpop.f32.mrb[0].mxu0
    %v1587 = vadd.f32 0.0, %v1586
    %v1588 = vpop.f32.mrb[0].mxu0
    %v1589 = vpop.f32.mrb[0].mxu0
    %v1590 = vadd.f32 0.0, %v1589
    %v1591 = vpop.f32.mrb[0].mxu0
    %1592 = vmatprep.mubr.bf16.mxu0 0
    %1593 = vmatmul.mubr.bf16.gmra.mrb[0].mxu0 %v1432
    %v1594 = vpop.f32.mrb[0].mxu0
    %v1595 = vadd.f32 0.0, %v1594
    %v1596 = vpop.f32.mrb[0].mxu0
    %v1597 = vpop.f32.mrb[0].mxu0
    %v1598 = vadd.f32 0.0, %v1597
    %v1599 = vpop.f32.mrb[0].mxu0
    %1600 = vmatprep.mubr.bf16.mxu0 0
    %1601 = vmatmul.mubr.bf16.gmra.mrb[0].mxu0 %v1433
    %v1602 = vpop.f32.mrb[0].mxu0
    %v1603 = vadd.f32 0.0, %v1602
    %v1604 = vpop.f32.mrb[0].mxu0
    %v1605 = vpop.f32.mrb[0].mxu0
    %v1606 = vadd.f32 0.0, %v1605
    %v1607 = vpop.f32.mrb[0].mxu0
    %1608 = vmatprep.mubr.bf16.mxu0 0
    %1609 = vmatmul.mubr.bf16.gmra.mrb[0].mxu0 %v1434
    %v1610 = vpop.f32.mrb[0].mxu0
    %v1611 = vadd.f32 0.0, %v1610
    %v1612 = vpop.f32.mrb[0].mxu0
    %v1613 = vpop.f32.mrb[0].mxu0
    %v1614 = vadd.f32 0.0, %v1613
    %v1615 = vpop.f32.mrb[0].mxu0
    %1616 = vmatprep.mubr.bf16.mxu0 0
    %1617 = vmatmul.mubr.bf16.gmra.mrb[0].mxu0 %v1435
    %v1618 = vpop.f32.mrb[0].mxu0
    %v1619 = vadd.f32 0.0, %v1618
    %v1620 = vpop.f32.mrb[0].mxu0
    %v1621 = vpop.f32.mrb[0].mxu0
    %v1622 = vadd.f32 0.0, %v1621
    %v1623 = vpop.f32.mrb[0].mxu0
    %1624 = vdwg.mxu0
    %v1625 = vadd.f32 %v811, %v1531
    %v1626 = vadd.f32 %v814, %v1534
    %v1627 = vadd.f32 %v819, %v1539
    %v1628 = vadd.f32 %v822, %v1542
    %v1629 = vadd.f32 %v827, %v1547
    %v1630 = vadd.f32 %v830, %v1550
    %v1631 = vadd.f32 %v835, %v1555
    %v1632 = vadd.f32 %v838, %v1558
    %v1633 = vadd.f32 %v843, %v1563
    %v1634 = vadd.f32 %v846, %v1566
    %v1635 = vadd.f32 %v851, %v1571
    %v1636 = vadd.f32 %v854, %v1574
    %v1637 = vadd.f32 %v859, %v1579
    %v1638 = vadd.f32 %v862, %v1582
    %v1639 = vadd.f32 %v867, %v1587
    %v1640 = vadd.f32 %v870, %v1590
    %v1641 = vadd.f32 %v875, %v1595
    %v1642 = vadd.f32 %v878, %v1598
    %v1643 = vadd.f32 %v883, %v1603
    %v1644 = vadd.f32 %v886, %v1606
    %v1645 = vadd.f32 %v891, %v1611
    %v1646 = vadd.f32 %v894, %v1614
    %v1647 = vadd.f32 %v899, %v1619
    %v1648 = vadd.f32 %v902, %v1622
    %s1649 = scalar_lea.vmem [#allocation2], 320
    %v1650 = vld [vmem:[%s1649] sm:$0xf]
    %v1651 = vld [vmem:[%s1649 + $0x4] sm:$0xf]
    %v1652 = vld [vmem:[%s1649 + $0x8] sm:$0xf]
    %v1653 = vld [vmem:[%s1649 + $0xc] sm:$0xf]
    %v1654 = vld [vmem:[%s1649 + $0x10] sm:$0xf]
    %v1655 = vld [vmem:[%s1649 + $0x14] sm:$0xf]
    %v1656 = vld [vmem:[%s1649 + $0x18] sm:$0xf]
    %v1657 = vld [vmem:[%s1649 + $0x1c] sm:$0xf]
    %v1658 = vld [vmem:[%s1649 + $0x20] sm:$0xf]
    %v1659 = vld [vmem:[%s1649 + $0x24] sm:$0xf]
    %v1660 = vld [vmem:[%s1649 + $0x28] sm:$0xf]
    %v1661 = vld [vmem:[%s1649 + $0x2c] sm:$0xf]
    %v1662 = vld [vmem:[%s1649 + $0x30] sm:$0xf]
    %v1663 = vld [vmem:[%s1649 + $0x34] sm:$0xf]
    %v1664 = vld [vmem:[%s1649 + $0x38] sm:$0xf]
    %v1665 = vld [vmem:[%s1649 + $0x3c] sm:$0xf]
    %v1682 = vunpack.c.l.b16 %v1650
    %v1683 = vunpack.c.l.b16 %v1651
    %v1684 = vunpack.c.l.b16 %v1652
    %v1685 = vunpack.c.l.b16 %v1653
    %v1686 = vunpack.c.l.b16 %v1654
    %v1687 = vunpack.c.l.b16 %v1655
    %v1688 = vunpack.c.l.b16 %v1656
    %v1689 = vunpack.c.l.b16 %v1657
    %v1690 = vunpack.c.l.b16 %v1658
    %v1691 = vunpack.c.l.b16 %v1659
    %v1692 = vunpack.c.l.b16 %v1660
    %v1693 = vunpack.c.l.b16 %v1661
    %v1694 = vunpack.c.l.b16 %v1662
    %v1695 = vunpack.c.l.b16 %v1663
    %v1696 = vunpack.c.l.b16 %v1664
    %v1697 = vunpack.c.l.b16 %v1665
    %v1698 = vpack.c.b16 %v1683, %v1682
    %v1699 = vpack.c.b16 %v1685, %v1684
    %v1700 = vpack.c.b16 %v1687, %v1686
    %v1701 = vpack.c.b16 %v1689, %v1688
    %v1702 = vpack.c.b16 %v1691, %v1690
    %v1703 = vpack.c.b16 %v1693, %v1692
    %v1704 = vpack.c.b16 %v1695, %v1694
    %v1705 = vpack.c.b16 %v1697, %v1696
    %1714 = vmatprep.subr.bf16.mxu0 0
    %1715 = vmatpush1.bf16.msra.mxu0 %v1698
    %1716 = vmatprep.subr.bf16.mxu0 0
    %1717 = vmatpush1.bf16.msra.mxu0 %v1699
    %1718 = vmatprep.subr.bf16.mxu0 0
    %1719 = vmatpush1.bf16.msra.mxu0 %v1700
    %1720 = vmatprep.subr.bf16.mxu0 0
    %1721 = vmatpush1.bf16.msra.mxu0 %v1701
    %1722 = vmatprep.subr.bf16.mxu0 0
    %1723 = vmatpush1.bf16.msra.mxu0 %v1702
    %1724 = vmatprep.subr.bf16.mxu0 0
    %1725 = vmatpush1.bf16.msra.mxu0 %v1703
    %1726 = vmatprep.subr.bf16.mxu0 0
    %1727 = vmatpush1.bf16.msra.mxu0 %v1704
    %1728 = vmatprep.subr.bf16.mxu0 0
    %1729 = vmatpush1.bf16.msra.mxu0 %v1705
    %1730 = vmatprep.subr.bf16.mxu0 0
    %1731 = vmatpush1.bf16.msra.mxu0 0
    %1732 = vmatprep.subr.bf16.mxu0 0
    %1733 = vmatpush1.bf16.msra.mxu0 0
    %1734 = vmatprep.subr.bf16.mxu0 0
    %1735 = vmatpush1.bf16.msra.mxu0 0
    %1736 = vmatprep.subr.bf16.mxu0 0
    %1737 = vmatpush1.bf16.msra.mxu0 0
    %1738 = vmatprep.subr.bf16.mxu0 0
    %1739 = vmatpush1.bf16.msra.mxu0 0
    %1740 = vmatprep.subr.bf16.mxu0 0
    %1741 = vmatpush1.bf16.msra.mxu0 0
    %1742 = vmatprep.subr.bf16.mxu0 0
    %1743 = vmatpush1.bf16.msra.mxu0 0
    %1744 = vmatprep.subr.bf16.mxu0 0
    %1745 = vmatpush1.bf16.msra.mxu0 0
    %1746 = vmatprep.mubr.bf16.mxu0 0
    %1747 = vmatmul.mubr.bf16.gmra.mrb[0].mxu0 %v1424
    %v1748 = vpop.f32.mrb[0].mxu0
    %v1749 = vadd.f32 0.0, %v1748
    %v1750 = vpop.f32.mrb[0].mxu0
    %v1751 = vpop.f32.mrb[0].mxu0
    %v1752 = vadd.f32 0.0, %v1751
    %v1753 = vpop.f32.mrb[0].mxu0
    %1754 = vmatprep.mubr.bf16.mxu0 0
    %1755 = vmatmul.mubr.bf16.gmra.mrb[0].mxu0 %v1425
    %v1756 = vpop.f32.mrb[0].mxu0
    %v1757 = vadd.f32 0.0, %v1756
    %v1758 = vpop.f32.mrb[0].mxu0
    %v1759 = vpop.f32.mrb[0].mxu0
    %v1760 = vadd.f32 0.0, %v1759
    %v1761 = vpop.f32.mrb[0].mxu0
    %1762 = vmatprep.mubr.bf16.mxu0 0
    %1763 = vmatmul.mubr.bf16.gmra.mrb[0].mxu0 %v1426
    %v1764 = vpop.f32.mrb[0].mxu0
    %v1765 = vadd.f32 0.0, %v1764
    %v1766 = vpop.f32.mrb[0].mxu0
    %v1767 = vpop.f32.mrb[0].mxu0
    %v1768 = vadd.f32 0.0, %v1767
    %v1769 = vpop.f32.mrb[0].mxu0
    %1770 = vmatprep.mubr.bf16.mxu0 0
    %1771 = vmatmul.mubr.bf16.gmra.mrb[0].mxu0 %v1427
    %v1772 = vpop.f32.mrb[0].mxu0
    %v1773 = vadd.f32 0.0, %v1772
    %v1774 = vpop.f32.mrb[0].mxu0
    %v1775 = vpop.f32.mrb[0].mxu0
    %v1776 = vadd.f32 0.0, %v1775
    %v1777 = vpop.f32.mrb[0].mxu0
    %1778 = vmatprep.mubr.bf16.mxu0 0
    %1779 = vmatmul.mubr.bf16.gmra.mrb[0].mxu0 %v1428
    %v1780 = vpop.f32.mrb[0].mxu0
    %v1781 = vadd.f32 0.0, %v1780
    %v1782 = vpop.f32.mrb[0].mxu0
    %v1783 = vpop.f32.mrb[0].mxu0
    %v1784 = vadd.f32 0.0, %v1783
    %v1785 = vpop.f32.mrb[0].mxu0
    %1786 = vmatprep.mubr.bf16.mxu0 0
    %1787 = vmatmul.mubr.bf16.gmra.mrb[0].mxu0 %v1429
    %v1788 = vpop.f32.mrb[0].mxu0
    %v1789 = vadd.f32 0.0, %v1788
    %v1790 = vpop.f32.mrb[0].mxu0
    %v1791 = vpop.f32.mrb[0].mxu0
    %v1792 = vadd.f32 0.0, %v1791
    %v1793 = vpop.f32.mrb[0].mxu0
    %1794 = vmatprep.mubr.bf16.mxu0 0
    %1795 = vmatmul.mubr.bf16.gmra.mrb[0].mxu0 %v1430
    %v1796 = vpop.f32.mrb[0].mxu0
    %v1797 = vadd.f32 0.0, %v1796
    %v1798 = vpop.f32.mrb[0].mxu0
    %v1799 = vpop.f32.mrb[0].mxu0
    %v1800 = vadd.f32 0.0, %v1799
    %v1801 = vpop.f32.mrb[0].mxu0
    %1802 = vmatprep.mubr.bf16.mxu0 0
    %1803 = vmatmul.mubr.bf16.gmra.mrb[0].mxu0 %v1431
    %v1804 = vpop.f32.mrb[0].mxu0
    %v1805 = vadd.f32 0.0, %v1804
    %v1806 = vpop.f32.mrb[0].mxu0
    %v1807 = vpop.f32.mrb[0].mxu0
    %v1808 = vadd.f32 0.0, %v1807
    %v1809 = vpop.f32.mrb[0].mxu0
    %1810 = vmatprep.mubr.bf16.mxu0 0
    %1811 = vmatmul.mubr.bf16.gmra.mrb[0].mxu0 %v1432
    %v1812 = vpop.f32.mrb[0].mxu0
    %v1813 = vadd.f32 0.0, %v1812
    %v1814 = vpop.f32.mrb[0].mxu0
    %v1815 = vpop.f32.mrb[0].mxu0
    %v1816 = vadd.f32 0.0, %v1815
    %v1817 = vpop.f32.mrb[0].mxu0
    %1818 = vmatprep.mubr.bf16.mxu0 0
    %1819 = vmatmul.mubr.bf16.gmra.mrb[0].mxu0 %v1433
    %v1820 = vpop.f32.mrb[0].mxu0
    %v1821 = vadd.f32 0.0, %v1820
    %v1822 = vpop.f32.mrb[0].mxu0
    %v1823 = vpop.f32.mrb[0].mxu0
    %v1824 = vadd.f32 0.0, %v1823
    %v1825 = vpop.f32.mrb[0].mxu0
    %1826 = vmatprep.mubr.bf16.mxu0 0
    %1827 = vmatmul.mubr.bf16.gmra.mrb[0].mxu0 %v1434
    %v1828 = vpop.f32.mrb[0].mxu0
    %v1829 = vadd.f32 0.0, %v1828
    %v1830 = vpop.f32.mrb[0].mxu0
    %v1831 = vpop.f32.mrb[0].mxu0
    %v1832 = vadd.f32 0.0, %v1831
    %v1833 = vpop.f32.mrb[0].mxu0
    %1834 = vmatprep.mubr.bf16.mxu0 0
    %1835 = vmatmul.mubr.bf16.gmra.mrb[0].mxu0 %v1435
    %v1836 = vpop.f32.mrb[0].mxu0
    %v1837 = vadd.f32 0.0, %v1836
    %v1838 = vpop.f32.mrb[0].mxu0
    %v1839 = vpop.f32.mrb[0].mxu0
    %v1840 = vadd.f32 0.0, %v1839
    %v1841 = vpop.f32.mrb[0].mxu0
    %1842 = vdwg.mxu0
    %v1843 = vadd.f32 %v1182, %v1749
    %v1844 = vadd.f32 %v1185, %v1752
    %v1845 = vadd.f32 %v1190, %v1757
    %v1846 = vadd.f32 %v1193, %v1760
    %v1847 = vadd.f32 %v1198, %v1765
    %v1848 = vadd.f32 %v1201, %v1768
    %v1849 = vadd.f32 %v1206, %v1773
    %v1850 = vadd.f32 %v1209, %v1776
    %v1851 = vadd.f32 %v1214, %v1781
    %v1852 = vadd.f32 %v1217, %v1784
    %v1853 = vadd.f32 %v1222, %v1789
    %v1854 = vadd.f32 %v1225, %v1792
    %v1855 = vadd.f32 %v1230, %v1797
    %v1856 = vadd.f32 %v1233, %v1800
    %v1857 = vadd.f32 %v1238, %v1805
    %v1858 = vadd.f32 %v1241, %v1808
    %v1859 = vadd.f32 %v1246, %v1813
    %v1860 = vadd.f32 %v1249, %v1816
    %v1861 = vadd.f32 %v1254, %v1821
    %v1862 = vadd.f32 %v1257, %v1824
    %v1863 = vadd.f32 %v1262, %v1829
    %v1864 = vadd.f32 %v1265, %v1832
    %v1865 = vadd.f32 %v1270, %v1837
    %v1866 = vadd.f32 %v1273, %v1840
    %v1867 = vld [vmem:[%s0 + $0xc] sm:$0x3]
    %v1868 = vld [vmem:[%s0 + $0x1c] sm:$0x3]
    %v1869 = vld [vmem:[%s0 + $0x2c] sm:$0x3]
    %v1870 = vld [vmem:[%s0 + $0x3c] sm:$0x3]
    %v1871 = vld [vmem:[%s0 + $0x4c] sm:$0x3]
    %v1872 = vld [vmem:[%s0 + $0x5c] sm:$0x3]
    %v1873 = vld [vmem:[%s0 + $0x6c] sm:$0x3]
    %v1874 = vld [vmem:[%s0 + $0x7c] sm:$0x3]
    %vm1875 = vsmask.f32 2304
    %vm1876 = vsmask.f32 6416
    %vm1877 = vmor %vm1875, %vm1876
    %v1879 = vshrl.u32 %v1276, 16
    %v1881 = vrot.slane %v1879, 5
    %v1882 = vshll.u32 %v1276, 16
    %v1884 = vrot.slane %v1882, 6
    %v1885 = vor.u32 %v1881, %v1884
    %v1886 = vrot.slane %v1885, 4
    %v1887 = vrot.slane %v156, 5
    %v1888 = vrot.slane %v152, 6
    %v1889 = vor.u32 %v1887, %v1888
    %v1890 = vsel %vm1877, %v1886, %v1889
    %v1891 = vrot.slane %v1889, 4
    %v1892 = vrot.slane %v166, 5
    %v1893 = vrot.slane %v162, 6
    %v1894 = vor.u32 %v1892, %v1893
    %v1895 = vsel %vm1877, %v1891, %v1894
    %v1896 = vrot.slane %v1894, 4
    %v1898 = vshrl.u32 %v1867, 16
    %v1900 = vrot.slane %v1898, 5
    %v1901 = vshll.u32 %v1867, 16
    %v1903 = vrot.slane %v1901, 6
    %v1904 = vor.u32 %v1900, %v1903
    %v1905 = vsel %vm1877, %v1896, %v1904
    %v1907 = vshrl.u32 %v1277, 16
    %v1909 = vrot.slane %v1907, 5
    %v1910 = vshll.u32 %v1277, 16
    %v1912 = vrot.slane %v1910, 6
    %v1913 = vor.u32 %v1909, %v1912
    %v1914 = vrot.slane %v1913, 4
    %v1915 = vrot.slane %v190, 5
    %v1916 = vrot.slane %v186, 6
    %v1917 = vor.u32 %v1915, %v1916
    %v1918 = vsel %vm1877, %v1914, %v1917
    %v1919 = vrot.slane %v1917, 4
    %v1920 = vrot.slane %v200, 5
    %v1921 = vrot.slane %v196, 6
    %v1922 = vor.u32 %v1920, %v1921
    %v1923 = vsel %vm1877, %v1919, %v1922
    %v1924 = vrot.slane %v1922, 4
    %v1926 = vshrl.u32 %v1868, 16
    %v1928 = vrot.slane %v1926, 5
    %v1929 = vshll.u32 %v1868, 16
    %v1931 = vrot.slane %v1929, 6
    %v1932 = vor.u32 %v1928, %v1931
    %v1933 = vsel %vm1877, %v1924, %v1932
    %v1935 = vshrl.u32 %v1278, 16
    %v1937 = vrot.slane %v1935, 5
    %v1938 = vshll.u32 %v1278, 16
    %v1940 = vrot.slane %v1938, 6
    %v1941 = vor.u32 %v1937, %v1940
    %v1942 = vrot.slane %v1941, 4
    %v1943 = vrot.slane %v224, 5
    %v1944 = vrot.slane %v220, 6
    %v1945 = vor.u32 %v1943, %v1944
    %v1946 = vsel %vm1877, %v1942, %v1945
    %v1947 = vrot.slane %v1945, 4
    %v1948 = vrot.slane %v234, 5
    %v1949 = vrot.slane %v230, 6
    %v1950 = vor.u32 %v1948, %v1949
    %v1951 = vsel %vm1877, %v1947, %v1950
    %v1952 = vrot.slane %v1950, 4
    %v1954 = vshrl.u32 %v1869, 16
    %v1956 = vrot.slane %v1954, 5
    %v1957 = vshll.u32 %v1869, 16
    %v1959 = vrot.slane %v1957, 6
    %v1960 = vor.u32 %v1956, %v1959
    %v1961 = vsel %vm1877, %v1952, %v1960
    %v1963 = vshrl.u32 %v1279, 16
    %v1965 = vrot.slane %v1963, 5
    %v1966 = vshll.u32 %v1279, 16
    %v1968 = vrot.slane %v1966, 6
    %v1969 = vor.u32 %v1965, %v1968
    %v1970 = vrot.slane %v1969, 4
    %v1971 = vrot.slane %v258, 5
    %v1972 = vrot.slane %v254, 6
    %v1973 = vor.u32 %v1971, %v1972
    %v1974 = vsel %vm1877, %v1970, %v1973
    %v1975 = vrot.slane %v1973, 4
    %v1976 = vrot.slane %v268, 5
    %v1977 = vrot.slane %v264, 6
    %v1978 = vor.u32 %v1976, %v1977
    %v1979 = vsel %vm1877, %v1975, %v1978
    %v1980 = vrot.slane %v1978, 4
    %v1982 = vshrl.u32 %v1870, 16
    %v1984 = vrot.slane %v1982, 5
    %v1985 = vshll.u32 %v1870, 16
    %v1987 = vrot.slane %v1985, 6
    %v1988 = vor.u32 %v1984, %v1987
    %v1989 = vsel %vm1877, %v1980, %v1988
    %v1991 = vshrl.u32 %v1280, 16
    %v1993 = vrot.slane %v1991, 5
    %v1994 = vshll.u32 %v1280, 16
    %v1996 = vrot.slane %v1994, 6
    %v1997 = vor.u32 %v1993, %v1996
    %v1998 = vrot.slane %v1997, 4
    %v1999 = vrot.slane %v292, 5
    %v2000 = vrot.slane %v288, 6
    %v2001 = vor.u32 %v1999, %v2000
    %v2002 = vsel %vm1877, %v1998, %v2001
    %v2003 = vrot.slane %v2001, 4
    %v2004 = vrot.slane %v302, 5
    %v2005 = vrot.slane %v298, 6
    %v2006 = vor.u32 %v2004, %v2005
    %v2007 = vsel %vm1877, %v2003, %v2006
    %v2008 = vrot.slane %v2006, 4
    %v2010 = vshrl.u32 %v1871, 16
    %v2012 = vrot.slane %v2010, 5
    %v2013 = vshll.u32 %v1871, 16
    %v2015 = vrot.slane %v2013, 6
    %v2016 = vor.u32 %v2012, %v2015
    %v2017 = vsel %vm1877, %v2008, %v2016
    %v2019 = vshrl.u32 %v1281, 16
    %v2021 = vrot.slane %v2019, 5
    %v2022 = vshll.u32 %v1281, 16
    %v2024 = vrot.slane %v2022, 6
    %v2025 = vor.u32 %v2021, %v2024
    %v2026 = vrot.slane %v2025, 4
    %v2027 = vrot.slane %v326, 5
    %v2028 = vrot.slane %v322, 6
    %v2029 = vor.u32 %v2027, %v2028
    %v2030 = vsel %vm1877, %v2026, %v2029
    %v2031 = vrot.slane %v2029, 4
    %v2032 = vrot.slane %v336, 5
    %v2033 = vrot.slane %v332, 6
    %v2034 = vor.u32 %v2032, %v2033
    %v2035 = vsel %vm1877, %v2031, %v2034
    %v2036 = vrot.slane %v2034, 4
    %v2038 = vshrl.u32 %v1872, 16
    %v2040 = vrot.slane %v2038, 5
    %v2041 = vshll.u32 %v1872, 16
    %v2043 = vrot.slane %v2041, 6
    %v2044 = vor.u32 %v2040, %v2043
    %v2045 = vsel %vm1877, %v2036, %v2044
    %v2047 = vshrl.u32 %v1282, 16
    %v2049 = vrot.slane %v2047, 5
    %v2050 = vshll.u32 %v1282, 16
    %v2052 = vrot.slane %v2050, 6
    %v2053 = vor.u32 %v2049, %v2052
    %v2054 = vrot.slane %v2053, 4
    %v2055 = vrot.slane %v360, 5
    %v2056 = vrot.slane %v356, 6
    %v2057 = vor.u32 %v2055, %v2056
    %v2058 = vsel %vm1877, %v2054, %v2057
    %v2059 = vrot.slane %v2057, 4
    %v2060 = vrot.slane %v370, 5
    %v2061 = vrot.slane %v366, 6
    %v2062 = vor.u32 %v2060, %v2061
    %v2063 = vsel %vm1877, %v2059, %v2062
    %v2064 = vrot.slane %v2062, 4
    %v2066 = vshrl.u32 %v1873, 16
    %v2068 = vrot.slane %v2066, 5
    %v2069 = vshll.u32 %v1873, 16
    %v2071 = vrot.slane %v2069, 6
    %v2072 = vor.u32 %v2068, %v2071
    %v2073 = vsel %vm1877, %v2064, %v2072
    %v2075 = vshrl.u32 %v1283, 16
    %v2077 = vrot.slane %v2075, 5
    %v2078 = vshll.u32 %v1283, 16
    %v2080 = vrot.slane %v2078, 6
    %v2081 = vor.u32 %v2077, %v2080
    %v2082 = vrot.slane %v2081, 4
    %v2083 = vrot.slane %v394, 5
    %v2084 = vrot.slane %v390, 6
    %v2085 = vor.u32 %v2083, %v2084
    %v2086 = vsel %vm1877, %v2082, %v2085
    %v2087 = vrot.slane %v2085, 4
    %v2088 = vrot.slane %v404, 5
    %v2089 = vrot.slane %v400, 6
    %v2090 = vor.u32 %v2088, %v2089
    %v2091 = vsel %vm1877, %v2087, %v2090
    %v2092 = vrot.slane %v2090, 4
    %v2094 = vshrl.u32 %v1874, 16
    %v2096 = vrot.slane %v2094, 5
    %v2097 = vshll.u32 %v1874, 16
    %v2099 = vrot.slane %v2097, 6
    %v2100 = vor.u32 %v2096, %v2099
    %v2101 = vsel %vm1877, %v2092, %v2100
    %s2102 = scalar_lea.vmem [#allocation2], 384
    %v2103 = vld [vmem:[%s2102] sm:$0xf]
    %v2104 = vld [vmem:[%s2102 + $0x4] sm:$0xf]
    %v2105 = vld [vmem:[%s2102 + $0x8] sm:$0xf]
    %v2106 = vld [vmem:[%s2102 + $0xc] sm:$0xf]
    %v2107 = vld [vmem:[%s2102 + $0x10] sm:$0xf]
    %v2108 = vld [vmem:[%s2102 + $0x14] sm:$0xf]
    %v2109 = vld [vmem:[%s2102 + $0x18] sm:$0xf]
    %v2110 = vld [vmem:[%s2102 + $0x1c] sm:$0xf]
    %v2111 = vld [vmem:[%s2102 + $0x20] sm:$0xf]
    %v2112 = vld [vmem:[%s2102 + $0x24] sm:$0xf]
    %v2113 = vld [vmem:[%s2102 + $0x28] sm:$0xf]
    %v2114 = vld [vmem:[%s2102 + $0x2c] sm:$0xf]
    %v2115 = vld [vmem:[%s2102 + $0x30] sm:$0xf]
    %v2116 = vld [vmem:[%s2102 + $0x34] sm:$0xf]
    %v2117 = vld [vmem:[%s2102 + $0x38] sm:$0xf]
    %v2118 = vld [vmem:[%s2102 + $0x3c] sm:$0xf]
    %v2119 = vunpack.c.l.b16 %v1890
    %v2120 = vunpack.c.l.b16 %v1895
    %v2121 = vunpack.c.l.b16 %v1905
    %v2122 = vunpack.c.l.b16 %v1918
    %v2123 = vunpack.c.l.b16 %v1923
    %v2124 = vunpack.c.l.b16 %v1933
    %v2125 = vunpack.c.l.b16 %v1946
    %v2126 = vunpack.c.l.b16 %v1951
    %v2127 = vunpack.c.l.b16 %v1961
    %v2128 = vunpack.c.l.b16 %v1974
    %v2129 = vunpack.c.l.b16 %v1979
    %v2130 = vunpack.c.l.b16 %v1989
    %v2131 = vunpack.c.l.b16 %v2002
    %v2132 = vunpack.c.l.b16 %v2007
    %v2133 = vunpack.c.l.b16 %v2017
    %v2134 = vunpack.c.l.b16 %v2030
    %v2135 = vunpack.c.l.b16 %v2035
    %v2136 = vunpack.c.l.b16 %v2045
    %v2137 = vunpack.c.l.b16 %v2058
    %v2138 = vunpack.c.l.b16 %v2063
    %v2139 = vunpack.c.l.b16 %v2073
    %v2140 = vunpack.c.l.b16 %v2086
    %v2141 = vunpack.c.l.b16 %v2091
    %v2142 = vunpack.c.l.b16 %v2101
    %v2143 = vpack.c.b16 %v2120, %v2119
    %v2144 = vpack.c.b16 %v2122, %v2121
    %v2145 = vpack.c.b16 %v2124, %v2123
    %v2146 = vpack.c.b16 %v2126, %v2125
    %v2147 = vpack.c.b16 %v2128, %v2127
    %v2148 = vpack.c.b16 %v2130, %v2129
    %v2149 = vpack.c.b16 %v2132, %v2131
    %v2150 = vpack.c.b16 %v2134, %v2133
    %v2151 = vpack.c.b16 %v2136, %v2135
    %v2152 = vpack.c.b16 %v2138, %v2137
    %v2153 = vpack.c.b16 %v2140, %v2139
    %v2154 = vpack.c.b16 %v2142, %v2141
    %v2183 = vunpack.c.l.b16 %v2103
    %v2184 = vunpack.c.l.b16 %v2104
    %v2185 = vunpack.c.l.b16 %v2105
    %v2186 = vunpack.c.l.b16 %v2106
    %v2187 = vunpack.c.l.b16 %v2107
    %v2188 = vunpack.c.l.b16 %v2108
    %v2189 = vunpack.c.l.b16 %v2109
    %v2190 = vunpack.c.l.b16 %v2110
    %v2191 = vunpack.c.l.b16 %v2111
    %v2192 = vunpack.c.l.b16 %v2112
    %v2193 = vunpack.c.l.b16 %v2113
    %v2194 = vunpack.c.l.b16 %v2114
    %v2195 = vunpack.c.l.b16 %v2115
    %v2196 = vunpack.c.l.b16 %v2116
    %v2197 = vunpack.c.l.b16 %v2117
    %v2198 = vunpack.c.l.b16 %v2118
    %v2199 = vpack.c.b16 %v2184, %v2183
    %v2200 = vpack.c.b16 %v2186, %v2185
    %v2201 = vpack.c.b16 %v2188, %v2187
    %v2202 = vpack.c.b16 %v2190, %v2189
    %v2203 = vpack.c.b16 %v2192, %v2191
    %v2204 = vpack.c.b16 %v2194, %v2193
    %v2205 = vpack.c.b16 %v2196, %v2195
    %v2206 = vpack.c.b16 %v2198, %v2197
    %2215 = vmatprep.subr.bf16.mxu0 0
    %2216 = vmatpush1.bf16.msra.mxu0 %v2199
    %2217 = vmatprep.subr.bf16.mxu0 0
    %2218 = vmatpush1.bf16.msra.mxu0 %v2200
    %2219 = vmatprep.subr.bf16.mxu0 0
    %2220 = vmatpush1.bf16.msra.mxu0 %v2201
    %2221 = vmatprep.subr.bf16.mxu0 0
    %2222 = vmatpush1.bf16.msra.mxu0 %v2202
    %2223 = vmatprep.subr.bf16.mxu0 0
    %2224 = vmatpush1.bf16.msra.mxu0 %v2203
    %2225 = vmatprep.subr.bf16.mxu0 0
    %2226 = vmatpush1.bf16.msra.mxu0 %v2204
    %2227 = vmatprep.subr.bf16.mxu0 0
    %2228 = vmatpush1.bf16.msra.mxu0 %v2205
    %2229 = vmatprep.subr.bf16.mxu0 0
    %2230 = vmatpush1.bf16.msra.mxu0 %v2206
    %2231 = vmatprep.subr.bf16.mxu0 0
    %2232 = vmatpush1.bf16.msra.mxu0 0
    %2233 = vmatprep.subr.bf16.mxu0 0
    %2234 = vmatpush1.bf16.msra.mxu0 0
    %2235 = vmatprep.subr.bf16.mxu0 0
    %2236 = vmatpush1.bf16.msra.mxu0 0
    %2237 = vmatprep.subr.bf16.mxu0 0
    %2238 = vmatpush1.bf16.msra.mxu0 0
    %2239 = vmatprep.subr.bf16.mxu0 0
    %2240 = vmatpush1.bf16.msra.mxu0 0
    %2241 = vmatprep.subr.bf16.mxu0 0
    %2242 = vmatpush1.bf16.msra.mxu0 0
    %2243 = vmatprep.subr.bf16.mxu0 0
    %2244 = vmatpush1.bf16.msra.mxu0 0
    %2245 = vmatprep.subr.bf16.mxu0 0
    %2246 = vmatpush1.bf16.msra.mxu0 0
    %2247 = vmatprep.mubr.bf16.mxu0 0
    %2248 = vmatmul.mubr.bf16.gmra.mrb[0].mxu0 %v2143
    %v2249 = vpop.f32.mrb[0].mxu0
    %v2250 = vadd.f32 0.0, %v2249
    %v2251 = vpop.f32.mrb[0].mxu0
    %v2252 = vpop.f32.mrb[0].mxu0
    %v2253 = vadd.f32 0.0, %v2252
    %v2254 = vpop.f32.mrb[0].mxu0
    %2255 = vmatprep.mubr.bf16.mxu0 0
    %2256 = vmatmul.mubr.bf16.gmra.mrb[0].mxu0 %v2144
    %v2257 = vpop.f32.mrb[0].mxu0
    %v2258 = vadd.f32 0.0, %v2257
    %v2259 = vpop.f32.mrb[0].mxu0
    %v2260 = vpop.f32.mrb[0].mxu0
    %v2261 = vadd.f32 0.0, %v2260
    %v2262 = vpop.f32.mrb[0].mxu0
    %2263 = vmatprep.mubr.bf16.mxu0 0
    %2264 = vmatmul.mubr.bf16.gmra.mrb[0].mxu0 %v2145
    %v2265 = vpop.f32.mrb[0].mxu0
    %v2266 = vadd.f32 0.0, %v2265
    %v2267 = vpop.f32.mrb[0].mxu0
    %v2268 = vpop.f32.mrb[0].mxu0
    %v2269 = vadd.f32 0.0, %v2268
    %v2270 = vpop.f32.mrb[0].mxu0
    %2271 = vmatprep.mubr.bf16.mxu0 0
    %2272 = vmatmul.mubr.bf16.gmra.mrb[0].mxu0 %v2146
    %v2273 = vpop.f32.mrb[0].mxu0
    %v2274 = vadd.f32 0.0, %v2273
    %v2275 = vpop.f32.mrb[0].mxu0
    %v2276 = vpop.f32.mrb[0].mxu0
    %v2277 = vadd.f32 0.0, %v2276
    %v2278 = vpop.f32.mrb[0].mxu0
    %2279 = vmatprep.mubr.bf16.mxu0 0
    %2280 = vmatmul.mubr.bf16.gmra.mrb[0].mxu0 %v2147
    %v2281 = vpop.f32.mrb[0].mxu0
    %v2282 = vadd.f32 0.0, %v2281
    %v2283 = vpop.f32.mrb[0].mxu0
    %v2284 = vpop.f32.mrb[0].mxu0
    %v2285 = vadd.f32 0.0, %v2284
    %v2286 = vpop.f32.mrb[0].mxu0
    %2287 = vmatprep.mubr.bf16.mxu0 0
    %2288 = vmatmul.mubr.bf16.gmra.mrb[0].mxu0 %v2148
    %v2289 = vpop.f32.mrb[0].mxu0
    %v2290 = vadd.f32 0.0, %v2289
    %v2291 = vpop.f32.mrb[0].mxu0
    %v2292 = vpop.f32.mrb[0].mxu0
    %v2293 = vadd.f32 0.0, %v2292
    %v2294 = vpop.f32.mrb[0].mxu0
    %2295 = vmatprep.mubr.bf16.mxu0 0
    %2296 = vmatmul.mubr.bf16.gmra.mrb[0].mxu0 %v2149
    %v2297 = vpop.f32.mrb[0].mxu0
    %v2298 = vadd.f32 0.0, %v2297
    %v2299 = vpop.f32.mrb[0].mxu0
    %v2300 = vpop.f32.mrb[0].mxu0
    %v2301 = vadd.f32 0.0, %v2300
    %v2302 = vpop.f32.mrb[0].mxu0
    %2303 = vmatprep.mubr.bf16.mxu0 0
    %2304 = vmatmul.mubr.bf16.gmra.mrb[0].mxu0 %v2150
    %v2305 = vpop.f32.mrb[0].mxu0
    %v2306 = vadd.f32 0.0, %v2305
    %v2307 = vpop.f32.mrb[0].mxu0
    %v2308 = vpop.f32.mrb[0].mxu0
    %v2309 = vadd.f32 0.0, %v2308
    %v2310 = vpop.f32.mrb[0].mxu0
    %2311 = vmatprep.mubr.bf16.mxu0 0
    %2312 = vmatmul.mubr.bf16.gmra.mrb[0].mxu0 %v2151
    %v2313 = vpop.f32.mrb[0].mxu0
    %v2314 = vadd.f32 0.0, %v2313
    %v2315 = vpop.f32.mrb[0].mxu0
    %v2316 = vpop.f32.mrb[0].mxu0
    %v2317 = vadd.f32 0.0, %v2316
    %v2318 = vpop.f32.mrb[0].mxu0
    %2319 = vmatprep.mubr.bf16.mxu0 0
    %2320 = vmatmul.mubr.bf16.gmra.mrb[0].mxu0 %v2152
    %v2321 = vpop.f32.mrb[0].mxu0
    %v2322 = vadd.f32 0.0, %v2321
    %v2323 = vpop.f32.mrb[0].mxu0
    %v2324 = vpop.f32.mrb[0].mxu0
    %v2325 = vadd.f32 0.0, %v2324
    %v2326 = vpop.f32.mrb[0].mxu0
    %2327 = vmatprep.mubr.bf16.mxu0 0
    %2328 = vmatmul.mubr.bf16.gmra.mrb[0].mxu0 %v2153
    %v2329 = vpop.f32.mrb[0].mxu0
    %v2330 = vadd.f32 0.0, %v2329
    %v2331 = vpop.f32.mrb[0].mxu0
    %v2332 = vpop.f32.mrb[0].mxu0
    %v2333 = vadd.f32 0.0, %v2332
    %v2334 = vpop.f32.mrb[0].mxu0
    %2335 = vmatprep.mubr.bf16.mxu0 0
    %2336 = vmatmul.mubr.bf16.gmra.mrb[0].mxu0 %v2154
    %v2337 = vpop.f32.mrb[0].mxu0
    %v2338 = vadd.f32 0.0, %v2337
    %v2339 = vpop.f32.mrb[0].mxu0
    %v2340 = vpop.f32.mrb[0].mxu0
    %v2341 = vadd.f32 0.0, %v2340
    %v2342 = vpop.f32.mrb[0].mxu0
    %2343 = vdwg.mxu0
    %v2344 = vadd.f32 %v1625, %v2250
    %v2345 = vadd.f32 %v1626, %v2253
    %v2346 = vadd.f32 %v1627, %v2258
    %v2347 = vadd.f32 %v1628, %v2261
    %v2348 = vadd.f32 %v1629, %v2266
    %v2349 = vadd.f32 %v1630, %v2269
    %v2350 = vadd.f32 %v1631, %v2274
    %v2351 = vadd.f32 %v1632, %v2277
    %v2352 = vadd.f32 %v1633, %v2282
    %v2353 = vadd.f32 %v1634, %v2285
    %v2354 = vadd.f32 %v1635, %v2290
    %v2355 = vadd.f32 %v1636, %v2293
    %v2356 = vadd.f32 %v1637, %v2298
    %v2357 = vadd.f32 %v1638, %v2301
    %v2358 = vadd.f32 %v1639, %v2306
    %v2359 = vadd.f32 %v1640, %v2309
    %v2360 = vadd.f32 %v1641, %v2314
    %v2361 = vadd.f32 %v1642, %v2317
    %v2362 = vadd.f32 %v1643, %v2322
    %v2363 = vadd.f32 %v1644, %v2325
    %v2364 = vadd.f32 %v1645, %v2330
    %v2365 = vadd.f32 %v1646, %v2333
    %v2366 = vadd.f32 %v1647, %v2338
    %v2367 = vadd.f32 %v1648, %v2341
    %s2368 = scalar_lea.vmem [#allocation2], 448
    %v2369 = vld [vmem:[%s2368] sm:$0xf]
    %v2370 = vld [vmem:[%s2368 + $0x4] sm:$0xf]
    %v2371 = vld [vmem:[%s2368 + $0x8] sm:$0xf]
    %v2372 = vld [vmem:[%s2368 + $0xc] sm:$0xf]
    %v2373 = vld [vmem:[%s2368 + $0x10] sm:$0xf]
    %v2374 = vld [vmem:[%s2368 + $0x14] sm:$0xf]
    %v2375 = vld [vmem:[%s2368 + $0x18] sm:$0xf]
    %v2376 = vld [vmem:[%s2368 + $0x1c] sm:$0xf]
    %v2377 = vld [vmem:[%s2368 + $0x20] sm:$0xf]
    %v2378 = vld [vmem:[%s2368 + $0x24] sm:$0xf]
    %v2379 = vld [vmem:[%s2368 + $0x28] sm:$0xf]
    %v2380 = vld [vmem:[%s2368 + $0x2c] sm:$0xf]
    %v2381 = vld [vmem:[%s2368 + $0x30] sm:$0xf]
    %v2382 = vld [vmem:[%s2368 + $0x34] sm:$0xf]
    %v2383 = vld [vmem:[%s2368 + $0x38] sm:$0xf]
    %v2384 = vld [vmem:[%s2368 + $0x3c] sm:$0xf]
    %v2401 = vunpack.c.l.b16 %v2369
    %v2402 = vunpack.c.l.b16 %v2370
    %v2403 = vunpack.c.l.b16 %v2371
    %v2404 = vunpack.c.l.b16 %v2372
    %v2405 = vunpack.c.l.b16 %v2373
    %v2406 = vunpack.c.l.b16 %v2374
    %v2407 = vunpack.c.l.b16 %v2375
    %v2408 = vunpack.c.l.b16 %v2376
    %v2409 = vunpack.c.l.b16 %v2377
    %v2410 = vunpack.c.l.b16 %v2378
    %v2411 = vunpack.c.l.b16 %v2379
    %v2412 = vunpack.c.l.b16 %v2380
    %v2413 = vunpack.c.l.b16 %v2381
    %v2414 = vunpack.c.l.b16 %v2382
    %v2415 = vunpack.c.l.b16 %v2383
    %v2416 = vunpack.c.l.b16 %v2384
    %v2417 = vpack.c.b16 %v2402, %v2401
    %v2418 = vpack.c.b16 %v2404, %v2403
    %v2419 = vpack.c.b16 %v2406, %v2405
    %v2420 = vpack.c.b16 %v2408, %v2407
    %v2421 = vpack.c.b16 %v2410, %v2409
    %v2422 = vpack.c.b16 %v2412, %v2411
    %v2423 = vpack.c.b16 %v2414, %v2413
    %v2424 = vpack.c.b16 %v2416, %v2415
    %2433 = vmatprep.subr.bf16.mxu0 0
    %2434 = vmatpush1.bf16.msra.mxu0 %v2417
    %2435 = vmatprep.subr.bf16.mxu0 0
    %2436 = vmatpush1.bf16.msra.mxu0 %v2418
    %2437 = vmatprep.subr.bf16.mxu0 0
    %2438 = vmatpush1.bf16.msra.mxu0 %v2419
    %2439 = vmatprep.subr.bf16.mxu0 0
    %2440 = vmatpush1.bf16.msra.mxu0 %v2420
    %2441 = vmatprep.subr.bf16.mxu0 0
    %2442 = vmatpush1.bf16.msra.mxu0 %v2421
    %2443 = vmatprep.subr.bf16.mxu0 0
    %2444 = vmatpush1.bf16.msra.mxu0 %v2422
    %2445 = vmatprep.subr.bf16.mxu0 0
    %2446 = vmatpush1.bf16.msra.mxu0 %v2423
    %2447 = vmatprep.subr.bf16.mxu0 0
    %2448 = vmatpush1.bf16.msra.mxu0 %v2424
    %2449 = vmatprep.subr.bf16.mxu0 0
    %2450 = vmatpush1.bf16.msra.mxu0 0
    %2451 = vmatprep.subr.bf16.mxu0 0
    %2452 = vmatpush1.bf16.msra.mxu0 0
    %2453 = vmatprep.subr.bf16.mxu0 0
    %2454 = vmatpush1.bf16.msra.mxu0 0
    %2455 = vmatprep.subr.bf16.mxu0 0
    %2456 = vmatpush1.bf16.msra.mxu0 0
    %2457 = vmatprep.subr.bf16.mxu0 0
    %2458 = vmatpush1.bf16.msra.mxu0 0
    %2459 = vmatprep.subr.bf16.mxu0 0
    %2460 = vmatpush1.bf16.msra.mxu0 0
    %2461 = vmatprep.subr.bf16.mxu0 0
    %2462 = vmatpush1.bf16.msra.mxu0 0
    %2463 = vmatprep.subr.bf16.mxu0 0
    %2464 = vmatpush1.bf16.msra.mxu0 0
    %2465 = vmatprep.mubr.bf16.mxu0 0
    %2466 = vmatmul.mubr.bf16.gmra.mrb[0].mxu0 %v2143
    %v2467 = vpop.f32.mrb[0].mxu0
    %v2468 = vadd.f32 0.0, %v2467
    %v2469 = vpop.f32.mrb[0].mxu0
    %v2470 = vpop.f32.mrb[0].mxu0
    %v2471 = vadd.f32 0.0, %v2470
    %v2472 = vpop.f32.mrb[0].mxu0
    %2473 = vmatprep.mubr.bf16.mxu0 0
    %2474 = vmatmul.mubr.bf16.gmra.mrb[0].mxu0 %v2144
    %v2475 = vpop.f32.mrb[0].mxu0
    %v2476 = vadd.f32 0.0, %v2475
    %v2477 = vpop.f32.mrb[0].mxu0
    %v2478 = vpop.f32.mrb[0].mxu0
    %v2479 = vadd.f32 0.0, %v2478
    %v2480 = vpop.f32.mrb[0].mxu0
    %2481 = vmatprep.mubr.bf16.mxu0 0
    %2482 = vmatmul.mubr.bf16.gmra.mrb[0].mxu0 %v2145
    %v2483 = vpop.f32.mrb[0].mxu0
    %v2484 = vadd.f32 0.0, %v2483
    %v2485 = vpop.f32.mrb[0].mxu0
    %v2486 = vpop.f32.mrb[0].mxu0
    %v2487 = vadd.f32 0.0, %v2486
    %v2488 = vpop.f32.mrb[0].mxu0
    %2489 = vmatprep.mubr.bf16.mxu0 0
    %2490 = vmatmul.mubr.bf16.gmra.mrb[0].mxu0 %v2146
    %v2491 = vpop.f32.mrb[0].mxu0
    %v2492 = vadd.f32 0.0, %v2491
    %v2493 = vpop.f32.mrb[0].mxu0
    %v2494 = vpop.f32.mrb[0].mxu0
    %v2495 = vadd.f32 0.0, %v2494
    %v2496 = vpop.f32.mrb[0].mxu0
    %2497 = vmatprep.mubr.bf16.mxu0 0
    %2498 = vmatmul.mubr.bf16.gmra.mrb[0].mxu0 %v2147
    %v2499 = vpop.f32.mrb[0].mxu0
    %v2500 = vadd.f32 0.0, %v2499
    %v2501 = vpop.f32.mrb[0].mxu0
    %v2502 = vpop.f32.mrb[0].mxu0
    %v2503 = vadd.f32 0.0, %v2502
    %v2504 = vpop.f32.mrb[0].mxu0
    %2505 = vmatprep.mubr.bf16.mxu0 0
    %2506 = vmatmul.mubr.bf16.gmra.mrb[0].mxu0 %v2148
    %v2507 = vpop.f32.mrb[0].mxu0
    %v2508 = vadd.f32 0.0, %v2507
    %v2509 = vpop.f32.mrb[0].mxu0
    %v2510 = vpop.f32.mrb[0].mxu0
    %v2511 = vadd.f32 0.0, %v2510
    %v2512 = vpop.f32.mrb[0].mxu0
    %2513 = vmatprep.mubr.bf16.mxu0 0
    %2514 = vmatmul.mubr.bf16.gmra.mrb[0].mxu0 %v2149
    %v2515 = vpop.f32.mrb[0].mxu0
    %v2516 = vadd.f32 0.0, %v2515
    %v2517 = vpop.f32.mrb[0].mxu0
    %v2518 = vpop.f32.mrb[0].mxu0
    %v2519 = vadd.f32 0.0, %v2518
    %v2520 = vpop.f32.mrb[0].mxu0
    %2521 = vmatprep.mubr.bf16.mxu0 0
    %2522 = vmatmul.mubr.bf16.gmra.mrb[0].mxu0 %v2150
    %v2523 = vpop.f32.mrb[0].mxu0
    %v2524 = vadd.f32 0.0, %v2523
    %v2525 = vpop.f32.mrb[0].mxu0
    %v2526 = vpop.f32.mrb[0].mxu0
    %v2527 = vadd.f32 0.0, %v2526
    %v2528 = vpop.f32.mrb[0].mxu0
    %2529 = vmatprep.mubr.bf16.mxu0 0
    %2530 = vmatmul.mubr.bf16.gmra.mrb[0].mxu0 %v2151
    %v2531 = vpop.f32.mrb[0].mxu0
    %v2532 = vadd.f32 0.0, %v2531
    %v2533 = vpop.f32.mrb[0].mxu0
    %v2534 = vpop.f32.mrb[0].mxu0
    %v2535 = vadd.f32 0.0, %v2534
    %v2536 = vpop.f32.mrb[0].mxu0
    %2537 = vmatprep.mubr.bf16.mxu0 0
    %2538 = vmatmul.mubr.bf16.gmra.mrb[0].mxu0 %v2152
    %v2539 = vpop.f32.mrb[0].mxu0
    %v2540 = vadd.f32 0.0, %v2539
    %v2541 = vpop.f32.mrb[0].mxu0
    %v2542 = vpop.f32.mrb[0].mxu0
    %v2543 = vadd.f32 0.0, %v2542
    %v2544 = vpop.f32.mrb[0].mxu0
    %2545 = vmatprep.mubr.bf16.mxu0 0
    %2546 = vmatmul.mubr.bf16.gmra.mrb[0].mxu0 %v2153
    %v2547 = vpop.f32.mrb[0].mxu0
    %v2548 = vadd.f32 0.0, %v2547
    %v2549 = vpop.f32.mrb[0].mxu0
    %v2550 = vpop.f32.mrb[0].mxu0
    %v2551 = vadd.f32 0.0, %v2550
    %v2552 = vpop.f32.mrb[0].mxu0
    %2553 = vmatprep.mubr.bf16.mxu0 0
    %2554 = vmatmul.mubr.bf16.gmra.mrb[0].mxu0 %v2154
    %v2555 = vpop.f32.mrb[0].mxu0
    %v2556 = vadd.f32 0.0, %v2555
    %v2557 = vpop.f32.mrb[0].mxu0
    %v2558 = vpop.f32.mrb[0].mxu0
    %v2559 = vadd.f32 0.0, %v2558
    %v2560 = vpop.f32.mrb[0].mxu0
    %2561 = vdwg.mxu0
    %v2562 = vadd.f32 %v1843, %v2468
    %v2563 = vadd.f32 %v1844, %v2471
    %v2564 = vadd.f32 %v1845, %v2476
    %v2565 = vadd.f32 %v1846, %v2479
    %v2566 = vadd.f32 %v1847, %v2484
    %v2567 = vadd.f32 %v1848, %v2487
    %v2568 = vadd.f32 %v1849, %v2492
    %v2569 = vadd.f32 %v1850, %v2495
    %v2570 = vadd.f32 %v1851, %v2500
    %v2571 = vadd.f32 %v1852, %v2503
    %v2572 = vadd.f32 %v1853, %v2508
    %v2573 = vadd.f32 %v1854, %v2511
    %v2574 = vadd.f32 %v1855, %v2516
    %v2575 = vadd.f32 %v1856, %v2519
    %v2576 = vadd.f32 %v1857, %v2524
    %v2577 = vadd.f32 %v1858, %v2527
    %v2578 = vadd.f32 %v1859, %v2532
    %v2579 = vadd.f32 %v1860, %v2535
    %v2580 = vadd.f32 %v1861, %v2540
    %v2581 = vadd.f32 %v1862, %v2543
    %v2582 = vadd.f32 %v1863, %v2548
    %v2583 = vadd.f32 %v1864, %v2551
    %v2584 = vadd.f32 %v1865, %v2556
    %v2585 = vadd.f32 %v1866, %v2559
    %v2586 = vld [vmem:[%s0] sm:$0xc]
    %v2587 = vld [vmem:[%s0 + $0x10] sm:$0xc]
    %v2588 = vld [vmem:[%s0 + $0x20] sm:$0xc]
    %v2589 = vld [vmem:[%s0 + $0x30] sm:$0xc]
    %v2590 = vld [vmem:[%s0 + $0x40] sm:$0xc]
    %v2591 = vld [vmem:[%s0 + $0x50] sm:$0xc]
    %v2592 = vld [vmem:[%s0 + $0x60] sm:$0xc]
    %v2593 = vld [vmem:[%s0 + $0x70] sm:$0xc]
    %vm2610 = vcmask 1041408
    %vm2611 = vcmask 1045508
    %vm2612 = vmor %vm2610, %vm2611
    %v2613 = vrot.slane %v2586, 6
    %v2614 = vrot.slane %v2613, 4
    %v2615 = vrot.slane %v75, 6
    %v2616 = vsel %vm2612, %v2614, %v2615
    %v2617 = vrot.slane %v2615, 4
    %v2618 = vrot.slane %v76, 6
    %v2619 = vsel %vm2612, %v2617, %v2618
    %v2620 = vrot.slane %v2618, 4
    %v2621 = vrot.slane %v1867, 6
    %v2622 = vsel %vm2612, %v2620, %v2621
    %v2623 = vrot.slane %v2587, 6
    %v2624 = vrot.slane %v2623, 4
    %v2625 = vrot.slane %v78, 6
    %v2626 = vsel %vm2612, %v2624, %v2625
    %v2627 = vrot.slane %v2625, 4
    %v2628 = vrot.slane %v79, 6
    %v2629 = vsel %vm2612, %v2627, %v2628
    %v2630 = vrot.slane %v2628, 4
    %v2631 = vrot.slane %v1868, 6
    %v2632 = vsel %vm2612, %v2630, %v2631
    %v2633 = vrot.slane %v2588, 6
    %v2634 = vrot.slane %v2633, 4
    %v2635 = vrot.slane %v81, 6
    %v2636 = vsel %vm2612, %v2634, %v2635
    %v2637 = vrot.slane %v2635, 4
    %v2638 = vrot.slane %v82, 6
    %v2639 = vsel %vm2612, %v2637, %v2638
    %v2640 = vrot.slane %v2638, 4
    %v2641 = vrot.slane %v1869, 6
    %v2642 = vsel %vm2612, %v2640, %v2641
    %v2643 = vrot.slane %v2589, 6
    %v2644 = vrot.slane %v2643, 4
    %v2645 = vrot.slane %v84, 6
    %v2646 = vsel %vm2612, %v2644, %v2645
    %v2647 = vrot.slane %v2645, 4
    %v2648 = vrot.slane %v85, 6
    %v2649 = vsel %vm2612, %v2647, %v2648
    %v2650 = vrot.slane %v2648, 4
    %v2651 = vrot.slane %v1870, 6
    %v2652 = vsel %vm2612, %v2650, %v2651
    %v2653 = vrot.slane %v2590, 6
    %v2654 = vrot.slane %v2653, 4
    %v2655 = vrot.slane %v87, 6
    %v2656 = vsel %vm2612, %v2654, %v2655
    %v2657 = vrot.slane %v2655, 4
    %v2658 = vrot.slane %v88, 6
    %v2659 = vsel %vm2612, %v2657, %v2658
    %v2660 = vrot.slane %v2658, 4
    %v2661 = vrot.slane %v1871, 6
    %v2662 = vsel %vm2612, %v2660, %v2661
    %v2663 = vrot.slane %v2591, 6
    %v2664 = vrot.slane %v2663, 4
    %v2665 = vrot.slane %v90, 6
    %v2666 = vsel %vm2612, %v2664, %v2665
    %v2667 = vrot.slane %v2665, 4
    %v2668 = vrot.slane %v91, 6
    %v2669 = vsel %vm2612, %v2667, %v2668
    %v2670 = vrot.slane %v2668, 4
    %v2671 = vrot.slane %v1872, 6
    %v2672 = vsel %vm2612, %v2670, %v2671
    %v2673 = vrot.slane %v2592, 6
    %v2674 = vrot.slane %v2673, 4
    %v2675 = vrot.slane %v93, 6
    %v2676 = vsel %vm2612, %v2674, %v2675
    %v2677 = vrot.slane %v2675, 4
    %v2678 = vrot.slane %v94, 6
    %v2679 = vsel %vm2612, %v2677, %v2678
    %v2680 = vrot.slane %v2678, 4
    %v2681 = vrot.slane %v1873, 6
    %v2682 = vsel %vm2612, %v2680, %v2681
    %v2683 = vrot.slane %v2593, 6
    %v2684 = vrot.slane %v2683, 4
    %v2685 = vrot.slane %v96, 6
    %v2686 = vsel %vm2612, %v2684, %v2685
    %v2687 = vrot.slane %v2685, 4
    %v2688 = vrot.slane %v97, 6
    %v2689 = vsel %vm2612, %v2687, %v2688
    %v2690 = vrot.slane %v2688, 4
    %v2691 = vrot.slane %v1874, 6
    %v2692 = vsel %vm2612, %v2690, %v2691
    %s2693 = scalar_lea.vmem [#allocation2], 512
    %v2694 = vld [vmem:[%s2693] sm:$0xf]
    %v2695 = vld [vmem:[%s2693 + $0x4] sm:$0xf]
    %v2696 = vld [vmem:[%s2693 + $0x8] sm:$0xf]
    %v2697 = vld [vmem:[%s2693 + $0xc] sm:$0xf]
    %v2698 = vld [vmem:[%s2693 + $0x10] sm:$0xf]
    %v2699 = vld [vmem:[%s2693 + $0x14] sm:$0xf]
    %v2700 = vld [vmem:[%s2693 + $0x18] sm:$0xf]
    %v2701 = vld [vmem:[%s2693 + $0x1c] sm:$0xf]
    %v2702 = vld [vmem:[%s2693 + $0x20] sm:$0xf]
    %v2703 = vld [vmem:[%s2693 + $0x24] sm:$0xf]
    %v2704 = vld [vmem:[%s2693 + $0x28] sm:$0xf]
    %v2705 = vld [vmem:[%s2693 + $0x2c] sm:$0xf]
    %v2706 = vld [vmem:[%s2693 + $0x30] sm:$0xf]
    %v2707 = vld [vmem:[%s2693 + $0x34] sm:$0xf]
    %v2708 = vld [vmem:[%s2693 + $0x38] sm:$0xf]
    %v2709 = vld [vmem:[%s2693 + $0x3c] sm:$0xf]
    %v2710 = vunpack.c.l.b16 %v2616
    %v2711 = vunpack.c.l.b16 %v2619
    %v2712 = vunpack.c.l.b16 %v2622
    %v2713 = vunpack.c.l.b16 %v2626
    %v2714 = vunpack.c.l.b16 %v2629
    %v2715 = vunpack.c.l.b16 %v2632
    %v2716 = vunpack.c.l.b16 %v2636
    %v2717 = vunpack.c.l.b16 %v2639
    %v2718 = vunpack.c.l.b16 %v2642
    %v2719 = vunpack.c.l.b16 %v2646
    %v2720 = vunpack.c.l.b16 %v2649
    %v2721 = vunpack.c.l.b16 %v2652
    %v2722 = vunpack.c.l.b16 %v2656
    %v2723 = vunpack.c.l.b16 %v2659
    %v2724 = vunpack.c.l.b16 %v2662
    %v2725 = vunpack.c.l.b16 %v2666
    %v2726 = vunpack.c.l.b16 %v2669
    %v2727 = vunpack.c.l.b16 %v2672
    %v2728 = vunpack.c.l.b16 %v2676
    %v2729 = vunpack.c.l.b16 %v2679
    %v2730 = vunpack.c.l.b16 %v2682
    %v2731 = vunpack.c.l.b16 %v2686
    %v2732 = vunpack.c.l.b16 %v2689
    %v2733 = vunpack.c.l.b16 %v2692
    %v2734 = vpack.c.b16 %v2711, %v2710
    %v2735 = vpack.c.b16 %v2713, %v2712
    %v2736 = vpack.c.b16 %v2715, %v2714
    %v2737 = vpack.c.b16 %v2717, %v2716
    %v2738 = vpack.c.b16 %v2719, %v2718
    %v2739 = vpack.c.b16 %v2721, %v2720
    %v2740 = vpack.c.b16 %v2723, %v2722
    %v2741 = vpack.c.b16 %v2725, %v2724
    %v2742 = vpack.c.b16 %v2727, %v2726
    %v2743 = vpack.c.b16 %v2729, %v2728
    %v2744 = vpack.c.b16 %v2731, %v2730
    %v2745 = vpack.c.b16 %v2733, %v2732
    %v2774 = vunpack.c.l.b16 %v2694
    %v2775 = vunpack.c.l.b16 %v2695
    %v2776 = vunpack.c.l.b16 %v2696
    %v2777 = vunpack.c.l.b16 %v2697
    %v2778 = vunpack.c.l.b16 %v2698
    %v2779 = vunpack.c.l.b16 %v2699
    %v2780 = vunpack.c.l.b16 %v2700
    %v2781 = vunpack.c.l.b16 %v2701
    %v2782 = vunpack.c.l.b16 %v2702
    %v2783 = vunpack.c.l.b16 %v2703
    %v2784 = vunpack.c.l.b16 %v2704
    %v2785 = vunpack.c.l.b16 %v2705
    %v2786 = vunpack.c.l.b16 %v2706
    %v2787 = vunpack.c.l.b16 %v2707
    %v2788 = vunpack.c.l.b16 %v2708
    %v2789 = vunpack.c.l.b16 %v2709
    %v2790 = vpack.c.b16 %v2775, %v2774
    %v2791 = vpack.c.b16 %v2777, %v2776
    %v2792 = vpack.c.b16 %v2779, %v2778
    %v2793 = vpack.c.b16 %v2781, %v2780
    %v2794 = vpack.c.b16 %v2783, %v2782
    %v2795 = vpack.c.b16 %v2785, %v2784
    %v2796 = vpack.c.b16 %v2787, %v2786
    %v2797 = vpack.c.b16 %v2789, %v2788
    %2806 = vmatprep.subr.bf16.mxu0 0
    %2807 = vmatpush1.bf16.msra.mxu0 %v2790
    %2808 = vmatprep.subr.bf16.mxu0 0
    %2809 = vmatpush1.bf16.msra.mxu0 %v2791
    %2810 = vmatprep.subr.bf16.mxu0 0
    %2811 = vmatpush1.bf16.msra.mxu0 %v2792
    %2812 = vmatprep.subr.bf16.mxu0 0
    %2813 = vmatpush1.bf16.msra.mxu0 %v2793
    %2814 = vmatprep.subr.bf16.mxu0 0
    %2815 = vmatpush1.bf16.msra.mxu0 %v2794
    %2816 = vmatprep.subr.bf16.mxu0 0
    %2817 = vmatpush1.bf16.msra.mxu0 %v2795
    %2818 = vmatprep.subr.bf16.mxu0 0
    %2819 = vmatpush1.bf16.msra.mxu0 %v2796
    %2820 = vmatprep.subr.bf16.mxu0 0
    %2821 = vmatpush1.bf16.msra.mxu0 %v2797
    %2822 = vmatprep.subr.bf16.mxu0 0
    %2823 = vmatpush1.bf16.msra.mxu0 0
    %2824 = vmatprep.subr.bf16.mxu0 0
    %2825 = vmatpush1.bf16.msra.mxu0 0
    %2826 = vmatprep.subr.bf16.mxu0 0
    %2827 = vmatpush1.bf16.msra.mxu0 0
    %2828 = vmatprep.subr.bf16.mxu0 0
    %2829 = vmatpush1.bf16.msra.mxu0 0
    %2830 = vmatprep.subr.bf16.mxu0 0
    %2831 = vmatpush1.bf16.msra.mxu0 0
    %2832 = vmatprep.subr.bf16.mxu0 0
    %2833 = vmatpush1.bf16.msra.mxu0 0
    %2834 = vmatprep.subr.bf16.mxu0 0
    %2835 = vmatpush1.bf16.msra.mxu0 0
    %2836 = vmatprep.subr.bf16.mxu0 0
    %2837 = vmatpush1.bf16.msra.mxu0 0
    %2838 = vmatprep.mubr.bf16.mxu0 0
    %2839 = vmatmul.mubr.bf16.gmra.mrb[0].mxu0 %v2734
    %v2840 = vpop.f32.mrb[0].mxu0
    %v2841 = vadd.f32 0.0, %v2840
    %v2842 = vpop.f32.mrb[0].mxu0
    %v2843 = vpop.f32.mrb[0].mxu0
    %v2844 = vadd.f32 0.0, %v2843
    %v2845 = vpop.f32.mrb[0].mxu0
    %2846 = vmatprep.mubr.bf16.mxu0 0
    %2847 = vmatmul.mubr.bf16.gmra.mrb[0].mxu0 %v2735
    %v2848 = vpop.f32.mrb[0].mxu0
    %v2849 = vadd.f32 0.0, %v2848
    %v2850 = vpop.f32.mrb[0].mxu0
    %v2851 = vpop.f32.mrb[0].mxu0
    %v2852 = vadd.f32 0.0, %v2851
    %v2853 = vpop.f32.mrb[0].mxu0
    %2854 = vmatprep.mubr.bf16.mxu0 0
    %2855 = vmatmul.mubr.bf16.gmra.mrb[0].mxu0 %v2736
    %v2856 = vpop.f32.mrb[0].mxu0
    %v2857 = vadd.f32 0.0, %v2856
    %v2858 = vpop.f32.mrb[0].mxu0
    %v2859 = vpop.f32.mrb[0].mxu0
    %v2860 = vadd.f32 0.0, %v2859
    %v2861 = vpop.f32.mrb[0].mxu0
    %2862 = vmatprep.mubr.bf16.mxu0 0
    %2863 = vmatmul.mubr.bf16.gmra.mrb[0].mxu0 %v2737
    %v2864 = vpop.f32.mrb[0].mxu0
    %v2865 = vadd.f32 0.0, %v2864
    %v2866 = vpop.f32.mrb[0].mxu0
    %v2867 = vpop.f32.mrb[0].mxu0
    %v2868 = vadd.f32 0.0, %v2867
    %v2869 = vpop.f32.mrb[0].mxu0
    %2870 = vmatprep.mubr.bf16.mxu0 0
    %2871 = vmatmul.mubr.bf16.gmra.mrb[0].mxu0 %v2738
    %v2872 = vpop.f32.mrb[0].mxu0
    %v2873 = vadd.f32 0.0, %v2872
    %v2874 = vpop.f32.mrb[0].mxu0
    %v2875 = vpop.f32.mrb[0].mxu0
    %v2876 = vadd.f32 0.0, %v2875
    %v2877 = vpop.f32.mrb[0].mxu0
    %2878 = vmatprep.mubr.bf16.mxu0 0
    %2879 = vmatmul.mubr.bf16.gmra.mrb[0].mxu0 %v2739
    %v2880 = vpop.f32.mrb[0].mxu0
    %v2881 = vadd.f32 0.0, %v2880
    %v2882 = vpop.f32.mrb[0].mxu0
    %v2883 = vpop.f32.mrb[0].mxu0
    %v2884 = vadd.f32 0.0, %v2883
    %v2885 = vpop.f32.mrb[0].mxu0
    %2886 = vmatprep.mubr.bf16.mxu0 0
    %2887 = vmatmul.mubr.bf16.gmra.mrb[0].mxu0 %v2740
    %v2888 = vpop.f32.mrb[0].mxu0
    %v2889 = vadd.f32 0.0, %v2888
    %v2890 = vpop.f32.mrb[0].mxu0
    %v2891 = vpop.f32.mrb[0].mxu0
    %v2892 = vadd.f32 0.0, %v2891
    %v2893 = vpop.f32.mrb[0].mxu0
    %2894 = vmatprep.mubr.bf16.mxu0 0
    %2895 = vmatmul.mubr.bf16.gmra.mrb[0].mxu0 %v2741
    %v2896 = vpop.f32.mrb[0].mxu0
    %v2897 = vadd.f32 0.0, %v2896
    %v2898 = vpop.f32.mrb[0].mxu0
    %v2899 = vpop.f32.mrb[0].mxu0
    %v2900 = vadd.f32 0.0, %v2899
    %v2901 = vpop.f32.mrb[0].mxu0
    %2902 = vmatprep.mubr.bf16.mxu0 0
    %2903 = vmatmul.mubr.bf16.gmra.mrb[0].mxu0 %v2742
    %v2904 = vpop.f32.mrb[0].mxu0
    %v2905 = vadd.f32 0.0, %v2904
    %v2906 = vpop.f32.mrb[0].mxu0
    %v2907 = vpop.f32.mrb[0].mxu0
    %v2908 = vadd.f32 0.0, %v2907
    %v2909 = vpop.f32.mrb[0].mxu0
    %2910 = vmatprep.mubr.bf16.mxu0 0
    %2911 = vmatmul.mubr.bf16.gmra.mrb[0].mxu0 %v2743
    %v2912 = vpop.f32.mrb[0].mxu0
    %v2913 = vadd.f32 0.0, %v2912
    %v2914 = vpop.f32.mrb[0].mxu0
    %v2915 = vpop.f32.mrb[0].mxu0
    %v2916 = vadd.f32 0.0, %v2915
    %v2917 = vpop.f32.mrb[0].mxu0
    %2918 = vmatprep.mubr.bf16.mxu0 0
    %2919 = vmatmul.mubr.bf16.gmra.mrb[0].mxu0 %v2744
    %v2920 = vpop.f32.mrb[0].mxu0
    %v2921 = vadd.f32 0.0, %v2920
    %v2922 = vpop.f32.mrb[0].mxu0
    %v2923 = vpop.f32.mrb[0].mxu0
    %v2924 = vadd.f32 0.0, %v2923
    %v2925 = vpop.f32.mrb[0].mxu0
    %2926 = vmatprep.mubr.bf16.mxu0 0
    %2927 = vmatmul.mubr.bf16.gmra.mrb[0].mxu0 %v2745
    %v2928 = vpop.f32.mrb[0].mxu0
    %v2929 = vadd.f32 0.0, %v2928
    %v2930 = vpop.f32.mrb[0].mxu0
    %v2931 = vpop.f32.mrb[0].mxu0
    %v2932 = vadd.f32 0.0, %v2931
    %v2933 = vpop.f32.mrb[0].mxu0
    %2934 = vdwg.mxu0
    %v2935 = vadd.f32 %v2344, %v2841
    %v2936 = vadd.f32 %v2345, %v2844
    %v2937 = vadd.f32 %v2346, %v2849
    %v2938 = vadd.f32 %v2347, %v2852
    %v2939 = vadd.f32 %v2348, %v2857
    %v2940 = vadd.f32 %v2349, %v2860
    %v2941 = vadd.f32 %v2350, %v2865
    %v2942 = vadd.f32 %v2351, %v2868
    %v2943 = vadd.f32 %v2352, %v2873
    %v2944 = vadd.f32 %v2353, %v2876
    %v2945 = vadd.f32 %v2354, %v2881
    %v2946 = vadd.f32 %v2355, %v2884
    %v2947 = vadd.f32 %v2356, %v2889
    %v2948 = vadd.f32 %v2357, %v2892
    %v2949 = vadd.f32 %v2358, %v2897
    %v2950 = vadd.f32 %v2359, %v2900
    %v2951 = vadd.f32 %v2360, %v2905
    %v2952 = vadd.f32 %v2361, %v2908
    %v2953 = vadd.f32 %v2362, %v2913
    %v2954 = vadd.f32 %v2363, %v2916
    %v2955 = vadd.f32 %v2364, %v2921
    %v2956 = vadd.f32 %v2365, %v2924
    %v2957 = vadd.f32 %v2366, %v2929
    %v2958 = vadd.f32 %v2367, %v2932
    %s2959 = scalar_lea.vmem [#allocation2], 576
    %v2960 = vld [vmem:[%s2959] sm:$0xf]
    %v2961 = vld [vmem:[%s2959 + $0x4] sm:$0xf]
    %v2962 = vld [vmem:[%s2959 + $0x8] sm:$0xf]
    %v2963 = vld [vmem:[%s2959 + $0xc] sm:$0xf]
    %v2964 = vld [vmem:[%s2959 + $0x10] sm:$0xf]
    %v2965 = vld [vmem:[%s2959 + $0x14] sm:$0xf]
    %v2966 = vld [vmem:[%s2959 + $0x18] sm:$0xf]
    %v2967 = vld [vmem:[%s2959 + $0x1c] sm:$0xf]
    %v2968 = vld [vmem:[%s2959 + $0x20] sm:$0xf]
    %v2969 = vld [vmem:[%s2959 + $0x24] sm:$0xf]
    %v2970 = vld [vmem:[%s2959 + $0x28] sm:$0xf]
    %v2971 = vld [vmem:[%s2959 + $0x2c] sm:$0xf]
    %v2972 = vld [vmem:[%s2959 + $0x30] sm:$0xf]
    %v2973 = vld [vmem:[%s2959 + $0x34] sm:$0xf]
    %v2974 = vld [vmem:[%s2959 + $0x38] sm:$0xf]
    %v2975 = vld [vmem:[%s2959 + $0x3c] sm:$0xf]
    %v2992 = vunpack.c.l.b16 %v2960
    %v2993 = vunpack.c.l.b16 %v2961
    %v2994 = vunpack.c.l.b16 %v2962
    %v2995 = vunpack.c.l.b16 %v2963
    %v2996 = vunpack.c.l.b16 %v2964
    %v2997 = vunpack.c.l.b16 %v2965
    %v2998 = vunpack.c.l.b16 %v2966
    %v2999 = vunpack.c.l.b16 %v2967
    %v3000 = vunpack.c.l.b16 %v2968
    %v3001 = vunpack.c.l.b16 %v2969
    %v3002 = vunpack.c.l.b16 %v2970
    %v3003 = vunpack.c.l.b16 %v2971
    %v3004 = vunpack.c.l.b16 %v2972
    %v3005 = vunpack.c.l.b16 %v2973
    %v3006 = vunpack.c.l.b16 %v2974
    %v3007 = vunpack.c.l.b16 %v2975
    %v3008 = vpack.c.b16 %v2993, %v2992
    %v3009 = vpack.c.b16 %v2995, %v2994
    %v3010 = vpack.c.b16 %v2997, %v2996
    %v3011 = vpack.c.b16 %v2999, %v2998
    %v3012 = vpack.c.b16 %v3001, %v3000
    %v3013 = vpack.c.b16 %v3003, %v3002
    %v3014 = vpack.c.b16 %v3005, %v3004
    %v3015 = vpack.c.b16 %v3007, %v3006
    %3024 = vmatprep.subr.bf16.mxu0 0
    %3025 = vmatpush1.bf16.msra.mxu0 %v3008
    %3026 = vmatprep.subr.bf16.mxu0 0
    %3027 = vmatpush1.bf16.msra.mxu0 %v3009
    %3028 = vmatprep.subr.bf16.mxu0 0
    %3029 = vmatpush1.bf16.msra.mxu0 %v3010
    %3030 = vmatprep.subr.bf16.mxu0 0
    %3031 = vmatpush1.bf16.msra.mxu0 %v3011
    %3032 = vmatprep.subr.bf16.mxu0 0
    %3033 = vmatpush1.bf16.msra.mxu0 %v3012
    %3034 = vmatprep.subr.bf16.mxu0 0
    %3035 = vmatpush1.bf16.msra.mxu0 %v3013
    %3036 = vmatprep.subr.bf16.mxu0 0
    %3037 = vmatpush1.bf16.msra.mxu0 %v3014
    %3038 = vmatprep.subr.bf16.mxu0 0
    %3039 = vmatpush1.bf16.msra.mxu0 %v3015
    %3040 = vmatprep.subr.bf16.mxu0 0
    %3041 = vmatpush1.bf16.msra.mxu0 0
    %3042 = vmatprep.subr.bf16.mxu0 0
    %3043 = vmatpush1.bf16.msra.mxu0 0
    %3044 = vmatprep.subr.bf16.mxu0 0
    %3045 = vmatpush1.bf16.msra.mxu0 0
    %3046 = vmatprep.subr.bf16.mxu0 0
    %3047 = vmatpush1.bf16.msra.mxu0 0
    %3048 = vmatprep.subr.bf16.mxu0 0
    %3049 = vmatpush1.bf16.msra.mxu0 0
    %3050 = vmatprep.subr.bf16.mxu0 0
    %3051 = vmatpush1.bf16.msra.mxu0 0
    %3052 = vmatprep.subr.bf16.mxu0 0
    %3053 = vmatpush1.bf16.msra.mxu0 0
    %3054 = vmatprep.subr.bf16.mxu0 0
    %3055 = vmatpush1.bf16.msra.mxu0 0
    %3056 = vmatprep.mubr.bf16.mxu0 0
    %3057 = vmatmul.mubr.bf16.gmra.mrb[0].mxu0 %v2734
    %v3058 = vpop.f32.mrb[0].mxu0
    %v3059 = vadd.f32 0.0, %v3058
    %v3060 = vpop.f32.mrb[0].mxu0
    %v3061 = vpop.f32.mrb[0].mxu0
    %v3062 = vadd.f32 0.0, %v3061
    %v3063 = vpop.f32.mrb[0].mxu0
    %3064 = vmatprep.mubr.bf16.mxu0 0
    %3065 = vmatmul.mubr.bf16.gmra.mrb[0].mxu0 %v2735
    %v3066 = vpop.f32.mrb[0].mxu0
    %v3067 = vadd.f32 0.0, %v3066
    %v3068 = vpop.f32.mrb[0].mxu0
    %v3069 = vpop.f32.mrb[0].mxu0
    %v3070 = vadd.f32 0.0, %v3069
    %v3071 = vpop.f32.mrb[0].mxu0
    %3072 = vmatprep.mubr.bf16.mxu0 0
    %3073 = vmatmul.mubr.bf16.gmra.mrb[0].mxu0 %v2736
    %v3074 = vpop.f32.mrb[0].mxu0
    %v3075 = vadd.f32 0.0, %v3074
    %v3076 = vpop.f32.mrb[0].mxu0
    %v3077 = vpop.f32.mrb[0].mxu0
    %v3078 = vadd.f32 0.0, %v3077
    %v3079 = vpop.f32.mrb[0].mxu0
    %3080 = vmatprep.mubr.bf16.mxu0 0
    %3081 = vmatmul.mubr.bf16.gmra.mrb[0].mxu0 %v2737
    %v3082 = vpop.f32.mrb[0].mxu0
    %v3083 = vadd.f32 0.0, %v3082
    %v3084 = vpop.f32.mrb[0].mxu0
    %v3085 = vpop.f32.mrb[0].mxu0
    %v3086 = vadd.f32 0.0, %v3085
    %v3087 = vpop.f32.mrb[0].mxu0
    %3088 = vmatprep.mubr.bf16.mxu0 0
    %3089 = vmatmul.mubr.bf16.gmra.mrb[0].mxu0 %v2738
    %v3090 = vpop.f32.mrb[0].mxu0
    %v3091 = vadd.f32 0.0, %v3090
    %v3092 = vpop.f32.mrb[0].mxu0
    %v3093 = vpop.f32.mrb[0].mxu0
    %v3094 = vadd.f32 0.0, %v3093
    %v3095 = vpop.f32.mrb[0].mxu0
    %3096 = vmatprep.mubr.bf16.mxu0 0
    %3097 = vmatmul.mubr.bf16.gmra.mrb[0].mxu0 %v2739
    %v3098 = vpop.f32.mrb[0].mxu0
    %v3099 = vadd.f32 0.0, %v3098
    %v3100 = vpop.f32.mrb[0].mxu0
    %v3101 = vpop.f32.mrb[0].mxu0
    %v3102 = vadd.f32 0.0, %v3101
    %v3103 = vpop.f32.mrb[0].mxu0
    %3104 = vmatprep.mubr.bf16.mxu0 0
    %3105 = vmatmul.mubr.bf16.gmra.mrb[0].mxu0 %v2740
    %v3106 = vpop.f32.mrb[0].mxu0
    %v3107 = vadd.f32 0.0, %v3106
    %v3108 = vpop.f32.mrb[0].mxu0
    %v3109 = vpop.f32.mrb[0].mxu0
    %v3110 = vadd.f32 0.0, %v3109
    %v3111 = vpop.f32.mrb[0].mxu0
    %3112 = vmatprep.mubr.bf16.mxu0 0
    %3113 = vmatmul.mubr.bf16.gmra.mrb[0].mxu0 %v2741
    %v3114 = vpop.f32.mrb[0].mxu0
    %v3115 = vadd.f32 0.0, %v3114
    %v3116 = vpop.f32.mrb[0].mxu0
    %v3117 = vpop.f32.mrb[0].mxu0
    %v3118 = vadd.f32 0.0, %v3117
    %v3119 = vpop.f32.mrb[0].mxu0
    %3120 = vmatprep.mubr.bf16.mxu0 0
    %3121 = vmatmul.mubr.bf16.gmra.mrb[0].mxu0 %v2742
    %v3122 = vpop.f32.mrb[0].mxu0
    %v3123 = vadd.f32 0.0, %v3122
    %v3124 = vpop.f32.mrb[0].mxu0
    %v3125 = vpop.f32.mrb[0].mxu0
    %v3126 = vadd.f32 0.0, %v3125
    %v3127 = vpop.f32.mrb[0].mxu0
    %3128 = vmatprep.mubr.bf16.mxu0 0
    %3129 = vmatmul.mubr.bf16.gmra.mrb[0].mxu0 %v2743
    %v3130 = vpop.f32.mrb[0].mxu0
    %v3131 = vadd.f32 0.0, %v3130
    %v3132 = vpop.f32.mrb[0].mxu0
    %v3133 = vpop.f32.mrb[0].mxu0
    %v3134 = vadd.f32 0.0, %v3133
    %v3135 = vpop.f32.mrb[0].mxu0
    %3136 = vmatprep.mubr.bf16.mxu0 0
    %3137 = vmatmul.mubr.bf16.gmra.mrb[0].mxu0 %v2744
    %v3138 = vpop.f32.mrb[0].mxu0
    %v3139 = vadd.f32 0.0, %v3138
    %v3140 = vpop.f32.mrb[0].mxu0
    %v3141 = vpop.f32.mrb[0].mxu0
    %v3142 = vadd.f32 0.0, %v3141
    %v3143 = vpop.f32.mrb[0].mxu0
    %3144 = vmatprep.mubr.bf16.mxu0 0
    %3145 = vmatmul.mubr.bf16.gmra.mrb[0].mxu0 %v2745
    %v3146 = vpop.f32.mrb[0].mxu0
    %v3147 = vadd.f32 0.0, %v3146
    %v3148 = vpop.f32.mrb[0].mxu0
    %v3149 = vpop.f32.mrb[0].mxu0
    %v3150 = vadd.f32 0.0, %v3149
    %v3151 = vpop.f32.mrb[0].mxu0
    %3152 = vdwg.mxu0
    %v3153 = vadd.f32 %v2562, %v3059
    %v3154 = vadd.f32 %v2563, %v3062
    %v3155 = vadd.f32 %v2564, %v3067
    %v3156 = vadd.f32 %v2565, %v3070
    %v3157 = vadd.f32 %v2566, %v3075
    %v3158 = vadd.f32 %v2567, %v3078
    %v3159 = vadd.f32 %v2568, %v3083
    %v3160 = vadd.f32 %v2569, %v3086
    %v3161 = vadd.f32 %v2570, %v3091
    %v3162 = vadd.f32 %v2571, %v3094
    %v3163 = vadd.f32 %v2572, %v3099
    %v3164 = vadd.f32 %v2573, %v3102
    %v3165 = vadd.f32 %v2574, %v3107
    %v3166 = vadd.f32 %v2575, %v3110
    %v3167 = vadd.f32 %v2576, %v3115
    %v3168 = vadd.f32 %v2577, %v3118
    %v3169 = vadd.f32 %v2578, %v3123
    %v3170 = vadd.f32 %v2579, %v3126
    %v3171 = vadd.f32 %v2580, %v3131
    %v3172 = vadd.f32 %v2581, %v3134
    %v3173 = vadd.f32 %v2582, %v3139
    %v3174 = vadd.f32 %v2583, %v3142
    %v3175 = vadd.f32 %v2584, %v3147
    %v3176 = vadd.f32 %v2585, %v3150
    %v3177 = vmax.f32 %v2935, %v3153
    %v3178 = vmax.f32 %v2936, %v3154
    %v3179 = vmax.f32 %v2937, %v3155
    %v3180 = vmax.f32 %v2938, %v3156
    %v3181 = vmax.f32 %v2939, %v3157
    %v3182 = vmax.f32 %v2940, %v3158
    %v3183 = vmax.f32 %v2941, %v3159
    %v3184 = vmax.f32 %v2942, %v3160
    %v3185 = vmax.f32 %v2943, %v3161
    %v3186 = vmax.f32 %v2944, %v3162
    %v3187 = vmax.f32 %v2945, %v3163
    %v3188 = vmax.f32 %v2946, %v3164
    %v3189 = vmax.f32 %v2947, %v3165
    %v3190 = vmax.f32 %v2948, %v3166
    %v3191 = vmax.f32 %v2949, %v3167
    %v3192 = vmax.f32 %v2950, %v3168
    %v3193 = vmax.f32 %v2951, %v3169
    %v3194 = vmax.f32 %v2952, %v3170
    %v3195 = vmax.f32 %v2953, %v3171
    %v3196 = vmax.f32 %v2954, %v3172
    %v3197 = vmax.f32 %v2955, %v3173
    %v3198 = vmax.f32 %v2956, %v3174
    %v3199 = vmax.f32 %v2957, %v3175
    %v3200 = vmax.f32 %v2958, %v3176
    %v3201 = vld [vmem:[%s2] sm:$0x1]
    %v3203 = vlaneseq
    %v3204 = vshrl.u32 %v3203, 7
    %v3205 = vsub.s32 0, %v3204
    %v3206 = vrot.slane %v3201, %v3205
    %v3208 = vadd.f32 %v3177, %v3206
    %v3209 = vadd.f32 %v3178, %v3206
    %v3210 = vadd.f32 %v3179, %v3206
    %v3211 = vadd.f32 %v3180, %v3206
    %v3212 = vadd.f32 %v3181, %v3206
    %v3213 = vadd.f32 %v3182, %v3206
    %v3214 = vadd.f32 %v3183, %v3206
    %v3215 = vadd.f32 %v3184, %v3206
    %v3216 = vadd.f32 %v3185, %v3206
    %v3217 = vadd.f32 %v3186, %v3206
    %v3218 = vadd.f32 %v3187, %v3206
    %v3219 = vadd.f32 %v3188, %v3206
    %v3220 = vadd.f32 %v3189, %v3206
    %v3221 = vadd.f32 %v3190, %v3206
    %v3222 = vadd.f32 %v3191, %v3206
    %v3223 = vadd.f32 %v3192, %v3206
    %v3224 = vadd.f32 %v3193, %v3206
    %v3225 = vadd.f32 %v3194, %v3206
    %v3226 = vadd.f32 %v3195, %v3206
    %v3227 = vadd.f32 %v3196, %v3206
    %v3228 = vadd.f32 %v3197, %v3206
    %v3229 = vadd.f32 %v3198, %v3206
    %v3230 = vadd.f32 %v3199, %v3206
    %v3231 = vadd.f32 %v3200, %v3206
    %v3256 = vcombine.high %v3208, %v3208
    %v3258 = vunpack.c.l.s4 1983009808
    %v3259 = vunpack.c.0.s8 %v3258
    %v3260 = vlaneseq
    %v3261 = vshrl.u32 %v3260, 7
    %v3262 = vsub.s32 %v3259, %v3261
    %v3263 = vrot.slane %v3208, %v3262
    %v3265 = vunpack.c.l.s4 1983009808
    %v3266 = vunpack.c.0.s8 %v3265
    %v3267 = vlaneseq
    %v3268 = vshrl.u32 %v3267, 7
    %v3269 = vsub.s32 %v3266, %v3268
    %v3270 = vrot.slane %v3256, %v3269
    %v3271 = vcombine.high %v3263, %v3263
    %v3272 = vcombine.high %v3270, %v3270
    %v3273 = vcombine.high %v3209, %v3209
    %v3275 = vunpack.c.l.s4 1983009808
    %v3276 = vunpack.c.0.s8 %v3275
    %v3277 = vlaneseq
    %v3278 = vshrl.u32 %v3277, 7
    %v3279 = vsub.s32 %v3276, %v3278
    %v3280 = vrot.slane %v3209, %v3279
    %v3282 = vunpack.c.l.s4 1983009808
    %v3283 = vunpack.c.0.s8 %v3282
    %v3284 = vlaneseq
    %v3285 = vshrl.u32 %v3284, 7
    %v3286 = vsub.s32 %v3283, %v3285
    %v3287 = vrot.slane %v3273, %v3286
    %v3288 = vcombine.high %v3280, %v3280
    %v3289 = vcombine.high %v3287, %v3287
    %v3290 = vcombine.high %v3210, %v3210
    %v3292 = vunpack.c.l.s4 1983009808
    %v3293 = vunpack.c.0.s8 %v3292
    %v3294 = vlaneseq
    %v3295 = vshrl.u32 %v3294, 7
    %v3296 = vsub.s32 %v3293, %v3295
    %v3297 = vrot.slane %v3210, %v3296
    %v3299 = vunpack.c.l.s4 1983009808
    %v3300 = vunpack.c.0.s8 %v3299
    %v3301 = vlaneseq
    %v3302 = vshrl.u32 %v3301, 7
    %v3303 = vsub.s32 %v3300, %v3302
    %v3304 = vrot.slane %v3290, %v3303
    %v3305 = vcombine.high %v3297, %v3297
    %v3306 = vcombine.high %v3304, %v3304
    %v3307 = vcombine.high %v3211, %v3211
    %v3309 = vunpack.c.l.s4 1983009808
    %v3310 = vunpack.c.0.s8 %v3309
    %v3311 = vlaneseq
    %v3312 = vshrl.u32 %v3311, 7
    %v3313 = vsub.s32 %v3310, %v3312
    %v3314 = vrot.slane %v3211, %v3313
    %v3316 = vunpack.c.l.s4 1983009808
    %v3317 = vunpack.c.0.s8 %v3316
    %v3318 = vlaneseq
    %v3319 = vshrl.u32 %v3318, 7
    %v3320 = vsub.s32 %v3317, %v3319
    %v3321 = vrot.slane %v3307, %v3320
    %v3322 = vcombine.high %v3314, %v3314
    %v3323 = vcombine.high %v3321, %v3321
    %v3324 = vcombine.high %v3212, %v3212
    %v3326 = vunpack.c.l.s4 1983009808
    %v3327 = vunpack.c.0.s8 %v3326
    %v3328 = vlaneseq
    %v3329 = vshrl.u32 %v3328, 7
    %v3330 = vsub.s32 %v3327, %v3329
    %v3331 = vrot.slane %v3212, %v3330
    %v3333 = vunpack.c.l.s4 1983009808
    %v3334 = vunpack.c.0.s8 %v3333
    %v3335 = vlaneseq
    %v3336 = vshrl.u32 %v3335, 7
    %v3337 = vsub.s32 %v3334, %v3336
    %v3338 = vrot.slane %v3324, %v3337
    %v3339 = vcombine.high %v3331, %v3331
    %v3340 = vcombine.high %v3338, %v3338
    %v3341 = vcombine.high %v3213, %v3213
    %v3343 = vunpack.c.l.s4 1983009808
    %v3344 = vunpack.c.0.s8 %v3343
    %v3345 = vlaneseq
    %v3346 = vshrl.u32 %v3345, 7
    %v3347 = vsub.s32 %v3344, %v3346
    %v3348 = vrot.slane %v3213, %v3347
    %v3350 = vunpack.c.l.s4 1983009808
    %v3351 = vunpack.c.0.s8 %v3350
    %v3352 = vlaneseq
    %v3353 = vshrl.u32 %v3352, 7
    %v3354 = vsub.s32 %v3351, %v3353
    %v3355 = vrot.slane %v3341, %v3354
    %v3356 = vcombine.high %v3348, %v3348
    %v3357 = vcombine.high %v3355, %v3355
    %v3358 = vcombine.high %v3214, %v3214
    %v3360 = vunpack.c.l.s4 1983009808
    %v3361 = vunpack.c.0.s8 %v3360
    %v3362 = vlaneseq
    %v3363 = vshrl.u32 %v3362, 7
    %v3364 = vsub.s32 %v3361, %v3363
    %v3365 = vrot.slane %v3214, %v3364
    %v3367 = vunpack.c.l.s4 1983009808
    %v3368 = vunpack.c.0.s8 %v3367
    %v3369 = vlaneseq
    %v3370 = vshrl.u32 %v3369, 7
    %v3371 = vsub.s32 %v3368, %v3370
    %v3372 = vrot.slane %v3358, %v3371
    %v3373 = vcombine.high %v3365, %v3365
    %v3374 = vcombine.high %v3372, %v3372
    %v3375 = vcombine.high %v3215, %v3215
    %v3377 = vunpack.c.l.s4 1983009808
    %v3378 = vunpack.c.0.s8 %v3377
    %v3379 = vlaneseq
    %v3380 = vshrl.u32 %v3379, 7
    %v3381 = vsub.s32 %v3378, %v3380
    %v3382 = vrot.slane %v3215, %v3381
    %v3384 = vunpack.c.l.s4 1983009808
    %v3385 = vunpack.c.0.s8 %v3384
    %v3386 = vlaneseq
    %v3387 = vshrl.u32 %v3386, 7
    %v3388 = vsub.s32 %v3385, %v3387
    %v3389 = vrot.slane %v3375, %v3388
    %v3390 = vcombine.high %v3382, %v3382
    %v3391 = vcombine.high %v3389, %v3389
    %v3392 = vcombine.high %v3216, %v3216
    %v3394 = vunpack.c.l.s4 1983009808
    %v3395 = vunpack.c.0.s8 %v3394
    %v3396 = vlaneseq
    %v3397 = vshrl.u32 %v3396, 7
    %v3398 = vsub.s32 %v3395, %v3397
    %v3399 = vrot.slane %v3216, %v3398
    %v3401 = vunpack.c.l.s4 1983009808
    %v3402 = vunpack.c.0.s8 %v3401
    %v3403 = vlaneseq
    %v3404 = vshrl.u32 %v3403, 7
    %v3405 = vsub.s32 %v3402, %v3404
    %v3406 = vrot.slane %v3392, %v3405
    %v3407 = vcombine.high %v3399, %v3399
    %v3408 = vcombine.high %v3406, %v3406
    %v3409 = vcombine.high %v3217, %v3217
    %v3411 = vunpack.c.l.s4 1983009808
    %v3412 = vunpack.c.0.s8 %v3411
    %v3413 = vlaneseq
    %v3414 = vshrl.u32 %v3413, 7
    %v3415 = vsub.s32 %v3412, %v3414
    %v3416 = vrot.slane %v3217, %v3415
    %v3418 = vunpack.c.l.s4 1983009808
    %v3419 = vunpack.c.0.s8 %v3418
    %v3420 = vlaneseq
    %v3421 = vshrl.u32 %v3420, 7
    %v3422 = vsub.s32 %v3419, %v3421
    %v3423 = vrot.slane %v3409, %v3422
    %v3424 = vcombine.high %v3416, %v3416
    %v3425 = vcombine.high %v3423, %v3423
    %v3426 = vcombine.high %v3218, %v3218
    %v3428 = vunpack.c.l.s4 1983009808
    %v3429 = vunpack.c.0.s8 %v3428
    %v3430 = vlaneseq
    %v3431 = vshrl.u32 %v3430, 7
    %v3432 = vsub.s32 %v3429, %v3431
    %v3433 = vrot.slane %v3218, %v3432
    %v3435 = vunpack.c.l.s4 1983009808
    %v3436 = vunpack.c.0.s8 %v3435
    %v3437 = vlaneseq
    %v3438 = vshrl.u32 %v3437, 7
    %v3439 = vsub.s32 %v3436, %v3438
    %v3440 = vrot.slane %v3426, %v3439
    %v3441 = vcombine.high %v3433, %v3433
    %v3442 = vcombine.high %v3440, %v3440
    %v3443 = vcombine.high %v3219, %v3219
    %v3445 = vunpack.c.l.s4 1983009808
    %v3446 = vunpack.c.0.s8 %v3445
    %v3447 = vlaneseq
    %v3448 = vshrl.u32 %v3447, 7
    %v3449 = vsub.s32 %v3446, %v3448
    %v3450 = vrot.slane %v3219, %v3449
    %v3452 = vunpack.c.l.s4 1983009808
    %v3453 = vunpack.c.0.s8 %v3452
    %v3454 = vlaneseq
    %v3455 = vshrl.u32 %v3454, 7
    %v3456 = vsub.s32 %v3453, %v3455
    %v3457 = vrot.slane %v3443, %v3456
    %v3458 = vcombine.high %v3450, %v3450
    %v3459 = vcombine.high %v3457, %v3457
    %v3460 = vcombine.high %v3220, %v3220
    %v3462 = vunpack.c.l.s4 1983009808
    %v3463 = vunpack.c.0.s8 %v3462
    %v3464 = vlaneseq
    %v3465 = vshrl.u32 %v3464, 7
    %v3466 = vsub.s32 %v3463, %v3465
    %v3467 = vrot.slane %v3220, %v3466
    %v3469 = vunpack.c.l.s4 1983009808
    %v3470 = vunpack.c.0.s8 %v3469
    %v3471 = vlaneseq
    %v3472 = vshrl.u32 %v3471, 7
    %v3473 = vsub.s32 %v3470, %v3472
    %v3474 = vrot.slane %v3460, %v3473
    %v3475 = vcombine.high %v3467, %v3467
    %v3476 = vcombine.high %v3474, %v3474
    %v3477 = vcombine.high %v3221, %v3221
    %v3479 = vunpack.c.l.s4 1983009808
    %v3480 = vunpack.c.0.s8 %v3479
    %v3481 = vlaneseq
    %v3482 = vshrl.u32 %v3481, 7
    %v3483 = vsub.s32 %v3480, %v3482
    %v3484 = vrot.slane %v3221, %v3483
    %v3486 = vunpack.c.l.s4 1983009808
    %v3487 = vunpack.c.0.s8 %v3486
    %v3488 = vlaneseq
    %v3489 = vshrl.u32 %v3488, 7
    %v3490 = vsub.s32 %v3487, %v3489
    %v3491 = vrot.slane %v3477, %v3490
    %v3492 = vcombine.high %v3484, %v3484
    %v3493 = vcombine.high %v3491, %v3491
    %v3494 = vcombine.high %v3222, %v3222
    %v3496 = vunpack.c.l.s4 1983009808
    %v3497 = vunpack.c.0.s8 %v3496
    %v3498 = vlaneseq
    %v3499 = vshrl.u32 %v3498, 7
    %v3500 = vsub.s32 %v3497, %v3499
    %v3501 = vrot.slane %v3222, %v3500
    %v3503 = vunpack.c.l.s4 1983009808
    %v3504 = vunpack.c.0.s8 %v3503
    %v3505 = vlaneseq
    %v3506 = vshrl.u32 %v3505, 7
    %v3507 = vsub.s32 %v3504, %v3506
    %v3508 = vrot.slane %v3494, %v3507
    %v3509 = vcombine.high %v3501, %v3501
    %v3510 = vcombine.high %v3508, %v3508
    %v3511 = vcombine.high %v3223, %v3223
    %v3513 = vunpack.c.l.s4 1983009808
    %v3514 = vunpack.c.0.s8 %v3513
    %v3515 = vlaneseq
    %v3516 = vshrl.u32 %v3515, 7
    %v3517 = vsub.s32 %v3514, %v3516
    %v3518 = vrot.slane %v3223, %v3517
    %v3520 = vunpack.c.l.s4 1983009808
    %v3521 = vunpack.c.0.s8 %v3520
    %v3522 = vlaneseq
    %v3523 = vshrl.u32 %v3522, 7
    %v3524 = vsub.s32 %v3521, %v3523
    %v3525 = vrot.slane %v3511, %v3524
    %v3526 = vcombine.high %v3518, %v3518
    %v3527 = vcombine.high %v3525, %v3525
    %v3528 = vcombine.high %v3224, %v3224
    %v3530 = vunpack.c.l.s4 1983009808
    %v3531 = vunpack.c.0.s8 %v3530
    %v3532 = vlaneseq
    %v3533 = vshrl.u32 %v3532, 7
    %v3534 = vsub.s32 %v3531, %v3533
    %v3535 = vrot.slane %v3224, %v3534
    %v3537 = vunpack.c.l.s4 1983009808
    %v3538 = vunpack.c.0.s8 %v3537
    %v3539 = vlaneseq
    %v3540 = vshrl.u32 %v3539, 7
    %v3541 = vsub.s32 %v3538, %v3540
    %v3542 = vrot.slane %v3528, %v3541
    %v3543 = vcombine.high %v3535, %v3535
    %v3544 = vcombine.high %v3542, %v3542
    %v3545 = vcombine.high %v3225, %v3225
    %v3547 = vunpack.c.l.s4 1983009808
    %v3548 = vunpack.c.0.s8 %v3547
    %v3549 = vlaneseq
    %v3550 = vshrl.u32 %v3549, 7
    %v3551 = vsub.s32 %v3548, %v3550
    %v3552 = vrot.slane %v3225, %v3551
    %v3554 = vunpack.c.l.s4 1983009808
    %v3555 = vunpack.c.0.s8 %v3554
    %v3556 = vlaneseq
    %v3557 = vshrl.u32 %v3556, 7
    %v3558 = vsub.s32 %v3555, %v3557
    %v3559 = vrot.slane %v3545, %v3558
    %v3560 = vcombine.high %v3552, %v3552
    %v3561 = vcombine.high %v3559, %v3559
    %v3562 = vcombine.high %v3226, %v3226
    %v3564 = vunpack.c.l.s4 1983009808
    %v3565 = vunpack.c.0.s8 %v3564
    %v3566 = vlaneseq
    %v3567 = vshrl.u32 %v3566, 7
    %v3568 = vsub.s32 %v3565, %v3567
    %v3569 = vrot.slane %v3226, %v3568
    %v3571 = vunpack.c.l.s4 1983009808
    %v3572 = vunpack.c.0.s8 %v3571
    %v3573 = vlaneseq
    %v3574 = vshrl.u32 %v3573, 7
    %v3575 = vsub.s32 %v3572, %v3574
    %v3576 = vrot.slane %v3562, %v3575
    %v3577 = vcombine.high %v3569, %v3569
    %v3578 = vcombine.high %v3576, %v3576
    %v3579 = vcombine.high %v3227, %v3227
    %v3581 = vunpack.c.l.s4 1983009808
    %v3582 = vunpack.c.0.s8 %v3581
    %v3583 = vlaneseq
    %v3584 = vshrl.u32 %v3583, 7
    %v3585 = vsub.s32 %v3582, %v3584
    %v3586 = vrot.slane %v3227, %v3585
    %v3588 = vunpack.c.l.s4 1983009808
    %v3589 = vunpack.c.0.s8 %v3588
    %v3590 = vlaneseq
    %v3591 = vshrl.u32 %v3590, 7
    %v3592 = vsub.s32 %v3589, %v3591
    %v3593 = vrot.slane %v3579, %v3592
    %v3594 = vcombine.high %v3586, %v3586
    %v3595 = vcombine.high %v3593, %v3593
    %v3596 = vcombine.high %v3228, %v3228
    %v3598 = vunpack.c.l.s4 1983009808
    %v3599 = vunpack.c.0.s8 %v3598
    %v3600 = vlaneseq
    %v3601 = vshrl.u32 %v3600, 7
    %v3602 = vsub.s32 %v3599, %v3601
    %v3603 = vrot.slane %v3228, %v3602
    %v3605 = vunpack.c.l.s4 1983009808
    %v3606 = vunpack.c.0.s8 %v3605
    %v3607 = vlaneseq
    %v3608 = vshrl.u32 %v3607, 7
    %v3609 = vsub.s32 %v3606, %v3608
    %v3610 = vrot.slane %v3596, %v3609
    %v3611 = vcombine.high %v3603, %v3603
    %v3612 = vcombine.high %v3610, %v3610
    %v3613 = vcombine.high %v3229, %v3229
    %v3615 = vunpack.c.l.s4 1983009808
    %v3616 = vunpack.c.0.s8 %v3615
    %v3617 = vlaneseq
    %v3618 = vshrl.u32 %v3617, 7
    %v3619 = vsub.s32 %v3616, %v3618
    %v3620 = vrot.slane %v3229, %v3619
    %v3622 = vunpack.c.l.s4 1983009808
    %v3623 = vunpack.c.0.s8 %v3622
    %v3624 = vlaneseq
    %v3625 = vshrl.u32 %v3624, 7
    %v3626 = vsub.s32 %v3623, %v3625
    %v3627 = vrot.slane %v3613, %v3626
    %v3628 = vcombine.high %v3620, %v3620
    %v3629 = vcombine.high %v3627, %v3627
    %v3630 = vcombine.high %v3230, %v3230
    %v3632 = vunpack.c.l.s4 1983009808
    %v3633 = vunpack.c.0.s8 %v3632
    %v3634 = vlaneseq
    %v3635 = vshrl.u32 %v3634, 7
    %v3636 = vsub.s32 %v3633, %v3635
    %v3637 = vrot.slane %v3230, %v3636
    %v3639 = vunpack.c.l.s4 1983009808
    %v3640 = vunpack.c.0.s8 %v3639
    %v3641 = vlaneseq
    %v3642 = vshrl.u32 %v3641, 7
    %v3643 = vsub.s32 %v3640, %v3642
    %v3644 = vrot.slane %v3630, %v3643
    %v3645 = vcombine.high %v3637, %v3637
    %v3646 = vcombine.high %v3644, %v3644
    %v3647 = vcombine.high %v3231, %v3231
    %v3649 = vunpack.c.l.s4 1983009808
    %v3650 = vunpack.c.0.s8 %v3649
    %v3651 = vlaneseq
    %v3652 = vshrl.u32 %v3651, 7
    %v3653 = vsub.s32 %v3650, %v3652
    %v3654 = vrot.slane %v3231, %v3653
    %v3656 = vunpack.c.l.s4 1983009808
    %v3657 = vunpack.c.0.s8 %v3656
    %v3658 = vlaneseq
    %v3659 = vshrl.u32 %v3658, 7
    %v3660 = vsub.s32 %v3657, %v3659
    %v3661 = vrot.slane %v3647, %v3660
    %v3662 = vcombine.high %v3654, %v3654
    %v3663 = vcombine.high %v3661, %v3661
    %v3760 = vrot.slane %v3263, 7
    %v3761 = vrot.slane %v3760, 2
    %v3762 = vrot.slane %v3271, 7
    %v3763 = vrot.slane %v3762, 2
    %v3764 = vrot.slane %v3270, 7
    %v3765 = vrot.slane %v3764, 2
    %v3766 = vrot.slane %v3272, 7
    %v3767 = vrot.slane %v3766, 2
    %v3768 = vrot.slane %v3280, 7
    %v3769 = vrot.slane %v3768, 2
    %v3770 = vrot.slane %v3288, 7
    %v3771 = vrot.slane %v3770, 2
    %v3772 = vrot.slane %v3287, 7
    %v3773 = vrot.slane %v3772, 2
    %v3774 = vrot.slane %v3289, 7
    %v3775 = vrot.slane %v3774, 2
    %v3776 = vrot.slane %v3297, 7
    %v3777 = vrot.slane %v3776, 2
    %v3778 = vrot.slane %v3305, 7
    %v3779 = vrot.slane %v3778, 2
    %v3780 = vrot.slane %v3304, 7
    %v3781 = vrot.slane %v3780, 2
    %v3782 = vrot.slane %v3306, 7
    %v3783 = vrot.slane %v3782, 2
    %v3784 = vrot.slane %v3314, 7
    %v3785 = vrot.slane %v3784, 2
    %v3786 = vrot.slane %v3322, 7
    %v3787 = vrot.slane %v3786, 2
    %v3788 = vrot.slane %v3321, 7
    %v3789 = vrot.slane %v3788, 2
    %v3790 = vrot.slane %v3323, 7
    %v3791 = vrot.slane %v3790, 2
    %v3792 = vrot.slane %v3331, 7
    %v3793 = vrot.slane %v3792, 2
    %v3794 = vrot.slane %v3339, 7
    %v3795 = vrot.slane %v3794, 2
    %v3796 = vrot.slane %v3338, 7
    %v3797 = vrot.slane %v3796, 2
    %v3798 = vrot.slane %v3340, 7
    %v3799 = vrot.slane %v3798, 2
    %v3800 = vrot.slane %v3348, 7
    %v3801 = vrot.slane %v3800, 2
    %v3802 = vrot.slane %v3356, 7
    %v3803 = vrot.slane %v3802, 2
    %v3804 = vrot.slane %v3355, 7
    %v3805 = vrot.slane %v3804, 2
    %v3806 = vrot.slane %v3357, 7
    %v3807 = vrot.slane %v3806, 2
    %v3808 = vrot.slane %v3365, 7
    %v3809 = vrot.slane %v3808, 2
    %v3810 = vrot.slane %v3373, 7
    %v3811 = vrot.slane %v3810, 2
    %v3812 = vrot.slane %v3372, 7
    %v3813 = vrot.slane %v3812, 2
    %v3814 = vrot.slane %v3374, 7
    %v3815 = vrot.slane %v3814, 2
    %v3816 = vrot.slane %v3382, 7
    %v3817 = vrot.slane %v3816, 2
    %v3818 = vrot.slane %v3390, 7
    %v3819 = vrot.slane %v3818, 2
    %v3820 = vrot.slane %v3389, 7
    %v3821 = vrot.slane %v3820, 2
    %v3822 = vrot.slane %v3391, 7
    %v3823 = vrot.slane %v3822, 2
    %v3824 = vrot.slane %v3399, 7
    %v3825 = vrot.slane %v3824, 2
    %v3826 = vrot.slane %v3407, 7
    %v3827 = vrot.slane %v3826, 2
    %v3828 = vrot.slane %v3406, 7
    %v3829 = vrot.slane %v3828, 2
    %v3830 = vrot.slane %v3408, 7
    %v3831 = vrot.slane %v3830, 2
    %v3832 = vrot.slane %v3416, 7
    %v3833 = vrot.slane %v3832, 2
    %v3834 = vrot.slane %v3424, 7
    %v3835 = vrot.slane %v3834, 2
    %v3836 = vrot.slane %v3423, 7
    %v3837 = vrot.slane %v3836, 2
    %v3838 = vrot.slane %v3425, 7
    %v3839 = vrot.slane %v3838, 2
    %v3840 = vrot.slane %v3433, 7
    %v3841 = vrot.slane %v3840, 2
    %v3842 = vrot.slane %v3441, 7
    %v3843 = vrot.slane %v3842, 2
    %v3844 = vrot.slane %v3440, 7
    %v3845 = vrot.slane %v3844, 2
    %v3846 = vrot.slane %v3442, 7
    %v3847 = vrot.slane %v3846, 2
    %v3848 = vrot.slane %v3450, 7
    %v3849 = vrot.slane %v3848, 2
    %v3850 = vrot.slane %v3458, 7
    %v3851 = vrot.slane %v3850, 2
    %v3852 = vrot.slane %v3457, 7
    %v3853 = vrot.slane %v3852, 2
    %v3854 = vrot.slane %v3459, 7
    %v3855 = vrot.slane %v3854, 2
    %v3856 = vrot.slane %v3467, 7
    %v3857 = vrot.slane %v3856, 2
    %v3858 = vrot.slane %v3475, 7
    %v3859 = vrot.slane %v3858, 2
    %v3860 = vrot.slane %v3474, 7
    %v3861 = vrot.slane %v3860, 2
    %v3862 = vrot.slane %v3476, 7
    %v3863 = vrot.slane %v3862, 2
    %v3864 = vrot.slane %v3484, 7
    %v3865 = vrot.slane %v3864, 2
    %v3866 = vrot.slane %v3492, 7
    %v3867 = vrot.slane %v3866, 2
    %v3868 = vrot.slane %v3491, 7
    %v3869 = vrot.slane %v3868, 2
    %v3870 = vrot.slane %v3493, 7
    %v3871 = vrot.slane %v3870, 2
    %v3872 = vrot.slane %v3501, 7
    %v3873 = vrot.slane %v3872, 2
    %v3874 = vrot.slane %v3509, 7
    %v3875 = vrot.slane %v3874, 2
    %v3876 = vrot.slane %v3508, 7
    %v3877 = vrot.slane %v3876, 2
    %v3878 = vrot.slane %v3510, 7
    %v3879 = vrot.slane %v3878, 2
    %v3880 = vrot.slane %v3518, 7
    %v3881 = vrot.slane %v3880, 2
    %v3882 = vrot.slane %v3526, 7
    %v3883 = vrot.slane %v3882, 2
    %v3884 = vrot.slane %v3525, 7
    %v3885 = vrot.slane %v3884, 2
    %v3886 = vrot.slane %v3527, 7
    %v3887 = vrot.slane %v3886, 2
    %v3888 = vrot.slane %v3535, 7
    %v3889 = vrot.slane %v3888, 2
    %v3890 = vrot.slane %v3543, 7
    %v3891 = vrot.slane %v3890, 2
    %v3892 = vrot.slane %v3542, 7
    %v3893 = vrot.slane %v3892, 2
    %v3894 = vrot.slane %v3544, 7
    %v3895 = vrot.slane %v3894, 2
    %v3896 = vrot.slane %v3552, 7
    %v3897 = vrot.slane %v3896, 2
    %v3898 = vrot.slane %v3560, 7
    %v3899 = vrot.slane %v3898, 2
    %v3900 = vrot.slane %v3559, 7
    %v3901 = vrot.slane %v3900, 2
    %v3902 = vrot.slane %v3561, 7
    %v3903 = vrot.slane %v3902, 2
    %v3904 = vrot.slane %v3569, 7
    %v3905 = vrot.slane %v3904, 2
    %v3906 = vrot.slane %v3577, 7
    %v3907 = vrot.slane %v3906, 2
    %v3908 = vrot.slane %v3576, 7
    %v3909 = vrot.slane %v3908, 2
    %v3910 = vrot.slane %v3578, 7
    %v3911 = vrot.slane %v3910, 2
    %v3912 = vrot.slane %v3586, 7
    %v3913 = vrot.slane %v3912, 2
    %v3914 = vrot.slane %v3594, 7
    %v3915 = vrot.slane %v3914, 2
    %v3916 = vrot.slane %v3593, 7
    %v3917 = vrot.slane %v3916, 2
    %v3918 = vrot.slane %v3595, 7
    %v3919 = vrot.slane %v3918, 2
    %v3920 = vrot.slane %v3603, 7
    %v3921 = vrot.slane %v3920, 2
    %v3922 = vrot.slane %v3611, 7
    %v3923 = vrot.slane %v3922, 2
    %v3924 = vrot.slane %v3610, 7
    %v3925 = vrot.slane %v3924, 2
    %v3926 = vrot.slane %v3612, 7
    %v3927 = vrot.slane %v3926, 2
    %v3928 = vrot.slane %v3620, 7
    %v3929 = vrot.slane %v3928, 2
    %v3930 = vrot.slane %v3628, 7
    %v3931 = vrot.slane %v3930, 2
    %v3932 = vrot.slane %v3627, 7
    %v3933 = vrot.slane %v3932, 2
    %v3934 = vrot.slane %v3629, 7
    %v3935 = vrot.slane %v3934, 2
    %v3936 = vrot.slane %v3637, 7
    %v3937 = vrot.slane %v3936, 2
    %v3938 = vrot.slane %v3645, 7
    %v3939 = vrot.slane %v3938, 2
    %v3940 = vrot.slane %v3644, 7
    %v3941 = vrot.slane %v3940, 2
    %v3942 = vrot.slane %v3646, 7
    %v3943 = vrot.slane %v3942, 2
    %v3944 = vrot.slane %v3654, 7
    %v3945 = vrot.slane %v3944, 2
    %v3946 = vrot.slane %v3662, 7
    %v3947 = vrot.slane %v3946, 2
    %v3948 = vrot.slane %v3661, 7
    %v3949 = vrot.slane %v3948, 2
    %v3950 = vrot.slane %v3663, 7
    %v3951 = vrot.slane %v3950, 2
    %v4048 = vmax.f32 %v3263, %v3761
    %v4049 = vmax.f32 %v3271, %v3763
    %v4050 = vmax.f32 %v3270, %v3765
    %v4051 = vmax.f32 %v3272, %v3767
    %v4052 = vmax.f32 %v3280, %v3769
    %v4053 = vmax.f32 %v3288, %v3771
    %v4054 = vmax.f32 %v3287, %v3773
    %v4055 = vmax.f32 %v3289, %v3775
    %v4056 = vmax.f32 %v3297, %v3777
    %v4057 = vmax.f32 %v3305, %v3779
    %v4058 = vmax.f32 %v3304, %v3781
    %v4059 = vmax.f32 %v3306, %v3783
    %v4060 = vmax.f32 %v3314, %v3785
    %v4061 = vmax.f32 %v3322, %v3787
    %v4062 = vmax.f32 %v3321, %v3789
    %v4063 = vmax.f32 %v3323, %v3791
    %v4064 = vmax.f32 %v3331, %v3793
    %v4065 = vmax.f32 %v3339, %v3795
    %v4066 = vmax.f32 %v3338, %v3797
    %v4067 = vmax.f32 %v3340, %v3799
    %v4068 = vmax.f32 %v3348, %v3801
    %v4069 = vmax.f32 %v3356, %v3803
    %v4070 = vmax.f32 %v3355, %v3805
    %v4071 = vmax.f32 %v3357, %v3807
    %v4072 = vmax.f32 %v3365, %v3809
    %v4073 = vmax.f32 %v3373, %v3811
    %v4074 = vmax.f32 %v3372, %v3813
    %v4075 = vmax.f32 %v3374, %v3815
    %v4076 = vmax.f32 %v3382, %v3817
    %v4077 = vmax.f32 %v3390, %v3819
    %v4078 = vmax.f32 %v3389, %v3821
    %v4079 = vmax.f32 %v3391, %v3823
    %v4080 = vmax.f32 %v3399, %v3825
    %v4081 = vmax.f32 %v3407, %v3827
    %v4082 = vmax.f32 %v3406, %v3829
    %v4083 = vmax.f32 %v3408, %v3831
    %v4084 = vmax.f32 %v3416, %v3833
    %v4085 = vmax.f32 %v3424, %v3835
    %v4086 = vmax.f32 %v3423, %v3837
    %v4087 = vmax.f32 %v3425, %v3839
    %v4088 = vmax.f32 %v3433, %v3841
    %v4089 = vmax.f32 %v3441, %v3843
    %v4090 = vmax.f32 %v3440, %v3845
    %v4091 = vmax.f32 %v3442, %v3847
    %v4092 = vmax.f32 %v3450, %v3849
    %v4093 = vmax.f32 %v3458, %v3851
    %v4094 = vmax.f32 %v3457, %v3853
    %v4095 = vmax.f32 %v3459, %v3855
    %v4096 = vmax.f32 %v3467, %v3857
    %v4097 = vmax.f32 %v3475, %v3859
    %v4098 = vmax.f32 %v3474, %v3861
    %v4099 = vmax.f32 %v3476, %v3863
    %v4100 = vmax.f32 %v3484, %v3865
    %v4101 = vmax.f32 %v3492, %v3867
    %v4102 = vmax.f32 %v3491, %v3869
    %v4103 = vmax.f32 %v3493, %v3871
    %v4104 = vmax.f32 %v3501, %v3873
    %v4105 = vmax.f32 %v3509, %v3875
    %v4106 = vmax.f32 %v3508, %v3877
    %v4107 = vmax.f32 %v3510, %v3879
    %v4108 = vmax.f32 %v3518, %v3881
    %v4109 = vmax.f32 %v3526, %v3883
    %v4110 = vmax.f32 %v3525, %v3885
    %v4111 = vmax.f32 %v3527, %v3887
    %v4112 = vmax.f32 %v3535, %v3889
    %v4113 = vmax.f32 %v3543, %v3891
    %v4114 = vmax.f32 %v3542, %v3893
    %v4115 = vmax.f32 %v3544, %v3895
    %v4116 = vmax.f32 %v3552, %v3897
    %v4117 = vmax.f32 %v3560, %v3899
    %v4118 = vmax.f32 %v3559, %v3901
    %v4119 = vmax.f32 %v3561, %v3903
    %v4120 = vmax.f32 %v3569, %v3905
    %v4121 = vmax.f32 %v3577, %v3907
    %v4122 = vmax.f32 %v3576, %v3909
    %v4123 = vmax.f32 %v3578, %v3911
    %v4124 = vmax.f32 %v3586, %v3913
    %v4125 = vmax.f32 %v3594, %v3915
    %v4126 = vmax.f32 %v3593, %v3917
    %v4127 = vmax.f32 %v3595, %v3919
    %v4128 = vmax.f32 %v3603, %v3921
    %v4129 = vmax.f32 %v3611, %v3923
    %v4130 = vmax.f32 %v3610, %v3925
    %v4131 = vmax.f32 %v3612, %v3927
    %v4132 = vmax.f32 %v3620, %v3929
    %v4133 = vmax.f32 %v3628, %v3931
    %v4134 = vmax.f32 %v3627, %v3933
    %v4135 = vmax.f32 %v3629, %v3935
    %v4136 = vmax.f32 %v3637, %v3937
    %v4137 = vmax.f32 %v3645, %v3939
    %v4138 = vmax.f32 %v3644, %v3941
    %v4139 = vmax.f32 %v3646, %v3943
    %v4140 = vmax.f32 %v3654, %v3945
    %v4141 = vmax.f32 %v3662, %v3947
    %v4142 = vmax.f32 %v3661, %v3949
    %v4143 = vmax.f32 %v3663, %v3951
    %v4144 = vmax.f32 %v4048, 0.0
    %v4145 = vmax.f32 %v4049, 0.0
    %v4146 = vmax.f32 %v4050, 0.0
    %v4147 = vmax.f32 %v4051, 0.0
    %v4148 = vmax.f32 %v4052, 0.0
    %v4149 = vmax.f32 %v4053, 0.0
    %v4150 = vmax.f32 %v4054, 0.0
    %v4151 = vmax.f32 %v4055, 0.0
    %v4152 = vmax.f32 %v4056, 0.0
    %v4153 = vmax.f32 %v4057, 0.0
    %v4154 = vmax.f32 %v4058, 0.0
    %v4155 = vmax.f32 %v4059, 0.0
    %v4156 = vmax.f32 %v4060, 0.0
    %v4157 = vmax.f32 %v4061, 0.0
    %v4158 = vmax.f32 %v4062, 0.0
    %v4159 = vmax.f32 %v4063, 0.0
    %v4160 = vmax.f32 %v4064, 0.0
    %v4161 = vmax.f32 %v4065, 0.0
    %v4162 = vmax.f32 %v4066, 0.0
    %v4163 = vmax.f32 %v4067, 0.0
    %v4164 = vmax.f32 %v4068, 0.0
    %v4165 = vmax.f32 %v4069, 0.0
    %v4166 = vmax.f32 %v4070, 0.0
    %v4167 = vmax.f32 %v4071, 0.0
    %v4168 = vmax.f32 %v4072, 0.0
    %v4169 = vmax.f32 %v4073, 0.0
    %v4170 = vmax.f32 %v4074, 0.0
    %v4171 = vmax.f32 %v4075, 0.0
    %v4172 = vmax.f32 %v4076, 0.0
    %v4173 = vmax.f32 %v4077, 0.0
    %v4174 = vmax.f32 %v4078, 0.0
    %v4175 = vmax.f32 %v4079, 0.0
    %v4176 = vmax.f32 %v4080, 0.0
    %v4177 = vmax.f32 %v4081, 0.0
    %v4178 = vmax.f32 %v4082, 0.0
    %v4179 = vmax.f32 %v4083, 0.0
    %v4180 = vmax.f32 %v4084, 0.0
    %v4181 = vmax.f32 %v4085, 0.0
    %v4182 = vmax.f32 %v4086, 0.0
    %v4183 = vmax.f32 %v4087, 0.0
    %v4184 = vmax.f32 %v4088, 0.0
    %v4185 = vmax.f32 %v4089, 0.0
    %v4186 = vmax.f32 %v4090, 0.0
    %v4187 = vmax.f32 %v4091, 0.0
    %v4188 = vmax.f32 %v4092, 0.0
    %v4189 = vmax.f32 %v4093, 0.0
    %v4190 = vmax.f32 %v4094, 0.0
    %v4191 = vmax.f32 %v4095, 0.0
    %v4192 = vmax.f32 %v4096, 0.0
    %v4193 = vmax.f32 %v4097, 0.0
    %v4194 = vmax.f32 %v4098, 0.0
    %v4195 = vmax.f32 %v4099, 0.0
    %v4196 = vmax.f32 %v4100, 0.0
    %v4197 = vmax.f32 %v4101, 0.0
    %v4198 = vmax.f32 %v4102, 0.0
    %v4199 = vmax.f32 %v4103, 0.0
    %v4200 = vmax.f32 %v4104, 0.0
    %v4201 = vmax.f32 %v4105, 0.0
    %v4202 = vmax.f32 %v4106, 0.0
    %v4203 = vmax.f32 %v4107, 0.0
    %v4204 = vmax.f32 %v4108, 0.0
    %v4205 = vmax.f32 %v4109, 0.0
    %v4206 = vmax.f32 %v4110, 0.0
    %v4207 = vmax.f32 %v4111, 0.0
    %v4208 = vmax.f32 %v4112, 0.0
    %v4209 = vmax.f32 %v4113, 0.0
    %v4210 = vmax.f32 %v4114, 0.0
    %v4211 = vmax.f32 %v4115, 0.0
    %v4212 = vmax.f32 %v4116, 0.0
    %v4213 = vmax.f32 %v4117, 0.0
    %v4214 = vmax.f32 %v4118, 0.0
    %v4215 = vmax.f32 %v4119, 0.0
    %v4216 = vmax.f32 %v4120, 0.0
    %v4217 = vmax.f32 %v4121, 0.0
    %v4218 = vmax.f32 %v4122, 0.0
    %v4219 = vmax.f32 %v4123, 0.0
    %v4220 = vmax.f32 %v4124, 0.0
    %v4221 = vmax.f32 %v4125, 0.0
    %v4222 = vmax.f32 %v4126, 0.0
    %v4223 = vmax.f32 %v4127, 0.0
    %v4224 = vmax.f32 %v4128, 0.0
    %v4225 = vmax.f32 %v4129, 0.0
    %v4226 = vmax.f32 %v4130, 0.0
    %v4227 = vmax.f32 %v4131, 0.0
    %v4228 = vmax.f32 %v4132, 0.0
    %v4229 = vmax.f32 %v4133, 0.0
    %v4230 = vmax.f32 %v4134, 0.0
    %v4231 = vmax.f32 %v4135, 0.0
    %v4232 = vmax.f32 %v4136, 0.0
    %v4233 = vmax.f32 %v4137, 0.0
    %v4234 = vmax.f32 %v4138, 0.0
    %v4235 = vmax.f32 %v4139, 0.0
    %v4236 = vmax.f32 %v4140, 0.0
    %v4237 = vmax.f32 %v4141, 0.0
    %v4238 = vmax.f32 %v4142, 0.0
    %v4239 = vmax.f32 %v4143, 0.0
    %v4240 = vpack.c.bf16 %v4144, %v4144
    %v4241 = vpack.c.bf16 %v4145, %v4145
    %v4242 = vpack.c.bf16 %v4146, %v4146
    %v4243 = vpack.c.bf16 %v4147, %v4147
    %v4244 = vpack.c.bf16 %v4148, %v4148
    %v4245 = vpack.c.bf16 %v4149, %v4149
    %v4246 = vpack.c.bf16 %v4150, %v4150
    %v4247 = vpack.c.bf16 %v4151, %v4151
    %v4248 = vpack.c.bf16 %v4152, %v4152
    %v4249 = vpack.c.bf16 %v4153, %v4153
    %v4250 = vpack.c.bf16 %v4154, %v4154
    %v4251 = vpack.c.bf16 %v4155, %v4155
    %v4252 = vpack.c.bf16 %v4156, %v4156
    %v4253 = vpack.c.bf16 %v4157, %v4157
    %v4254 = vpack.c.bf16 %v4158, %v4158
    %v4255 = vpack.c.bf16 %v4159, %v4159
    %v4256 = vpack.c.bf16 %v4160, %v4160
    %v4257 = vpack.c.bf16 %v4161, %v4161
    %v4258 = vpack.c.bf16 %v4162, %v4162
    %v4259 = vpack.c.bf16 %v4163, %v4163
    %v4260 = vpack.c.bf16 %v4164, %v4164
    %v4261 = vpack.c.bf16 %v4165, %v4165
    %v4262 = vpack.c.bf16 %v4166, %v4166
    %v4263 = vpack.c.bf16 %v4167, %v4167
    %v4264 = vpack.c.bf16 %v4168, %v4168
    %v4265 = vpack.c.bf16 %v4169, %v4169
    %v4266 = vpack.c.bf16 %v4170, %v4170
    %v4267 = vpack.c.bf16 %v4171, %v4171
    %v4268 = vpack.c.bf16 %v4172, %v4172
    %v4269 = vpack.c.bf16 %v4173, %v4173
    %v4270 = vpack.c.bf16 %v4174, %v4174
    %v4271 = vpack.c.bf16 %v4175, %v4175
    %v4272 = vpack.c.bf16 %v4176, %v4176
    %v4273 = vpack.c.bf16 %v4177, %v4177
    %v4274 = vpack.c.bf16 %v4178, %v4178
    %v4275 = vpack.c.bf16 %v4179, %v4179
    %v4276 = vpack.c.bf16 %v4180, %v4180
    %v4277 = vpack.c.bf16 %v4181, %v4181
    %v4278 = vpack.c.bf16 %v4182, %v4182
    %v4279 = vpack.c.bf16 %v4183, %v4183
    %v4280 = vpack.c.bf16 %v4184, %v4184
    %v4281 = vpack.c.bf16 %v4185, %v4185
    %v4282 = vpack.c.bf16 %v4186, %v4186
    %v4283 = vpack.c.bf16 %v4187, %v4187
    %v4284 = vpack.c.bf16 %v4188, %v4188
    %v4285 = vpack.c.bf16 %v4189, %v4189
    %v4286 = vpack.c.bf16 %v4190, %v4190
    %v4287 = vpack.c.bf16 %v4191, %v4191
    %v4288 = vpack.c.bf16 %v4192, %v4192
    %v4289 = vpack.c.bf16 %v4193, %v4193
    %v4290 = vpack.c.bf16 %v4194, %v4194
    %v4291 = vpack.c.bf16 %v4195, %v4195
    %v4292 = vpack.c.bf16 %v4196, %v4196
    %v4293 = vpack.c.bf16 %v4197, %v4197
    %v4294 = vpack.c.bf16 %v4198, %v4198
    %v4295 = vpack.c.bf16 %v4199, %v4199
    %v4296 = vpack.c.bf16 %v4200, %v4200
    %v4297 = vpack.c.bf16 %v4201, %v4201
    %v4298 = vpack.c.bf16 %v4202, %v4202
    %v4299 = vpack.c.bf16 %v4203, %v4203
    %v4300 = vpack.c.bf16 %v4204, %v4204
    %v4301 = vpack.c.bf16 %v4205, %v4205
    %v4302 = vpack.c.bf16 %v4206, %v4206
    %v4303 = vpack.c.bf16 %v4207, %v4207
    %v4304 = vpack.c.bf16 %v4208, %v4208
    %v4305 = vpack.c.bf16 %v4209, %v4209
    %v4306 = vpack.c.bf16 %v4210, %v4210
    %v4307 = vpack.c.bf16 %v4211, %v4211
    %v4308 = vpack.c.bf16 %v4212, %v4212
    %v4309 = vpack.c.bf16 %v4213, %v4213
    %v4310 = vpack.c.bf16 %v4214, %v4214
    %v4311 = vpack.c.bf16 %v4215, %v4215
    %v4312 = vpack.c.bf16 %v4216, %v4216
    %v4313 = vpack.c.bf16 %v4217, %v4217
    %v4314 = vpack.c.bf16 %v4218, %v4218
    %v4315 = vpack.c.bf16 %v4219, %v4219
    %v4316 = vpack.c.bf16 %v4220, %v4220
    %v4317 = vpack.c.bf16 %v4221, %v4221
    %v4318 = vpack.c.bf16 %v4222, %v4222
    %v4319 = vpack.c.bf16 %v4223, %v4223
    %v4320 = vpack.c.bf16 %v4224, %v4224
    %v4321 = vpack.c.bf16 %v4225, %v4225
    %v4322 = vpack.c.bf16 %v4226, %v4226
    %v4323 = vpack.c.bf16 %v4227, %v4227
    %v4324 = vpack.c.bf16 %v4228, %v4228
    %v4325 = vpack.c.bf16 %v4229, %v4229
    %v4326 = vpack.c.bf16 %v4230, %v4230
    %v4327 = vpack.c.bf16 %v4231, %v4231
    %v4328 = vpack.c.bf16 %v4232, %v4232
    %v4329 = vpack.c.bf16 %v4233, %v4233
    %v4330 = vpack.c.bf16 %v4234, %v4234
    %v4331 = vpack.c.bf16 %v4235, %v4235
    %v4332 = vpack.c.bf16 %v4236, %v4236
    %v4333 = vpack.c.bf16 %v4237, %v4237
    %v4334 = vpack.c.bf16 %v4238, %v4238
    %v4335 = vpack.c.bf16 %v4239, %v4239
    %v4336 = vld [vmem:[#allocation4] sm:$0xf]
    %v4337 = vld [vmem:[#allocation4 + $0x4] sm:$0xf]
    %v4338 = vld [vmem:[#allocation4 + $0x8] sm:$0xf]
    %v4339 = vld [vmem:[#allocation4 + $0xc] sm:$0xf]
    %v4340 = vld [vmem:[#allocation4 + $0x10] sm:$0xf]
    %v4341 = vld [vmem:[#allocation4 + $0x14] sm:$0xf]
    %v4342 = vld [vmem:[#allocation4 + $0x18] sm:$0xf]
    %v4343 = vld [vmem:[#allocation4 + $0x1c] sm:$0xf]
    %v4344 = vld [vmem:[#allocation4 + $0x20] sm:$0xf]
    %v4345 = vld [vmem:[#allocation4 + $0x24] sm:$0xf]
    %v4346 = vld [vmem:[#allocation4 + $0x28] sm:$0xf]
    %v4347 = vld [vmem:[#allocation4 + $0x2c] sm:$0xf]
    %v4348 = vld [vmem:[#allocation4 + $0x30] sm:$0xf]
    %v4349 = vld [vmem:[#allocation4 + $0x34] sm:$0xf]
    %v4350 = vld [vmem:[#allocation4 + $0x38] sm:$0xf]
    %v4351 = vld [vmem:[#allocation4 + $0x3c] sm:$0xf]
    %s4352 = scalar_lea.vmem [#allocation4], 64
    %v4353 = vld [vmem:[%s4352] sm:$0xf]
    %v4354 = vld [vmem:[%s4352 + $0x4] sm:$0xf]
    %v4355 = vld [vmem:[%s4352 + $0x8] sm:$0xf]
    %v4356 = vld [vmem:[%s4352 + $0xc] sm:$0xf]
    %v4357 = vld [vmem:[%s4352 + $0x10] sm:$0xf]
    %v4358 = vld [vmem:[%s4352 + $0x14] sm:$0xf]
    %v4359 = vld [vmem:[%s4352 + $0x18] sm:$0xf]
    %v4360 = vld [vmem:[%s4352 + $0x1c] sm:$0xf]
    %v4361 = vld [vmem:[%s4352 + $0x20] sm:$0xf]
    %v4362 = vld [vmem:[%s4352 + $0x24] sm:$0xf]
    %v4363 = vld [vmem:[%s4352 + $0x28] sm:$0xf]
    %v4364 = vld [vmem:[%s4352 + $0x2c] sm:$0xf]
    %v4365 = vld [vmem:[%s4352 + $0x30] sm:$0xf]
    %v4366 = vld [vmem:[%s4352 + $0x34] sm:$0xf]
    %v4367 = vld [vmem:[%s4352 + $0x38] sm:$0xf]
    %v4368 = vld [vmem:[%s4352 + $0x3c] sm:$0xf]
    %s4369 = scalar_lea.vmem [#allocation4], 128
    %v4370 = vld [vmem:[%s4369] sm:$0xf]
    %v4371 = vld [vmem:[%s4369 + $0x4] sm:$0xf]
    %v4372 = vld [vmem:[%s4369 + $0x8] sm:$0xf]
    %v4373 = vld [vmem:[%s4369 + $0xc] sm:$0xf]
    %v4374 = vld [vmem:[%s4369 + $0x10] sm:$0xf]
    %v4375 = vld [vmem:[%s4369 + $0x14] sm:$0xf]
    %v4376 = vld [vmem:[%s4369 + $0x18] sm:$0xf]
    %v4377 = vld [vmem:[%s4369 + $0x1c] sm:$0xf]
    %v4378 = vld [vmem:[%s4369 + $0x20] sm:$0xf]
    %v4379 = vld [vmem:[%s4369 + $0x24] sm:$0xf]
    %v4380 = vld [vmem:[%s4369 + $0x28] sm:$0xf]
    %v4381 = vld [vmem:[%s4369 + $0x2c] sm:$0xf]
    %v4382 = vld [vmem:[%s4369 + $0x30] sm:$0xf]
    %v4383 = vld [vmem:[%s4369 + $0x34] sm:$0xf]
    %v4384 = vld [vmem:[%s4369 + $0x38] sm:$0xf]
    %v4385 = vld [vmem:[%s4369 + $0x3c] sm:$0xf]
    %v4450 = vunpack.c.l.b16 %v4241
    %v4451 = vunpack.c.l.b16 %v4242
    %v4452 = vunpack.c.l.b16 %v4243
    %v4453 = vunpack.c.l.b16 %v4244
    %v4454 = vunpack.c.l.b16 %v4245
    %v4455 = vunpack.c.l.b16 %v4246
    %v4456 = vunpack.c.l.b16 %v4247
    %v4457 = vunpack.c.l.b16 %v4248
    %v4458 = vunpack.c.l.b16 %v4253
    %v4459 = vunpack.c.l.b16 %v4254
    %v4460 = vunpack.c.l.b16 %v4255
    %v4461 = vunpack.c.l.b16 %v4256
    %v4462 = vunpack.c.l.b16 %v4257
    %v4463 = vunpack.c.l.b16 %v4258
    %v4464 = vunpack.c.l.b16 %v4259
    %v4465 = vunpack.c.l.b16 %v4260
    %v4466 = vunpack.c.l.b16 %v4265
    %v4467 = vunpack.c.l.b16 %v4266
    %v4468 = vunpack.c.l.b16 %v4267
    %v4469 = vunpack.c.l.b16 %v4268
    %v4470 = vunpack.c.l.b16 %v4269
    %v4471 = vunpack.c.l.b16 %v4270
    %v4472 = vunpack.c.l.b16 %v4271
    %v4473 = vunpack.c.l.b16 %v4272
    %v4474 = vunpack.c.l.b16 %v4277
    %v4475 = vunpack.c.l.b16 %v4278
    %v4476 = vunpack.c.l.b16 %v4279
    %v4477 = vunpack.c.l.b16 %v4280
    %v4478 = vunpack.c.l.b16 %v4281
    %v4479 = vunpack.c.l.b16 %v4282
    %v4480 = vunpack.c.l.b16 %v4283
    %v4481 = vunpack.c.l.b16 %v4284
    %v4482 = vunpack.c.l.b16 %v4289
    %v4483 = vunpack.c.l.b16 %v4290
    %v4484 = vunpack.c.l.b16 %v4291
    %v4485 = vunpack.c.l.b16 %v4292
    %v4486 = vunpack.c.l.b16 %v4293
    %v4487 = vunpack.c.l.b16 %v4294
    %v4488 = vunpack.c.l.b16 %v4295
    %v4489 = vunpack.c.l.b16 %v4296
    %v4490 = vunpack.c.l.b16 %v4301
    %v4491 = vunpack.c.l.b16 %v4302
    %v4492 = vunpack.c.l.b16 %v4303
    %v4493 = vunpack.c.l.b16 %v4304
    %v4494 = vunpack.c.l.b16 %v4305
    %v4495 = vunpack.c.l.b16 %v4306
    %v4496 = vunpack.c.l.b16 %v4307
    %v4497 = vunpack.c.l.b16 %v4308
    %v4498 = vunpack.c.l.b16 %v4313
    %v4499 = vunpack.c.l.b16 %v4314
    %v4500 = vunpack.c.l.b16 %v4315
    %v4501 = vunpack.c.l.b16 %v4316
    %v4502 = vunpack.c.l.b16 %v4317
    %v4503 = vunpack.c.l.b16 %v4318
    %v4504 = vunpack.c.l.b16 %v4319
    %v4505 = vunpack.c.l.b16 %v4320
    %v4506 = vunpack.c.l.b16 %v4325
    %v4507 = vunpack.c.l.b16 %v4326
    %v4508 = vunpack.c.l.b16 %v4327
    %v4509 = vunpack.c.l.b16 %v4328
    %v4510 = vunpack.c.l.b16 %v4329
    %v4511 = vunpack.c.l.b16 %v4330
    %v4512 = vunpack.c.l.b16 %v4331
    %v4513 = vunpack.c.l.b16 %v4332
    %v4514 = vrot.slane %v4451, 7
    %vm4515 = vcmask 1041409
    %v4516 = vsel %vm4515, %v4514, %v4450
    %v4517 = vrot.slane %v4452, 6
    %vm4518 = vcmask 1042434
    %v4519 = vsel %vm4518, %v4517, %v4516
    %v4520 = vrot.slane %v4453, 5
    %vm4521 = vcmask 1043459
    %v4522 = vsel %vm4521, %v4520, %v4519
    %v4523 = vrot.slane %v4454, 4
    %vm4524 = vcmask 1044484
    %v4525 = vsel %vm4524, %v4523, %v4522
    %v4526 = vrot.slane %v4455, 3
    %vm4527 = vcmask 1045509
    %v4528 = vsel %vm4527, %v4526, %v4525
    %v4529 = vrot.slane %v4456, 2
    %vm4530 = vcmask 1046534
    %v4531 = vsel %vm4530, %v4529, %v4528
    %v4532 = vrot.slane %v4457, 1
    %vm4533 = vcmask 1047559
    %v4534 = vsel %vm4533, %v4532, %v4531
    %v4535 = vrot.slane %v4459, 7
    %v4536 = vsel %vm4515, %v4535, %v4458
    %v4537 = vrot.slane %v4460, 6
    %v4538 = vsel %vm4518, %v4537, %v4536
    %v4539 = vrot.slane %v4461, 5
    %v4540 = vsel %vm4521, %v4539, %v4538
    %v4541 = vrot.slane %v4462, 4
    %v4542 = vsel %vm4524, %v4541, %v4540
    %v4543 = vrot.slane %v4463, 3
    %v4544 = vsel %vm4527, %v4543, %v4542
    %v4545 = vrot.slane %v4464, 2
    %v4546 = vsel %vm4530, %v4545, %v4544
    %v4547 = vrot.slane %v4465, 1
    %v4548 = vsel %vm4533, %v4547, %v4546
    %v4549 = vrot.slane %v4467, 7
    %v4550 = vsel %vm4515, %v4549, %v4466
    %v4551 = vrot.slane %v4468, 6
    %v4552 = vsel %vm4518, %v4551, %v4550
    %v4553 = vrot.slane %v4469, 5
    %v4554 = vsel %vm4521, %v4553, %v4552
    %v4555 = vrot.slane %v4470, 4
    %v4556 = vsel %vm4524, %v4555, %v4554
    %v4557 = vrot.slane %v4471, 3
    %v4558 = vsel %vm4527, %v4557, %v4556
    %v4559 = vrot.slane %v4472, 2
    %v4560 = vsel %vm4530, %v4559, %v4558
    %v4561 = vrot.slane %v4473, 1
    %v4562 = vsel %vm4533, %v4561, %v4560
    %v4563 = vrot.slane %v4475, 7
    %v4564 = vsel %vm4515, %v4563, %v4474
    %v4565 = vrot.slane %v4476, 6
    %v4566 = vsel %vm4518, %v4565, %v4564
    %v4567 = vrot.slane %v4477, 5
    %v4568 = vsel %vm4521, %v4567, %v4566
    %v4569 = vrot.slane %v4478, 4
    %v4570 = vsel %vm4524, %v4569, %v4568
    %v4571 = vrot.slane %v4479, 3
    %v4572 = vsel %vm4527, %v4571, %v4570
    %v4573 = vrot.slane %v4480, 2
    %v4574 = vsel %vm4530, %v4573, %v4572
    %v4575 = vrot.slane %v4481, 1
    %v4576 = vsel %vm4533, %v4575, %v4574
    %v4577 = vrot.slane %v4483, 7
    %v4578 = vsel %vm4515, %v4577, %v4482
    %v4579 = vrot.slane %v4484, 6
    %v4580 = vsel %vm4518, %v4579, %v4578
    %v4581 = vrot.slane %v4485, 5
    %v4582 = vsel %vm4521, %v4581, %v4580
    %v4583 = vrot.slane %v4486, 4
    %v4584 = vsel %vm4524, %v4583, %v4582
    %v4585 = vrot.slane %v4487, 3
    %v4586 = vsel %vm4527, %v4585, %v4584
    %v4587 = vrot.slane %v4488, 2
    %v4588 = vsel %vm4530, %v4587, %v4586
    %v4589 = vrot.slane %v4489, 1
    %v4590 = vsel %vm4533, %v4589, %v4588
    %v4591 = vrot.slane %v4491, 7
    %v4592 = vsel %vm4515, %v4591, %v4490
    %v4593 = vrot.slane %v4492, 6
    %v4594 = vsel %vm4518, %v4593, %v4592
    %v4595 = vrot.slane %v4493, 5
    %v4596 = vsel %vm4521, %v4595, %v4594
    %v4597 = vrot.slane %v4494, 4
    %v4598 = vsel %vm4524, %v4597, %v4596
    %v4599 = vrot.slane %v4495, 3
    %v4600 = vsel %vm4527, %v4599, %v4598
    %v4601 = vrot.slane %v4496, 2
    %v4602 = vsel %vm4530, %v4601, %v4600
    %v4603 = vrot.slane %v4497, 1
    %v4604 = vsel %vm4533, %v4603, %v4602
    %v4605 = vrot.slane %v4499, 7
    %v4606 = vsel %vm4515, %v4605, %v4498
    %v4607 = vrot.slane %v4500, 6
    %v4608 = vsel %vm4518, %v4607, %v4606
    %v4609 = vrot.slane %v4501, 5
    %v4610 = vsel %vm4521, %v4609, %v4608
    %v4611 = vrot.slane %v4502, 4
    %v4612 = vsel %vm4524, %v4611, %v4610
    %v4613 = vrot.slane %v4503, 3
    %v4614 = vsel %vm4527, %v4613, %v4612
    %v4615 = vrot.slane %v4504, 2
    %v4616 = vsel %vm4530, %v4615, %v4614
    %v4617 = vrot.slane %v4505, 1
    %v4618 = vsel %vm4533, %v4617, %v4616
    %v4619 = vrot.slane %v4507, 7
    %v4620 = vsel %vm4515, %v4619, %v4506
    %v4621 = vrot.slane %v4508, 6
    %v4622 = vsel %vm4518, %v4621, %v4620
    %v4623 = vrot.slane %v4509, 5
    %v4624 = vsel %vm4521, %v4623, %v4622
    %v4625 = vrot.slane %v4510, 4
    %v4626 = vsel %vm4524, %v4625, %v4624
    %v4627 = vrot.slane %v4511, 3
    %v4628 = vsel %vm4527, %v4627, %v4626
    %v4629 = vrot.slane %v4512, 2
    %v4630 = vsel %vm4530, %v4629, %v4628
    %v4631 = vrot.slane %v4513, 1
    %v4632 = vsel %vm4533, %v4631, %v4630
    %v4633 = vpack.c.b16 %v4548, %v4534
    %v4634 = vpack.c.b16 %v4576, %v4562
    %v4635 = vpack.c.b16 %v4604, %v4590
    %v4636 = vpack.c.b16 %v4632, %v4618
    %v4657 = vunpack.c.l.b16 %v4370
    %v4658 = vunpack.c.l.b16 %v4371
    %v4659 = vunpack.c.l.b16 %v4372
    %v4660 = vunpack.c.l.b16 %v4373
    %v4661 = vunpack.c.l.b16 %v4374
    %v4662 = vunpack.c.l.b16 %v4375
    %v4663 = vunpack.c.l.b16 %v4376
    %v4664 = vunpack.c.l.b16 %v4377
    %v4665 = vunpack.c.l.b16 %v4378
    %v4666 = vunpack.c.l.b16 %v4379
    %v4667 = vunpack.c.l.b16 %v4380
    %v4668 = vunpack.c.l.b16 %v4381
    %v4669 = vunpack.c.l.b16 %v4382
    %v4670 = vunpack.c.l.b16 %v4383
    %v4671 = vunpack.c.l.b16 %v4384
    %v4672 = vunpack.c.l.b16 %v4385
    %v4673 = vpack.c.b16 %v4658, %v4657
    %v4674 = vpack.c.b16 %v4660, %v4659
    %v4675 = vpack.c.b16 %v4662, %v4661
    %v4676 = vpack.c.b16 %v4664, %v4663
    %v4677 = vpack.c.b16 %v4666, %v4665
    %v4678 = vpack.c.b16 %v4668, %v4667
    %v4679 = vpack.c.b16 %v4670, %v4669
    %v4680 = vpack.c.b16 %v4672, %v4671
    %4689 = vmatprep.subr.bf16.mxu0 0
    %4690 = vmatpush1.bf16.msra.mxu0 %v4673
    %4691 = vmatprep.subr.bf16.mxu0 0
    %4692 = vmatpush1.bf16.msra.mxu0 %v4674
    %4693 = vmatprep.subr.bf16.mxu0 0
    %4694 = vmatpush1.bf16.msra.mxu0 %v4675
    %4695 = vmatprep.subr.bf16.mxu0 0
    %4696 = vmatpush1.bf16.msra.mxu0 %v4676
    %4697 = vmatprep.subr.bf16.mxu0 0
    %4698 = vmatpush1.bf16.msra.mxu0 %v4677
    %4699 = vmatprep.subr.bf16.mxu0 0
    %4700 = vmatpush1.bf16.msra.mxu0 %v4678
    %4701 = vmatprep.subr.bf16.mxu0 0
    %4702 = vmatpush1.bf16.msra.mxu0 %v4679
    %4703 = vmatprep.subr.bf16.mxu0 0
    %4704 = vmatpush1.bf16.msra.mxu0 %v4680
    %4705 = vmatprep.subr.bf16.mxu0 0
    %4706 = vmatpush1.bf16.msra.mxu0 0
    %4707 = vmatprep.subr.bf16.mxu0 0
    %4708 = vmatpush1.bf16.msra.mxu0 0
    %4709 = vmatprep.subr.bf16.mxu0 0
    %4710 = vmatpush1.bf16.msra.mxu0 0
    %4711 = vmatprep.subr.bf16.mxu0 0
    %4712 = vmatpush1.bf16.msra.mxu0 0
    %4713 = vmatprep.subr.bf16.mxu0 0
    %4714 = vmatpush1.bf16.msra.mxu0 0
    %4715 = vmatprep.subr.bf16.mxu0 0
    %4716 = vmatpush1.bf16.msra.mxu0 0
    %4717 = vmatprep.subr.bf16.mxu0 0
    %4718 = vmatpush1.bf16.msra.mxu0 0
    %4719 = vmatprep.subr.bf16.mxu0 0
    %4720 = vmatpush1.bf16.msra.mxu0 0
    %4721 = vmatprep.mubr.bf16.mxu0 0
    %4722 = vmatmul.mubr.bf16.gmra.mrb[0].mxu0 %v4633
    %v4723 = vpop.f32.mrb[0].mxu0
    %v4724 = vadd.f32 0.0, %v4723
    %v4725 = vpop.f32.mrb[0].mxu0
    %v4726 = vpop.f32.mrb[0].mxu0
    %v4727 = vadd.f32 0.0, %v4726
    %v4728 = vpop.f32.mrb[0].mxu0
    %4729 = vmatprep.mubr.bf16.mxu0 0
    %4730 = vmatmul.mubr.bf16.gmra.mrb[0].mxu0 %v4634
    %v4731 = vpop.f32.mrb[0].mxu0
    %v4732 = vadd.f32 0.0, %v4731
    %v4733 = vpop.f32.mrb[0].mxu0
    %v4734 = vpop.f32.mrb[0].mxu0
    %v4735 = vadd.f32 0.0, %v4734
    %v4736 = vpop.f32.mrb[0].mxu0
    %4737 = vmatprep.mubr.bf16.mxu0 0
    %4738 = vmatmul.mubr.bf16.gmra.mrb[0].mxu0 %v4635
    %v4739 = vpop.f32.mrb[0].mxu0
    %v4740 = vadd.f32 0.0, %v4739
    %v4741 = vpop.f32.mrb[0].mxu0
    %v4742 = vpop.f32.mrb[0].mxu0
    %v4743 = vadd.f32 0.0, %v4742
    %v4744 = vpop.f32.mrb[0].mxu0
    %4745 = vmatprep.mubr.bf16.mxu0 0
    %4746 = vmatmul.mubr.bf16.gmra.mrb[0].mxu0 %v4636
    %v4747 = vpop.f32.mrb[0].mxu0
    %v4748 = vadd.f32 0.0, %v4747
    %v4749 = vpop.f32.mrb[0].mxu0
    %v4750 = vpop.f32.mrb[0].mxu0
    %v4751 = vadd.f32 0.0, %v4750
    %v4752 = vpop.f32.mrb[0].mxu0
    %4753 = vdwg.mxu0
    %v4762 = vunpack.c.l.b16 %v4240
    %v4763 = vunpack.c.l.b16 %v4252
    %v4764 = vunpack.c.l.b16 %v4264
    %v4765 = vunpack.c.l.b16 %v4276
    %v4766 = vunpack.c.l.b16 %v4288
    %v4767 = vunpack.c.l.b16 %v4300
    %v4768 = vunpack.c.l.b16 %v4312
    %v4769 = vunpack.c.l.b16 %v4324
    %v4770 = vrot.slane %v4450, 7
    %v4771 = vsel %vm4515, %v4770, %v4762
    %v4772 = vrot.slane %v4451, 6
    %v4773 = vsel %vm4518, %v4772, %v4771
    %v4774 = vrot.slane %v4452, 5
    %v4775 = vsel %vm4521, %v4774, %v4773
    %v4776 = vrot.slane %v4453, 4
    %v4777 = vsel %vm4524, %v4776, %v4775
    %v4778 = vrot.slane %v4454, 3
    %v4779 = vsel %vm4527, %v4778, %v4777
    %v4780 = vrot.slane %v4455, 2
    %v4781 = vsel %vm4530, %v4780, %v4779
    %v4782 = vrot.slane %v4456, 1
    %v4783 = vsel %vm4533, %v4782, %v4781
    %v4784 = vrot.slane %v4458, 7
    %v4785 = vsel %vm4515, %v4784, %v4763
    %v4786 = vrot.slane %v4459, 6
    %v4787 = vsel %vm4518, %v4786, %v4785
    %v4788 = vrot.slane %v4460, 5
    %v4789 = vsel %vm4521, %v4788, %v4787
    %v4790 = vrot.slane %v4461, 4
    %v4791 = vsel %vm4524, %v4790, %v4789
    %v4792 = vrot.slane %v4462, 3
    %v4793 = vsel %vm4527, %v4792, %v4791
    %v4794 = vrot.slane %v4463, 2
    %v4795 = vsel %vm4530, %v4794, %v4793
    %v4796 = vrot.slane %v4464, 1
    %v4797 = vsel %vm4533, %v4796, %v4795
    %v4798 = vrot.slane %v4466, 7
    %v4799 = vsel %vm4515, %v4798, %v4764
    %v4800 = vrot.slane %v4467, 6
    %v4801 = vsel %vm4518, %v4800, %v4799
    %v4802 = vrot.slane %v4468, 5
    %v4803 = vsel %vm4521, %v4802, %v4801
    %v4804 = vrot.slane %v4469, 4
    %v4805 = vsel %vm4524, %v4804, %v4803
    %v4806 = vrot.slane %v4470, 3
    %v4807 = vsel %vm4527, %v4806, %v4805
    %v4808 = vrot.slane %v4471, 2
    %v4809 = vsel %vm4530, %v4808, %v4807
    %v4810 = vrot.slane %v4472, 1
    %v4811 = vsel %vm4533, %v4810, %v4809
    %v4812 = vrot.slane %v4474, 7
    %v4813 = vsel %vm4515, %v4812, %v4765
    %v4814 = vrot.slane %v4475, 6
    %v4815 = vsel %vm4518, %v4814, %v4813
    %v4816 = vrot.slane %v4476, 5
    %v4817 = vsel %vm4521, %v4816, %v4815
    %v4818 = vrot.slane %v4477, 4
    %v4819 = vsel %vm4524, %v4818, %v4817
    %v4820 = vrot.slane %v4478, 3
    %v4821 = vsel %vm4527, %v4820, %v4819
    %v4822 = vrot.slane %v4479, 2
    %v4823 = vsel %vm4530, %v4822, %v4821
    %v4824 = vrot.slane %v4480, 1
    %v4825 = vsel %vm4533, %v4824, %v4823
    %v4826 = vrot.slane %v4482, 7
    %v4827 = vsel %vm4515, %v4826, %v4766
    %v4828 = vrot.slane %v4483, 6
    %v4829 = vsel %vm4518, %v4828, %v4827
    %v4830 = vrot.slane %v4484, 5
    %v4831 = vsel %vm4521, %v4830, %v4829
    %v4832 = vrot.slane %v4485, 4
    %v4833 = vsel %vm4524, %v4832, %v4831
    %v4834 = vrot.slane %v4486, 3
    %v4835 = vsel %vm4527, %v4834, %v4833
    %v4836 = vrot.slane %v4487, 2
    %v4837 = vsel %vm4530, %v4836, %v4835
    %v4838 = vrot.slane %v4488, 1
    %v4839 = vsel %vm4533, %v4838, %v4837
    %v4840 = vrot.slane %v4490, 7
    %v4841 = vsel %vm4515, %v4840, %v4767
    %v4842 = vrot.slane %v4491, 6
    %v4843 = vsel %vm4518, %v4842, %v4841
    %v4844 = vrot.slane %v4492, 5
    %v4845 = vsel %vm4521, %v4844, %v4843
    %v4846 = vrot.slane %v4493, 4
    %v4847 = vsel %vm4524, %v4846, %v4845
    %v4848 = vrot.slane %v4494, 3
    %v4849 = vsel %vm4527, %v4848, %v4847
    %v4850 = vrot.slane %v4495, 2
    %v4851 = vsel %vm4530, %v4850, %v4849
    %v4852 = vrot.slane %v4496, 1
    %v4853 = vsel %vm4533, %v4852, %v4851
    %v4854 = vrot.slane %v4498, 7
    %v4855 = vsel %vm4515, %v4854, %v4768
    %v4856 = vrot.slane %v4499, 6
    %v4857 = vsel %vm4518, %v4856, %v4855
    %v4858 = vrot.slane %v4500, 5
    %v4859 = vsel %vm4521, %v4858, %v4857
    %v4860 = vrot.slane %v4501, 4
    %v4861 = vsel %vm4524, %v4860, %v4859
    %v4862 = vrot.slane %v4502, 3
    %v4863 = vsel %vm4527, %v4862, %v4861
    %v4864 = vrot.slane %v4503, 2
    %v4865 = vsel %vm4530, %v4864, %v4863
    %v4866 = vrot.slane %v4504, 1
    %v4867 = vsel %vm4533, %v4866, %v4865
    %v4868 = vrot.slane %v4506, 7
    %v4869 = vsel %vm4515, %v4868, %v4769
    %v4870 = vrot.slane %v4507, 6
    %v4871 = vsel %vm4518, %v4870, %v4869
    %v4872 = vrot.slane %v4508, 5
    %v4873 = vsel %vm4521, %v4872, %v4871
    %v4874 = vrot.slane %v4509, 4
    %v4875 = vsel %vm4524, %v4874, %v4873
    %v4876 = vrot.slane %v4510, 3
    %v4877 = vsel %vm4527, %v4876, %v4875
    %v4878 = vrot.slane %v4511, 2
    %v4879 = vsel %vm4530, %v4878, %v4877
    %v4880 = vrot.slane %v4512, 1
    %v4881 = vsel %vm4533, %v4880, %v4879
    %v4882 = vpack.c.b16 %v4797, %v4783
    %v4883 = vpack.c.b16 %v4825, %v4811
    %v4884 = vpack.c.b16 %v4853, %v4839
    %v4885 = vpack.c.b16 %v4881, %v4867
    %v4906 = vunpack.c.l.b16 %v4336
    %v4907 = vunpack.c.l.b16 %v4337
    %v4908 = vunpack.c.l.b16 %v4338
    %v4909 = vunpack.c.l.b16 %v4339
    %v4910 = vunpack.c.l.b16 %v4340
    %v4911 = vunpack.c.l.b16 %v4341
    %v4912 = vunpack.c.l.b16 %v4342
    %v4913 = vunpack.c.l.b16 %v4343
    %v4914 = vunpack.c.l.b16 %v4344
    %v4915 = vunpack.c.l.b16 %v4345
    %v4916 = vunpack.c.l.b16 %v4346
    %v4917 = vunpack.c.l.b16 %v4347
    %v4918 = vunpack.c.l.b16 %v4348
    %v4919 = vunpack.c.l.b16 %v4349
    %v4920 = vunpack.c.l.b16 %v4350
    %v4921 = vunpack.c.l.b16 %v4351
    %v4922 = vpack.c.b16 %v4907, %v4906
    %v4923 = vpack.c.b16 %v4909, %v4908
    %v4924 = vpack.c.b16 %v4911, %v4910
    %v4925 = vpack.c.b16 %v4913, %v4912
    %v4926 = vpack.c.b16 %v4915, %v4914
    %v4927 = vpack.c.b16 %v4917, %v4916
    %v4928 = vpack.c.b16 %v4919, %v4918
    %v4929 = vpack.c.b16 %v4921, %v4920
    %4938 = vmatprep.subr.bf16.mxu0 0
    %4939 = vmatpush1.bf16.msra.mxu0 %v4922
    %4940 = vmatprep.subr.bf16.mxu0 0
    %4941 = vmatpush1.bf16.msra.mxu0 %v4923
    %4942 = vmatprep.subr.bf16.mxu0 0
    %4943 = vmatpush1.bf16.msra.mxu0 %v4924
    %4944 = vmatprep.subr.bf16.mxu0 0
    %4945 = vmatpush1.bf16.msra.mxu0 %v4925
    %4946 = vmatprep.subr.bf16.mxu0 0
    %4947 = vmatpush1.bf16.msra.mxu0 %v4926
    %4948 = vmatprep.subr.bf16.mxu0 0
    %4949 = vmatpush1.bf16.msra.mxu0 %v4927
    %4950 = vmatprep.subr.bf16.mxu0 0
    %4951 = vmatpush1.bf16.msra.mxu0 %v4928
    %4952 = vmatprep.subr.bf16.mxu0 0
    %4953 = vmatpush1.bf16.msra.mxu0 %v4929
    %4954 = vmatprep.subr.bf16.mxu0 0
    %4955 = vmatpush1.bf16.msra.mxu0 0
    %4956 = vmatprep.subr.bf16.mxu0 0
    %4957 = vmatpush1.bf16.msra.mxu0 0
    %4958 = vmatprep.subr.bf16.mxu0 0
    %4959 = vmatpush1.bf16.msra.mxu0 0
    %4960 = vmatprep.subr.bf16.mxu0 0
    %4961 = vmatpush1.bf16.msra.mxu0 0
    %4962 = vmatprep.subr.bf16.mxu0 0
    %4963 = vmatpush1.bf16.msra.mxu0 0
    %4964 = vmatprep.subr.bf16.mxu0 0
    %4965 = vmatpush1.bf16.msra.mxu0 0
    %4966 = vmatprep.subr.bf16.mxu0 0
    %4967 = vmatpush1.bf16.msra.mxu0 0
    %4968 = vmatprep.subr.bf16.mxu0 0
    %4969 = vmatpush1.bf16.msra.mxu0 0
    %4970 = vmatprep.mubr.bf16.mxu0 0
    %4971 = vmatmul.mubr.bf16.gmra.mrb[0].mxu0 %v4882
    %v4972 = vpop.f32.mrb[0].mxu0
    %v4973 = vadd.f32 %v4724, %v4972
    %v4974 = vpop.f32.mrb[0].mxu0
    %v4975 = vpop.f32.mrb[0].mxu0
    %v4976 = vadd.f32 %v4727, %v4975
    %v4977 = vpop.f32.mrb[0].mxu0
    %4978 = vmatprep.mubr.bf16.mxu0 0
    %4979 = vmatmul.mubr.bf16.gmra.mrb[0].mxu0 %v4883
    %v4980 = vpop.f32.mrb[0].mxu0
    %v4981 = vadd.f32 %v4732, %v4980
    %v4982 = vpop.f32.mrb[0].mxu0
    %v4983 = vpop.f32.mrb[0].mxu0
    %v4984 = vadd.f32 %v4735, %v4983
    %v4985 = vpop.f32.mrb[0].mxu0
    %4986 = vmatprep.mubr.bf16.mxu0 0
    %4987 = vmatmul.mubr.bf16.gmra.mrb[0].mxu0 %v4884
    %v4988 = vpop.f32.mrb[0].mxu0
    %v4989 = vadd.f32 %v4740, %v4988
    %v4990 = vpop.f32.mrb[0].mxu0
    %v4991 = vpop.f32.mrb[0].mxu0
    %v4992 = vadd.f32 %v4743, %v4991
    %v4993 = vpop.f32.mrb[0].mxu0
    %4994 = vmatprep.mubr.bf16.mxu0 0
    %4995 = vmatmul.mubr.bf16.gmra.mrb[0].mxu0 %v4885
    %v4996 = vpop.f32.mrb[0].mxu0
    %v4997 = vadd.f32 %v4748, %v4996
    %v4998 = vpop.f32.mrb[0].mxu0
    %v4999 = vpop.f32.mrb[0].mxu0
    %v5000 = vadd.f32 %v4751, %v4999
    %v5001 = vpop.f32.mrb[0].mxu0
    %5002 = vdwg.mxu0
    %s5003 = scalar_lea.vmem [#allocation4], 192
    %v5004 = vld [vmem:[%s5003] sm:$0xf]
    %v5005 = vld [vmem:[%s5003 + $0x4] sm:$0xf]
    %v5006 = vld [vmem:[%s5003 + $0x8] sm:$0xf]
    %v5007 = vld [vmem:[%s5003 + $0xc] sm:$0xf]
    %v5008 = vld [vmem:[%s5003 + $0x10] sm:$0xf]
    %v5009 = vld [vmem:[%s5003 + $0x14] sm:$0xf]
    %v5010 = vld [vmem:[%s5003 + $0x18] sm:$0xf]
    %v5011 = vld [vmem:[%s5003 + $0x1c] sm:$0xf]
    %v5012 = vld [vmem:[%s5003 + $0x20] sm:$0xf]
    %v5013 = vld [vmem:[%s5003 + $0x24] sm:$0xf]
    %v5014 = vld [vmem:[%s5003 + $0x28] sm:$0xf]
    %v5015 = vld [vmem:[%s5003 + $0x2c] sm:$0xf]
    %v5016 = vld [vmem:[%s5003 + $0x30] sm:$0xf]
    %v5017 = vld [vmem:[%s5003 + $0x34] sm:$0xf]
    %v5018 = vld [vmem:[%s5003 + $0x38] sm:$0xf]
    %v5019 = vld [vmem:[%s5003 + $0x3c] sm:$0xf]
    %v5036 = vunpack.c.l.b16 %v5004
    %v5037 = vunpack.c.l.b16 %v5005
    %v5038 = vunpack.c.l.b16 %v5006
    %v5039 = vunpack.c.l.b16 %v5007
    %v5040 = vunpack.c.l.b16 %v5008
    %v5041 = vunpack.c.l.b16 %v5009
    %v5042 = vunpack.c.l.b16 %v5010
    %v5043 = vunpack.c.l.b16 %v5011
    %v5044 = vunpack.c.l.b16 %v5012
    %v5045 = vunpack.c.l.b16 %v5013
    %v5046 = vunpack.c.l.b16 %v5014
    %v5047 = vunpack.c.l.b16 %v5015
    %v5048 = vunpack.c.l.b16 %v5016
    %v5049 = vunpack.c.l.b16 %v5017
    %v5050 = vunpack.c.l.b16 %v5018
    %v5051 = vunpack.c.l.b16 %v5019
    %v5052 = vpack.c.b16 %v5037, %v5036
    %v5053 = vpack.c.b16 %v5039, %v5038
    %v5054 = vpack.c.b16 %v5041, %v5040
    %v5055 = vpack.c.b16 %v5043, %v5042
    %v5056 = vpack.c.b16 %v5045, %v5044
    %v5057 = vpack.c.b16 %v5047, %v5046
    %v5058 = vpack.c.b16 %v5049, %v5048
    %v5059 = vpack.c.b16 %v5051, %v5050
    %5068 = vmatprep.subr.bf16.mxu0 0
    %5069 = vmatpush1.bf16.msra.mxu0 %v5052
    %5070 = vmatprep.subr.bf16.mxu0 0
    %5071 = vmatpush1.bf16.msra.mxu0 %v5053
    %5072 = vmatprep.subr.bf16.mxu0 0
    %5073 = vmatpush1.bf16.msra.mxu0 %v5054
    %5074 = vmatprep.subr.bf16.mxu0 0
    %5075 = vmatpush1.bf16.msra.mxu0 %v5055
    %5076 = vmatprep.subr.bf16.mxu0 0
    %5077 = vmatpush1.bf16.msra.mxu0 %v5056
    %5078 = vmatprep.subr.bf16.mxu0 0
    %5079 = vmatpush1.bf16.msra.mxu0 %v5057
    %5080 = vmatprep.subr.bf16.mxu0 0
    %5081 = vmatpush1.bf16.msra.mxu0 %v5058
    %5082 = vmatprep.subr.bf16.mxu0 0
    %5083 = vmatpush1.bf16.msra.mxu0 %v5059
    %5084 = vmatprep.subr.bf16.mxu0 0
    %5085 = vmatpush1.bf16.msra.mxu0 0
    %5086 = vmatprep.subr.bf16.mxu0 0
    %5087 = vmatpush1.bf16.msra.mxu0 0
    %5088 = vmatprep.subr.bf16.mxu0 0
    %5089 = vmatpush1.bf16.msra.mxu0 0
    %5090 = vmatprep.subr.bf16.mxu0 0
    %5091 = vmatpush1.bf16.msra.mxu0 0
    %5092 = vmatprep.subr.bf16.mxu0 0
    %5093 = vmatpush1.bf16.msra.mxu0 0
    %5094 = vmatprep.subr.bf16.mxu0 0
    %5095 = vmatpush1.bf16.msra.mxu0 0
    %5096 = vmatprep.subr.bf16.mxu0 0
    %5097 = vmatpush1.bf16.msra.mxu0 0
    %5098 = vmatprep.subr.bf16.mxu0 0
    %5099 = vmatpush1.bf16.msra.mxu0 0
    %5100 = vmatprep.mubr.bf16.mxu0 0
    %5101 = vmatmul.mubr.bf16.gmra.mrb[0].mxu0 %v4633
    %v5102 = vpop.f32.mrb[0].mxu0
    %v5103 = vadd.f32 0.0, %v5102
    %v5104 = vpop.f32.mrb[0].mxu0
    %v5105 = vpop.f32.mrb[0].mxu0
    %v5106 = vadd.f32 0.0, %v5105
    %v5107 = vpop.f32.mrb[0].mxu0
    %5108 = vmatprep.mubr.bf16.mxu0 0
    %5109 = vmatmul.mubr.bf16.gmra.mrb[0].mxu0 %v4634
    %v5110 = vpop.f32.mrb[0].mxu0
    %v5111 = vadd.f32 0.0, %v5110
    %v5112 = vpop.f32.mrb[0].mxu0
    %v5113 = vpop.f32.mrb[0].mxu0
    %v5114 = vadd.f32 0.0, %v5113
    %v5115 = vpop.f32.mrb[0].mxu0
    %5116 = vmatprep.mubr.bf16.mxu0 0
    %5117 = vmatmul.mubr.bf16.gmra.mrb[0].mxu0 %v4635
    %v5118 = vpop.f32.mrb[0].mxu0
    %v5119 = vadd.f32 0.0, %v5118
    %v5120 = vpop.f32.mrb[0].mxu0
    %v5121 = vpop.f32.mrb[0].mxu0
    %v5122 = vadd.f32 0.0, %v5121
    %v5123 = vpop.f32.mrb[0].mxu0
    %5124 = vmatprep.mubr.bf16.mxu0 0
    %5125 = vmatmul.mubr.bf16.gmra.mrb[0].mxu0 %v4636
    %v5126 = vpop.f32.mrb[0].mxu0
    %v5127 = vadd.f32 0.0, %v5126
    %v5128 = vpop.f32.mrb[0].mxu0
    %v5129 = vpop.f32.mrb[0].mxu0
    %v5130 = vadd.f32 0.0, %v5129
    %v5131 = vpop.f32.mrb[0].mxu0
    %5132 = vdwg.mxu0
    %v5149 = vunpack.c.l.b16 %v4353
    %v5150 = vunpack.c.l.b16 %v4354
    %v5151 = vunpack.c.l.b16 %v4355
    %v5152 = vunpack.c.l.b16 %v4356
    %v5153 = vunpack.c.l.b16 %v4357
    %v5154 = vunpack.c.l.b16 %v4358
    %v5155 = vunpack.c.l.b16 %v4359
    %v5156 = vunpack.c.l.b16 %v4360
    %v5157 = vunpack.c.l.b16 %v4361
    %v5158 = vunpack.c.l.b16 %v4362
    %v5159 = vunpack.c.l.b16 %v4363
    %v5160 = vunpack.c.l.b16 %v4364
    %v5161 = vunpack.c.l.b16 %v4365
    %v5162 = vunpack.c.l.b16 %v4366
    %v5163 = vunpack.c.l.b16 %v4367
    %v5164 = vunpack.c.l.b16 %v4368
    %v5165 = vpack.c.b16 %v5150, %v5149
    %v5166 = vpack.c.b16 %v5152, %v5151
    %v5167 = vpack.c.b16 %v5154, %v5153
    %v5168 = vpack.c.b16 %v5156, %v5155
    %v5169 = vpack.c.b16 %v5158, %v5157
    %v5170 = vpack.c.b16 %v5160, %v5159
    %v5171 = vpack.c.b16 %v5162, %v5161
    %v5172 = vpack.c.b16 %v5164, %v5163
    %5181 = vmatprep.subr.bf16.mxu0 0
    %5182 = vmatpush1.bf16.msra.mxu0 %v5165
    %5183 = vmatprep.subr.bf16.mxu0 0
    %5184 = vmatpush1.bf16.msra.mxu0 %v5166
    %5185 = vmatprep.subr.bf16.mxu0 0
    %5186 = vmatpush1.bf16.msra.mxu0 %v5167
    %5187 = vmatprep.subr.bf16.mxu0 0
    %5188 = vmatpush1.bf16.msra.mxu0 %v5168
    %5189 = vmatprep.subr.bf16.mxu0 0
    %5190 = vmatpush1.bf16.msra.mxu0 %v5169
    %5191 = vmatprep.subr.bf16.mxu0 0
    %5192 = vmatpush1.bf16.msra.mxu0 %v5170
    %5193 = vmatprep.subr.bf16.mxu0 0
    %5194 = vmatpush1.bf16.msra.mxu0 %v5171
    %5195 = vmatprep.subr.bf16.mxu0 0
    %5196 = vmatpush1.bf16.msra.mxu0 %v5172
    %5197 = vmatprep.subr.bf16.mxu0 0
    %5198 = vmatpush1.bf16.msra.mxu0 0
    %5199 = vmatprep.subr.bf16.mxu0 0
    %5200 = vmatpush1.bf16.msra.mxu0 0
    %5201 = vmatprep.subr.bf16.mxu0 0
    %5202 = vmatpush1.bf16.msra.mxu0 0
    %5203 = vmatprep.subr.bf16.mxu0 0
    %5204 = vmatpush1.bf16.msra.mxu0 0
    %5205 = vmatprep.subr.bf16.mxu0 0
    %5206 = vmatpush1.bf16.msra.mxu0 0
    %5207 = vmatprep.subr.bf16.mxu0 0
    %5208 = vmatpush1.bf16.msra.mxu0 0
    %5209 = vmatprep.subr.bf16.mxu0 0
    %5210 = vmatpush1.bf16.msra.mxu0 0
    %5211 = vmatprep.subr.bf16.mxu0 0
    %5212 = vmatpush1.bf16.msra.mxu0 0
    %5213 = vmatprep.mubr.bf16.mxu0 0
    %5214 = vmatmul.mubr.bf16.gmra.mrb[0].mxu0 %v4882
    %v5215 = vpop.f32.mrb[0].mxu0
    %v5216 = vadd.f32 %v5103, %v5215
    %v5217 = vpop.f32.mrb[0].mxu0
    %v5218 = vpop.f32.mrb[0].mxu0
    %v5219 = vadd.f32 %v5106, %v5218
    %v5220 = vpop.f32.mrb[0].mxu0
    %5221 = vmatprep.mubr.bf16.mxu0 0
    %5222 = vmatmul.mubr.bf16.gmra.mrb[0].mxu0 %v4883
    %v5223 = vpop.f32.mrb[0].mxu0
    %v5224 = vadd.f32 %v5111, %v5223
    %v5225 = vpop.f32.mrb[0].mxu0
    %v5226 = vpop.f32.mrb[0].mxu0
    %v5227 = vadd.f32 %v5114, %v5226
    %v5228 = vpop.f32.mrb[0].mxu0
    %5229 = vmatprep.mubr.bf16.mxu0 0
    %5230 = vmatmul.mubr.bf16.gmra.mrb[0].mxu0 %v4884
    %v5231 = vpop.f32.mrb[0].mxu0
    %v5232 = vadd.f32 %v5119, %v5231
    %v5233 = vpop.f32.mrb[0].mxu0
    %v5234 = vpop.f32.mrb[0].mxu0
    %v5235 = vadd.f32 %v5122, %v5234
    %v5236 = vpop.f32.mrb[0].mxu0
    %5237 = vmatprep.mubr.bf16.mxu0 0
    %5238 = vmatmul.mubr.bf16.gmra.mrb[0].mxu0 %v4885
    %v5239 = vpop.f32.mrb[0].mxu0
    %v5240 = vadd.f32 %v5127, %v5239
    %v5241 = vpop.f32.mrb[0].mxu0
    %v5242 = vpop.f32.mrb[0].mxu0
    %v5243 = vadd.f32 %v5130, %v5242
    %v5244 = vpop.f32.mrb[0].mxu0
    %5245 = vdwg.mxu0
    %s5246 = scalar_lea.vmem [#allocation4], 256
    %v5247 = vld [vmem:[%s5246] sm:$0xf]
    %v5248 = vld [vmem:[%s5246 + $0x4] sm:$0xf]
    %v5249 = vld [vmem:[%s5246 + $0x8] sm:$0xf]
    %v5250 = vld [vmem:[%s5246 + $0xc] sm:$0xf]
    %v5251 = vld [vmem:[%s5246 + $0x10] sm:$0xf]
    %v5252 = vld [vmem:[%s5246 + $0x14] sm:$0xf]
    %v5253 = vld [vmem:[%s5246 + $0x18] sm:$0xf]
    %v5254 = vld [vmem:[%s5246 + $0x1c] sm:$0xf]
    %v5255 = vld [vmem:[%s5246 + $0x20] sm:$0xf]
    %v5256 = vld [vmem:[%s5246 + $0x24] sm:$0xf]
    %v5257 = vld [vmem:[%s5246 + $0x28] sm:$0xf]
    %v5258 = vld [vmem:[%s5246 + $0x2c] sm:$0xf]
    %v5259 = vld [vmem:[%s5246 + $0x30] sm:$0xf]
    %v5260 = vld [vmem:[%s5246 + $0x34] sm:$0xf]
    %v5261 = vld [vmem:[%s5246 + $0x38] sm:$0xf]
    %v5262 = vld [vmem:[%s5246 + $0x3c] sm:$0xf]
    %v5271 = vunpack.c.l.b16 %v4249
    %v5272 = vunpack.c.l.b16 %v4261
    %v5273 = vunpack.c.l.b16 %v4273
    %v5274 = vunpack.c.l.b16 %v4285
    %v5275 = vunpack.c.l.b16 %v4297
    %v5276 = vunpack.c.l.b16 %v4309
    %v5277 = vunpack.c.l.b16 %v4321
    %v5278 = vunpack.c.l.b16 %v4333
    %v5279 = vrot.slane %v4452, 7
    %v5280 = vsel %vm4515, %v5279, %v4451
    %v5281 = vrot.slane %v4453, 6
    %v5282 = vsel %vm4518, %v5281, %v5280
    %v5283 = vrot.slane %v4454, 5
    %v5284 = vsel %vm4521, %v5283, %v5282
    %v5285 = vrot.slane %v4455, 4
    %v5286 = vsel %vm4524, %v5285, %v5284
    %v5287 = vrot.slane %v4456, 3
    %v5288 = vsel %vm4527, %v5287, %v5286
    %v5289 = vrot.slane %v4457, 2
    %v5290 = vsel %vm4530, %v5289, %v5288
    %v5291 = vrot.slane %v5271, 1
    %v5292 = vsel %vm4533, %v5291, %v5290
    %v5293 = vrot.slane %v4460, 7
    %v5294 = vsel %vm4515, %v5293, %v4459
    %v5295 = vrot.slane %v4461, 6
    %v5296 = vsel %vm4518, %v5295, %v5294
    %v5297 = vrot.slane %v4462, 5
    %v5298 = vsel %vm4521, %v5297, %v5296
    %v5299 = vrot.slane %v4463, 4
    %v5300 = vsel %vm4524, %v5299, %v5298
    %v5301 = vrot.slane %v4464, 3
    %v5302 = vsel %vm4527, %v5301, %v5300
    %v5303 = vrot.slane %v4465, 2
    %v5304 = vsel %vm4530, %v5303, %v5302
    %v5305 = vrot.slane %v5272, 1
    %v5306 = vsel %vm4533, %v5305, %v5304
    %v5307 = vrot.slane %v4468, 7
    %v5308 = vsel %vm4515, %v5307, %v4467
    %v5309 = vrot.slane %v4469, 6
    %v5310 = vsel %vm4518, %v5309, %v5308
    %v5311 = vrot.slane %v4470, 5
    %v5312 = vsel %vm4521, %v5311, %v5310
    %v5313 = vrot.slane %v4471, 4
    %v5314 = vsel %vm4524, %v5313, %v5312
    %v5315 = vrot.slane %v4472, 3
    %v5316 = vsel %vm4527, %v5315, %v5314
    %v5317 = vrot.slane %v4473, 2
    %v5318 = vsel %vm4530, %v5317, %v5316
    %v5319 = vrot.slane %v5273, 1
    %v5320 = vsel %vm4533, %v5319, %v5318
    %v5321 = vrot.slane %v4476, 7
    %v5322 = vsel %vm4515, %v5321, %v4475
    %v5323 = vrot.slane %v4477, 6
    %v5324 = vsel %vm4518, %v5323, %v5322
    %v5325 = vrot.slane %v4478, 5
    %v5326 = vsel %vm4521, %v5325, %v5324
    %v5327 = vrot.slane %v4479, 4
    %v5328 = vsel %vm4524, %v5327, %v5326
    %v5329 = vrot.slane %v4480, 3
    %v5330 = vsel %vm4527, %v5329, %v5328
    %v5331 = vrot.slane %v4481, 2
    %v5332 = vsel %vm4530, %v5331, %v5330
    %v5333 = vrot.slane %v5274, 1
    %v5334 = vsel %vm4533, %v5333, %v5332
    %v5335 = vrot.slane %v4484, 7
    %v5336 = vsel %vm4515, %v5335, %v4483
    %v5337 = vrot.slane %v4485, 6
    %v5338 = vsel %vm4518, %v5337, %v5336
    %v5339 = vrot.slane %v4486, 5
    %v5340 = vsel %vm4521, %v5339, %v5338
    %v5341 = vrot.slane %v4487, 4
    %v5342 = vsel %vm4524, %v5341, %v5340
    %v5343 = vrot.slane %v4488, 3
    %v5344 = vsel %vm4527, %v5343, %v5342
    %v5345 = vrot.slane %v4489, 2
    %v5346 = vsel %vm4530, %v5345, %v5344
    %v5347 = vrot.slane %v5275, 1
    %v5348 = vsel %vm4533, %v5347, %v5346
    %v5349 = vrot.slane %v4492, 7
    %v5350 = vsel %vm4515, %v5349, %v4491
    %v5351 = vrot.slane %v4493, 6
    %v5352 = vsel %vm4518, %v5351, %v5350
    %v5353 = vrot.slane %v4494, 5
    %v5354 = vsel %vm4521, %v5353, %v5352
    %v5355 = vrot.slane %v4495, 4
    %v5356 = vsel %vm4524, %v5355, %v5354
    %v5357 = vrot.slane %v4496, 3
    %v5358 = vsel %vm4527, %v5357, %v5356
    %v5359 = vrot.slane %v4497, 2
    %v5360 = vsel %vm4530, %v5359, %v5358
    %v5361 = vrot.slane %v5276, 1
    %v5362 = vsel %vm4533, %v5361, %v5360
    %v5363 = vrot.slane %v4500, 7
    %v5364 = vsel %vm4515, %v5363, %v4499
    %v5365 = vrot.slane %v4501, 6
    %v5366 = vsel %vm4518, %v5365, %v5364
    %v5367 = vrot.slane %v4502, 5
    %v5368 = vsel %vm4521, %v5367, %v5366
    %v5369 = vrot.slane %v4503, 4
    %v5370 = vsel %vm4524, %v5369, %v5368
    %v5371 = vrot.slane %v4504, 3
    %v5372 = vsel %vm4527, %v5371, %v5370
    %v5373 = vrot.slane %v4505, 2
    %v5374 = vsel %vm4530, %v5373, %v5372
    %v5375 = vrot.slane %v5277, 1
    %v5376 = vsel %vm4533, %v5375, %v5374
    %v5377 = vrot.slane %v4508, 7
    %v5378 = vsel %vm4515, %v5377, %v4507
    %v5379 = vrot.slane %v4509, 6
    %v5380 = vsel %vm4518, %v5379, %v5378
    %v5381 = vrot.slane %v4510, 5
    %v5382 = vsel %vm4521, %v5381, %v5380
    %v5383 = vrot.slane %v4511, 4
    %v5384 = vsel %vm4524, %v5383, %v5382
    %v5385 = vrot.slane %v4512, 3
    %v5386 = vsel %vm4527, %v5385, %v5384
    %v5387 = vrot.slane %v4513, 2
    %v5388 = vsel %vm4530, %v5387, %v5386
    %v5389 = vrot.slane %v5278, 1
    %v5390 = vsel %vm4533, %v5389, %v5388
    %v5391 = vpack.c.b16 %v5306, %v5292
    %v5392 = vpack.c.b16 %v5334, %v5320
    %v5393 = vpack.c.b16 %v5362, %v5348
    %v5394 = vpack.c.b16 %v5390, %v5376
    %v5415 = vunpack.c.l.b16 %v5247
    %v5416 = vunpack.c.l.b16 %v5248
    %v5417 = vunpack.c.l.b16 %v5249
    %v5418 = vunpack.c.l.b16 %v5250
    %v5419 = vunpack.c.l.b16 %v5251
    %v5420 = vunpack.c.l.b16 %v5252
    %v5421 = vunpack.c.l.b16 %v5253
    %v5422 = vunpack.c.l.b16 %v5254
    %v5423 = vunpack.c.l.b16 %v5255
    %v5424 = vunpack.c.l.b16 %v5256
    %v5425 = vunpack.c.l.b16 %v5257
    %v5426 = vunpack.c.l.b16 %v5258
    %v5427 = vunpack.c.l.b16 %v5259
    %v5428 = vunpack.c.l.b16 %v5260
    %v5429 = vunpack.c.l.b16 %v5261
    %v5430 = vunpack.c.l.b16 %v5262
    %v5431 = vpack.c.b16 %v5416, %v5415
    %v5432 = vpack.c.b16 %v5418, %v5417
    %v5433 = vpack.c.b16 %v5420, %v5419
    %v5434 = vpack.c.b16 %v5422, %v5421
    %v5435 = vpack.c.b16 %v5424, %v5423
    %v5436 = vpack.c.b16 %v5426, %v5425
    %v5437 = vpack.c.b16 %v5428, %v5427
    %v5438 = vpack.c.b16 %v5430, %v5429
    %5447 = vmatprep.subr.bf16.mxu0 0
    %5448 = vmatpush1.bf16.msra.mxu0 %v5431
    %5449 = vmatprep.subr.bf16.mxu0 0
    %5450 = vmatpush1.bf16.msra.mxu0 %v5432
    %5451 = vmatprep.subr.bf16.mxu0 0
    %5452 = vmatpush1.bf16.msra.mxu0 %v5433
    %5453 = vmatprep.subr.bf16.mxu0 0
    %5454 = vmatpush1.bf16.msra.mxu0 %v5434
    %5455 = vmatprep.subr.bf16.mxu0 0
    %5456 = vmatpush1.bf16.msra.mxu0 %v5435
    %5457 = vmatprep.subr.bf16.mxu0 0
    %5458 = vmatpush1.bf16.msra.mxu0 %v5436
    %5459 = vmatprep.subr.bf16.mxu0 0
    %5460 = vmatpush1.bf16.msra.mxu0 %v5437
    %5461 = vmatprep.subr.bf16.mxu0 0
    %5462 = vmatpush1.bf16.msra.mxu0 %v5438
    %5463 = vmatprep.subr.bf16.mxu0 0
    %5464 = vmatpush1.bf16.msra.mxu0 0
    %5465 = vmatprep.subr.bf16.mxu0 0
    %5466 = vmatpush1.bf16.msra.mxu0 0
    %5467 = vmatprep.subr.bf16.mxu0 0
    %5468 = vmatpush1.bf16.msra.mxu0 0
    %5469 = vmatprep.subr.bf16.mxu0 0
    %5470 = vmatpush1.bf16.msra.mxu0 0
    %5471 = vmatprep.subr.bf16.mxu0 0
    %5472 = vmatpush1.bf16.msra.mxu0 0
    %5473 = vmatprep.subr.bf16.mxu0 0
    %5474 = vmatpush1.bf16.msra.mxu0 0
    %5475 = vmatprep.subr.bf16.mxu0 0
    %5476 = vmatpush1.bf16.msra.mxu0 0
    %5477 = vmatprep.subr.bf16.mxu0 0
    %5478 = vmatpush1.bf16.msra.mxu0 0
    %5479 = vmatprep.mubr.bf16.mxu0 0
    %5480 = vmatmul.mubr.bf16.gmra.mrb[0].mxu0 %v5391
    %v5481 = vpop.f32.mrb[0].mxu0
    %v5482 = vadd.f32 0.0, %v5481
    %v5483 = vpop.f32.mrb[0].mxu0
    %v5484 = vpop.f32.mrb[0].mxu0
    %v5485 = vadd.f32 0.0, %v5484
    %v5486 = vpop.f32.mrb[0].mxu0
    %5487 = vmatprep.mubr.bf16.mxu0 0
    %5488 = vmatmul.mubr.bf16.gmra.mrb[0].mxu0 %v5392
    %v5489 = vpop.f32.mrb[0].mxu0
    %v5490 = vadd.f32 0.0, %v5489
    %v5491 = vpop.f32.mrb[0].mxu0
    %v5492 = vpop.f32.mrb[0].mxu0
    %v5493 = vadd.f32 0.0, %v5492
    %v5494 = vpop.f32.mrb[0].mxu0
    %5495 = vmatprep.mubr.bf16.mxu0 0
    %5496 = vmatmul.mubr.bf16.gmra.mrb[0].mxu0 %v5393
    %v5497 = vpop.f32.mrb[0].mxu0
    %v5498 = vadd.f32 0.0, %v5497
    %v5499 = vpop.f32.mrb[0].mxu0
    %v5500 = vpop.f32.mrb[0].mxu0
    %v5501 = vadd.f32 0.0, %v5500
    %v5502 = vpop.f32.mrb[0].mxu0
    %5503 = vmatprep.mubr.bf16.mxu0 0
    %5504 = vmatmul.mubr.bf16.gmra.mrb[0].mxu0 %v5394
    %v5505 = vpop.f32.mrb[0].mxu0
    %v5506 = vadd.f32 0.0, %v5505
    %v5507 = vpop.f32.mrb[0].mxu0
    %v5508 = vpop.f32.mrb[0].mxu0
    %v5509 = vadd.f32 0.0, %v5508
    %v5510 = vpop.f32.mrb[0].mxu0
    %5511 = vdwg.mxu0
    %v5512 = vadd.f32 %v4973, %v5482
    %v5513 = vadd.f32 %v4976, %v5485
    %v5514 = vadd.f32 %v4981, %v5490
    %v5515 = vadd.f32 %v4984, %v5493
    %v5516 = vadd.f32 %v4989, %v5498
    %v5517 = vadd.f32 %v4992, %v5501
    %v5518 = vadd.f32 %v4997, %v5506
    %v5519 = vadd.f32 %v5000, %v5509
    %s5520 = scalar_lea.vmem [#allocation4], 320
    %v5521 = vld [vmem:[%s5520] sm:$0xf]
    %v5522 = vld [vmem:[%s5520 + $0x4] sm:$0xf]
    %v5523 = vld [vmem:[%s5520 + $0x8] sm:$0xf]
    %v5524 = vld [vmem:[%s5520 + $0xc] sm:$0xf]
    %v5525 = vld [vmem:[%s5520 + $0x10] sm:$0xf]
    %v5526 = vld [vmem:[%s5520 + $0x14] sm:$0xf]
    %v5527 = vld [vmem:[%s5520 + $0x18] sm:$0xf]
    %v5528 = vld [vmem:[%s5520 + $0x1c] sm:$0xf]
    %v5529 = vld [vmem:[%s5520 + $0x20] sm:$0xf]
    %v5530 = vld [vmem:[%s5520 + $0x24] sm:$0xf]
    %v5531 = vld [vmem:[%s5520 + $0x28] sm:$0xf]
    %v5532 = vld [vmem:[%s5520 + $0x2c] sm:$0xf]
    %v5533 = vld [vmem:[%s5520 + $0x30] sm:$0xf]
    %v5534 = vld [vmem:[%s5520 + $0x34] sm:$0xf]
    %v5535 = vld [vmem:[%s5520 + $0x38] sm:$0xf]
    %v5536 = vld [vmem:[%s5520 + $0x3c] sm:$0xf]
    %v5553 = vunpack.c.l.b16 %v5521
    %v5554 = vunpack.c.l.b16 %v5522
    %v5555 = vunpack.c.l.b16 %v5523
    %v5556 = vunpack.c.l.b16 %v5524
    %v5557 = vunpack.c.l.b16 %v5525
    %v5558 = vunpack.c.l.b16 %v5526
    %v5559 = vunpack.c.l.b16 %v5527
    %v5560 = vunpack.c.l.b16 %v5528
    %v5561 = vunpack.c.l.b16 %v5529
    %v5562 = vunpack.c.l.b16 %v5530
    %v5563 = vunpack.c.l.b16 %v5531
    %v5564 = vunpack.c.l.b16 %v5532
    %v5565 = vunpack.c.l.b16 %v5533
    %v5566 = vunpack.c.l.b16 %v5534
    %v5567 = vunpack.c.l.b16 %v5535
    %v5568 = vunpack.c.l.b16 %v5536
    %v5569 = vpack.c.b16 %v5554, %v5553
    %v5570 = vpack.c.b16 %v5556, %v5555
    %v5571 = vpack.c.b16 %v5558, %v5557
    %v5572 = vpack.c.b16 %v5560, %v5559
    %v5573 = vpack.c.b16 %v5562, %v5561
    %v5574 = vpack.c.b16 %v5564, %v5563
    %v5575 = vpack.c.b16 %v5566, %v5565
    %v5576 = vpack.c.b16 %v5568, %v5567
    %5585 = vmatprep.subr.bf16.mxu0 0
    %5586 = vmatpush1.bf16.msra.mxu0 %v5569
    %5587 = vmatprep.subr.bf16.mxu0 0
    %5588 = vmatpush1.bf16.msra.mxu0 %v5570
    %5589 = vmatprep.subr.bf16.mxu0 0
    %5590 = vmatpush1.bf16.msra.mxu0 %v5571
    %5591 = vmatprep.subr.bf16.mxu0 0
    %5592 = vmatpush1.bf16.msra.mxu0 %v5572
    %5593 = vmatprep.subr.bf16.mxu0 0
    %5594 = vmatpush1.bf16.msra.mxu0 %v5573
    %5595 = vmatprep.subr.bf16.mxu0 0
    %5596 = vmatpush1.bf16.msra.mxu0 %v5574
    %5597 = vmatprep.subr.bf16.mxu0 0
    %5598 = vmatpush1.bf16.msra.mxu0 %v5575
    %5599 = vmatprep.subr.bf16.mxu0 0
    %5600 = vmatpush1.bf16.msra.mxu0 %v5576
    %5601 = vmatprep.subr.bf16.mxu0 0
    %5602 = vmatpush1.bf16.msra.mxu0 0
    %5603 = vmatprep.subr.bf16.mxu0 0
    %5604 = vmatpush1.bf16.msra.mxu0 0
    %5605 = vmatprep.subr.bf16.mxu0 0
    %5606 = vmatpush1.bf16.msra.mxu0 0
    %5607 = vmatprep.subr.bf16.mxu0 0
    %5608 = vmatpush1.bf16.msra.mxu0 0
    %5609 = vmatprep.subr.bf16.mxu0 0
    %5610 = vmatpush1.bf16.msra.mxu0 0
    %5611 = vmatprep.subr.bf16.mxu0 0
    %5612 = vmatpush1.bf16.msra.mxu0 0
    %5613 = vmatprep.subr.bf16.mxu0 0
    %5614 = vmatpush1.bf16.msra.mxu0 0
    %5615 = vmatprep.subr.bf16.mxu0 0
    %5616 = vmatpush1.bf16.msra.mxu0 0
    %5617 = vmatprep.mubr.bf16.mxu0 0
    %5618 = vmatmul.mubr.bf16.gmra.mrb[0].mxu0 %v5391
    %v5619 = vpop.f32.mrb[0].mxu0
    %v5620 = vadd.f32 0.0, %v5619
    %v5621 = vpop.f32.mrb[0].mxu0
    %v5622 = vpop.f32.mrb[0].mxu0
    %v5623 = vadd.f32 0.0, %v5622
    %v5624 = vpop.f32.mrb[0].mxu0
    %5625 = vmatprep.mubr.bf16.mxu0 0
    %5626 = vmatmul.mubr.bf16.gmra.mrb[0].mxu0 %v5392
    %v5627 = vpop.f32.mrb[0].mxu0
    %v5628 = vadd.f32 0.0, %v5627
    %v5629 = vpop.f32.mrb[0].mxu0
    %v5630 = vpop.f32.mrb[0].mxu0
    %v5631 = vadd.f32 0.0, %v5630
    %v5632 = vpop.f32.mrb[0].mxu0
    %5633 = vmatprep.mubr.bf16.mxu0 0
    %5634 = vmatmul.mubr.bf16.gmra.mrb[0].mxu0 %v5393
    %v5635 = vpop.f32.mrb[0].mxu0
    %v5636 = vadd.f32 0.0, %v5635
    %v5637 = vpop.f32.mrb[0].mxu0
    %v5638 = vpop.f32.mrb[0].mxu0
    %v5639 = vadd.f32 0.0, %v5638
    %v5640 = vpop.f32.mrb[0].mxu0
    %5641 = vmatprep.mubr.bf16.mxu0 0
    %5642 = vmatmul.mubr.bf16.gmra.mrb[0].mxu0 %v5394
    %v5643 = vpop.f32.mrb[0].mxu0
    %v5644 = vadd.f32 0.0, %v5643
    %v5645 = vpop.f32.mrb[0].mxu0
    %v5646 = vpop.f32.mrb[0].mxu0
    %v5647 = vadd.f32 0.0, %v5646
    %v5648 = vpop.f32.mrb[0].mxu0
    %5649 = vdwg.mxu0
    %v5650 = vadd.f32 %v5216, %v5620
    %v5651 = vadd.f32 %v5219, %v5623
    %v5652 = vadd.f32 %v5224, %v5628
    %v5653 = vadd.f32 %v5227, %v5631
    %v5654 = vadd.f32 %v5232, %v5636
    %v5655 = vadd.f32 %v5235, %v5639
    %v5656 = vadd.f32 %v5240, %v5644
    %v5657 = vadd.f32 %v5243, %v5647
    %s5658 = scalar_lea.vmem [#allocation4], 384
    %v5659 = vld [vmem:[%s5658] sm:$0xf]
    %v5660 = vld [vmem:[%s5658 + $0x4] sm:$0xf]
    %v5661 = vld [vmem:[%s5658 + $0x8] sm:$0xf]
    %v5662 = vld [vmem:[%s5658 + $0xc] sm:$0xf]
    %v5663 = vld [vmem:[%s5658 + $0x10] sm:$0xf]
    %v5664 = vld [vmem:[%s5658 + $0x14] sm:$0xf]
    %v5665 = vld [vmem:[%s5658 + $0x18] sm:$0xf]
    %v5666 = vld [vmem:[%s5658 + $0x1c] sm:$0xf]
    %v5667 = vld [vmem:[%s5658 + $0x20] sm:$0xf]
    %v5668 = vld [vmem:[%s5658 + $0x24] sm:$0xf]
    %v5669 = vld [vmem:[%s5658 + $0x28] sm:$0xf]
    %v5670 = vld [vmem:[%s5658 + $0x2c] sm:$0xf]
    %v5671 = vld [vmem:[%s5658 + $0x30] sm:$0xf]
    %v5672 = vld [vmem:[%s5658 + $0x34] sm:$0xf]
    %v5673 = vld [vmem:[%s5658 + $0x38] sm:$0xf]
    %v5674 = vld [vmem:[%s5658 + $0x3c] sm:$0xf]
    %v5683 = vunpack.c.l.b16 %v4250
    %v5684 = vunpack.c.l.b16 %v4262
    %v5685 = vunpack.c.l.b16 %v4274
    %v5686 = vunpack.c.l.b16 %v4286
    %v5687 = vunpack.c.l.b16 %v4298
    %v5688 = vunpack.c.l.b16 %v4310
    %v5689 = vunpack.c.l.b16 %v4322
    %v5690 = vunpack.c.l.b16 %v4334
    %v5691 = vrot.slane %v4453, 7
    %v5692 = vsel %vm4515, %v5691, %v4452
    %v5693 = vrot.slane %v4454, 6
    %v5694 = vsel %vm4518, %v5693, %v5692
    %v5695 = vrot.slane %v4455, 5
    %v5696 = vsel %vm4521, %v5695, %v5694
    %v5697 = vrot.slane %v4456, 4
    %v5698 = vsel %vm4524, %v5697, %v5696
    %v5699 = vrot.slane %v4457, 3
    %v5700 = vsel %vm4527, %v5699, %v5698
    %v5701 = vrot.slane %v5271, 2
    %v5702 = vsel %vm4530, %v5701, %v5700
    %v5703 = vrot.slane %v5683, 1
    %v5704 = vsel %vm4533, %v5703, %v5702
    %v5705 = vrot.slane %v4461, 7
    %v5706 = vsel %vm4515, %v5705, %v4460
    %v5707 = vrot.slane %v4462, 6
    %v5708 = vsel %vm4518, %v5707, %v5706
    %v5709 = vrot.slane %v4463, 5
    %v5710 = vsel %vm4521, %v5709, %v5708
    %v5711 = vrot.slane %v4464, 4
    %v5712 = vsel %vm4524, %v5711, %v5710
    %v5713 = vrot.slane %v4465, 3
    %v5714 = vsel %vm4527, %v5713, %v5712
    %v5715 = vrot.slane %v5272, 2
    %v5716 = vsel %vm4530, %v5715, %v5714
    %v5717 = vrot.slane %v5684, 1
    %v5718 = vsel %vm4533, %v5717, %v5716
    %v5719 = vrot.slane %v4469, 7
    %v5720 = vsel %vm4515, %v5719, %v4468
    %v5721 = vrot.slane %v4470, 6
    %v5722 = vsel %vm4518, %v5721, %v5720
    %v5723 = vrot.slane %v4471, 5
    %v5724 = vsel %vm4521, %v5723, %v5722
    %v5725 = vrot.slane %v4472, 4
    %v5726 = vsel %vm4524, %v5725, %v5724
    %v5727 = vrot.slane %v4473, 3
    %v5728 = vsel %vm4527, %v5727, %v5726
    %v5729 = vrot.slane %v5273, 2
    %v5730 = vsel %vm4530, %v5729, %v5728
    %v5731 = vrot.slane %v5685, 1
    %v5732 = vsel %vm4533, %v5731, %v5730
    %v5733 = vrot.slane %v4477, 7
    %v5734 = vsel %vm4515, %v5733, %v4476
    %v5735 = vrot.slane %v4478, 6
    %v5736 = vsel %vm4518, %v5735, %v5734
    %v5737 = vrot.slane %v4479, 5
    %v5738 = vsel %vm4521, %v5737, %v5736
    %v5739 = vrot.slane %v4480, 4
    %v5740 = vsel %vm4524, %v5739, %v5738
    %v5741 = vrot.slane %v4481, 3
    %v5742 = vsel %vm4527, %v5741, %v5740
    %v5743 = vrot.slane %v5274, 2
    %v5744 = vsel %vm4530, %v5743, %v5742
    %v5745 = vrot.slane %v5686, 1
    %v5746 = vsel %vm4533, %v5745, %v5744
    %v5747 = vrot.slane %v4485, 7
    %v5748 = vsel %vm4515, %v5747, %v4484
    %v5749 = vrot.slane %v4486, 6
    %v5750 = vsel %vm4518, %v5749, %v5748
    %v5751 = vrot.slane %v4487, 5
    %v5752 = vsel %vm4521, %v5751, %v5750
    %v5753 = vrot.slane %v4488, 4
    %v5754 = vsel %vm4524, %v5753, %v5752
    %v5755 = vrot.slane %v4489, 3
    %v5756 = vsel %vm4527, %v5755, %v5754
    %v5757 = vrot.slane %v5275, 2
    %v5758 = vsel %vm4530, %v5757, %v5756
    %v5759 = vrot.slane %v5687, 1
    %v5760 = vsel %vm4533, %v5759, %v5758
    %v5761 = vrot.slane %v4493, 7
    %v5762 = vsel %vm4515, %v5761, %v4492
    %v5763 = vrot.slane %v4494, 6
    %v5764 = vsel %vm4518, %v5763, %v5762
    %v5765 = vrot.slane %v4495, 5
    %v5766 = vsel %vm4521, %v5765, %v5764
    %v5767 = vrot.slane %v4496, 4
    %v5768 = vsel %vm4524, %v5767, %v5766
    %v5769 = vrot.slane %v4497, 3
    %v5770 = vsel %vm4527, %v5769, %v5768
    %v5771 = vrot.slane %v5276, 2
    %v5772 = vsel %vm4530, %v5771, %v5770
    %v5773 = vrot.slane %v5688, 1
    %v5774 = vsel %vm4533, %v5773, %v5772
    %v5775 = vrot.slane %v4501, 7
    %v5776 = vsel %vm4515, %v5775, %v4500
    %v5777 = vrot.slane %v4502, 6
    %v5778 = vsel %vm4518, %v5777, %v5776
    %v5779 = vrot.slane %v4503, 5
    %v5780 = vsel %vm4521, %v5779, %v5778
    %v5781 = vrot.slane %v4504, 4
    %v5782 = vsel %vm4524, %v5781, %v5780
    %v5783 = vrot.slane %v4505, 3
    %v5784 = vsel %vm4527, %v5783, %v5782
    %v5785 = vrot.slane %v5277, 2
    %v5786 = vsel %vm4530, %v5785, %v5784
    %v5787 = vrot.slane %v5689, 1
    %v5788 = vsel %vm4533, %v5787, %v5786
    %v5789 = vrot.slane %v4509, 7
    %v5790 = vsel %vm4515, %v5789, %v4508
    %v5791 = vrot.slane %v4510, 6
    %v5792 = vsel %vm4518, %v5791, %v5790
    %v5793 = vrot.slane %v4511, 5
    %v5794 = vsel %vm4521, %v5793, %v5792
    %v5795 = vrot.slane %v4512, 4
    %v5796 = vsel %vm4524, %v5795, %v5794
    %v5797 = vrot.slane %v4513, 3
    %v5798 = vsel %vm4527, %v5797, %v5796
    %v5799 = vrot.slane %v5278, 2
    %v5800 = vsel %vm4530, %v5799, %v5798
    %v5801 = vrot.slane %v5690, 1
    %v5802 = vsel %vm4533, %v5801, %v5800
    %v5803 = vpack.c.b16 %v5718, %v5704
    %v5804 = vpack.c.b16 %v5746, %v5732
    %v5805 = vpack.c.b16 %v5774, %v5760
    %v5806 = vpack.c.b16 %v5802, %v5788
    %v5827 = vunpack.c.l.b16 %v5659
    %v5828 = vunpack.c.l.b16 %v5660
    %v5829 = vunpack.c.l.b16 %v5661
    %v5830 = vunpack.c.l.b16 %v5662
    %v5831 = vunpack.c.l.b16 %v5663
    %v5832 = vunpack.c.l.b16 %v5664
    %v5833 = vunpack.c.l.b16 %v5665
    %v5834 = vunpack.c.l.b16 %v5666
    %v5835 = vunpack.c.l.b16 %v5667
    %v5836 = vunpack.c.l.b16 %v5668
    %v5837 = vunpack.c.l.b16 %v5669
    %v5838 = vunpack.c.l.b16 %v5670
    %v5839 = vunpack.c.l.b16 %v5671
    %v5840 = vunpack.c.l.b16 %v5672
    %v5841 = vunpack.c.l.b16 %v5673
    %v5842 = vunpack.c.l.b16 %v5674
    %v5843 = vpack.c.b16 %v5828, %v5827
    %v5844 = vpack.c.b16 %v5830, %v5829
    %v5845 = vpack.c.b16 %v5832, %v5831
    %v5846 = vpack.c.b16 %v5834, %v5833
    %v5847 = vpack.c.b16 %v5836, %v5835
    %v5848 = vpack.c.b16 %v5838, %v5837
    %v5849 = vpack.c.b16 %v5840, %v5839
    %v5850 = vpack.c.b16 %v5842, %v5841
    %5859 = vmatprep.subr.bf16.mxu0 0
    %5860 = vmatpush1.bf16.msra.mxu0 %v5843
    %5861 = vmatprep.subr.bf16.mxu0 0
    %5862 = vmatpush1.bf16.msra.mxu0 %v5844
    %5863 = vmatprep.subr.bf16.mxu0 0
    %5864 = vmatpush1.bf16.msra.mxu0 %v5845
    %5865 = vmatprep.subr.bf16.mxu0 0
    %5866 = vmatpush1.bf16.msra.mxu0 %v5846
    %5867 = vmatprep.subr.bf16.mxu0 0
    %5868 = vmatpush1.bf16.msra.mxu0 %v5847
    %5869 = vmatprep.subr.bf16.mxu0 0
    %5870 = vmatpush1.bf16.msra.mxu0 %v5848
    %5871 = vmatprep.subr.bf16.mxu0 0
    %5872 = vmatpush1.bf16.msra.mxu0 %v5849
    %5873 = vmatprep.subr.bf16.mxu0 0
    %5874 = vmatpush1.bf16.msra.mxu0 %v5850
    %5875 = vmatprep.subr.bf16.mxu0 0
    %5876 = vmatpush1.bf16.msra.mxu0 0
    %5877 = vmatprep.subr.bf16.mxu0 0
    %5878 = vmatpush1.bf16.msra.mxu0 0
    %5879 = vmatprep.subr.bf16.mxu0 0
    %5880 = vmatpush1.bf16.msra.mxu0 0
    %5881 = vmatprep.subr.bf16.mxu0 0
    %5882 = vmatpush1.bf16.msra.mxu0 0
    %5883 = vmatprep.subr.bf16.mxu0 0
    %5884 = vmatpush1.bf16.msra.mxu0 0
    %5885 = vmatprep.subr.bf16.mxu0 0
    %5886 = vmatpush1.bf16.msra.mxu0 0
    %5887 = vmatprep.subr.bf16.mxu0 0
    %5888 = vmatpush1.bf16.msra.mxu0 0
    %5889 = vmatprep.subr.bf16.mxu0 0
    %5890 = vmatpush1.bf16.msra.mxu0 0
    %5891 = vmatprep.mubr.bf16.mxu0 0
    %5892 = vmatmul.mubr.bf16.gmra.mrb[0].mxu0 %v5803
    %v5893 = vpop.f32.mrb[0].mxu0
    %v5894 = vadd.f32 0.0, %v5893
    %v5895 = vpop.f32.mrb[0].mxu0
    %v5896 = vpop.f32.mrb[0].mxu0
    %v5897 = vadd.f32 0.0, %v5896
    %v5898 = vpop.f32.mrb[0].mxu0
    %5899 = vmatprep.mubr.bf16.mxu0 0
    %5900 = vmatmul.mubr.bf16.gmra.mrb[0].mxu0 %v5804
    %v5901 = vpop.f32.mrb[0].mxu0
    %v5902 = vadd.f32 0.0, %v5901
    %v5903 = vpop.f32.mrb[0].mxu0
    %v5904 = vpop.f32.mrb[0].mxu0
    %v5905 = vadd.f32 0.0, %v5904
    %v5906 = vpop.f32.mrb[0].mxu0
    %5907 = vmatprep.mubr.bf16.mxu0 0
    %5908 = vmatmul.mubr.bf16.gmra.mrb[0].mxu0 %v5805
    %v5909 = vpop.f32.mrb[0].mxu0
    %v5910 = vadd.f32 0.0, %v5909
    %v5911 = vpop.f32.mrb[0].mxu0
    %v5912 = vpop.f32.mrb[0].mxu0
    %v5913 = vadd.f32 0.0, %v5912
    %v5914 = vpop.f32.mrb[0].mxu0
    %5915 = vmatprep.mubr.bf16.mxu0 0
    %5916 = vmatmul.mubr.bf16.gmra.mrb[0].mxu0 %v5806
    %v5917 = vpop.f32.mrb[0].mxu0
    %v5918 = vadd.f32 0.0, %v5917
    %v5919 = vpop.f32.mrb[0].mxu0
    %v5920 = vpop.f32.mrb[0].mxu0
    %v5921 = vadd.f32 0.0, %v5920
    %v5922 = vpop.f32.mrb[0].mxu0
    %5923 = vdwg.mxu0
    %v5924 = vadd.f32 %v5512, %v5894
    %v5925 = vadd.f32 %v5513, %v5897
    %v5926 = vadd.f32 %v5514, %v5902
    %v5927 = vadd.f32 %v5515, %v5905
    %v5928 = vadd.f32 %v5516, %v5910
    %v5929 = vadd.f32 %v5517, %v5913
    %v5930 = vadd.f32 %v5518, %v5918
    %v5931 = vadd.f32 %v5519, %v5921
    %s5932 = scalar_lea.vmem [#allocation4], 448
    %v5933 = vld [vmem:[%s5932] sm:$0xf]
    %v5934 = vld [vmem:[%s5932 + $0x4] sm:$0xf]
    %v5935 = vld [vmem:[%s5932 + $0x8] sm:$0xf]
    %v5936 = vld [vmem:[%s5932 + $0xc] sm:$0xf]
    %v5937 = vld [vmem:[%s5932 + $0x10] sm:$0xf]
    %v5938 = vld [vmem:[%s5932 + $0x14] sm:$0xf]
    %v5939 = vld [vmem:[%s5932 + $0x18] sm:$0xf]
    %v5940 = vld [vmem:[%s5932 + $0x1c] sm:$0xf]
    %v5941 = vld [vmem:[%s5932 + $0x20] sm:$0xf]
    %v5942 = vld [vmem:[%s5932 + $0x24] sm:$0xf]
    %v5943 = vld [vmem:[%s5932 + $0x28] sm:$0xf]
    %v5944 = vld [vmem:[%s5932 + $0x2c] sm:$0xf]
    %v5945 = vld [vmem:[%s5932 + $0x30] sm:$0xf]
    %v5946 = vld [vmem:[%s5932 + $0x34] sm:$0xf]
    %v5947 = vld [vmem:[%s5932 + $0x38] sm:$0xf]
    %v5948 = vld [vmem:[%s5932 + $0x3c] sm:$0xf]
    %v5965 = vunpack.c.l.b16 %v5933
    %v5966 = vunpack.c.l.b16 %v5934
    %v5967 = vunpack.c.l.b16 %v5935
    %v5968 = vunpack.c.l.b16 %v5936
    %v5969 = vunpack.c.l.b16 %v5937
    %v5970 = vunpack.c.l.b16 %v5938
    %v5971 = vunpack.c.l.b16 %v5939
    %v5972 = vunpack.c.l.b16 %v5940
    %v5973 = vunpack.c.l.b16 %v5941
    %v5974 = vunpack.c.l.b16 %v5942
    %v5975 = vunpack.c.l.b16 %v5943
    %v5976 = vunpack.c.l.b16 %v5944
    %v5977 = vunpack.c.l.b16 %v5945
    %v5978 = vunpack.c.l.b16 %v5946
    %v5979 = vunpack.c.l.b16 %v5947
    %v5980 = vunpack.c.l.b16 %v5948
    %v5981 = vpack.c.b16 %v5966, %v5965
    %v5982 = vpack.c.b16 %v5968, %v5967
    %v5983 = vpack.c.b16 %v5970, %v5969
    %v5984 = vpack.c.b16 %v5972, %v5971
    %v5985 = vpack.c.b16 %v5974, %v5973
    %v5986 = vpack.c.b16 %v5976, %v5975
    %v5987 = vpack.c.b16 %v5978, %v5977
    %v5988 = vpack.c.b16 %v5980, %v5979
    %5997 = vmatprep.subr.bf16.mxu0 0
    %5998 = vmatpush1.bf16.msra.mxu0 %v5981
    %5999 = vmatprep.subr.bf16.mxu0 0
    %6000 = vmatpush1.bf16.msra.mxu0 %v5982
    %6001 = vmatprep.subr.bf16.mxu0 0
    %6002 = vmatpush1.bf16.msra.mxu0 %v5983
    %6003 = vmatprep.subr.bf16.mxu0 0
    %6004 = vmatpush1.bf16.msra.mxu0 %v5984
    %6005 = vmatprep.subr.bf16.mxu0 0
    %6006 = vmatpush1.bf16.msra.mxu0 %v5985
    %6007 = vmatprep.subr.bf16.mxu0 0
    %6008 = vmatpush1.bf16.msra.mxu0 %v5986
    %6009 = vmatprep.subr.bf16.mxu0 0
    %6010 = vmatpush1.bf16.msra.mxu0 %v5987
    %6011 = vmatprep.subr.bf16.mxu0 0
    %6012 = vmatpush1.bf16.msra.mxu0 %v5988
    %6013 = vmatprep.subr.bf16.mxu0 0
    %6014 = vmatpush1.bf16.msra.mxu0 0
    %6015 = vmatprep.subr.bf16.mxu0 0
    %6016 = vmatpush1.bf16.msra.mxu0 0
    %6017 = vmatprep.subr.bf16.mxu0 0
    %6018 = vmatpush1.bf16.msra.mxu0 0
    %6019 = vmatprep.subr.bf16.mxu0 0
    %6020 = vmatpush1.bf16.msra.mxu0 0
    %6021 = vmatprep.subr.bf16.mxu0 0
    %6022 = vmatpush1.bf16.msra.mxu0 0
    %6023 = vmatprep.subr.bf16.mxu0 0
    %6024 = vmatpush1.bf16.msra.mxu0 0
    %6025 = vmatprep.subr.bf16.mxu0 0
    %6026 = vmatpush1.bf16.msra.mxu0 0
    %6027 = vmatprep.subr.bf16.mxu0 0
    %6028 = vmatpush1.bf16.msra.mxu0 0
    %6029 = vmatprep.mubr.bf16.mxu0 0
    %6030 = vmatmul.mubr.bf16.gmra.mrb[0].mxu0 %v5803
    %v6031 = vpop.f32.mrb[0].mxu0
    %v6032 = vadd.f32 0.0, %v6031
    %v6033 = vpop.f32.mrb[0].mxu0
    %v6034 = vpop.f32.mrb[0].mxu0
    %v6035 = vadd.f32 0.0, %v6034
    %v6036 = vpop.f32.mrb[0].mxu0
    %6037 = vmatprep.mubr.bf16.mxu0 0
    %6038 = vmatmul.mubr.bf16.gmra.mrb[0].mxu0 %v5804
    %v6039 = vpop.f32.mrb[0].mxu0
    %v6040 = vadd.f32 0.0, %v6039
    %v6041 = vpop.f32.mrb[0].mxu0
    %v6042 = vpop.f32.mrb[0].mxu0
    %v6043 = vadd.f32 0.0, %v6042
    %v6044 = vpop.f32.mrb[0].mxu0
    %6045 = vmatprep.mubr.bf16.mxu0 0
    %6046 = vmatmul.mubr.bf16.gmra.mrb[0].mxu0 %v5805
    %v6047 = vpop.f32.mrb[0].mxu0
    %v6048 = vadd.f32 0.0, %v6047
    %v6049 = vpop.f32.mrb[0].mxu0
    %v6050 = vpop.f32.mrb[0].mxu0
    %v6051 = vadd.f32 0.0, %v6050
    %v6052 = vpop.f32.mrb[0].mxu0
    %6053 = vmatprep.mubr.bf16.mxu0 0
    %6054 = vmatmul.mubr.bf16.gmra.mrb[0].mxu0 %v5806
    %v6055 = vpop.f32.mrb[0].mxu0
    %v6056 = vadd.f32 0.0, %v6055
    %v6057 = vpop.f32.mrb[0].mxu0
    %v6058 = vpop.f32.mrb[0].mxu0
    %v6059 = vadd.f32 0.0, %v6058
    %v6060 = vpop.f32.mrb[0].mxu0
    %6061 = vdwg.mxu0
    %v6062 = vadd.f32 %v5650, %v6032
    %v6063 = vadd.f32 %v5651, %v6035
    %v6064 = vadd.f32 %v5652, %v6040
    %v6065 = vadd.f32 %v5653, %v6043
    %v6066 = vadd.f32 %v5654, %v6048
    %v6067 = vadd.f32 %v5655, %v6051
    %v6068 = vadd.f32 %v5656, %v6056
    %v6069 = vadd.f32 %v5657, %v6059
    %s6070 = scalar_lea.vmem [#allocation4], 512
    %v6071 = vld [vmem:[%s6070] sm:$0xf]
    %v6072 = vld [vmem:[%s6070 + $0x4] sm:$0xf]
    %v6073 = vld [vmem:[%s6070 + $0x8] sm:$0xf]
    %v6074 = vld [vmem:[%s6070 + $0xc] sm:$0xf]
    %v6075 = vld [vmem:[%s6070 + $0x10] sm:$0xf]
    %v6076 = vld [vmem:[%s6070 + $0x14] sm:$0xf]
    %v6077 = vld [vmem:[%s6070 + $0x18] sm:$0xf]
    %v6078 = vld [vmem:[%s6070 + $0x1c] sm:$0xf]
    %v6079 = vld [vmem:[%s6070 + $0x20] sm:$0xf]
    %v6080 = vld [vmem:[%s6070 + $0x24] sm:$0xf]
    %v6081 = vld [vmem:[%s6070 + $0x28] sm:$0xf]
    %v6082 = vld [vmem:[%s6070 + $0x2c] sm:$0xf]
    %v6083 = vld [vmem:[%s6070 + $0x30] sm:$0xf]
    %v6084 = vld [vmem:[%s6070 + $0x34] sm:$0xf]
    %v6085 = vld [vmem:[%s6070 + $0x38] sm:$0xf]
    %v6086 = vld [vmem:[%s6070 + $0x3c] sm:$0xf]
    %v6095 = vunpack.c.l.b16 %v4251
    %v6096 = vunpack.c.l.b16 %v4263
    %v6097 = vunpack.c.l.b16 %v4275
    %v6098 = vunpack.c.l.b16 %v4287
    %v6099 = vunpack.c.l.b16 %v4299
    %v6100 = vunpack.c.l.b16 %v4311
    %v6101 = vunpack.c.l.b16 %v4323
    %v6102 = vunpack.c.l.b16 %v4335
    %v6103 = vrot.slane %v4454, 7
    %v6104 = vsel %vm4515, %v6103, %v4453
    %v6105 = vrot.slane %v4455, 6
    %v6106 = vsel %vm4518, %v6105, %v6104
    %v6107 = vrot.slane %v4456, 5
    %v6108 = vsel %vm4521, %v6107, %v6106
    %v6109 = vrot.slane %v4457, 4
    %v6110 = vsel %vm4524, %v6109, %v6108
    %v6111 = vrot.slane %v5271, 3
    %v6112 = vsel %vm4527, %v6111, %v6110
    %v6113 = vrot.slane %v5683, 2
    %v6114 = vsel %vm4530, %v6113, %v6112
    %v6115 = vrot.slane %v6095, 1
    %v6116 = vsel %vm4533, %v6115, %v6114
    %v6117 = vrot.slane %v4462, 7
    %v6118 = vsel %vm4515, %v6117, %v4461
    %v6119 = vrot.slane %v4463, 6
    %v6120 = vsel %vm4518, %v6119, %v6118
    %v6121 = vrot.slane %v4464, 5
    %v6122 = vsel %vm4521, %v6121, %v6120
    %v6123 = vrot.slane %v4465, 4
    %v6124 = vsel %vm4524, %v6123, %v6122
    %v6125 = vrot.slane %v5272, 3
    %v6126 = vsel %vm4527, %v6125, %v6124
    %v6127 = vrot.slane %v5684, 2
    %v6128 = vsel %vm4530, %v6127, %v6126
    %v6129 = vrot.slane %v6096, 1
    %v6130 = vsel %vm4533, %v6129, %v6128
    %v6131 = vrot.slane %v4470, 7
    %v6132 = vsel %vm4515, %v6131, %v4469
    %v6133 = vrot.slane %v4471, 6
    %v6134 = vsel %vm4518, %v6133, %v6132
    %v6135 = vrot.slane %v4472, 5
    %v6136 = vsel %vm4521, %v6135, %v6134
    %v6137 = vrot.slane %v4473, 4
    %v6138 = vsel %vm4524, %v6137, %v6136
    %v6139 = vrot.slane %v5273, 3
    %v6140 = vsel %vm4527, %v6139, %v6138
    %v6141 = vrot.slane %v5685, 2
    %v6142 = vsel %vm4530, %v6141, %v6140
    %v6143 = vrot.slane %v6097, 1
    %v6144 = vsel %vm4533, %v6143, %v6142
    %v6145 = vrot.slane %v4478, 7
    %v6146 = vsel %vm4515, %v6145, %v4477
    %v6147 = vrot.slane %v4479, 6
    %v6148 = vsel %vm4518, %v6147, %v6146
    %v6149 = vrot.slane %v4480, 5
    %v6150 = vsel %vm4521, %v6149, %v6148
    %v6151 = vrot.slane %v4481, 4
    %v6152 = vsel %vm4524, %v6151, %v6150
    %v6153 = vrot.slane %v5274, 3
    %v6154 = vsel %vm4527, %v6153, %v6152
    %v6155 = vrot.slane %v5686, 2
    %v6156 = vsel %vm4530, %v6155, %v6154
    %v6157 = vrot.slane %v6098, 1
    %v6158 = vsel %vm4533, %v6157, %v6156
    %v6159 = vrot.slane %v4486, 7
    %v6160 = vsel %vm4515, %v6159, %v4485
    %v6161 = vrot.slane %v4487, 6
    %v6162 = vsel %vm4518, %v6161, %v6160
    %v6163 = vrot.slane %v4488, 5
    %v6164 = vsel %vm4521, %v6163, %v6162
    %v6165 = vrot.slane %v4489, 4
    %v6166 = vsel %vm4524, %v6165, %v6164
    %v6167 = vrot.slane %v5275, 3
    %v6168 = vsel %vm4527, %v6167, %v6166
    %v6169 = vrot.slane %v5687, 2
    %v6170 = vsel %vm4530, %v6169, %v6168
    %v6171 = vrot.slane %v6099, 1
    %v6172 = vsel %vm4533, %v6171, %v6170
    %v6173 = vrot.slane %v4494, 7
    %v6174 = vsel %vm4515, %v6173, %v4493
    %v6175 = vrot.slane %v4495, 6
    %v6176 = vsel %vm4518, %v6175, %v6174
    %v6177 = vrot.slane %v4496, 5
    %v6178 = vsel %vm4521, %v6177, %v6176
    %v6179 = vrot.slane %v4497, 4
    %v6180 = vsel %vm4524, %v6179, %v6178
    %v6181 = vrot.slane %v5276, 3
    %v6182 = vsel %vm4527, %v6181, %v6180
    %v6183 = vrot.slane %v5688, 2
    %v6184 = vsel %vm4530, %v6183, %v6182
    %v6185 = vrot.slane %v6100, 1
    %v6186 = vsel %vm4533, %v6185, %v6184
    %v6187 = vrot.slane %v4502, 7
    %v6188 = vsel %vm4515, %v6187, %v4501
    %v6189 = vrot.slane %v4503, 6
    %v6190 = vsel %vm4518, %v6189, %v6188
    %v6191 = vrot.slane %v4504, 5
    %v6192 = vsel %vm4521, %v6191, %v6190
    %v6193 = vrot.slane %v4505, 4
    %v6194 = vsel %vm4524, %v6193, %v6192
    %v6195 = vrot.slane %v5277, 3
    %v6196 = vsel %vm4527, %v6195, %v6194
    %v6197 = vrot.slane %v5689, 2
    %v6198 = vsel %vm4530, %v6197, %v6196
    %v6199 = vrot.slane %v6101, 1
    %v6200 = vsel %vm4533, %v6199, %v6198
    %v6201 = vrot.slane %v4510, 7
    %v6202 = vsel %vm4515, %v6201, %v4509
    %v6203 = vrot.slane %v4511, 6
    %v6204 = vsel %vm4518, %v6203, %v6202
    %v6205 = vrot.slane %v4512, 5
    %v6206 = vsel %vm4521, %v6205, %v6204
    %v6207 = vrot.slane %v4513, 4
    %v6208 = vsel %vm4524, %v6207, %v6206
    %v6209 = vrot.slane %v5278, 3
    %v6210 = vsel %vm4527, %v6209, %v6208
    %v6211 = vrot.slane %v5690, 2
    %v6212 = vsel %vm4530, %v6211, %v6210
    %v6213 = vrot.slane %v6102, 1
    %v6214 = vsel %vm4533, %v6213, %v6212
    %v6215 = vpack.c.b16 %v6130, %v6116
    %v6216 = vpack.c.b16 %v6158, %v6144
    %v6217 = vpack.c.b16 %v6186, %v6172
    %v6218 = vpack.c.b16 %v6214, %v6200
    %v6239 = vunpack.c.l.b16 %v6071
    %v6240 = vunpack.c.l.b16 %v6072
    %v6241 = vunpack.c.l.b16 %v6073
    %v6242 = vunpack.c.l.b16 %v6074
    %v6243 = vunpack.c.l.b16 %v6075
    %v6244 = vunpack.c.l.b16 %v6076
    %v6245 = vunpack.c.l.b16 %v6077
    %v6246 = vunpack.c.l.b16 %v6078
    %v6247 = vunpack.c.l.b16 %v6079
    %v6248 = vunpack.c.l.b16 %v6080
    %v6249 = vunpack.c.l.b16 %v6081
    %v6250 = vunpack.c.l.b16 %v6082
    %v6251 = vunpack.c.l.b16 %v6083
    %v6252 = vunpack.c.l.b16 %v6084
    %v6253 = vunpack.c.l.b16 %v6085
    %v6254 = vunpack.c.l.b16 %v6086
    %v6255 = vpack.c.b16 %v6240, %v6239
    %v6256 = vpack.c.b16 %v6242, %v6241
    %v6257 = vpack.c.b16 %v6244, %v6243
    %v6258 = vpack.c.b16 %v6246, %v6245
    %v6259 = vpack.c.b16 %v6248, %v6247
    %v6260 = vpack.c.b16 %v6250, %v6249
    %v6261 = vpack.c.b16 %v6252, %v6251
    %v6262 = vpack.c.b16 %v6254, %v6253
    %6271 = vmatprep.subr.bf16.mxu0 0
    %6272 = vmatpush1.bf16.msra.mxu0 %v6255
    %6273 = vmatprep.subr.bf16.mxu0 0
    %6274 = vmatpush1.bf16.msra.mxu0 %v6256
    %6275 = vmatprep.subr.bf16.mxu0 0
    %6276 = vmatpush1.bf16.msra.mxu0 %v6257
    %6277 = vmatprep.subr.bf16.mxu0 0
    %6278 = vmatpush1.bf16.msra.mxu0 %v6258
    %6279 = vmatprep.subr.bf16.mxu0 0
    %6280 = vmatpush1.bf16.msra.mxu0 %v6259
    %6281 = vmatprep.subr.bf16.mxu0 0
    %6282 = vmatpush1.bf16.msra.mxu0 %v6260
    %6283 = vmatprep.subr.bf16.mxu0 0
    %6284 = vmatpush1.bf16.msra.mxu0 %v6261
    %6285 = vmatprep.subr.bf16.mxu0 0
    %6286 = vmatpush1.bf16.msra.mxu0 %v6262
    %6287 = vmatprep.subr.bf16.mxu0 0
    %6288 = vmatpush1.bf16.msra.mxu0 0
    %6289 = vmatprep.subr.bf16.mxu0 0
    %6290 = vmatpush1.bf16.msra.mxu0 0
    %6291 = vmatprep.subr.bf16.mxu0 0
    %6292 = vmatpush1.bf16.msra.mxu0 0
    %6293 = vmatprep.subr.bf16.mxu0 0
    %6294 = vmatpush1.bf16.msra.mxu0 0
    %6295 = vmatprep.subr.bf16.mxu0 0
    %6296 = vmatpush1.bf16.msra.mxu0 0
    %6297 = vmatprep.subr.bf16.mxu0 0
    %6298 = vmatpush1.bf16.msra.mxu0 0
    %6299 = vmatprep.subr.bf16.mxu0 0
    %6300 = vmatpush1.bf16.msra.mxu0 0
    %6301 = vmatprep.subr.bf16.mxu0 0
    %6302 = vmatpush1.bf16.msra.mxu0 0
    %6303 = vmatprep.mubr.bf16.mxu0 0
    %6304 = vmatmul.mubr.bf16.gmra.mrb[0].mxu0 %v6215
    %v6305 = vpop.f32.mrb[0].mxu0
    %v6306 = vadd.f32 0.0, %v6305
    %v6307 = vpop.f32.mrb[0].mxu0
    %v6308 = vpop.f32.mrb[0].mxu0
    %v6309 = vadd.f32 0.0, %v6308
    %v6310 = vpop.f32.mrb[0].mxu0
    %6311 = vmatprep.mubr.bf16.mxu0 0
    %6312 = vmatmul.mubr.bf16.gmra.mrb[0].mxu0 %v6216
    %v6313 = vpop.f32.mrb[0].mxu0
    %v6314 = vadd.f32 0.0, %v6313
    %v6315 = vpop.f32.mrb[0].mxu0
    %v6316 = vpop.f32.mrb[0].mxu0
    %v6317 = vadd.f32 0.0, %v6316
    %v6318 = vpop.f32.mrb[0].mxu0
    %6319 = vmatprep.mubr.bf16.mxu0 0
    %6320 = vmatmul.mubr.bf16.gmra.mrb[0].mxu0 %v6217
    %v6321 = vpop.f32.mrb[0].mxu0
    %v6322 = vadd.f32 0.0, %v6321
    %v6323 = vpop.f32.mrb[0].mxu0
    %v6324 = vpop.f32.mrb[0].mxu0
    %v6325 = vadd.f32 0.0, %v6324
    %v6326 = vpop.f32.mrb[0].mxu0
    %6327 = vmatprep.mubr.bf16.mxu0 0
    %6328 = vmatmul.mubr.bf16.gmra.mrb[0].mxu0 %v6218
    %v6329 = vpop.f32.mrb[0].mxu0
    %v6330 = vadd.f32 0.0, %v6329
    %v6331 = vpop.f32.mrb[0].mxu0
    %v6332 = vpop.f32.mrb[0].mxu0
    %v6333 = vadd.f32 0.0, %v6332
    %v6334 = vpop.f32.mrb[0].mxu0
    %6335 = vdwg.mxu0
    %v6336 = vadd.f32 %v5924, %v6306
    %v6337 = vadd.f32 %v5925, %v6309
    %v6338 = vadd.f32 %v5926, %v6314
    %v6339 = vadd.f32 %v5927, %v6317
    %v6340 = vadd.f32 %v5928, %v6322
    %v6341 = vadd.f32 %v5929, %v6325
    %v6342 = vadd.f32 %v5930, %v6330
    %v6343 = vadd.f32 %v5931, %v6333
    %s6344 = scalar_lea.vmem [#allocation4], 576
    %v6345 = vld [vmem:[%s6344] sm:$0xf]
    %v6346 = vld [vmem:[%s6344 + $0x4] sm:$0xf]
    %v6347 = vld [vmem:[%s6344 + $0x8] sm:$0xf]
    %v6348 = vld [vmem:[%s6344 + $0xc] sm:$0xf]
    %v6349 = vld [vmem:[%s6344 + $0x10] sm:$0xf]
    %v6350 = vld [vmem:[%s6344 + $0x14] sm:$0xf]
    %v6351 = vld [vmem:[%s6344 + $0x18] sm:$0xf]
    %v6352 = vld [vmem:[%s6344 + $0x1c] sm:$0xf]
    %v6353 = vld [vmem:[%s6344 + $0x20] sm:$0xf]
    %v6354 = vld [vmem:[%s6344 + $0x24] sm:$0xf]
    %v6355 = vld [vmem:[%s6344 + $0x28] sm:$0xf]
    %v6356 = vld [vmem:[%s6344 + $0x2c] sm:$0xf]
    %v6357 = vld [vmem:[%s6344 + $0x30] sm:$0xf]
    %v6358 = vld [vmem:[%s6344 + $0x34] sm:$0xf]
    %v6359 = vld [vmem:[%s6344 + $0x38] sm:$0xf]
    %v6360 = vld [vmem:[%s6344 + $0x3c] sm:$0xf]
    %v6377 = vunpack.c.l.b16 %v6345
    %v6378 = vunpack.c.l.b16 %v6346
    %v6379 = vunpack.c.l.b16 %v6347
    %v6380 = vunpack.c.l.b16 %v6348
    %v6381 = vunpack.c.l.b16 %v6349
    %v6382 = vunpack.c.l.b16 %v6350
    %v6383 = vunpack.c.l.b16 %v6351
    %v6384 = vunpack.c.l.b16 %v6352
    %v6385 = vunpack.c.l.b16 %v6353
    %v6386 = vunpack.c.l.b16 %v6354
    %v6387 = vunpack.c.l.b16 %v6355
    %v6388 = vunpack.c.l.b16 %v6356
    %v6389 = vunpack.c.l.b16 %v6357
    %v6390 = vunpack.c.l.b16 %v6358
    %v6391 = vunpack.c.l.b16 %v6359
    %v6392 = vunpack.c.l.b16 %v6360
    %v6393 = vpack.c.b16 %v6378, %v6377
    %v6394 = vpack.c.b16 %v6380, %v6379
    %v6395 = vpack.c.b16 %v6382, %v6381
    %v6396 = vpack.c.b16 %v6384, %v6383
    %v6397 = vpack.c.b16 %v6386, %v6385
    %v6398 = vpack.c.b16 %v6388, %v6387
    %v6399 = vpack.c.b16 %v6390, %v6389
    %v6400 = vpack.c.b16 %v6392, %v6391
    %6409 = vmatprep.subr.bf16.mxu0 0
    %6410 = vmatpush1.bf16.msra.mxu0 %v6393
    %6411 = vmatprep.subr.bf16.mxu0 0
    %6412 = vmatpush1.bf16.msra.mxu0 %v6394
    %6413 = vmatprep.subr.bf16.mxu0 0
    %6414 = vmatpush1.bf16.msra.mxu0 %v6395
    %6415 = vmatprep.subr.bf16.mxu0 0
    %6416 = vmatpush1.bf16.msra.mxu0 %v6396
    %6417 = vmatprep.subr.bf16.mxu0 0
    %6418 = vmatpush1.bf16.msra.mxu0 %v6397
    %6419 = vmatprep.subr.bf16.mxu0 0
    %6420 = vmatpush1.bf16.msra.mxu0 %v6398
    %6421 = vmatprep.subr.bf16.mxu0 0
    %6422 = vmatpush1.bf16.msra.mxu0 %v6399
    %6423 = vmatprep.subr.bf16.mxu0 0
    %6424 = vmatpush1.bf16.msra.mxu0 %v6400
    %6425 = vmatprep.subr.bf16.mxu0 0
    %6426 = vmatpush1.bf16.msra.mxu0 0
    %6427 = vmatprep.subr.bf16.mxu0 0
    %6428 = vmatpush1.bf16.msra.mxu0 0
    %6429 = vmatprep.subr.bf16.mxu0 0
    %6430 = vmatpush1.bf16.msra.mxu0 0
    %6431 = vmatprep.subr.bf16.mxu0 0
    %6432 = vmatpush1.bf16.msra.mxu0 0
    %6433 = vmatprep.subr.bf16.mxu0 0
    %6434 = vmatpush1.bf16.msra.mxu0 0
    %6435 = vmatprep.subr.bf16.mxu0 0
    %6436 = vmatpush1.bf16.msra.mxu0 0
    %6437 = vmatprep.subr.bf16.mxu0 0
    %6438 = vmatpush1.bf16.msra.mxu0 0
    %6439 = vmatprep.subr.bf16.mxu0 0
    %6440 = vmatpush1.bf16.msra.mxu0 0
    %6441 = vmatprep.mubr.bf16.mxu0 0
    %6442 = vmatmul.mubr.bf16.gmra.mrb[0].mxu0 %v6215
    %v6443 = vpop.f32.mrb[0].mxu0
    %v6444 = vadd.f32 0.0, %v6443
    %v6445 = vpop.f32.mrb[0].mxu0
    %v6446 = vpop.f32.mrb[0].mxu0
    %v6447 = vadd.f32 0.0, %v6446
    %v6448 = vpop.f32.mrb[0].mxu0
    %6449 = vmatprep.mubr.bf16.mxu0 0
    %6450 = vmatmul.mubr.bf16.gmra.mrb[0].mxu0 %v6216
    %v6451 = vpop.f32.mrb[0].mxu0
    %v6452 = vadd.f32 0.0, %v6451
    %v6453 = vpop.f32.mrb[0].mxu0
    %v6454 = vpop.f32.mrb[0].mxu0
    %v6455 = vadd.f32 0.0, %v6454
    %v6456 = vpop.f32.mrb[0].mxu0
    %6457 = vmatprep.mubr.bf16.mxu0 0
    %6458 = vmatmul.mubr.bf16.gmra.mrb[0].mxu0 %v6217
    %v6459 = vpop.f32.mrb[0].mxu0
    %v6460 = vadd.f32 0.0, %v6459
    %v6461 = vpop.f32.mrb[0].mxu0
    %v6462 = vpop.f32.mrb[0].mxu0
    %v6463 = vadd.f32 0.0, %v6462
    %v6464 = vpop.f32.mrb[0].mxu0
    %6465 = vmatprep.mubr.bf16.mxu0 0
    %6466 = vmatmul.mubr.bf16.gmra.mrb[0].mxu0 %v6218
    %v6467 = vpop.f32.mrb[0].mxu0
    %v6468 = vadd.f32 0.0, %v6467
    %v6469 = vpop.f32.mrb[0].mxu0
    %v6470 = vpop.f32.mrb[0].mxu0
    %v6471 = vadd.f32 0.0, %v6470
    %v6472 = vpop.f32.mrb[0].mxu0
    %6473 = vdwg.mxu0
    %v6474 = vadd.f32 %v6062, %v6444
    %v6475 = vadd.f32 %v6063, %v6447
    %v6476 = vadd.f32 %v6064, %v6452
    %v6477 = vadd.f32 %v6065, %v6455
    %v6478 = vadd.f32 %v6066, %v6460
    %v6479 = vadd.f32 %v6067, %v6463
    %v6480 = vadd.f32 %v6068, %v6468
    %v6481 = vadd.f32 %v6069, %v6471
    %v6482 = vmax.f32 %v6336, %v6474
    %v6483 = vmax.f32 %v6337, %v6475
    %v6484 = vmax.f32 %v6338, %v6476
    %v6485 = vmax.f32 %v6339, %v6477
    %v6486 = vmax.f32 %v6340, %v6478
    %v6487 = vmax.f32 %v6341, %v6479
    %v6488 = vmax.f32 %v6342, %v6480
    %v6489 = vmax.f32 %v6343, %v6481
    %v6490 = vld [vmem:[%s4] sm:$0x1]
    %v6492 = vlaneseq
    %v6493 = vshrl.u32 %v6492, 7
    %v6494 = vsub.s32 0, %v6493
    %v6495 = vrot.slane %v6490, %v6494
    %v6497 = vadd.f32 %v6482, %v6495
    %v6498 = vadd.f32 %v6483, %v6495
    %v6499 = vadd.f32 %v6484, %v6495
    %v6500 = vadd.f32 %v6485, %v6495
    %v6501 = vadd.f32 %v6486, %v6495
    %v6502 = vadd.f32 %v6487, %v6495
    %v6503 = vadd.f32 %v6488, %v6495
    %v6504 = vadd.f32 %v6489, %v6495
    %v6513 = vcombine.high %v6497, %v6497
    %v6515 = vunpack.c.l.s4 1983009808
    %v6516 = vunpack.c.0.s8 %v6515
    %v6517 = vlaneseq
    %v6518 = vshrl.u32 %v6517, 7
    %v6519 = vsub.s32 %v6516, %v6518
    %v6520 = vrot.slane %v6497, %v6519
    %v6522 = vunpack.c.l.s4 1983009808
    %v6523 = vunpack.c.0.s8 %v6522
    %v6524 = vlaneseq
    %v6525 = vshrl.u32 %v6524, 7
    %v6526 = vsub.s32 %v6523, %v6525
    %v6527 = vrot.slane %v6513, %v6526
    %v6528 = vcombine.high %v6520, %v6520
    %v6529 = vcombine.high %v6527, %v6527
    %v6530 = vcombine.high %v6498, %v6498
    %v6532 = vunpack.c.l.s4 1983009808
    %v6533 = vunpack.c.0.s8 %v6532
    %v6534 = vlaneseq
    %v6535 = vshrl.u32 %v6534, 7
    %v6536 = vsub.s32 %v6533, %v6535
    %v6537 = vrot.slane %v6498, %v6536
    %v6539 = vunpack.c.l.s4 1983009808
    %v6540 = vunpack.c.0.s8 %v6539
    %v6541 = vlaneseq
    %v6542 = vshrl.u32 %v6541, 7
    %v6543 = vsub.s32 %v6540, %v6542
    %v6544 = vrot.slane %v6530, %v6543
    %v6545 = vcombine.high %v6537, %v6537
    %v6546 = vcombine.high %v6544, %v6544
    %v6547 = vcombine.high %v6499, %v6499
    %v6549 = vunpack.c.l.s4 1983009808
    %v6550 = vunpack.c.0.s8 %v6549
    %v6551 = vlaneseq
    %v6552 = vshrl.u32 %v6551, 7
    %v6553 = vsub.s32 %v6550, %v6552
    %v6554 = vrot.slane %v6499, %v6553
    %v6556 = vunpack.c.l.s4 1983009808
    %v6557 = vunpack.c.0.s8 %v6556
    %v6558 = vlaneseq
    %v6559 = vshrl.u32 %v6558, 7
    %v6560 = vsub.s32 %v6557, %v6559
    %v6561 = vrot.slane %v6547, %v6560
    %v6562 = vcombine.high %v6554, %v6554
    %v6563 = vcombine.high %v6561, %v6561
    %v6564 = vcombine.high %v6500, %v6500
    %v6566 = vunpack.c.l.s4 1983009808
    %v6567 = vunpack.c.0.s8 %v6566
    %v6568 = vlaneseq
    %v6569 = vshrl.u32 %v6568, 7
    %v6570 = vsub.s32 %v6567, %v6569
    %v6571 = vrot.slane %v6500, %v6570
    %v6573 = vunpack.c.l.s4 1983009808
    %v6574 = vunpack.c.0.s8 %v6573
    %v6575 = vlaneseq
    %v6576 = vshrl.u32 %v6575, 7
    %v6577 = vsub.s32 %v6574, %v6576
    %v6578 = vrot.slane %v6564, %v6577
    %v6579 = vcombine.high %v6571, %v6571
    %v6580 = vcombine.high %v6578, %v6578
    %v6581 = vcombine.high %v6501, %v6501
    %v6583 = vunpack.c.l.s4 1983009808
    %v6584 = vunpack.c.0.s8 %v6583
    %v6585 = vlaneseq
    %v6586 = vshrl.u32 %v6585, 7
    %v6587 = vsub.s32 %v6584, %v6586
    %v6588 = vrot.slane %v6501, %v6587
    %v6590 = vunpack.c.l.s4 1983009808
    %v6591 = vunpack.c.0.s8 %v6590
    %v6592 = vlaneseq
    %v6593 = vshrl.u32 %v6592, 7
    %v6594 = vsub.s32 %v6591, %v6593
    %v6595 = vrot.slane %v6581, %v6594
    %v6596 = vcombine.high %v6588, %v6588
    %v6597 = vcombine.high %v6595, %v6595
    %v6598 = vcombine.high %v6502, %v6502
    %v6600 = vunpack.c.l.s4 1983009808
    %v6601 = vunpack.c.0.s8 %v6600
    %v6602 = vlaneseq
    %v6603 = vshrl.u32 %v6602, 7
    %v6604 = vsub.s32 %v6601, %v6603
    %v6605 = vrot.slane %v6502, %v6604
    %v6607 = vunpack.c.l.s4 1983009808
    %v6608 = vunpack.c.0.s8 %v6607
    %v6609 = vlaneseq
    %v6610 = vshrl.u32 %v6609, 7
    %v6611 = vsub.s32 %v6608, %v6610
    %v6612 = vrot.slane %v6598, %v6611
    %v6613 = vcombine.high %v6605, %v6605
    %v6614 = vcombine.high %v6612, %v6612
    %v6615 = vcombine.high %v6503, %v6503
    %v6617 = vunpack.c.l.s4 1983009808
    %v6618 = vunpack.c.0.s8 %v6617
    %v6619 = vlaneseq
    %v6620 = vshrl.u32 %v6619, 7
    %v6621 = vsub.s32 %v6618, %v6620
    %v6622 = vrot.slane %v6503, %v6621
    %v6624 = vunpack.c.l.s4 1983009808
    %v6625 = vunpack.c.0.s8 %v6624
    %v6626 = vlaneseq
    %v6627 = vshrl.u32 %v6626, 7
    %v6628 = vsub.s32 %v6625, %v6627
    %v6629 = vrot.slane %v6615, %v6628
    %v6630 = vcombine.high %v6622, %v6622
    %v6631 = vcombine.high %v6629, %v6629
    %v6632 = vcombine.high %v6504, %v6504
    %v6634 = vunpack.c.l.s4 1983009808
    %v6635 = vunpack.c.0.s8 %v6634
    %v6636 = vlaneseq
    %v6637 = vshrl.u32 %v6636, 7
    %v6638 = vsub.s32 %v6635, %v6637
    %v6639 = vrot.slane %v6504, %v6638
    %v6641 = vunpack.c.l.s4 1983009808
    %v6642 = vunpack.c.0.s8 %v6641
    %v6643 = vlaneseq
    %v6644 = vshrl.u32 %v6643, 7
    %v6645 = vsub.s32 %v6642, %v6644
    %v6646 = vrot.slane %v6632, %v6645
    %v6647 = vcombine.high %v6639, %v6639
    %v6648 = vcombine.high %v6646, %v6646
    %v6681 = vrot.slane %v6520, 7
    %v6682 = vrot.slane %v6681, 2
    %v6683 = vrot.slane %v6528, 7
    %v6684 = vrot.slane %v6683, 2
    %v6685 = vrot.slane %v6527, 7
    %v6686 = vrot.slane %v6685, 2
    %v6687 = vrot.slane %v6529, 7
    %v6688 = vrot.slane %v6687, 2
    %v6689 = vrot.slane %v6537, 7
    %v6690 = vrot.slane %v6689, 2
    %v6691 = vrot.slane %v6545, 7
    %v6692 = vrot.slane %v6691, 2
    %v6693 = vrot.slane %v6544, 7
    %v6694 = vrot.slane %v6693, 2
    %v6695 = vrot.slane %v6546, 7
    %v6696 = vrot.slane %v6695, 2
    %v6697 = vrot.slane %v6554, 7
    %v6698 = vrot.slane %v6697, 2
    %v6699 = vrot.slane %v6562, 7
    %v6700 = vrot.slane %v6699, 2
    %v6701 = vrot.slane %v6561, 7
    %v6702 = vrot.slane %v6701, 2
    %v6703 = vrot.slane %v6563, 7
    %v6704 = vrot.slane %v6703, 2
    %v6705 = vrot.slane %v6571, 7
    %v6706 = vrot.slane %v6705, 2
    %v6707 = vrot.slane %v6579, 7
    %v6708 = vrot.slane %v6707, 2
    %v6709 = vrot.slane %v6578, 7
    %v6710 = vrot.slane %v6709, 2
    %v6711 = vrot.slane %v6580, 7
    %v6712 = vrot.slane %v6711, 2
    %v6713 = vrot.slane %v6588, 7
    %v6714 = vrot.slane %v6713, 2
    %v6715 = vrot.slane %v6596, 7
    %v6716 = vrot.slane %v6715, 2
    %v6717 = vrot.slane %v6595, 7
    %v6718 = vrot.slane %v6717, 2
    %v6719 = vrot.slane %v6597, 7
    %v6720 = vrot.slane %v6719, 2
    %v6721 = vrot.slane %v6605, 7
    %v6722 = vrot.slane %v6721, 2
    %v6723 = vrot.slane %v6613, 7
    %v6724 = vrot.slane %v6723, 2
    %v6725 = vrot.slane %v6612, 7
    %v6726 = vrot.slane %v6725, 2
    %v6727 = vrot.slane %v6614, 7
    %v6728 = vrot.slane %v6727, 2
    %v6729 = vrot.slane %v6622, 7
    %v6730 = vrot.slane %v6729, 2
    %v6731 = vrot.slane %v6630, 7
    %v6732 = vrot.slane %v6731, 2
    %v6733 = vrot.slane %v6629, 7
    %v6734 = vrot.slane %v6733, 2
    %v6735 = vrot.slane %v6631, 7
    %v6736 = vrot.slane %v6735, 2
    %v6737 = vrot.slane %v6639, 7
    %v6738 = vrot.slane %v6737, 2
    %v6739 = vrot.slane %v6647, 7
    %v6740 = vrot.slane %v6739, 2
    %v6741 = vrot.slane %v6646, 7
    %v6742 = vrot.slane %v6741, 2
    %v6743 = vrot.slane %v6648, 7
    %v6744 = vrot.slane %v6743, 2
    %v6777 = vmax.f32 %v6520, %v6682
    %v6778 = vmax.f32 %v6528, %v6684
    %v6779 = vmax.f32 %v6527, %v6686
    %v6780 = vmax.f32 %v6529, %v6688
    %v6781 = vmax.f32 %v6537, %v6690
    %v6782 = vmax.f32 %v6545, %v6692
    %v6783 = vmax.f32 %v6544, %v6694
    %v6784 = vmax.f32 %v6546, %v6696
    %v6785 = vmax.f32 %v6554, %v6698
    %v6786 = vmax.f32 %v6562, %v6700
    %v6787 = vmax.f32 %v6561, %v6702
    %v6788 = vmax.f32 %v6563, %v6704
    %v6789 = vmax.f32 %v6571, %v6706
    %v6790 = vmax.f32 %v6579, %v6708
    %v6791 = vmax.f32 %v6578, %v6710
    %v6792 = vmax.f32 %v6580, %v6712
    %v6793 = vmax.f32 %v6588, %v6714
    %v6794 = vmax.f32 %v6596, %v6716
    %v6795 = vmax.f32 %v6595, %v6718
    %v6796 = vmax.f32 %v6597, %v6720
    %v6797 = vmax.f32 %v6605, %v6722
    %v6798 = vmax.f32 %v6613, %v6724
    %v6799 = vmax.f32 %v6612, %v6726
    %v6800 = vmax.f32 %v6614, %v6728
    %v6801 = vmax.f32 %v6622, %v6730
    %v6802 = vmax.f32 %v6630, %v6732
    %v6803 = vmax.f32 %v6629, %v6734
    %v6804 = vmax.f32 %v6631, %v6736
    %v6805 = vmax.f32 %v6639, %v6738
    %v6806 = vmax.f32 %v6647, %v6740
    %v6807 = vmax.f32 %v6646, %v6742
    %v6808 = vmax.f32 %v6648, %v6744
    %v6809 = vmax.f32 %v6777, 0.0
    %v6810 = vmax.f32 %v6778, 0.0
    %v6811 = vmax.f32 %v6779, 0.0
    %v6812 = vmax.f32 %v6780, 0.0
    %v6813 = vmax.f32 %v6781, 0.0
    %v6814 = vmax.f32 %v6782, 0.0
    %v6815 = vmax.f32 %v6783, 0.0
    %v6816 = vmax.f32 %v6784, 0.0
    %v6817 = vmax.f32 %v6785, 0.0
    %v6818 = vmax.f32 %v6786, 0.0
    %v6819 = vmax.f32 %v6787, 0.0
    %v6820 = vmax.f32 %v6788, 0.0
    %v6821 = vmax.f32 %v6789, 0.0
    %v6822 = vmax.f32 %v6790, 0.0
    %v6823 = vmax.f32 %v6791, 0.0
    %v6824 = vmax.f32 %v6792, 0.0
    %v6825 = vmax.f32 %v6793, 0.0
    %v6826 = vmax.f32 %v6794, 0.0
    %v6827 = vmax.f32 %v6795, 0.0
    %v6828 = vmax.f32 %v6796, 0.0
    %v6829 = vmax.f32 %v6797, 0.0
    %v6830 = vmax.f32 %v6798, 0.0
    %v6831 = vmax.f32 %v6799, 0.0
    %v6832 = vmax.f32 %v6800, 0.0
    %v6833 = vmax.f32 %v6801, 0.0
    %v6834 = vmax.f32 %v6802, 0.0
    %v6835 = vmax.f32 %v6803, 0.0
    %v6836 = vmax.f32 %v6804, 0.0
    %v6837 = vmax.f32 %v6805, 0.0
    %v6838 = vmax.f32 %v6806, 0.0
    %v6839 = vmax.f32 %v6807, 0.0
    %v6840 = vmax.f32 %v6808, 0.0
    %v6841 = vpack.c.bf16 %v6809, %v6809
    %v6842 = vpack.c.bf16 %v6810, %v6810
    %v6843 = vpack.c.bf16 %v6811, %v6811
    %v6844 = vpack.c.bf16 %v6812, %v6812
    %v6845 = vpack.c.bf16 %v6813, %v6813
    %v6846 = vpack.c.bf16 %v6814, %v6814
    %v6847 = vpack.c.bf16 %v6815, %v6815
    %v6848 = vpack.c.bf16 %v6816, %v6816
    %v6849 = vpack.c.bf16 %v6817, %v6817
    %v6850 = vpack.c.bf16 %v6818, %v6818
    %v6851 = vpack.c.bf16 %v6819, %v6819
    %v6852 = vpack.c.bf16 %v6820, %v6820
    %v6853 = vpack.c.bf16 %v6821, %v6821
    %v6854 = vpack.c.bf16 %v6822, %v6822
    %v6855 = vpack.c.bf16 %v6823, %v6823
    %v6856 = vpack.c.bf16 %v6824, %v6824
    %v6857 = vpack.c.bf16 %v6825, %v6825
    %v6858 = vpack.c.bf16 %v6826, %v6826
    %v6859 = vpack.c.bf16 %v6827, %v6827
    %v6860 = vpack.c.bf16 %v6828, %v6828
    %v6861 = vpack.c.bf16 %v6829, %v6829
    %v6862 = vpack.c.bf16 %v6830, %v6830
    %v6863 = vpack.c.bf16 %v6831, %v6831
    %v6864 = vpack.c.bf16 %v6832, %v6832
    %v6865 = vpack.c.bf16 %v6833, %v6833
    %v6866 = vpack.c.bf16 %v6834, %v6834
    %v6867 = vpack.c.bf16 %v6835, %v6835
    %v6868 = vpack.c.bf16 %v6836, %v6836
    %v6869 = vpack.c.bf16 %v6837, %v6837
    %v6870 = vpack.c.bf16 %v6838, %v6838
    %v6871 = vpack.c.bf16 %v6839, %v6839
    %v6872 = vpack.c.bf16 %v6840, %v6840
    %v6873 = vld [vmem:[%s5] sm:$0xf]
    %v6874 = vld [vmem:[%s5 + $0x4] sm:$0xf]
    %v6875 = vld [vmem:[%s5 + $0x8] sm:$0xf]
    %v6876 = vld [vmem:[%s5 + $0xc] sm:$0xf]
    %v6877 = vld [vmem:[%s5 + $0x10] sm:$0xf]
    %v6878 = vld [vmem:[%s5 + $0x14] sm:$0xf]
    %v6879 = vld [vmem:[%s5 + $0x18] sm:$0xf]
    %v6880 = vld [vmem:[%s5 + $0x1c] sm:$0xf]
    %v6881 = vld [vmem:[%s5 + $0x20] sm:$0xf]
    %v6882 = vld [vmem:[%s5 + $0x24] sm:$0xf]
    %v6883 = vld [vmem:[%s5 + $0x28] sm:$0xf]
    %v6884 = vld [vmem:[%s5 + $0x2c] sm:$0xf]
    %v6885 = vld [vmem:[%s5 + $0x30] sm:$0xf]
    %v6886 = vld [vmem:[%s5 + $0x34] sm:$0xf]
    %v6887 = vld [vmem:[%s5 + $0x38] sm:$0xf]
    %v6888 = vld [vmem:[%s5 + $0x3c] sm:$0xf]
    %s6889 = scalar_lea.vmem %s5, 64
    %v6890 = vld [vmem:[%s6889] sm:$0xf]
    %v6891 = vld [vmem:[%s6889 + $0x4] sm:$0xf]
    %v6892 = vld [vmem:[%s6889 + $0x8] sm:$0xf]
    %v6893 = vld [vmem:[%s6889 + $0xc] sm:$0xf]
    %v6894 = vld [vmem:[%s6889 + $0x10] sm:$0xf]
    %v6895 = vld [vmem:[%s6889 + $0x14] sm:$0xf]
    %v6896 = vld [vmem:[%s6889 + $0x18] sm:$0xf]
    %v6897 = vld [vmem:[%s6889 + $0x1c] sm:$0xf]
    %v6898 = vld [vmem:[%s6889 + $0x20] sm:$0xf]
    %v6899 = vld [vmem:[%s6889 + $0x24] sm:$0xf]
    %v6900 = vld [vmem:[%s6889 + $0x28] sm:$0xf]
    %v6901 = vld [vmem:[%s6889 + $0x2c] sm:$0xf]
    %v6902 = vld [vmem:[%s6889 + $0x30] sm:$0xf]
    %v6903 = vld [vmem:[%s6889 + $0x34] sm:$0xf]
    %v6904 = vld [vmem:[%s6889 + $0x38] sm:$0xf]
    %v6905 = vld [vmem:[%s6889 + $0x3c] sm:$0xf]
    %v6914 = vunpack.c.l.b16 %v6842
    %v6915 = vunpack.c.l.b16 %v6846
    %v6916 = vunpack.c.l.b16 %v6850
    %v6917 = vunpack.c.l.b16 %v6854
    %v6918 = vunpack.c.l.b16 %v6858
    %v6919 = vunpack.c.l.b16 %v6862
    %v6920 = vunpack.c.l.b16 %v6866
    %v6921 = vunpack.c.l.b16 %v6870
    %v6922 = vrot.slane %v6915, 7
    %v6923 = vsel %vm4515, %v6922, %v6914
    %v6924 = vrot.slane %v6916, 6
    %v6925 = vsel %vm4518, %v6924, %v6923
    %v6926 = vrot.slane %v6917, 5
    %v6927 = vsel %vm4521, %v6926, %v6925
    %v6928 = vrot.slane %v6918, 4
    %v6929 = vsel %vm4524, %v6928, %v6927
    %v6930 = vrot.slane %v6919, 3
    %v6931 = vsel %vm4527, %v6930, %v6929
    %v6932 = vrot.slane %v6920, 2
    %v6933 = vsel %vm4530, %v6932, %v6931
    %v6934 = vrot.slane %v6921, 1
    %v6935 = vsel %vm4533, %v6934, %v6933
    %v6936 = vpack.c.b16 %v6935, %v6935
    %v6954 = vunpack.c.l.b16 %v6890
    %v6955 = vunpack.c.l.b16 %v6891
    %v6956 = vunpack.c.l.b16 %v6892
    %v6957 = vunpack.c.l.b16 %v6893
    %v6958 = vunpack.c.l.b16 %v6894
    %v6959 = vunpack.c.l.b16 %v6895
    %v6960 = vunpack.c.l.b16 %v6896
    %v6961 = vunpack.c.l.b16 %v6897
    %v6962 = vunpack.c.l.b16 %v6898
    %v6963 = vunpack.c.l.b16 %v6899
    %v6964 = vunpack.c.l.b16 %v6900
    %v6965 = vunpack.c.l.b16 %v6901
    %v6966 = vunpack.c.l.b16 %v6902
    %v6967 = vunpack.c.l.b16 %v6903
    %v6968 = vunpack.c.l.b16 %v6904
    %v6969 = vunpack.c.l.b16 %v6905
    %v6970 = vpack.c.b16 %v6955, %v6954
    %v6971 = vpack.c.b16 %v6957, %v6956
    %v6972 = vpack.c.b16 %v6959, %v6958
    %v6973 = vpack.c.b16 %v6961, %v6960
    %v6974 = vpack.c.b16 %v6963, %v6962
    %v6975 = vpack.c.b16 %v6965, %v6964
    %v6976 = vpack.c.b16 %v6967, %v6966
    %v6977 = vpack.c.b16 %v6969, %v6968
    %6986 = vmatprep.subr.bf16.mxu0 0
    %6987 = vmatpush1.bf16.msra.mxu0 %v6970
    %6988 = vmatprep.subr.bf16.mxu0 0
    %6989 = vmatpush1.bf16.msra.mxu0 %v6971
    %6990 = vmatprep.subr.bf16.mxu0 0
    %6991 = vmatpush1.bf16.msra.mxu0 %v6972
    %6992 = vmatprep.subr.bf16.mxu0 0
    %6993 = vmatpush1.bf16.msra.mxu0 %v6973
    %6994 = vmatprep.subr.bf16.mxu0 0
    %6995 = vmatpush1.bf16.msra.mxu0 %v6974
    %6996 = vmatprep.subr.bf16.mxu0 0
    %6997 = vmatpush1.bf16.msra.mxu0 %v6975
    %6998 = vmatprep.subr.bf16.mxu0 0
    %6999 = vmatpush1.bf16.msra.mxu0 %v6976
    %7000 = vmatprep.subr.bf16.mxu0 0
    %7001 = vmatpush1.bf16.msra.mxu0 %v6977
    %7002 = vmatprep.subr.bf16.mxu0 0
    %7003 = vmatpush1.bf16.msra.mxu0 0
    %7004 = vmatprep.subr.bf16.mxu0 0
    %7005 = vmatpush1.bf16.msra.mxu0 0
    %7006 = vmatprep.subr.bf16.mxu0 0
    %7007 = vmatpush1.bf16.msra.mxu0 0
    %7008 = vmatprep.subr.bf16.mxu0 0
    %7009 = vmatpush1.bf16.msra.mxu0 0
    %7010 = vmatprep.subr.bf16.mxu0 0
    %7011 = vmatpush1.bf16.msra.mxu0 0
    %7012 = vmatprep.subr.bf16.mxu0 0
    %7013 = vmatpush1.bf16.msra.mxu0 0
    %7014 = vmatprep.subr.bf16.mxu0 0
    %7015 = vmatpush1.bf16.msra.mxu0 0
    %7016 = vmatprep.subr.bf16.mxu0 0
    %7017 = vmatpush1.bf16.msra.mxu0 0
    %7018 = vmatprep.mubr.bf16.mxu0 0
    %7019 = vmatmul.mubr.bf16.gmra.mrb[0].mxu0 %v6936
    %v7020 = vpop.f32.mrb[0].mxu0
    %v7021 = vadd.f32 0.0, %v7020
    %v7022 = vpop.f32.mrb[0].mxu0
    %v7023 = vpop.f32.mrb[0].mxu0
    %v7024 = vpop.f32.mrb[0].mxu0
    %7025 = vdwg.mxu0
    %v7034 = vunpack.c.l.b16 %v6841
    %v7035 = vunpack.c.l.b16 %v6845
    %v7036 = vunpack.c.l.b16 %v6849
    %v7037 = vunpack.c.l.b16 %v6853
    %v7038 = vunpack.c.l.b16 %v6857
    %v7039 = vunpack.c.l.b16 %v6861
    %v7040 = vunpack.c.l.b16 %v6865
    %v7041 = vunpack.c.l.b16 %v6869
    %v7042 = vrot.slane %v7035, 7
    %v7043 = vsel %vm4515, %v7042, %v7034
    %v7044 = vrot.slane %v7036, 6
    %v7045 = vsel %vm4518, %v7044, %v7043
    %v7046 = vrot.slane %v7037, 5
    %v7047 = vsel %vm4521, %v7046, %v7045
    %v7048 = vrot.slane %v7038, 4
    %v7049 = vsel %vm4524, %v7048, %v7047
    %v7050 = vrot.slane %v7039, 3
    %v7051 = vsel %vm4527, %v7050, %v7049
    %v7052 = vrot.slane %v7040, 2
    %v7053 = vsel %vm4530, %v7052, %v7051
    %v7054 = vrot.slane %v7041, 1
    %v7055 = vsel %vm4533, %v7054, %v7053
    %v7056 = vpack.c.b16 %v7055, %v7055
    %v7074 = vunpack.c.l.b16 %v6873
    %v7075 = vunpack.c.l.b16 %v6874
    %v7076 = vunpack.c.l.b16 %v6875
    %v7077 = vunpack.c.l.b16 %v6876
    %v7078 = vunpack.c.l.b16 %v6877
    %v7079 = vunpack.c.l.b16 %v6878
    %v7080 = vunpack.c.l.b16 %v6879
    %v7081 = vunpack.c.l.b16 %v6880
    %v7082 = vunpack.c.l.b16 %v6881
    %v7083 = vunpack.c.l.b16 %v6882
    %v7084 = vunpack.c.l.b16 %v6883
    %v7085 = vunpack.c.l.b16 %v6884
    %v7086 = vunpack.c.l.b16 %v6885
    %v7087 = vunpack.c.l.b16 %v6886
    %v7088 = vunpack.c.l.b16 %v6887
    %v7089 = vunpack.c.l.b16 %v6888
    %v7090 = vpack.c.b16 %v7075, %v7074
    %v7091 = vpack.c.b16 %v7077, %v7076
    %v7092 = vpack.c.b16 %v7079, %v7078
    %v7093 = vpack.c.b16 %v7081, %v7080
    %v7094 = vpack.c.b16 %v7083, %v7082
    %v7095 = vpack.c.b16 %v7085, %v7084
    %v7096 = vpack.c.b16 %v7087, %v7086
    %v7097 = vpack.c.b16 %v7089, %v7088
    %7106 = vmatprep.subr.bf16.mxu0 0
    %7107 = vmatpush1.bf16.msra.mxu0 %v7090
    %7108 = vmatprep.subr.bf16.mxu0 0
    %7109 = vmatpush1.bf16.msra.mxu0 %v7091
    %7110 = vmatprep.subr.bf16.mxu0 0
    %7111 = vmatpush1.bf16.msra.mxu0 %v7092
    %7112 = vmatprep.subr.bf16.mxu0 0
    %7113 = vmatpush1.bf16.msra.mxu0 %v7093
    %7114 = vmatprep.subr.bf16.mxu0 0
    %7115 = vmatpush1.bf16.msra.mxu0 %v7094
    %7116 = vmatprep.subr.bf16.mxu0 0
    %7117 = vmatpush1.bf16.msra.mxu0 %v7095
    %7118 = vmatprep.subr.bf16.mxu0 0
    %7119 = vmatpush1.bf16.msra.mxu0 %v7096
    %7120 = vmatprep.subr.bf16.mxu0 0
    %7121 = vmatpush1.bf16.msra.mxu0 %v7097
    %7122 = vmatprep.subr.bf16.mxu0 0
    %7123 = vmatpush1.bf16.msra.mxu0 0
    %7124 = vmatprep.subr.bf16.mxu0 0
    %7125 = vmatpush1.bf16.msra.mxu0 0
    %7126 = vmatprep.subr.bf16.mxu0 0
    %7127 = vmatpush1.bf16.msra.mxu0 0
    %7128 = vmatprep.subr.bf16.mxu0 0
    %7129 = vmatpush1.bf16.msra.mxu0 0
    %7130 = vmatprep.subr.bf16.mxu0 0
    %7131 = vmatpush1.bf16.msra.mxu0 0
    %7132 = vmatprep.subr.bf16.mxu0 0
    %7133 = vmatpush1.bf16.msra.mxu0 0
    %7134 = vmatprep.subr.bf16.mxu0 0
    %7135 = vmatpush1.bf16.msra.mxu0 0
    %7136 = vmatprep.subr.bf16.mxu0 0
    %7137 = vmatpush1.bf16.msra.mxu0 0
    %7138 = vmatprep.mubr.bf16.mxu0 0
    %7139 = vmatmul.mubr.bf16.gmra.mrb[0].mxu0 %v7056
    %v7140 = vpop.f32.mrb[0].mxu0
    %v7141 = vadd.f32 %v7021, %v7140
    %v7142 = vpop.f32.mrb[0].mxu0
    %v7143 = vpop.f32.mrb[0].mxu0
    %v7144 = vpop.f32.mrb[0].mxu0
    %7145 = vdwg.mxu0
    %s7146 = scalar_lea.vmem %s5, 128
    %v7147 = vld [vmem:[%s7146] sm:$0xf]
    %v7148 = vld [vmem:[%s7146 + $0x4] sm:$0xf]
    %v7149 = vld [vmem:[%s7146 + $0x8] sm:$0xf]
    %v7150 = vld [vmem:[%s7146 + $0xc] sm:$0xf]
    %v7151 = vld [vmem:[%s7146 + $0x10] sm:$0xf]
    %v7152 = vld [vmem:[%s7146 + $0x14] sm:$0xf]
    %v7153 = vld [vmem:[%s7146 + $0x18] sm:$0xf]
    %v7154 = vld [vmem:[%s7146 + $0x1c] sm:$0xf]
    %v7155 = vld [vmem:[%s7146 + $0x20] sm:$0xf]
    %v7156 = vld [vmem:[%s7146 + $0x24] sm:$0xf]
    %v7157 = vld [vmem:[%s7146 + $0x28] sm:$0xf]
    %v7158 = vld [vmem:[%s7146 + $0x2c] sm:$0xf]
    %v7159 = vld [vmem:[%s7146 + $0x30] sm:$0xf]
    %v7160 = vld [vmem:[%s7146 + $0x34] sm:$0xf]
    %v7161 = vld [vmem:[%s7146 + $0x38] sm:$0xf]
    %v7162 = vld [vmem:[%s7146 + $0x3c] sm:$0xf]
    %v7171 = vunpack.c.l.b16 %v6843
    %v7172 = vunpack.c.l.b16 %v6847
    %v7173 = vunpack.c.l.b16 %v6851
    %v7174 = vunpack.c.l.b16 %v6855
    %v7175 = vunpack.c.l.b16 %v6859
    %v7176 = vunpack.c.l.b16 %v6863
    %v7177 = vunpack.c.l.b16 %v6867
    %v7178 = vunpack.c.l.b16 %v6871
    %v7179 = vrot.slane %v7172, 7
    %v7180 = vsel %vm4515, %v7179, %v7171
    %v7181 = vrot.slane %v7173, 6
    %v7182 = vsel %vm4518, %v7181, %v7180
    %v7183 = vrot.slane %v7174, 5
    %v7184 = vsel %vm4521, %v7183, %v7182
    %v7185 = vrot.slane %v7175, 4
    %v7186 = vsel %vm4524, %v7185, %v7184
    %v7187 = vrot.slane %v7176, 3
    %v7188 = vsel %vm4527, %v7187, %v7186
    %v7189 = vrot.slane %v7177, 2
    %v7190 = vsel %vm4530, %v7189, %v7188
    %v7191 = vrot.slane %v7178, 1
    %v7192 = vsel %vm4533, %v7191, %v7190
    %v7193 = vpack.c.b16 %v7192, %v7192
    %v7211 = vunpack.c.l.b16 %v7147
    %v7212 = vunpack.c.l.b16 %v7148
    %v7213 = vunpack.c.l.b16 %v7149
    %v7214 = vunpack.c.l.b16 %v7150
    %v7215 = vunpack.c.l.b16 %v7151
    %v7216 = vunpack.c.l.b16 %v7152
    %v7217 = vunpack.c.l.b16 %v7153
    %v7218 = vunpack.c.l.b16 %v7154
    %v7219 = vunpack.c.l.b16 %v7155
    %v7220 = vunpack.c.l.b16 %v7156
    %v7221 = vunpack.c.l.b16 %v7157
    %v7222 = vunpack.c.l.b16 %v7158
    %v7223 = vunpack.c.l.b16 %v7159
    %v7224 = vunpack.c.l.b16 %v7160
    %v7225 = vunpack.c.l.b16 %v7161
    %v7226 = vunpack.c.l.b16 %v7162
    %v7227 = vpack.c.b16 %v7212, %v7211
    %v7228 = vpack.c.b16 %v7214, %v7213
    %v7229 = vpack.c.b16 %v7216, %v7215
    %v7230 = vpack.c.b16 %v7218, %v7217
    %v7231 = vpack.c.b16 %v7220, %v7219
    %v7232 = vpack.c.b16 %v7222, %v7221
    %v7233 = vpack.c.b16 %v7224, %v7223
    %v7234 = vpack.c.b16 %v7226, %v7225
    %7243 = vmatprep.subr.bf16.mxu0 0
    %7244 = vmatpush1.bf16.msra.mxu0 %v7227
    %7245 = vmatprep.subr.bf16.mxu0 0
    %7246 = vmatpush1.bf16.msra.mxu0 %v7228
    %7247 = vmatprep.subr.bf16.mxu0 0
    %7248 = vmatpush1.bf16.msra.mxu0 %v7229
    %7249 = vmatprep.subr.bf16.mxu0 0
    %7250 = vmatpush1.bf16.msra.mxu0 %v7230
    %7251 = vmatprep.subr.bf16.mxu0 0
    %7252 = vmatpush1.bf16.msra.mxu0 %v7231
    %7253 = vmatprep.subr.bf16.mxu0 0
    %7254 = vmatpush1.bf16.msra.mxu0 %v7232
    %7255 = vmatprep.subr.bf16.mxu0 0
    %7256 = vmatpush1.bf16.msra.mxu0 %v7233
    %7257 = vmatprep.subr.bf16.mxu0 0
    %7258 = vmatpush1.bf16.msra.mxu0 %v7234
    %7259 = vmatprep.subr.bf16.mxu0 0
    %7260 = vmatpush1.bf16.msra.mxu0 0
    %7261 = vmatprep.subr.bf16.mxu0 0
    %7262 = vmatpush1.bf16.msra.mxu0 0
    %7263 = vmatprep.subr.bf16.mxu0 0
    %7264 = vmatpush1.bf16.msra.mxu0 0
    %7265 = vmatprep.subr.bf16.mxu0 0
    %7266 = vmatpush1.bf16.msra.mxu0 0
    %7267 = vmatprep.subr.bf16.mxu0 0
    %7268 = vmatpush1.bf16.msra.mxu0 0
    %7269 = vmatprep.subr.bf16.mxu0 0
    %7270 = vmatpush1.bf16.msra.mxu0 0
    %7271 = vmatprep.subr.bf16.mxu0 0
    %7272 = vmatpush1.bf16.msra.mxu0 0
    %7273 = vmatprep.subr.bf16.mxu0 0
    %7274 = vmatpush1.bf16.msra.mxu0 0
    %7275 = vmatprep.mubr.bf16.mxu0 0
    %7276 = vmatmul.mubr.bf16.gmra.mrb[0].mxu0 %v7193
    %v7277 = vpop.f32.mrb[0].mxu0
    %v7278 = vadd.f32 0.0, %v7277
    %v7279 = vpop.f32.mrb[0].mxu0
    %v7280 = vpop.f32.mrb[0].mxu0
    %v7281 = vpop.f32.mrb[0].mxu0
    %7282 = vdwg.mxu0
    %v7283 = vadd.f32 %v7141, %v7278
    %s7284 = scalar_lea.vmem %s5, 192
    %v7285 = vld [vmem:[%s7284] sm:$0xf]
    %v7286 = vld [vmem:[%s7284 + $0x4] sm:$0xf]
    %v7287 = vld [vmem:[%s7284 + $0x8] sm:$0xf]
    %v7288 = vld [vmem:[%s7284 + $0xc] sm:$0xf]
    %v7289 = vld [vmem:[%s7284 + $0x10] sm:$0xf]
    %v7290 = vld [vmem:[%s7284 + $0x14] sm:$0xf]
    %v7291 = vld [vmem:[%s7284 + $0x18] sm:$0xf]
    %v7292 = vld [vmem:[%s7284 + $0x1c] sm:$0xf]
    %v7293 = vld [vmem:[%s7284 + $0x20] sm:$0xf]
    %v7294 = vld [vmem:[%s7284 + $0x24] sm:$0xf]
    %v7295 = vld [vmem:[%s7284 + $0x28] sm:$0xf]
    %v7296 = vld [vmem:[%s7284 + $0x2c] sm:$0xf]
    %v7297 = vld [vmem:[%s7284 + $0x30] sm:$0xf]
    %v7298 = vld [vmem:[%s7284 + $0x34] sm:$0xf]
    %v7299 = vld [vmem:[%s7284 + $0x38] sm:$0xf]
    %v7300 = vld [vmem:[%s7284 + $0x3c] sm:$0xf]
    %v7309 = vunpack.c.l.b16 %v6844
    %v7310 = vunpack.c.l.b16 %v6848
    %v7311 = vunpack.c.l.b16 %v6852
    %v7312 = vunpack.c.l.b16 %v6856
    %v7313 = vunpack.c.l.b16 %v6860
    %v7314 = vunpack.c.l.b16 %v6864
    %v7315 = vunpack.c.l.b16 %v6868
    %v7316 = vunpack.c.l.b16 %v6872
    %v7317 = vrot.slane %v7310, 7
    %v7318 = vsel %vm4515, %v7317, %v7309
    %v7319 = vrot.slane %v7311, 6
    %v7320 = vsel %vm4518, %v7319, %v7318
    %v7321 = vrot.slane %v7312, 5
    %v7322 = vsel %vm4521, %v7321, %v7320
    %v7323 = vrot.slane %v7313, 4
    %v7324 = vsel %vm4524, %v7323, %v7322
    %v7325 = vrot.slane %v7314, 3
    %v7326 = vsel %vm4527, %v7325, %v7324
    %v7327 = vrot.slane %v7315, 2
    %v7328 = vsel %vm4530, %v7327, %v7326
    %v7329 = vrot.slane %v7316, 1
    %v7330 = vsel %vm4533, %v7329, %v7328
    %v7331 = vpack.c.b16 %v7330, %v7330
    %v7349 = vunpack.c.l.b16 %v7285
    %v7350 = vunpack.c.l.b16 %v7286
    %v7351 = vunpack.c.l.b16 %v7287
    %v7352 = vunpack.c.l.b16 %v7288
    %v7353 = vunpack.c.l.b16 %v7289
    %v7354 = vunpack.c.l.b16 %v7290
    %v7355 = vunpack.c.l.b16 %v7291
    %v7356 = vunpack.c.l.b16 %v7292
    %v7357 = vunpack.c.l.b16 %v7293
    %v7358 = vunpack.c.l.b16 %v7294
    %v7359 = vunpack.c.l.b16 %v7295
    %v7360 = vunpack.c.l.b16 %v7296
    %v7361 = vunpack.c.l.b16 %v7297
    %v7362 = vunpack.c.l.b16 %v7298
    %v7363 = vunpack.c.l.b16 %v7299
    %v7364 = vunpack.c.l.b16 %v7300
    %v7365 = vpack.c.b16 %v7350, %v7349
    %v7366 = vpack.c.b16 %v7352, %v7351
    %v7367 = vpack.c.b16 %v7354, %v7353
    %v7368 = vpack.c.b16 %v7356, %v7355
    %v7369 = vpack.c.b16 %v7358, %v7357
    %v7370 = vpack.c.b16 %v7360, %v7359
    %v7371 = vpack.c.b16 %v7362, %v7361
    %v7372 = vpack.c.b16 %v7364, %v7363
    %7381 = vmatprep.subr.bf16.mxu0 0
    %7382 = vmatpush1.bf16.msra.mxu0 %v7365
    %7383 = vmatprep.subr.bf16.mxu0 0
    %7384 = vmatpush1.bf16.msra.mxu0 %v7366
    %7385 = vmatprep.subr.bf16.mxu0 0
    %7386 = vmatpush1.bf16.msra.mxu0 %v7367
    %7387 = vmatprep.subr.bf16.mxu0 0
    %7388 = vmatpush1.bf16.msra.mxu0 %v7368
    %7389 = vmatprep.subr.bf16.mxu0 0
    %7390 = vmatpush1.bf16.msra.mxu0 %v7369
    %7391 = vmatprep.subr.bf16.mxu0 0
    %7392 = vmatpush1.bf16.msra.mxu0 %v7370
    %7393 = vmatprep.subr.bf16.mxu0 0
    %7394 = vmatpush1.bf16.msra.mxu0 %v7371
    %7395 = vmatprep.subr.bf16.mxu0 0
    %7396 = vmatpush1.bf16.msra.mxu0 %v7372
    %7397 = vmatprep.subr.bf16.mxu0 0
    %7398 = vmatpush1.bf16.msra.mxu0 0
    %7399 = vmatprep.subr.bf16.mxu0 0
    %7400 = vmatpush1.bf16.msra.mxu0 0
    %7401 = vmatprep.subr.bf16.mxu0 0
    %7402 = vmatpush1.bf16.msra.mxu0 0
    %7403 = vmatprep.subr.bf16.mxu0 0
    %7404 = vmatpush1.bf16.msra.mxu0 0
    %7405 = vmatprep.subr.bf16.mxu0 0
    %7406 = vmatpush1.bf16.msra.mxu0 0
    %7407 = vmatprep.subr.bf16.mxu0 0
    %7408 = vmatpush1.bf16.msra.mxu0 0
    %7409 = vmatprep.subr.bf16.mxu0 0
    %7410 = vmatpush1.bf16.msra.mxu0 0
    %7411 = vmatprep.subr.bf16.mxu0 0
    %7412 = vmatpush1.bf16.msra.mxu0 0
    %7413 = vmatprep.mubr.bf16.mxu0 0
    %7414 = vmatmul.mubr.bf16.gmra.mrb[0].mxu0 %v7331
    %v7415 = vpop.f32.mrb[0].mxu0
    %v7416 = vadd.f32 0.0, %v7415
    %v7417 = vpop.f32.mrb[0].mxu0
    %v7418 = vpop.f32.mrb[0].mxu0
    %v7419 = vpop.f32.mrb[0].mxu0
    %7420 = vdwg.mxu0
    %v7421 = vadd.f32 %v7283, %v7416
    %v7422 = vld [vmem:[%s6] sm:$0x1]
    %v7424 = vlaneseq
    %v7425 = vshrl.u32 %v7424, 7
    %v7426 = vsub.s32 0, %v7425
    %v7427 = vrot.slane %v7422, %v7426
    %v7429 = vadd.f32 %v7421, %v7427
    %v7430 = vmax.f32 %v7429, 0.0
    %v7431 = vpack.c.bf16 %v7430, %v7430
    %v7432 = vld [vmem:[#allocation6] sm:$0xf]
    %v7433 = vld [vmem:[#allocation6 + $0x4] sm:$0xf]
    %v7434 = vld [vmem:[#allocation6 + $0x8] sm:$0xf]
    %v7435 = vld [vmem:[#allocation6 + $0xc] sm:$0xf]
    %v7436 = vld [vmem:[#allocation6 + $0x10] sm:$0xf]
    %v7437 = vld [vmem:[#allocation6 + $0x14] sm:$0xf]
    %v7438 = vld [vmem:[#allocation6 + $0x18] sm:$0xf]
    %v7439 = vld [vmem:[#allocation6 + $0x1c] sm:$0xf]
    %v7440 = vld [vmem:[#allocation6 + $0x20] sm:$0xf]
    %v7441 = vld [vmem:[#allocation6 + $0x24] sm:$0xf]
    %v7442 = vld [vmem:[#allocation6 + $0x28] sm:$0xf]
    %v7443 = vld [vmem:[#allocation6 + $0x2c] sm:$0xf]
    %v7444 = vld [vmem:[#allocation6 + $0x30] sm:$0xf]
    %v7445 = vld [vmem:[#allocation6 + $0x34] sm:$0xf]
    %v7446 = vld [vmem:[#allocation6 + $0x38] sm:$0xf]
    %v7447 = vld [vmem:[#allocation6 + $0x3c] sm:$0xf]
    %v7448 = vld [vmem:[%s8] sm:$0x1]
    %v7450 = vlaneseq
    %v7451 = vshrl.u32 %v7450, 7
    %v7452 = vsub.s32 0, %v7451
    %v7453 = vrot.slane %v7448, %v7452
    %v7471 = vunpack.c.l.b16 %v7432
    %v7472 = vunpack.c.l.b16 %v7433
    %v7473 = vunpack.c.l.b16 %v7434
    %v7474 = vunpack.c.l.b16 %v7435
    %v7475 = vunpack.c.l.b16 %v7436
    %v7476 = vunpack.c.l.b16 %v7437
    %v7477 = vunpack.c.l.b16 %v7438
    %v7478 = vunpack.c.l.b16 %v7439
    %v7479 = vunpack.c.l.b16 %v7440
    %v7480 = vunpack.c.l.b16 %v7441
    %v7481 = vunpack.c.l.b16 %v7442
    %v7482 = vunpack.c.l.b16 %v7443
    %v7483 = vunpack.c.l.b16 %v7444
    %v7484 = vunpack.c.l.b16 %v7445
    %v7485 = vunpack.c.l.b16 %v7446
    %v7486 = vunpack.c.l.b16 %v7447
    %v7487 = vpack.c.b16 %v7472, %v7471
    %v7488 = vpack.c.b16 %v7474, %v7473
    %v7489 = vpack.c.b16 %v7476, %v7475
    %v7490 = vpack.c.b16 %v7478, %v7477
    %v7491 = vpack.c.b16 %v7480, %v7479
    %v7492 = vpack.c.b16 %v7482, %v7481
    %v7493 = vpack.c.b16 %v7484, %v7483
    %v7494 = vpack.c.b16 %v7486, %v7485
    %7503 = vmatprep.subr.bf16.mxu0 0
    %7504 = vmatpush1.bf16.msra.mxu0 %v7487
    %7505 = vmatprep.subr.bf16.mxu0 0
    %7506 = vmatpush1.bf16.msra.mxu0 %v7488
    %7507 = vmatprep.subr.bf16.mxu0 0
    %7508 = vmatpush1.bf16.msra.mxu0 %v7489
    %7509 = vmatprep.subr.bf16.mxu0 0
    %7510 = vmatpush1.bf16.msra.mxu0 %v7490
    %7511 = vmatprep.subr.bf16.mxu0 0
    %7512 = vmatpush1.bf16.msra.mxu0 %v7491
    %7513 = vmatprep.subr.bf16.mxu0 0
    %7514 = vmatpush1.bf16.msra.mxu0 %v7492
    %7515 = vmatprep.subr.bf16.mxu0 0
    %7516 = vmatpush1.bf16.msra.mxu0 %v7493
    %7517 = vmatprep.subr.bf16.mxu0 0
    %7518 = vmatpush1.bf16.msra.mxu0 %v7494
    %7519 = vmatprep.subr.bf16.mxu0 0
    %7520 = vmatpush1.bf16.msra.mxu0 0
    %7521 = vmatprep.subr.bf16.mxu0 0
    %7522 = vmatpush1.bf16.msra.mxu0 0
    %7523 = vmatprep.subr.bf16.mxu0 0
    %7524 = vmatpush1.bf16.msra.mxu0 0
    %7525 = vmatprep.subr.bf16.mxu0 0
    %7526 = vmatpush1.bf16.msra.mxu0 0
    %7527 = vmatprep.subr.bf16.mxu0 0
    %7528 = vmatpush1.bf16.msra.mxu0 0
    %7529 = vmatprep.subr.bf16.mxu0 0
    %7530 = vmatpush1.bf16.msra.mxu0 0
    %7531 = vmatprep.subr.bf16.mxu0 0
    %7532 = vmatpush1.bf16.msra.mxu0 0
    %7533 = vmatprep.subr.bf16.mxu0 0
    %7534 = vmatpush1.bf16.msra.mxu0 0
    %7535 = vmatprep.mubr.bf16.mxu0 0
    %7536 = vmatmul.mubr.bf16.gmra.mrb[0].mxu0 %v7431
    %v7537 = vpop.f32.mrb[0].mxu0
    %v7538 = vadd.f32 %v7453, %v7537
    %v7539 = vpop.f32.mrb[0].mxu0
    %v7540 = vpop.f32.mrb[0].mxu0
    %v7541 = vpop.f32.mrb[0].mxu0
    %7542 = vdwg.mxu0
    %7543 = vst [vmem:[%s9] sm:$0xff] %v7538
    // Predicated region
    $region50: #{cnn_forward.1} parent=1 // pred_check
      _
    $region51: #{cnn_forward.1} parent=1 // pred_check_branch
      %7545 = sbr.rel (0) target = $region53
    $region52: #{cnn_forward.1} parent=1 // pred_region
      _
    $region53: #{cnn_forward.1} parent=1 // pred_fallthru
      _
    // Predicated region
    $region54: #{cnn_forward.1} parent=1 // pred_check
      _
    $region55: #{cnn_forward.1} parent=1 // pred_check_branch
      %7547 = sbr.rel (0) target = $region57
    $region56: #{cnn_forward.1} parent=1 // pred_region
      _
    $region57: #{cnn_forward.1} parent=1 // pred_fallthru
      _
    %7548 = vsyncpa [#allocation3], 1
    %7549 = vsyncpa [#allocation5], 1

</llo_original>
